<compile_context>
chip_gen: v7x
topology: tpu7x:2x2x1
jax: 0.10.0
libtpu: 0.0.40
codegen_flags: <defaults>
</compile_context>

<pallas_src>
import functools
import math

import jax
import jax.numpy as jnp
from jax import lax
from jax.experimental import pallas as pl
from jax.experimental.pallas import tpu as pltpu


# Parameter-pack layouts (per layer).
_ENC_W_N = 6    # 0 wq, 1 wk, 2 wv, 3 wo, 4 w1, 5 w2
_ENC_B_N = 10   # 0 bq, 1 bk, 2 bv, 3 bo, 4 b1, 5 b2, 6 ln1_g, 7 ln1_b, 8 ln2_g, 9 ln2_b
_DEC_W_N = 10   # 0 wq_sa,1 wk_sa,2 wv_sa,3 wo_sa,4 wq_ca,5 wk_ca,6 wv_ca,7 wo_ca,8 w1,9 w2
_DEC_B_N = 16   # 0..9 biases (same order), 10 ln1_g, 11 ln1_b, 12 ln2_g, 13 ln2_b, 14 ln3_g, 15 ln3_b


# --------------------------- in-kernel helpers ------------------------------

def _mm(a, w):
    """MXU matmul: activation cast to the (bf16) weight dtype, f32 accumulation."""
    return jnp.dot(a.astype(w.dtype), w, preferred_element_type=jnp.float32)


def _ln(x, g, b, eps=1e-5):
    """LayerNorm over the last axis (f32 statistics). x: (R, H), g/b: (1, H)."""
    mu = jnp.mean(x, axis=-1, keepdims=True)
    xc = x - mu
    var = jnp.mean(xc * xc, axis=-1, keepdims=True)
    return xc * lax.rsqrt(var + eps) * g + b


def _mha(q, k, v, wo, bo, B, nheads):
    """Multi-head attention with the batch folded into the rows.

    q: (B*Sq, H), k/v: (B*Sk, H)  [batch-major rows], wo: (H, H) bf16, bo: (1, H).
    Scores are computed per head with batched einsums, stacked along the
    sublane axis for ONE softmax; head outputs are concatenated and a single
    output-projection dot is performed.
    """
    R, H = q.shape
    Sq = R // B
    Sk = k.shape[0] // B
    dh = H // nheads
    scale = 1.0 / math.sqrt(dh)

    q3 = (q * scale).reshape(B, Sq, H).astype(jnp.bfloat16)
    k3 = k.reshape(B, Sk, H).astype(jnp.bfloat16)
    v3 = v.reshape(B, Sk, H).astype(jnp.bfloat16)

    # Per-head scores (B, Sq, Sk), stacked along the q/sublane axis.
    s_h = [
        jnp.einsum('bqd,bkd->bqk',
                   q3[:, :, h * dh:(h + 1) * dh],
                   k3[:, :, h * dh:(h + 1) * dh],
                   preferred_element_type=jnp.float32)
        for h in range(nheads)
    ]
    s = jnp.concatenate(s_h, axis=1)                     # (B, nheads*Sq, Sk)

    # One softmax (exact division for parity with the PyTorch reference).
    s = s - jnp.max(s, axis=-1, keepdims=True)
    e = jnp.exp(s)
    p = (e / jnp.sum(e, axis=-1, keepdims=True)).astype(jnp.bfloat16)

    # Per-head PV, concatenated along lanes -> (B, Sq, H); single output proj.
    o_h = [
        jnp.einsum('bqk,bkd->bqd',
                   p[:, h * Sq:(h + 1) * Sq, :],
                   v3[:, :, h * dh:(h + 1) * dh],
                   preferred_element_type=jnp.float32)
        for h in range(nheads)
    ]
    o = jnp.concatenate(o_h, axis=-1).reshape(R, H)
    return _mm(o, wo) + bo


# ------------------------------ fused kernel --------------------------------

def _fused_forward_kernel(xsrc_ref, y_ref,
                          enc_w_ref, enc_b_ref, enc_norm_ref,
                          dec_w_ref, dec_b_ref, dec_norm_ref,
                          head_w_ref, head_b_ref,
                          o_ref, *, nheads, n_layers, B):
    # Small f32 vector packs, loaded once and sliced as jnp arrays.
    enc_b = enc_b_ref[...]          # (L*_ENC_B_N, H)
    dec_b = dec_b_ref[...]          # (L*_DEC_B_N, H)
    enc_norm = enc_norm_ref[...]    # (2, H)
    dec_norm = dec_norm_ref[...]    # (2, H)

    def row(arr, i):
        return arr[i:i + 1, :]

    # ---------------- encoder (dim_feedforward == hidden_size, post-norm) ---
    # Recomputed on every grid step (one per decoder): compute is tiny, the
    # encoder weights keep a constant block index (no re-DMA), and it keeps
    # grid=(D,) fully parallel across TensorCores on v7x.
    x = xsrc_ref[...]                                   # (B*Ss, H) f32
    for l in range(n_layers):
        W = lambda i, b=l * _ENC_W_N: enc_w_ref[b + i, :, :]
        bv = lambda i, b=l * _ENC_B_N: row(enc_b, b + i)
        q = _mm(x, W(0)) + bv(0)
        k = _mm(x, W(1)) + bv(1)
        v = _mm(x, W(2)) + bv(2)
        sa = _mha(q, k, v, W(3), bv(3), B, nheads)
        x = _ln(x + sa, bv(6), bv(7))
        ff = jnp.maximum(_mm(x, W(4)) + bv(4), 0.0)
        ff = _mm(ff, W(5)) + bv(5)
        x = _ln(x + ff, bv(8), bv(9))
    mem = _ln(x, row(enc_norm, 0), row(enc_norm, 1))    # encoder final norm

    # ---------------- decoder stack (this grid step's decoder) --------------
    # TODO(synk): no causal tgt_mask (reference forward defaults it to None).
    y = y_ref[...]                                      # (B*St, H) f32
    for l in range(n_layers):
        W = lambda i, b=l * _DEC_W_N: dec_w_ref[b + i, :, :]
        bv = lambda i, b=l * _DEC_B_N: row(dec_b, b + i)
        # self attention
        q = _mm(y, W(0)) + bv(0)
        k = _mm(y, W(1)) + bv(1)
        v = _mm(y, W(2)) + bv(2)
        sa = _mha(q, k, v, W(3), bv(3), B, nheads)
        y = _ln(y + sa, bv(10), bv(11))
        # cross attention over encoder memory
        qc = _mm(y, W(4)) + bv(4)
        kc = _mm(mem, W(5)) + bv(5)
        vc = _mm(mem, W(6)) + bv(6)
        ca = _mha(qc, kc, vc, W(7), bv(7), B, nheads)
        y = _ln(y + ca, bv(12), bv(13))
        # feed forward
        ff = jnp.maximum(_mm(y, W(8)) + bv(8), 0.0)
        ff = _mm(ff, W(9)) + bv(9)
        y = _ln(y + ff, bv(14), bv(15))
    y = _ln(y, row(dec_norm, 0), row(dec_norm, 1))      # decoder final norm

    # ---------------- head: linear (lane-padded to 128) + log_softmax -------
    logits = _mm(y, head_w_ref[...]) + head_b_ref[...]  # (B*St, 128) f32
    z = logits - jnp.max(logits, axis=-1, keepdims=True)
    lse = jnp.log(jnp.sum(jnp.exp(z), axis=-1, keepdims=True))
    o_ref[...] = z - lse                                # lane-dense 128-wide store


# ------------------------------ kernel wrapper -------------------------------

def fused_forward(x_src, y_stack, p, *, nheads, n_layers, B):
    """x_src: (B*Ss, H) f32.  y_stack: (D, B*St, H) f32.  Returns (D, B*St, 128)."""
    D, Rt, _ = y_stack.shape
    VP = p["head_w"].shape[-1]

    kern = functools.partial(_fused_forward_kernel,
                             nheads=nheads, n_layers=n_layers, B=B)

    def shared(arr):
        zeros = (0,) * arr.ndim
        return pl.BlockSpec(arr.shape, lambda d: zeros)

    def per_d(arr):
        shp = arr.shape[1:]
        zeros = (0,) * len(shp)
        return pl.BlockSpec((None,) + shp, lambda d: (d,) + zeros)

    return pl.pallas_call(
        kern,
        out_shape=jax.ShapeDtypeStruct((D, Rt, VP), jnp.float32),
        grid=(D,),
        in_specs=[
            shared(x_src),                 # source activations (same for all d)
            per_d(y_stack),                # this decoder's target activations
            shared(p["enc_w"]), shared(p["enc_b"]), shared(p["enc_norm"]),
            per_d(p["dec_w"]), per_d(p["dec_b"]), per_d(p["dec_norm"]),
            per_d(p["head_w"]), per_d(p["head_b"]),
        ],
        out_specs=pl.BlockSpec((None, Rt, VP), lambda d: (d, 0, 0)),
        compiler_params=pltpu.CompilerParams(
            dimension_semantics=("parallel",),
            vmem_limit_bytes=32 * 1024 * 1024),
    )(x_src, y_stack, p["enc_w"], p["enc_b"], p["enc_norm"],
      p["dec_w"], p["dec_b"], p["dec_norm"], p["head_w"], p["head_b"])


# ------------------------------ forward pass --------------------------------

def make_positional_table(H, max_len=1000):
    # exact reproduction of PositionalEncoding.__init__
    pos = jnp.arange(max_len, dtype=jnp.float32).reshape(-1, 1)
    div = jnp.power(10000.0, jnp.arange(0, H, 2, dtype=jnp.float32) / H)
    X = pos / div
    P = jnp.zeros((max_len, H), dtype=jnp.float32)
    P = P.at[:, 0::2].set(jnp.sin(X))
    P = P.at[:, 1::2].set(jnp.cos(X))
    return P


def forward(params, src, tgt, src_de, inchi, pubchemfp, *, nheads, n_layers,
            out_sizes):
    P = params["pe"]
    H = P.shape[-1]

    def embed(tokens, table):
        # nn.Embedding lookup + positional encoding (dropout = identity, eval)
        x = table[tokens]                               # (S, B, H)
        x = x + P[: x.shape[0]][:, None, :]
        B = x.shape[1]
        return x.transpose(1, 0, 2).reshape(B * x.shape[0], H)  # batch-major rows

    B = src.shape[1]
    St = tgt.shape[0]
    # TODO(synk): stacking assumes equal target lengths for the 4 decoders.
    assert tgt.shape[0] == src_de.shape[0] == inchi.shape[0] == pubchemfp.shape[0]

    x_src = embed(src, params["embed"])                 # (B*Ss, H)
    y_stack = jnp.stack([
        embed(tgt, params["embed_tgt"]),
        embed(src_de, params["embed"]),
        embed(inchi, params["embed_inchi"]),
        embed(pubchemfp, params["embed_pubchemfp"]),
    ], axis=0)                                          # (4, B*St, H)

    out_pad = fused_forward(x_src, y_stack, params,
                            nheads=nheads, n_layers=n_layers, B=B)  # (4,B*St,128)

    outs = []
    for d, v in enumerate(out_sizes):
        o = out_pad[d].reshape(B, St, -1)[:, :, :v].transpose(1, 0, 2)  # (St,B,v)
        outs.append(o)
    return tuple(outs)


# ------------------------------ parameter init ------------------------------

class KeyGen:
    def __init__(self, key):
        self.key = key

    def __call__(self):
        self.key, sub = jax.random.split(self.key)
        return sub


def init_params(key, in_size, H, out_sizes, n_layers, vpad=128):
    kg = KeyGen(key)
    D = len(out_sizes)
    L = n_layers

    def nrm(shape, scale=0.05):
        return jax.random.normal(kg(), shape, dtype=jnp.float32) * scale

    # ---- encoder packs ----
    enc_w = nrm((L * _ENC_W_N, H, H))
    enc_b = jnp.zeros((L * _ENC_B_N, H), jnp.float32)
    for l in range(L):
        enc_b = enc_b.at[l * _ENC_B_N + 6, :].set(1.0)   # ln1 gamma
        enc_b = enc_b.at[l * _ENC_B_N + 8, :].set(1.0)   # ln2 gamma
    enc_norm = jnp.concatenate(
        [jnp.ones((1, H), jnp.float32), jnp.zeros((1, H), jnp.float32)], axis=0)

    # ---- decoder packs (stacked over the 4 decoders) ----
    dec_w = nrm((D, L * _DEC_W_N, H, H))
    dec_b = jnp.zeros((D, L * _DEC_B_N, H), jnp.float32)
    for l in range(L):
        for g in (10, 12, 14):                           # ln1/ln2/ln3 gammas
            dec_b = dec_b.at[:, l * _DEC_B_N + g, :].set(1.0)
    dec_norm = jnp.concatenate(
        [jnp.ones((D, 1, H), jnp.float32), jnp.zeros((D, 1, H), jnp.float32)], axis=1)

    # ---- output heads: zero-padded weights / -1e30-padded biases to a
    #      lane-dense 128-wide output (exact for log_softmax; sliced outside).
    head_w = jnp.zeros((D, H, vpad), jnp.float32)
    head_b = jnp.full((D, 1, vpad), -1e30, jnp.float32)
    for d, v in enumerate(out_sizes):
        head_w = head_w.at[d, :, :v].set(nrm((H, v)))
        head_b = head_b.at[d, 0, :v].set(0.0)

    return {
        "pe": make_positional_table(H),
        "embed": nrm((in_size, H), 1.0),
        "embed_tgt": nrm((out_sizes[0], H), 1.0),
        "embed_inchi": nrm((out_sizes[2], H), 1.0),
        "embed_pubchemfp": nrm((out_sizes[3], H), 1.0),
        # matmul operands stored bf16 (native MXU path); vector params stay f32
        "enc_w": enc_w.astype(jnp.bfloat16),
        "enc_b": enc_b,
        "enc_norm": enc_norm,
        "dec_w": dec_w.astype(jnp.bfloat16),
        "dec_b": dec_b,
        "dec_norm": dec_norm,
        "head_w": head_w.astype(jnp.bfloat16),
        "head_b": head_b,
    }


# ----------------------------------- main -----------------------------------

if __name__ == "__main__":
    IN_SIZE = 20
    HIDDEN = 32
    OUT1, OUT2, OUT3, OUT4 = 18, 20, 22, 24
    NHEADS = 4
    NLAYERS = 2
    S_SRC = S_TGT = S_INCHI = S_PUB = 8
    B = 2

    root = jax.random.PRNGKey(0)
    k_params, k_src, k_tgt, k_srcde, k_inchi, k_pub = jax.random.split(root, 6)

    out_sizes = (OUT1, OUT2, OUT3, OUT4)
    params = init_params(k_params, IN_SIZE, HIDDEN, out_sizes, NLAYERS)

    src = jax.random.randint(k_src, (S_SRC, B), 0, IN_SIZE, dtype=jnp.int32)
    tgt = jax.random.randint(k_tgt, (S_TGT, B), 0, OUT1, dtype=jnp.int32)
    src_de = jax.random.randint(k_srcde, (S_SRC, B), 0, IN_SIZE, dtype=jnp.int32)
    inchi = jax.random.randint(k_inchi, (S_INCHI, B), 0, OUT3, dtype=jnp.int32)
    pubchemfp = jax.random.randint(k_pub, (S_PUB, B), 0, OUT4, dtype=jnp.int32)

    fwd = jax.jit(functools.partial(forward, nheads=NHEADS, n_layers=NLAYERS,
                                    out_sizes=out_sizes))
    outs = fwd(params, src, tgt, src_de, inchi, pubchemfp)
    outs = jax.block_until_ready(outs)

    assert outs[0].shape == (S_TGT, B, OUT1)
    assert outs[1].shape == (S_SRC, B, OUT2)
    assert outs[2].shape == (S_INCHI, B, OUT3)
    assert outs[3].shape == (S_PUB, B, OUT4)
    # log_softmax rows should sum (in prob space) to 1 and be finite
    for o in outs:
        assert bool(jnp.allclose(jnp.exp(o).sum(-1), 1.0, atol=1e-4))
        assert bool(jnp.all(jnp.isfinite(o)))

    print("KERNEL_OK")
</pallas_src>

<mosaic_0001>
module attributes {stable_mosaic.version = 11 : i64} {
  func.func @_fused_forward_kernel(%arg0: i32, %arg1: memref<16x32xf32, #tpu.memory_space<vmem>>, %arg2: memref<1x16x32xf32, #tpu.memory_space<vmem>>, %arg3: memref<12x32x32xbf16, #tpu.memory_space<vmem>>, %arg4: memref<20x32xf32, #tpu.memory_space<vmem>>, %arg5: memref<2x32xf32, #tpu.memory_space<vmem>>, %arg6: memref<1x20x32x32xbf16, #tpu.memory_space<vmem>>, %arg7: memref<1x32x32xf32, #tpu.memory_space<vmem>>, %arg8: memref<1x2x32xf32, #tpu.memory_space<vmem>>, %arg9: memref<1x32x128xbf16, #tpu.memory_space<vmem>>, %arg10: memref<1x1x128xf32, #tpu.memory_space<vmem>>, %arg11: memref<1x16x128xf32, #tpu.memory_space<vmem>>) attributes {dimension_semantics = [#tpu.dimension_semantics<parallel>], iteration_bounds = array<i64: 4>, scalar_prefetch = 0 : i64, scratch_operands = 0 : i64, tpu.core_type = #tpu.core_type<tc>, window_params = [{pipeline_mode = #tpu.pipeline_mode<synchronous>, transform_indices = @transform_0, window_bounds = array<i64: 16, 32>}, {transform_indices = @transform_1, window_bounds = array<i64: 1, 16, 32>}, {pipeline_mode = #tpu.pipeline_mode<synchronous>, transform_indices = @transform_2, window_bounds = array<i64: 12, 32, 32>}, {pipeline_mode = #tpu.pipeline_mode<synchronous>, transform_indices = @transform_3, window_bounds = array<i64: 20, 32>}, {pipeline_mode = #tpu.pipeline_mode<synchronous>, transform_indices = @transform_4, window_bounds = array<i64: 2, 32>}, {transform_indices = @transform_5, window_bounds = array<i64: 1, 20, 32, 32>}, {transform_indices = @transform_6, window_bounds = array<i64: 1, 32, 32>}, {transform_indices = @transform_7, window_bounds = array<i64: 1, 2, 32>}, {transform_indices = @transform_8, window_bounds = array<i64: 1, 32, 128>}, {transform_indices = @transform_9, window_bounds = array<i64: 1, 1, 128>}, {transform_indices = @transform_10, window_bounds = array<i64: 1, 16, 128>}]} {
    %c0 = arith.constant 0 : index
    %c0_0 = arith.constant 0 : index
    %0 = vector.load %arg4[%c0, %c0_0] : memref<20x32xf32, #tpu.memory_space<vmem>>, vector<20x32xf32>
    %c0_1 = arith.constant 0 : index
    %c0_2 = arith.constant 0 : index
    %c0_3 = arith.constant 0 : index
    %1 = vector.load %arg7[%c0_1, %c0_2, %c0_3] : memref<1x32x32xf32, #tpu.memory_space<vmem>>, vector<1x32x32xf32>
    %2 = vector.shape_cast %1 : vector<1x32x32xf32> to vector<32x32xf32>
    %c0_4 = arith.constant 0 : index
    %c0_5 = arith.constant 0 : index
    %3 = vector.load %arg5[%c0_4, %c0_5] : memref<2x32xf32, #tpu.memory_space<vmem>>, vector<2x32xf32>
    %c0_6 = arith.constant 0 : index
    %c0_7 = arith.constant 0 : index
    %c0_8 = arith.constant 0 : index
    %4 = vector.load %arg8[%c0_6, %c0_7, %c0_8] : memref<1x2x32xf32, #tpu.memory_space<vmem>>, vector<1x2x32xf32>
    %5 = vector.shape_cast %4 : vector<1x2x32xf32> to vector<2x32xf32>
    %c0_9 = arith.constant 0 : index
    %c0_10 = arith.constant 0 : index
    %6 = vector.load %arg1[%c0_9, %c0_10] : memref<16x32xf32, #tpu.memory_space<vmem>>, vector<16x32xf32>
    %c0_11 = arith.constant 0 : index
    %c0_12 = arith.constant 0 : index
    %c0_13 = arith.constant 0 : index
    %7 = vector.load %arg3[%c0_11, %c0_12, %c0_13] : memref<12x32x32xbf16, #tpu.memory_space<vmem>>, vector<1x32x32xbf16>
    %8 = vector.shape_cast %7 : vector<1x32x32xbf16> to vector<32x32xbf16>
    %9 = arith.truncf %6 : vector<16x32xf32> to vector<16x32xbf16>
    %cst = arith.constant dense<0.000000e+00> : vector<16x32xf32>
    %10 = tpu.matmul %9, %8, %cst {dimension_numbers = #tpu.dot_dimension_numbers<[1], [0], [0], [1], [0, 0, 1, 1], [], []>} : vector<16x32xbf16>, vector<32x32xbf16>, vector<16x32xf32> -> vector<16x32xf32>
    %11 = vector.extract_strided_slice %0 {offsets = [0, 0], sizes = [1, 32], strides = [1, 1]} : vector<20x32xf32> to vector<1x32xf32>
    %12 = vector.broadcast %11 : vector<1x32xf32> to vector<16x32xf32>
    %13 = arith.addf %10, %12 : vector<16x32xf32>
    %c1 = arith.constant 1 : index
    %c0_14 = arith.constant 0 : index
    %c0_15 = arith.constant 0 : index
    %14 = vector.load %arg3[%c1, %c0_14, %c0_15] : memref<12x32x32xbf16, #tpu.memory_space<vmem>>, vector<1x32x32xbf16>
    %15 = vector.shape_cast %14 : vector<1x32x32xbf16> to vector<32x32xbf16>
    %16 = arith.truncf %6 : vector<16x32xf32> to vector<16x32xbf16>
    %cst_16 = arith.constant dense<0.000000e+00> : vector<16x32xf32>
    %17 = tpu.matmul %16, %15, %cst_16 {dimension_numbers = #tpu.dot_dimension_numbers<[1], [0], [0], [1], [0, 0, 1, 1], [], []>} : vector<16x32xbf16>, vector<32x32xbf16>, vector<16x32xf32> -> vector<16x32xf32>
    %18 = vector.extract_strided_slice %0 {offsets = [1, 0], sizes = [1, 32], strides = [1, 1]} : vector<20x32xf32> to vector<1x32xf32>
    %19 = vector.broadcast %18 : vector<1x32xf32> to vector<16x32xf32>
    %20 = arith.addf %17, %19 : vector<16x32xf32>
    %c2 = arith.constant 2 : index
    %c0_17 = arith.constant 0 : index
    %c0_18 = arith.constant 0 : index
    %21 = vector.load %arg3[%c2, %c0_17, %c0_18] : memref<12x32x32xbf16, #tpu.memory_space<vmem>>, vector<1x32x32xbf16>
    %22 = vector.shape_cast %21 : vector<1x32x32xbf16> to vector<32x32xbf16>
    %23 = arith.truncf %6 : vector<16x32xf32> to vector<16x32xbf16>
    %cst_19 = arith.constant dense<0.000000e+00> : vector<16x32xf32>
    %24 = tpu.matmul %23, %22, %cst_19 {dimension_numbers = #tpu.dot_dimension_numbers<[1], [0], [0], [1], [0, 0, 1, 1], [], []>} : vector<16x32xbf16>, vector<32x32xbf16>, vector<16x32xf32> -> vector<16x32xf32>
    %25 = vector.extract_strided_slice %0 {offsets = [2, 0], sizes = [1, 32], strides = [1, 1]} : vector<20x32xf32> to vector<1x32xf32>
    %26 = vector.broadcast %25 : vector<1x32xf32> to vector<16x32xf32>
    %27 = arith.addf %24, %26 : vector<16x32xf32>
    %c3 = arith.constant 3 : index
    %c0_20 = arith.constant 0 : index
    %c0_21 = arith.constant 0 : index
    %28 = vector.load %arg3[%c3, %c0_20, %c0_21] : memref<12x32x32xbf16, #tpu.memory_space<vmem>>, vector<1x32x32xbf16>
    %29 = vector.shape_cast %28 : vector<1x32x32xbf16> to vector<32x32xbf16>
    %30 = vector.extract_strided_slice %0 {offsets = [3, 0], sizes = [1, 32], strides = [1, 1]} : vector<20x32xf32> to vector<1x32xf32>
    %cst_22 = arith.constant 0.353553385 : f32
    %31 = vector.broadcast %cst_22 : f32 to vector<16x32xf32>
    %32 = arith.mulf %13, %31 : vector<16x32xf32>
    %33 = vector.shape_cast %32 : vector<16x32xf32> to vector<2x8x32xf32>
    %34 = arith.truncf %33 : vector<2x8x32xf32> to vector<2x8x32xbf16>
    %35 = vector.shape_cast %20 : vector<16x32xf32> to vector<2x8x32xf32>
    %36 = arith.truncf %35 : vector<2x8x32xf32> to vector<2x8x32xbf16>
    %37 = vector.shape_cast %27 : vector<16x32xf32> to vector<2x8x32xf32>
    %38 = arith.truncf %37 : vector<2x8x32xf32> to vector<2x8x32xbf16>
    %39 = vector.extract_strided_slice %34 {offsets = [0, 0, 0], sizes = [2, 8, 8], strides = [1, 1, 1]} : vector<2x8x32xbf16> to vector<2x8x8xbf16>
    %40 = vector.extract_strided_slice %36 {offsets = [0, 0, 0], sizes = [2, 8, 8], strides = [1, 1, 1]} : vector<2x8x32xbf16> to vector<2x8x8xbf16>
    "tpu.trace_start"() <{level = 10 : i32, message = "bqd,bkd->bqk"}> : () -> ()
    %cst_23 = arith.constant dense<0.000000e+00> : vector<2x8x8xf32>
    %41 = tpu.matmul %39, %40, %cst_23 {dimension_numbers = #tpu.dot_dimension_numbers<[2], [2], [1], [1], [0, 0, 0, 1, 1, 1], [0], [0]>} : vector<2x8x8xbf16>, vector<2x8x8xbf16>, vector<2x8x8xf32> -> vector<2x8x8xf32>
    "tpu.trace_stop"() : () -> ()
    %42 = vector.extract_strided_slice %34 {offsets = [0, 0, 8], sizes = [2, 8, 8], strides = [1, 1, 1]} : vector<2x8x32xbf16> to vector<2x8x8xbf16>
    %43 = vector.extract_strided_slice %36 {offsets = [0, 0, 8], sizes = [2, 8, 8], strides = [1, 1, 1]} : vector<2x8x32xbf16> to vector<2x8x8xbf16>
    "tpu.trace_start"() <{level = 10 : i32, message = "bqd,bkd->bqk"}> : () -> ()
    %cst_24 = arith.constant dense<0.000000e+00> : vector<2x8x8xf32>
    %44 = tpu.matmul %42, %43, %cst_24 {dimension_numbers = #tpu.dot_dimension_numbers<[2], [2], [1], [1], [0, 0, 0, 1, 1, 1], [0], [0]>} : vector<2x8x8xbf16>, vector<2x8x8xbf16>, vector<2x8x8xf32> -> vector<2x8x8xf32>
    "tpu.trace_stop"() : () -> ()
    %45 = vector.extract_strided_slice %34 {offsets = [0, 0, 16], sizes = [2, 8, 8], strides = [1, 1, 1]} : vector<2x8x32xbf16> to vector<2x8x8xbf16>
    %46 = vector.extract_strided_slice %36 {offsets = [0, 0, 16], sizes = [2, 8, 8], strides = [1, 1, 1]} : vector<2x8x32xbf16> to vector<2x8x8xbf16>
    "tpu.trace_start"() <{level = 10 : i32, message = "bqd,bkd->bqk"}> : () -> ()
    %cst_25 = arith.constant dense<0.000000e+00> : vector<2x8x8xf32>
    %47 = tpu.matmul %45, %46, %cst_25 {dimension_numbers = #tpu.dot_dimension_numbers<[2], [2], [1], [1], [0, 0, 0, 1, 1, 1], [0], [0]>} : vector<2x8x8xbf16>, vector<2x8x8xbf16>, vector<2x8x8xf32> -> vector<2x8x8xf32>
    "tpu.trace_stop"() : () -> ()
    %48 = vector.extract_strided_slice %34 {offsets = [0, 0, 24], sizes = [2, 8, 8], strides = [1, 1, 1]} : vector<2x8x32xbf16> to vector<2x8x8xbf16>
    %49 = vector.extract_strided_slice %36 {offsets = [0, 0, 24], sizes = [2, 8, 8], strides = [1, 1, 1]} : vector<2x8x32xbf16> to vector<2x8x8xbf16>
    "tpu.trace_start"() <{level = 10 : i32, message = "bqd,bkd->bqk"}> : () -> ()
    %cst_26 = arith.constant dense<0.000000e+00> : vector<2x8x8xf32>
    %50 = tpu.matmul %48, %49, %cst_26 {dimension_numbers = #tpu.dot_dimension_numbers<[2], [2], [1], [1], [0, 0, 0, 1, 1, 1], [0], [0]>} : vector<2x8x8xbf16>, vector<2x8x8xbf16>, vector<2x8x8xf32> -> vector<2x8x8xf32>
    "tpu.trace_stop"() : () -> ()
    %51 = tpu.concatenate %41, %44, %47, %50 in 1 : vector<2x8x8xf32>, vector<2x8x8xf32>, vector<2x8x8xf32>, vector<2x8x8xf32> -> vector<2x32x8xf32>
    %cst_27 = arith.constant dense<0xFF800000> : vector<2x32xf32>
    %52 = vector.multi_reduction <maximumf>, %51, %cst_27 [2] : vector<2x32x8xf32> to vector<2x32xf32>
    %53 = vector.shape_cast %52 : vector<2x32xf32> to vector<2x32x1xf32>
    %54 = vector.broadcast %53 : vector<2x32x1xf32> to vector<2x32x8xf32>
    %55 = arith.subf %51, %54 : vector<2x32x8xf32>
    %56 = math.exp %55 : vector<2x32x8xf32>
    %cst_28 = arith.constant dense<0.000000e+00> : vector<2x32xf32>
    %57 = vector.multi_reduction <add>, %56, %cst_28 [2] : vector<2x32x8xf32> to vector<2x32xf32>
    %58 = vector.shape_cast %57 : vector<2x32xf32> to vector<2x32x1xf32>
    %59 = vector.broadcast %58 : vector<2x32x1xf32> to vector<2x32x8xf32>
    %60 = arith.divf %56, %59 : vector<2x32x8xf32>
    %61 = arith.truncf %60 : vector<2x32x8xf32> to vector<2x32x8xbf16>
    %62 = vector.extract_strided_slice %61 {offsets = [0, 0, 0], sizes = [2, 8, 8], strides = [1, 1, 1]} : vector<2x32x8xbf16> to vector<2x8x8xbf16>
    %63 = vector.extract_strided_slice %38 {offsets = [0, 0, 0], sizes = [2, 8, 8], strides = [1, 1, 1]} : vector<2x8x32xbf16> to vector<2x8x8xbf16>
    "tpu.trace_start"() <{level = 10 : i32, message = "bqk,bkd->bqd"}> : () -> ()
    %cst_29 = arith.constant dense<0.000000e+00> : vector<2x8x8xf32>
    %64 = tpu.matmul %62, %63, %cst_29 {dimension_numbers = #tpu.dot_dimension_numbers<[2], [1], [1], [2], [0, 0, 0, 1, 1, 2], [0], [0]>} : vector<2x8x8xbf16>, vector<2x8x8xbf16>, vector<2x8x8xf32> -> vector<2x8x8xf32>
    "tpu.trace_stop"() : () -> ()
    %65 = vector.extract_strided_slice %61 {offsets = [0, 8, 0], sizes = [2, 8, 8], strides = [1, 1, 1]} : vector<2x32x8xbf16> to vector<2x8x8xbf16>
    %66 = vector.extract_strided_slice %38 {offsets = [0, 0, 8], sizes = [2, 8, 8], strides = [1, 1, 1]} : vector<2x8x32xbf16> to vector<2x8x8xbf16>
    "tpu.trace_start"() <{level = 10 : i32, message = "bqk,bkd->bqd"}> : () -> ()
    %cst_30 = arith.constant dense<0.000000e+00> : vector<2x8x8xf32>
    %67 = tpu.matmul %65, %66, %cst_30 {dimension_numbers = #tpu.dot_dimension_numbers<[2], [1], [1], [2], [0, 0, 0, 1, 1, 2], [0], [0]>} : vector<2x8x8xbf16>, vector<2x8x8xbf16>, vector<2x8x8xf32> -> vector<2x8x8xf32>
    "tpu.trace_stop"() : () -> ()
    %68 = vector.extract_strided_slice %61 {offsets = [0, 16, 0], sizes = [2, 8, 8], strides = [1, 1, 1]} : vector<2x32x8xbf16> to vector<2x8x8xbf16>
    %69 = vector.extract_strided_slice %38 {offsets = [0, 0, 16], sizes = [2, 8, 8], strides = [1, 1, 1]} : vector<2x8x32xbf16> to vector<2x8x8xbf16>
    "tpu.trace_start"() <{level = 10 : i32, message = "bqk,bkd->bqd"}> : () -> ()
    %cst_31 = arith.constant dense<0.000000e+00> : vector<2x8x8xf32>
    %70 = tpu.matmul %68, %69, %cst_31 {dimension_numbers = #tpu.dot_dimension_numbers<[2], [1], [1], [2], [0, 0, 0, 1, 1, 2], [0], [0]>} : vector<2x8x8xbf16>, vector<2x8x8xbf16>, vector<2x8x8xf32> -> vector<2x8x8xf32>
    "tpu.trace_stop"() : () -> ()
    %71 = vector.extract_strided_slice %61 {offsets = [0, 24, 0], sizes = [2, 8, 8], strides = [1, 1, 1]} : vector<2x32x8xbf16> to vector<2x8x8xbf16>
    %72 = vector.extract_strided_slice %38 {offsets = [0, 0, 24], sizes = [2, 8, 8], strides = [1, 1, 1]} : vector<2x8x32xbf16> to vector<2x8x8xbf16>
    "tpu.trace_start"() <{level = 10 : i32, message = "bqk,bkd->bqd"}> : () -> ()
    %cst_32 = arith.constant dense<0.000000e+00> : vector<2x8x8xf32>
    %73 = tpu.matmul %71, %72, %cst_32 {dimension_numbers = #tpu.dot_dimension_numbers<[2], [1], [1], [2], [0, 0, 0, 1, 1, 2], [0], [0]>} : vector<2x8x8xbf16>, vector<2x8x8xbf16>, vector<2x8x8xf32> -> vector<2x8x8xf32>
    "tpu.trace_stop"() : () -> ()
    %74 = tpu.concatenate %64, %67, %70, %73 in 2 : vector<2x8x8xf32>, vector<2x8x8xf32>, vector<2x8x8xf32>, vector<2x8x8xf32> -> vector<2x8x32xf32>
    %75 = vector.shape_cast %74 : vector<2x8x32xf32> to vector<16x32xf32>
    %76 = arith.truncf %75 : vector<16x32xf32> to vector<16x32xbf16>
    %cst_33 = arith.constant dense<0.000000e+00> : vector<16x32xf32>
    %77 = tpu.matmul %76, %29, %cst_33 {dimension_numbers = #tpu.dot_dimension_numbers<[1], [0], [0], [1], [0, 0, 1, 1], [], []>} : vector<16x32xbf16>, vector<32x32xbf16>, vector<16x32xf32> -> vector<16x32xf32>
    %78 = vector.broadcast %30 : vector<1x32xf32> to vector<16x32xf32>
    %79 = arith.addf %77, %78 : vector<16x32xf32>
    %80 = arith.addf %6, %79 : vector<16x32xf32>
    %81 = vector.extract_strided_slice %0 {offsets = [6, 0], sizes = [1, 32], strides = [1, 1]} : vector<20x32xf32> to vector<1x32xf32>
    %82 = vector.extract_strided_slice %0 {offsets = [7, 0], sizes = [1, 32], strides = [1, 1]} : vector<20x32xf32> to vector<1x32xf32>
    %cst_34 = arith.constant dense<0.000000e+00> : vector<16xf32>
    %83 = vector.multi_reduction <add>, %80, %cst_34 [1] : vector<16x32xf32> to vector<16xf32>
    %84 = vector.shape_cast %83 : vector<16xf32> to vector<16x1xf32>
    %cst_35 = arith.constant 3.200000e+01 : f32
    %85 = vector.broadcast %cst_35 : f32 to vector<16x1xf32>
    %86 = arith.divf %84, %85 : vector<16x1xf32>
    %87 = vector.broadcast %86 : vector<16x1xf32> to vector<16x32xf32>
    %88 = arith.subf %80, %87 : vector<16x32xf32>
    %89 = arith.mulf %88, %88 : vector<16x32xf32>
    %cst_36 = arith.constant dense<0.000000e+00> : vector<16xf32>
    %90 = vector.multi_reduction <add>, %89, %cst_36 [1] : vector<16x32xf32> to vector<16xf32>
    %91 = vector.shape_cast %90 : vector<16xf32> to vector<16x1xf32>
    %cst_37 = arith.constant 3.200000e+01 : f32
    %92 = vector.broadcast %cst_37 : f32 to vector<16x1xf32>
    %93 = arith.divf %91, %92 : vector<16x1xf32>
    %cst_38 = arith.constant 9.99999974E-6 : f32
    %94 = vector.broadcast %cst_38 : f32 to vector<16x1xf32>
    %95 = arith.addf %93, %94 : vector<16x1xf32>
    %96 = math.rsqrt %95 : vector<16x1xf32>
    %97 = vector.broadcast %96 : vector<16x1xf32> to vector<16x32xf32>
    %98 = arith.mulf %88, %97 : vector<16x32xf32>
    %99 = vector.broadcast %81 : vector<1x32xf32> to vector<16x32xf32>
    %100 = arith.mulf %98, %99 : vector<16x32xf32>
    %101 = vector.broadcast %82 : vector<1x32xf32> to vector<16x32xf32>
    %102 = arith.addf %100, %101 : vector<16x32xf32>
    %c4 = arith.constant 4 : index
    %c0_39 = arith.constant 0 : index
    %c0_40 = arith.constant 0 : index
    %103 = vector.load %arg3[%c4, %c0_39, %c0_40] : memref<12x32x32xbf16, #tpu.memory_space<vmem>>, vector<1x32x32xbf16>
    %104 = vector.shape_cast %103 : vector<1x32x32xbf16> to vector<32x32xbf16>
    %105 = arith.truncf %102 : vector<16x32xf32> to vector<16x32xbf16>
    %cst_41 = arith.constant dense<0.000000e+00> : vector<16x32xf32>
    %106 = tpu.matmul %105, %104, %cst_41 {dimension_numbers = #tpu.dot_dimension_numbers<[1], [0], [0], [1], [0, 0, 1, 1], [], []>} : vector<16x32xbf16>, vector<32x32xbf16>, vector<16x32xf32> -> vector<16x32xf32>
    %107 = vector.extract_strided_slice %0 {offsets = [4, 0], sizes = [1, 32], strides = [1, 1]} : vector<20x32xf32> to vector<1x32xf32>
    %108 = vector.broadcast %107 : vector<1x32xf32> to vector<16x32xf32>
    %109 = arith.addf %106, %108 : vector<16x32xf32>
    %cst_42 = arith.constant 0.000000e+00 : f32
    %110 = vector.broadcast %cst_42 : f32 to vector<16x32xf32>
    %111 = arith.maximumf %109, %110 : vector<16x32xf32>
    %c5 = arith.constant 5 : index
    %c0_43 = arith.constant 0 : index
    %c0_44 = arith.constant 0 : index
    %112 = vector.load %arg3[%c5, %c0_43, %c0_44] : memref<12x32x32xbf16, #tpu.memory_space<vmem>>, vector<1x32x32xbf16>
    %113 = vector.shape_cast %112 : vector<1x32x32xbf16> to vector<32x32xbf16>
    %114 = arith.truncf %111 : vector<16x32xf32> to vector<16x32xbf16>
    %cst_45 = arith.constant dense<0.000000e+00> : vector<16x32xf32>
    %115 = tpu.matmul %114, %113, %cst_45 {dimension_numbers = #tpu.dot_dimension_numbers<[1], [0], [0], [1], [0, 0, 1, 1], [], []>} : vector<16x32xbf16>, vector<32x32xbf16>, vector<16x32xf32> -> vector<16x32xf32>
    %116 = vector.extract_strided_slice %0 {offsets = [5, 0], sizes = [1, 32], strides = [1, 1]} : vector<20x32xf32> to vector<1x32xf32>
    %117 = vector.broadcast %116 : vector<1x32xf32> to vector<16x32xf32>
    %118 = arith.addf %115, %117 : vector<16x32xf32>
    %119 = arith.addf %102, %118 : vector<16x32xf32>
    %120 = vector.extract_strided_slice %0 {offsets = [8, 0], sizes = [1, 32], strides = [1, 1]} : vector<20x32xf32> to vector<1x32xf32>
    %121 = vector.extract_strided_slice %0 {offsets = [9, 0], sizes = [1, 32], strides = [1, 1]} : vector<20x32xf32> to vector<1x32xf32>
    %cst_46 = arith.constant dense<0.000000e+00> : vector<16xf32>
    %122 = vector.multi_reduction <add>, %119, %cst_46 [1] : vector<16x32xf32> to vector<16xf32>
    %123 = vector.shape_cast %122 : vector<16xf32> to vector<16x1xf32>
    %cst_47 = arith.constant 3.200000e+01 : f32
    %124 = vector.broadcast %cst_47 : f32 to vector<16x1xf32>
    %125 = arith.divf %123, %124 : vector<16x1xf32>
    %126 = vector.broadcast %125 : vector<16x1xf32> to vector<16x32xf32>
    %127 = arith.subf %119, %126 : vector<16x32xf32>
    %128 = arith.mulf %127, %127 : vector<16x32xf32>
    %cst_48 = arith.constant dense<0.000000e+00> : vector<16xf32>
    %129 = vector.multi_reduction <add>, %128, %cst_48 [1] : vector<16x32xf32> to vector<16xf32>
    %130 = vector.shape_cast %129 : vector<16xf32> to vector<16x1xf32>
    %cst_49 = arith.constant 3.200000e+01 : f32
    %131 = vector.broadcast %cst_49 : f32 to vector<16x1xf32>
    %132 = arith.divf %130, %131 : vector<16x1xf32>
    %cst_50 = arith.constant 9.99999974E-6 : f32
    %133 = vector.broadcast %cst_50 : f32 to vector<16x1xf32>
    %134 = arith.addf %132, %133 : vector<16x1xf32>
    %135 = math.rsqrt %134 : vector<16x1xf32>
    %136 = vector.broadcast %135 : vector<16x1xf32> to vector<16x32xf32>
    %137 = arith.mulf %127, %136 : vector<16x32xf32>
    %138 = vector.broadcast %120 : vector<1x32xf32> to vector<16x32xf32>
    %139 = arith.mulf %137, %138 : vector<16x32xf32>
    %140 = vector.broadcast %121 : vector<1x32xf32> to vector<16x32xf32>
    %141 = arith.addf %139, %140 : vector<16x32xf32>
    %c6 = arith.constant 6 : index
    %c0_51 = arith.constant 0 : index
    %c0_52 = arith.constant 0 : index
    %142 = vector.load %arg3[%c6, %c0_51, %c0_52] : memref<12x32x32xbf16, #tpu.memory_space<vmem>>, vector<1x32x32xbf16>
    %143 = vector.shape_cast %142 : vector<1x32x32xbf16> to vector<32x32xbf16>
    %144 = arith.truncf %141 : vector<16x32xf32> to vector<16x32xbf16>
    %cst_53 = arith.constant dense<0.000000e+00> : vector<16x32xf32>
    %145 = tpu.matmul %144, %143, %cst_53 {dimension_numbers = #tpu.dot_dimension_numbers<[1], [0], [0], [1], [0, 0, 1, 1], [], []>} : vector<16x32xbf16>, vector<32x32xbf16>, vector<16x32xf32> -> vector<16x32xf32>
    %146 = vector.extract_strided_slice %0 {offsets = [10, 0], sizes = [1, 32], strides = [1, 1]} : vector<20x32xf32> to vector<1x32xf32>
    %147 = vector.broadcast %146 : vector<1x32xf32> to vector<16x32xf32>
    %148 = arith.addf %145, %147 : vector<16x32xf32>
    %c7 = arith.constant 7 : index
    %c0_54 = arith.constant 0 : index
    %c0_55 = arith.constant 0 : index
    %149 = vector.load %arg3[%c7, %c0_54, %c0_55] : memref<12x32x32xbf16, #tpu.memory_space<vmem>>, vector<1x32x32xbf16>
    %150 = vector.shape_cast %149 : vector<1x32x32xbf16> to vector<32x32xbf16>
    %151 = arith.truncf %141 : vector<16x32xf32> to vector<16x32xbf16>
    %cst_56 = arith.constant dense<0.000000e+00> : vector<16x32xf32>
    %152 = tpu.matmul %151, %150, %cst_56 {dimension_numbers = #tpu.dot_dimension_numbers<[1], [0], [0], [1], [0, 0, 1, 1], [], []>} : vector<16x32xbf16>, vector<32x32xbf16>, vector<16x32xf32> -> vector<16x32xf32>
    %153 = vector.extract_strided_slice %0 {offsets = [11, 0], sizes = [1, 32], strides = [1, 1]} : vector<20x32xf32> to vector<1x32xf32>
    %154 = vector.broadcast %153 : vector<1x32xf32> to vector<16x32xf32>
    %155 = arith.addf %152, %154 : vector<16x32xf32>
    %c8 = arith.constant 8 : index
    %c0_57 = arith.constant 0 : index
    %c0_58 = arith.constant 0 : index
    %156 = vector.load %arg3[%c8, %c0_57, %c0_58] : memref<12x32x32xbf16, #tpu.memory_space<vmem>>, vector<1x32x32xbf16>
    %157 = vector.shape_cast %156 : vector<1x32x32xbf16> to vector<32x32xbf16>
    %158 = arith.truncf %141 : vector<16x32xf32> to vector<16x32xbf16>
    %cst_59 = arith.constant dense<0.000000e+00> : vector<16x32xf32>
    %159 = tpu.matmul %158, %157, %cst_59 {dimension_numbers = #tpu.dot_dimension_numbers<[1], [0], [0], [1], [0, 0, 1, 1], [], []>} : vector<16x32xbf16>, vector<32x32xbf16>, vector<16x32xf32> -> vector<16x32xf32>
    %160 = vector.extract_strided_slice %0 {offsets = [12, 0], sizes = [1, 32], strides = [1, 1]} : vector<20x32xf32> to vector<1x32xf32>
    %161 = vector.broadcast %160 : vector<1x32xf32> to vector<16x32xf32>
    %162 = arith.addf %159, %161 : vector<16x32xf32>
    %c9 = arith.constant 9 : index
    %c0_60 = arith.constant 0 : index
    %c0_61 = arith.constant 0 : index
    %163 = vector.load %arg3[%c9, %c0_60, %c0_61] : memref<12x32x32xbf16, #tpu.memory_space<vmem>>, vector<1x32x32xbf16>
    %164 = vector.shape_cast %163 : vector<1x32x32xbf16> to vector<32x32xbf16>
    %165 = vector.extract_strided_slice %0 {offsets = [13, 0], sizes = [1, 32], strides = [1, 1]} : vector<20x32xf32> to vector<1x32xf32>
    %cst_62 = arith.constant 0.353553385 : f32
    %166 = vector.broadcast %cst_62 : f32 to vector<16x32xf32>
    %167 = arith.mulf %148, %166 : vector<16x32xf32>
    %168 = vector.shape_cast %167 : vector<16x32xf32> to vector<2x8x32xf32>
    %169 = arith.truncf %168 : vector<2x8x32xf32> to vector<2x8x32xbf16>
    %170 = vector.shape_cast %155 : vector<16x32xf32> to vector<2x8x32xf32>
    %171 = arith.truncf %170 : vector<2x8x32xf32> to vector<2x8x32xbf16>
    %172 = vector.shape_cast %162 : vector<16x32xf32> to vector<2x8x32xf32>
    %173 = arith.truncf %172 : vector<2x8x32xf32> to vector<2x8x32xbf16>
    %174 = vector.extract_strided_slice %169 {offsets = [0, 0, 0], sizes = [2, 8, 8], strides = [1, 1, 1]} : vector<2x8x32xbf16> to vector<2x8x8xbf16>
    %175 = vector.extract_strided_slice %171 {offsets = [0, 0, 0], sizes = [2, 8, 8], strides = [1, 1, 1]} : vector<2x8x32xbf16> to vector<2x8x8xbf16>
    "tpu.trace_start"() <{level = 10 : i32, message = "bqd,bkd->bqk"}> : () -> ()
    %cst_63 = arith.constant dense<0.000000e+00> : vector<2x8x8xf32>
    %176 = tpu.matmul %174, %175, %cst_63 {dimension_numbers = #tpu.dot_dimension_numbers<[2], [2], [1], [1], [0, 0, 0, 1, 1, 1], [0], [0]>} : vector<2x8x8xbf16>, vector<2x8x8xbf16>, vector<2x8x8xf32> -> vector<2x8x8xf32>
    "tpu.trace_stop"() : () -> ()
    %177 = vector.extract_strided_slice %169 {offsets = [0, 0, 8], sizes = [2, 8, 8], strides = [1, 1, 1]} : vector<2x8x32xbf16> to vector<2x8x8xbf16>
    %178 = vector.extract_strided_slice %171 {offsets = [0, 0, 8], sizes = [2, 8, 8], strides = [1, 1, 1]} : vector<2x8x32xbf16> to vector<2x8x8xbf16>
    "tpu.trace_start"() <{level = 10 : i32, message = "bqd,bkd->bqk"}> : () -> ()
    %cst_64 = arith.constant dense<0.000000e+00> : vector<2x8x8xf32>
    %179 = tpu.matmul %177, %178, %cst_64 {dimension_numbers = #tpu.dot_dimension_numbers<[2], [2], [1], [1], [0, 0, 0, 1, 1, 1], [0], [0]>} : vector<2x8x8xbf16>, vector<2x8x8xbf16>, vector<2x8x8xf32> -> vector<2x8x8xf32>
    "tpu.trace_stop"() : () -> ()
    %180 = vector.extract_strided_slice %169 {offsets = [0, 0, 16], sizes = [2, 8, 8], strides = [1, 1, 1]} : vector<2x8x32xbf16> to vector<2x8x8xbf16>
    %181 = vector.extract_strided_slice %171 {offsets = [0, 0, 16], sizes = [2, 8, 8], strides = [1, 1, 1]} : vector<2x8x32xbf16> to vector<2x8x8xbf16>
    "tpu.trace_start"() <{level = 10 : i32, message = "bqd,bkd->bqk"}> : () -> ()
    %cst_65 = arith.constant dense<0.000000e+00> : vector<2x8x8xf32>
    %182 = tpu.matmul %180, %181, %cst_65 {dimension_numbers = #tpu.dot_dimension_numbers<[2], [2], [1], [1], [0, 0, 0, 1, 1, 1], [0], [0]>} : vector<2x8x8xbf16>, vector<2x8x8xbf16>, vector<2x8x8xf32> -> vector<2x8x8xf32>
    "tpu.trace_stop"() : () -> ()
    %183 = vector.extract_strided_slice %169 {offsets = [0, 0, 24], sizes = [2, 8, 8], strides = [1, 1, 1]} : vector<2x8x32xbf16> to vector<2x8x8xbf16>
    %184 = vector.extract_strided_slice %171 {offsets = [0, 0, 24], sizes = [2, 8, 8], strides = [1, 1, 1]} : vector<2x8x32xbf16> to vector<2x8x8xbf16>
    "tpu.trace_start"() <{level = 10 : i32, message = "bqd,bkd->bqk"}> : () -> ()
    %cst_66 = arith.constant dense<0.000000e+00> : vector<2x8x8xf32>
    %185 = tpu.matmul %183, %184, %cst_66 {dimension_numbers = #tpu.dot_dimension_numbers<[2], [2], [1], [1], [0, 0, 0, 1, 1, 1], [0], [0]>} : vector<2x8x8xbf16>, vector<2x8x8xbf16>, vector<2x8x8xf32> -> vector<2x8x8xf32>
    "tpu.trace_stop"() : () -> ()
    %186 = tpu.concatenate %176, %179, %182, %185 in 1 : vector<2x8x8xf32>, vector<2x8x8xf32>, vector<2x8x8xf32>, vector<2x8x8xf32> -> vector<2x32x8xf32>
    %cst_67 = arith.constant dense<0xFF800000> : vector<2x32xf32>
    %187 = vector.multi_reduction <maximumf>, %186, %cst_67 [2] : vector<2x32x8xf32> to vector<2x32xf32>
    %188 = vector.shape_cast %187 : vector<2x32xf32> to vector<2x32x1xf32>
    %189 = vector.broadcast %188 : vector<2x32x1xf32> to vector<2x32x8xf32>
    %190 = arith.subf %186, %189 : vector<2x32x8xf32>
    %191 = math.exp %190 : vector<2x32x8xf32>
    %cst_68 = arith.constant dense<0.000000e+00> : vector<2x32xf32>
    %192 = vector.multi_reduction <add>, %191, %cst_68 [2] : vector<2x32x8xf32> to vector<2x32xf32>
    %193 = vector.shape_cast %192 : vector<2x32xf32> to vector<2x32x1xf32>
    %194 = vector.broadcast %193 : vector<2x32x1xf32> to vector<2x32x8xf32>
    %195 = arith.divf %191, %194 : vector<2x32x8xf32>
    %196 = arith.truncf %195 : vector<2x32x8xf32> to vector<2x32x8xbf16>
    %197 = vector.extract_strided_slice %196 {offsets = [0, 0, 0], sizes = [2, 8, 8], strides = [1, 1, 1]} : vector<2x32x8xbf16> to vector<2x8x8xbf16>
    %198 = vector.extract_strided_slice %173 {offsets = [0, 0, 0], sizes = [2, 8, 8], strides = [1, 1, 1]} : vector<2x8x32xbf16> to vector<2x8x8xbf16>
    "tpu.trace_start"() <{level = 10 : i32, message = "bqk,bkd->bqd"}> : () -> ()
    %cst_69 = arith.constant dense<0.000000e+00> : vector<2x8x8xf32>
    %199 = tpu.matmul %197, %198, %cst_69 {dimension_numbers = #tpu.dot_dimension_numbers<[2], [1], [1], [2], [0, 0, 0, 1, 1, 2], [0], [0]>} : vector<2x8x8xbf16>, vector<2x8x8xbf16>, vector<2x8x8xf32> -> vector<2x8x8xf32>
    "tpu.trace_stop"() : () -> ()
    %200 = vector.extract_strided_slice %196 {offsets = [0, 8, 0], sizes = [2, 8, 8], strides = [1, 1, 1]} : vector<2x32x8xbf16> to vector<2x8x8xbf16>
    %201 = vector.extract_strided_slice %173 {offsets = [0, 0, 8], sizes = [2, 8, 8], strides = [1, 1, 1]} : vector<2x8x32xbf16> to vector<2x8x8xbf16>
    "tpu.trace_start"() <{level = 10 : i32, message = "bqk,bkd->bqd"}> : () -> ()
    %cst_70 = arith.constant dense<0.000000e+00> : vector<2x8x8xf32>
    %202 = tpu.matmul %200, %201, %cst_70 {dimension_numbers = #tpu.dot_dimension_numbers<[2], [1], [1], [2], [0, 0, 0, 1, 1, 2], [0], [0]>} : vector<2x8x8xbf16>, vector<2x8x8xbf16>, vector<2x8x8xf32> -> vector<2x8x8xf32>
    "tpu.trace_stop"() : () -> ()
    %203 = vector.extract_strided_slice %196 {offsets = [0, 16, 0], sizes = [2, 8, 8], strides = [1, 1, 1]} : vector<2x32x8xbf16> to vector<2x8x8xbf16>
    %204 = vector.extract_strided_slice %173 {offsets = [0, 0, 16], sizes = [2, 8, 8], strides = [1, 1, 1]} : vector<2x8x32xbf16> to vector<2x8x8xbf16>
    "tpu.trace_start"() <{level = 10 : i32, message = "bqk,bkd->bqd"}> : () -> ()
    %cst_71 = arith.constant dense<0.000000e+00> : vector<2x8x8xf32>
    %205 = tpu.matmul %203, %204, %cst_71 {dimension_numbers = #tpu.dot_dimension_numbers<[2], [1], [1], [2], [0, 0, 0, 1, 1, 2], [0], [0]>} : vector<2x8x8xbf16>, vector<2x8x8xbf16>, vector<2x8x8xf32> -> vector<2x8x8xf32>
    "tpu.trace_stop"() : () -> ()
    %206 = vector.extract_strided_slice %196 {offsets = [0, 24, 0], sizes = [2, 8, 8], strides = [1, 1, 1]} : vector<2x32x8xbf16> to vector<2x8x8xbf16>
    %207 = vector.extract_strided_slice %173 {offsets = [0, 0, 24], sizes = [2, 8, 8], strides = [1, 1, 1]} : vector<2x8x32xbf16> to vector<2x8x8xbf16>
    "tpu.trace_start"() <{level = 10 : i32, message = "bqk,bkd->bqd"}> : () -> ()
    %cst_72 = arith.constant dense<0.000000e+00> : vector<2x8x8xf32>
    %208 = tpu.matmul %206, %207, %cst_72 {dimension_numbers = #tpu.dot_dimension_numbers<[2], [1], [1], [2], [0, 0, 0, 1, 1, 2], [0], [0]>} : vector<2x8x8xbf16>, vector<2x8x8xbf16>, vector<2x8x8xf32> -> vector<2x8x8xf32>
    "tpu.trace_stop"() : () -> ()
    %209 = tpu.concatenate %199, %202, %205, %208 in 2 : vector<2x8x8xf32>, vector<2x8x8xf32>, vector<2x8x8xf32>, vector<2x8x8xf32> -> vector<2x8x32xf32>
    %210 = vector.shape_cast %209 : vector<2x8x32xf32> to vector<16x32xf32>
    %211 = arith.truncf %210 : vector<16x32xf32> to vector<16x32xbf16>
    %cst_73 = arith.constant dense<0.000000e+00> : vector<16x32xf32>
    %212 = tpu.matmul %211, %164, %cst_73 {dimension_numbers = #tpu.dot_dimension_numbers<[1], [0], [0], [1], [0, 0, 1, 1], [], []>} : vector<16x32xbf16>, vector<32x32xbf16>, vector<16x32xf32> -> vector<16x32xf32>
    %213 = vector.broadcast %165 : vector<1x32xf32> to vector<16x32xf32>
    %214 = arith.addf %212, %213 : vector<16x32xf32>
    %215 = arith.addf %141, %214 : vector<16x32xf32>
    %216 = vector.extract_strided_slice %0 {offsets = [16, 0], sizes = [1, 32], strides = [1, 1]} : vector<20x32xf32> to vector<1x32xf32>
    %217 = vector.extract_strided_slice %0 {offsets = [17, 0], sizes = [1, 32], strides = [1, 1]} : vector<20x32xf32> to vector<1x32xf32>
    %cst_74 = arith.constant dense<0.000000e+00> : vector<16xf32>
    %218 = vector.multi_reduction <add>, %215, %cst_74 [1] : vector<16x32xf32> to vector<16xf32>
    %219 = vector.shape_cast %218 : vector<16xf32> to vector<16x1xf32>
    %cst_75 = arith.constant 3.200000e+01 : f32
    %220 = vector.broadcast %cst_75 : f32 to vector<16x1xf32>
    %221 = arith.divf %219, %220 : vector<16x1xf32>
    %222 = vector.broadcast %221 : vector<16x1xf32> to vector<16x32xf32>
    %223 = arith.subf %215, %222 : vector<16x32xf32>
    %224 = arith.mulf %223, %223 : vector<16x32xf32>
    %cst_76 = arith.constant dense<0.000000e+00> : vector<16xf32>
    %225 = vector.multi_reduction <add>, %224, %cst_76 [1] : vector<16x32xf32> to vector<16xf32>
    %226 = vector.shape_cast %225 : vector<16xf32> to vector<16x1xf32>
    %cst_77 = arith.constant 3.200000e+01 : f32
    %227 = vector.broadcast %cst_77 : f32 to vector<16x1xf32>
    %228 = arith.divf %226, %227 : vector<16x1xf32>
    %cst_78 = arith.constant 9.99999974E-6 : f32
    %229 = vector.broadcast %cst_78 : f32 to vector<16x1xf32>
    %230 = arith.addf %228, %229 : vector<16x1xf32>
    %231 = math.rsqrt %230 : vector<16x1xf32>
    %232 = vector.broadcast %231 : vector<16x1xf32> to vector<16x32xf32>
    %233 = arith.mulf %223, %232 : vector<16x32xf32>
    %234 = vector.broadcast %216 : vector<1x32xf32> to vector<16x32xf32>
    %235 = arith.mulf %233, %234 : vector<16x32xf32>
    %236 = vector.broadcast %217 : vector<1x32xf32> to vector<16x32xf32>
    %237 = arith.addf %235, %236 : vector<16x32xf32>
    %c10 = arith.constant 10 : index
    %c0_79 = arith.constant 0 : index
    %c0_80 = arith.constant 0 : index
    %238 = vector.load %arg3[%c10, %c0_79, %c0_80] : memref<12x32x32xbf16, #tpu.memory_space<vmem>>, vector<1x32x32xbf16>
    %239 = vector.shape_cast %238 : vector<1x32x32xbf16> to vector<32x32xbf16>
    %240 = arith.truncf %237 : vector<16x32xf32> to vector<16x32xbf16>
    %cst_81 = arith.constant dense<0.000000e+00> : vector<16x32xf32>
    %241 = tpu.matmul %240, %239, %cst_81 {dimension_numbers = #tpu.dot_dimension_numbers<[1], [0], [0], [1], [0, 0, 1, 1], [], []>} : vector<16x32xbf16>, vector<32x32xbf16>, vector<16x32xf32> -> vector<16x32xf32>
    %242 = vector.extract_strided_slice %0 {offsets = [14, 0], sizes = [1, 32], strides = [1, 1]} : vector<20x32xf32> to vector<1x32xf32>
    %243 = vector.broadcast %242 : vector<1x32xf32> to vector<16x32xf32>
    %244 = arith.addf %241, %243 : vector<16x32xf32>
    %cst_82 = arith.constant 0.000000e+00 : f32
    %245 = vector.broadcast %cst_82 : f32 to vector<16x32xf32>
    %246 = arith.maximumf %244, %245 : vector<16x32xf32>
    %c11 = arith.constant 11 : index
    %c0_83 = arith.constant 0 : index
    %c0_84 = arith.constant 0 : index
    %247 = vector.load %arg3[%c11, %c0_83, %c0_84] : memref<12x32x32xbf16, #tpu.memory_space<vmem>>, vector<1x32x32xbf16>
    %248 = vector.shape_cast %247 : vector<1x32x32xbf16> to vector<32x32xbf16>
    %249 = arith.truncf %246 : vector<16x32xf32> to vector<16x32xbf16>
    %cst_85 = arith.constant dense<0.000000e+00> : vector<16x32xf32>
    %250 = tpu.matmul %249, %248, %cst_85 {dimension_numbers = #tpu.dot_dimension_numbers<[1], [0], [0], [1], [0, 0, 1, 1], [], []>} : vector<16x32xbf16>, vector<32x32xbf16>, vector<16x32xf32> -> vector<16x32xf32>
    %251 = vector.extract_strided_slice %0 {offsets = [15, 0], sizes = [1, 32], strides = [1, 1]} : vector<20x32xf32> to vector<1x32xf32>
    %252 = vector.broadcast %251 : vector<1x32xf32> to vector<16x32xf32>
    %253 = arith.addf %250, %252 : vector<16x32xf32>
    %254 = arith.addf %237, %253 : vector<16x32xf32>
    %255 = vector.extract_strided_slice %0 {offsets = [18, 0], sizes = [1, 32], strides = [1, 1]} : vector<20x32xf32> to vector<1x32xf32>
    %256 = vector.extract_strided_slice %0 {offsets = [19, 0], sizes = [1, 32], strides = [1, 1]} : vector<20x32xf32> to vector<1x32xf32>
    %cst_86 = arith.constant dense<0.000000e+00> : vector<16xf32>
    %257 = vector.multi_reduction <add>, %254, %cst_86 [1] : vector<16x32xf32> to vector<16xf32>
    %258 = vector.shape_cast %257 : vector<16xf32> to vector<16x1xf32>
    %cst_87 = arith.constant 3.200000e+01 : f32
    %259 = vector.broadcast %cst_87 : f32 to vector<16x1xf32>
    %260 = arith.divf %258, %259 : vector<16x1xf32>
    %261 = vector.broadcast %260 : vector<16x1xf32> to vector<16x32xf32>
    %262 = arith.subf %254, %261 : vector<16x32xf32>
    %263 = arith.mulf %262, %262 : vector<16x32xf32>
    %cst_88 = arith.constant dense<0.000000e+00> : vector<16xf32>
    %264 = vector.multi_reduction <add>, %263, %cst_88 [1] : vector<16x32xf32> to vector<16xf32>
    %265 = vector.shape_cast %264 : vector<16xf32> to vector<16x1xf32>
    %cst_89 = arith.constant 3.200000e+01 : f32
    %266 = vector.broadcast %cst_89 : f32 to vector<16x1xf32>
    %267 = arith.divf %265, %266 : vector<16x1xf32>
    %cst_90 = arith.constant 9.99999974E-6 : f32
    %268 = vector.broadcast %cst_90 : f32 to vector<16x1xf32>
    %269 = arith.addf %267, %268 : vector<16x1xf32>
    %270 = math.rsqrt %269 : vector<16x1xf32>
    %271 = vector.broadcast %270 : vector<16x1xf32> to vector<16x32xf32>
    %272 = arith.mulf %262, %271 : vector<16x32xf32>
    %273 = vector.broadcast %255 : vector<1x32xf32> to vector<16x32xf32>
    %274 = arith.mulf %272, %273 : vector<16x32xf32>
    %275 = vector.broadcast %256 : vector<1x32xf32> to vector<16x32xf32>
    %276 = arith.addf %274, %275 : vector<16x32xf32>
    %277 = vector.extract_strided_slice %3 {offsets = [0, 0], sizes = [1, 32], strides = [1, 1]} : vector<2x32xf32> to vector<1x32xf32>
    %278 = vector.extract_strided_slice %3 {offsets = [1, 0], sizes = [1, 32], strides = [1, 1]} : vector<2x32xf32> to vector<1x32xf32>
    %cst_91 = arith.constant dense<0.000000e+00> : vector<16xf32>
    %279 = vector.multi_reduction <add>, %276, %cst_91 [1] : vector<16x32xf32> to vector<16xf32>
    %280 = vector.shape_cast %279 : vector<16xf32> to vector<16x1xf32>
    %cst_92 = arith.constant 3.200000e+01 : f32
    %281 = vector.broadcast %cst_92 : f32 to vector<16x1xf32>
    %282 = arith.divf %280, %281 : vector<16x1xf32>
    %283 = vector.broadcast %282 : vector<16x1xf32> to vector<16x32xf32>
    %284 = arith.subf %276, %283 : vector<16x32xf32>
    %285 = arith.mulf %284, %284 : vector<16x32xf32>
    %cst_93 = arith.constant dense<0.000000e+00> : vector<16xf32>
    %286 = vector.multi_reduction <add>, %285, %cst_93 [1] : vector<16x32xf32> to vector<16xf32>
    %287 = vector.shape_cast %286 : vector<16xf32> to vector<16x1xf32>
    %cst_94 = arith.constant 3.200000e+01 : f32
    %288 = vector.broadcast %cst_94 : f32 to vector<16x1xf32>
    %289 = arith.divf %287, %288 : vector<16x1xf32>
    %cst_95 = arith.constant 9.99999974E-6 : f32
    %290 = vector.broadcast %cst_95 : f32 to vector<16x1xf32>
    %291 = arith.addf %289, %290 : vector<16x1xf32>
    %292 = math.rsqrt %291 : vector<16x1xf32>
    %293 = vector.broadcast %292 : vector<16x1xf32> to vector<16x32xf32>
    %294 = arith.mulf %284, %293 : vector<16x32xf32>
    %295 = vector.broadcast %277 : vector<1x32xf32> to vector<16x32xf32>
    %296 = arith.mulf %294, %295 : vector<16x32xf32>
    %297 = vector.broadcast %278 : vector<1x32xf32> to vector<16x32xf32>
    %298 = arith.addf %296, %297 : vector<16x32xf32>
    %c0_96 = arith.constant 0 : index
    %c0_97 = arith.constant 0 : index
    %c0_98 = arith.constant 0 : index
    %299 = vector.load %arg2[%c0_96, %c0_97, %c0_98] : memref<1x16x32xf32, #tpu.memory_space<vmem>>, vector<1x16x32xf32>
    %300 = vector.shape_cast %299 : vector<1x16x32xf32> to vector<16x32xf32>
    %c0_99 = arith.constant 0 : index
    %c0_100 = arith.constant 0 : index
    %c0_101 = arith.constant 0 : index
    %c0_102 = arith.constant 0 : index
    %301 = vector.load %arg6[%c0_99, %c0_100, %c0_101, %c0_102] : memref<1x20x32x32xbf16, #tpu.memory_space<vmem>>, vector<1x1x32x32xbf16>
    %302 = vector.shape_cast %301 : vector<1x1x32x32xbf16> to vector<32x32xbf16>
    %303 = arith.truncf %300 : vector<16x32xf32> to vector<16x32xbf16>
    %cst_103 = arith.constant dense<0.000000e+00> : vector<16x32xf32>
    %304 = tpu.matmul %303, %302, %cst_103 {dimension_numbers = #tpu.dot_dimension_numbers<[1], [0], [0], [1], [0, 0, 1, 1], [], []>} : vector<16x32xbf16>, vector<32x32xbf16>, vector<16x32xf32> -> vector<16x32xf32>
    %305 = vector.extract_strided_slice %2 {offsets = [0, 0], sizes = [1, 32], strides = [1, 1]} : vector<32x32xf32> to vector<1x32xf32>
    %306 = vector.broadcast %305 : vector<1x32xf32> to vector<16x32xf32>
    %307 = arith.addf %304, %306 : vector<16x32xf32>
    %c0_104 = arith.constant 0 : index
    %c1_105 = arith.constant 1 : index
    %c0_106 = arith.constant 0 : index
    %c0_107 = arith.constant 0 : index
    %308 = vector.load %arg6[%c0_104, %c1_105, %c0_106, %c0_107] : memref<1x20x32x32xbf16, #tpu.memory_space<vmem>>, vector<1x1x32x32xbf16>
    %309 = vector.shape_cast %308 : vector<1x1x32x32xbf16> to vector<32x32xbf16>
    %310 = arith.truncf %300 : vector<16x32xf32> to vector<16x32xbf16>
    %cst_108 = arith.constant dense<0.000000e+00> : vector<16x32xf32>
    %311 = tpu.matmul %310, %309, %cst_108 {dimension_numbers = #tpu.dot_dimension_numbers<[1], [0], [0], [1], [0, 0, 1, 1], [], []>} : vector<16x32xbf16>, vector<32x32xbf16>, vector<16x32xf32> -> vector<16x32xf32>
    %312 = vector.extract_strided_slice %2 {offsets = [1, 0], sizes = [1, 32], strides = [1, 1]} : vector<32x32xf32> to vector<1x32xf32>
    %313 = vector.broadcast %312 : vector<1x32xf32> to vector<16x32xf32>
    %314 = arith.addf %311, %313 : vector<16x32xf32>
    %c0_109 = arith.constant 0 : index
    %c2_110 = arith.constant 2 : index
    %c0_111 = arith.constant 0 : index
    %c0_112 = arith.constant 0 : index
    %315 = vector.load %arg6[%c0_109, %c2_110, %c0_111, %c0_112] : memref<1x20x32x32xbf16, #tpu.memory_space<vmem>>, vector<1x1x32x32xbf16>
    %316 = vector.shape_cast %315 : vector<1x1x32x32xbf16> to vector<32x32xbf16>
    %317 = arith.truncf %300 : vector<16x32xf32> to vector<16x32xbf16>
    %cst_113 = arith.constant dense<0.000000e+00> : vector<16x32xf32>
    %318 = tpu.matmul %317, %316, %cst_113 {dimension_numbers = #tpu.dot_dimension_numbers<[1], [0], [0], [1], [0, 0, 1, 1], [], []>} : vector<16x32xbf16>, vector<32x32xbf16>, vector<16x32xf32> -> vector<16x32xf32>
    %319 = vector.extract_strided_slice %2 {offsets = [2, 0], sizes = [1, 32], strides = [1, 1]} : vector<32x32xf32> to vector<1x32xf32>
    %320 = vector.broadcast %319 : vector<1x32xf32> to vector<16x32xf32>
    %321 = arith.addf %318, %320 : vector<16x32xf32>
    %c0_114 = arith.constant 0 : index
    %c3_115 = arith.constant 3 : index
    %c0_116 = arith.constant 0 : index
    %c0_117 = arith.constant 0 : index
    %322 = vector.load %arg6[%c0_114, %c3_115, %c0_116, %c0_117] : memref<1x20x32x32xbf16, #tpu.memory_space<vmem>>, vector<1x1x32x32xbf16>
    %323 = vector.shape_cast %322 : vector<1x1x32x32xbf16> to vector<32x32xbf16>
    %324 = vector.extract_strided_slice %2 {offsets = [3, 0], sizes = [1, 32], strides = [1, 1]} : vector<32x32xf32> to vector<1x32xf32>
    %cst_118 = arith.constant 0.353553385 : f32
    %325 = vector.broadcast %cst_118 : f32 to vector<16x32xf32>
    %326 = arith.mulf %307, %325 : vector<16x32xf32>
    %327 = vector.shape_cast %326 : vector<16x32xf32> to vector<2x8x32xf32>
    %328 = arith.truncf %327 : vector<2x8x32xf32> to vector<2x8x32xbf16>
    %329 = vector.shape_cast %314 : vector<16x32xf32> to vector<2x8x32xf32>
    %330 = arith.truncf %329 : vector<2x8x32xf32> to vector<2x8x32xbf16>
    %331 = vector.shape_cast %321 : vector<16x32xf32> to vector<2x8x32xf32>
    %332 = arith.truncf %331 : vector<2x8x32xf32> to vector<2x8x32xbf16>
    %333 = vector.extract_strided_slice %328 {offsets = [0, 0, 0], sizes = [2, 8, 8], strides = [1, 1, 1]} : vector<2x8x32xbf16> to vector<2x8x8xbf16>
    %334 = vector.extract_strided_slice %330 {offsets = [0, 0, 0], sizes = [2, 8, 8], strides = [1, 1, 1]} : vector<2x8x32xbf16> to vector<2x8x8xbf16>
    "tpu.trace_start"() <{level = 10 : i32, message = "bqd,bkd->bqk"}> : () -> ()
    %cst_119 = arith.constant dense<0.000000e+00> : vector<2x8x8xf32>
    %335 = tpu.matmul %333, %334, %cst_119 {dimension_numbers = #tpu.dot_dimension_numbers<[2], [2], [1], [1], [0, 0, 0, 1, 1, 1], [0], [0]>} : vector<2x8x8xbf16>, vector<2x8x8xbf16>, vector<2x8x8xf32> -> vector<2x8x8xf32>
    "tpu.trace_stop"() : () -> ()
    %336 = vector.extract_strided_slice %328 {offsets = [0, 0, 8], sizes = [2, 8, 8], strides = [1, 1, 1]} : vector<2x8x32xbf16> to vector<2x8x8xbf16>
    %337 = vector.extract_strided_slice %330 {offsets = [0, 0, 8], sizes = [2, 8, 8], strides = [1, 1, 1]} : vector<2x8x32xbf16> to vector<2x8x8xbf16>
    "tpu.trace_start"() <{level = 10 : i32, message = "bqd,bkd->bqk"}> : () -> ()
    %cst_120 = arith.constant dense<0.000000e+00> : vector<2x8x8xf32>
    %338 = tpu.matmul %336, %337, %cst_120 {dimension_numbers = #tpu.dot_dimension_numbers<[2], [2], [1], [1], [0, 0, 0, 1, 1, 1], [0], [0]>} : vector<2x8x8xbf16>, vector<2x8x8xbf16>, vector<2x8x8xf32> -> vector<2x8x8xf32>
    "tpu.trace_stop"() : () -> ()
    %339 = vector.extract_strided_slice %328 {offsets = [0, 0, 16], sizes = [2, 8, 8], strides = [1, 1, 1]} : vector<2x8x32xbf16> to vector<2x8x8xbf16>
    %340 = vector.extract_strided_slice %330 {offsets = [0, 0, 16], sizes = [2, 8, 8], strides = [1, 1, 1]} : vector<2x8x32xbf16> to vector<2x8x8xbf16>
    "tpu.trace_start"() <{level = 10 : i32, message = "bqd,bkd->bqk"}> : () -> ()
    %cst_121 = arith.constant dense<0.000000e+00> : vector<2x8x8xf32>
    %341 = tpu.matmul %339, %340, %cst_121 {dimension_numbers = #tpu.dot_dimension_numbers<[2], [2], [1], [1], [0, 0, 0, 1, 1, 1], [0], [0]>} : vector<2x8x8xbf16>, vector<2x8x8xbf16>, vector<2x8x8xf32> -> vector<2x8x8xf32>
    "tpu.trace_stop"() : () -> ()
    %342 = vector.extract_strided_slice %328 {offsets = [0, 0, 24], sizes = [2, 8, 8], strides = [1, 1, 1]} : vector<2x8x32xbf16> to vector<2x8x8xbf16>
    %343 = vector.extract_strided_slice %330 {offsets = [0, 0, 24], sizes = [2, 8, 8], strides = [1, 1, 1]} : vector<2x8x32xbf16> to vector<2x8x8xbf16>
    "tpu.trace_start"() <{level = 10 : i32, message = "bqd,bkd->bqk"}> : () -> ()
    %cst_122 = arith.constant dense<0.000000e+00> : vector<2x8x8xf32>
    %344 = tpu.matmul %342, %343, %cst_122 {dimension_numbers = #tpu.dot_dimension_numbers<[2], [2], [1], [1], [0, 0, 0, 1, 1, 1], [0], [0]>} : vector<2x8x8xbf16>, vector<2x8x8xbf16>, vector<2x8x8xf32> -> vector<2x8x8xf32>
    "tpu.trace_stop"() : () -> ()
    %345 = tpu.concatenate %335, %338, %341, %344 in 1 : vector<2x8x8xf32>, vector<2x8x8xf32>, vector<2x8x8xf32>, vector<2x8x8xf32> -> vector<2x32x8xf32>
    %cst_123 = arith.constant dense<0xFF800000> : vector<2x32xf32>
    %346 = vector.multi_reduction <maximumf>, %345, %cst_123 [2] : vector<2x32x8xf32> to vector<2x32xf32>
    %347 = vector.shape_cast %346 : vector<2x32xf32> to vector<2x32x1xf32>
    %348 = vector.broadcast %347 : vector<2x32x1xf32> to vector<2x32x8xf32>
    %349 = arith.subf %345, %348 : vector<2x32x8xf32>
    %350 = math.exp %349 : vector<2x32x8xf32>
    %cst_124 = arith.constant dense<0.000000e+00> : vector<2x32xf32>
    %351 = vector.multi_reduction <add>, %350, %cst_124 [2] : vector<2x32x8xf32> to vector<2x32xf32>
    %352 = vector.shape_cast %351 : vector<2x32xf32> to vector<2x32x1xf32>
    %353 = vector.broadcast %352 : vector<2x32x1xf32> to vector<2x32x8xf32>
    %354 = arith.divf %350, %353 : vector<2x32x8xf32>
    %355 = arith.truncf %354 : vector<2x32x8xf32> to vector<2x32x8xbf16>
    %356 = vector.extract_strided_slice %355 {offsets = [0, 0, 0], sizes = [2, 8, 8], strides = [1, 1, 1]} : vector<2x32x8xbf16> to vector<2x8x8xbf16>
    %357 = vector.extract_strided_slice %332 {offsets = [0, 0, 0], sizes = [2, 8, 8], strides = [1, 1, 1]} : vector<2x8x32xbf16> to vector<2x8x8xbf16>
    "tpu.trace_start"() <{level = 10 : i32, message = "bqk,bkd->bqd"}> : () -> ()
    %cst_125 = arith.constant dense<0.000000e+00> : vector<2x8x8xf32>
    %358 = tpu.matmul %356, %357, %cst_125 {dimension_numbers = #tpu.dot_dimension_numbers<[2], [1], [1], [2], [0, 0, 0, 1, 1, 2], [0], [0]>} : vector<2x8x8xbf16>, vector<2x8x8xbf16>, vector<2x8x8xf32> -> vector<2x8x8xf32>
    "tpu.trace_stop"() : () -> ()
    %359 = vector.extract_strided_slice %355 {offsets = [0, 8, 0], sizes = [2, 8, 8], strides = [1, 1, 1]} : vector<2x32x8xbf16> to vector<2x8x8xbf16>
    %360 = vector.extract_strided_slice %332 {offsets = [0, 0, 8], sizes = [2, 8, 8], strides = [1, 1, 1]} : vector<2x8x32xbf16> to vector<2x8x8xbf16>
    "tpu.trace_start"() <{level = 10 : i32, message = "bqk,bkd->bqd"}> : () -> ()
    %cst_126 = arith.constant dense<0.000000e+00> : vector<2x8x8xf32>
    %361 = tpu.matmul %359, %360, %cst_126 {dimension_numbers = #tpu.dot_dimension_numbers<[2], [1], [1], [2], [0, 0, 0, 1, 1, 2], [0], [0]>} : vector<2x8x8xbf16>, vector<2x8x8xbf16>, vector<2x8x8xf32> -> vector<2x8x8xf32>
    "tpu.trace_stop"() : () -> ()
    %362 = vector.extract_strided_slice %355 {offsets = [0, 16, 0], sizes = [2, 8, 8], strides = [1, 1, 1]} : vector<2x32x8xbf16> to vector<2x8x8xbf16>
    %363 = vector.extract_strided_slice %332 {offsets = [0, 0, 16], sizes = [2, 8, 8], strides = [1, 1, 1]} : vector<2x8x32xbf16> to vector<2x8x8xbf16>
    "tpu.trace_start"() <{level = 10 : i32, message = "bqk,bkd->bqd"}> : () -> ()
    %cst_127 = arith.constant dense<0.000000e+00> : vector<2x8x8xf32>
    %364 = tpu.matmul %362, %363, %cst_127 {dimension_numbers = #tpu.dot_dimension_numbers<[2], [1], [1], [2], [0, 0, 0, 1, 1, 2], [0], [0]>} : vector<2x8x8xbf16>, vector<2x8x8xbf16>, vector<2x8x8xf32> -> vector<2x8x8xf32>
    "tpu.trace_stop"() : () -> ()
    %365 = vector.extract_strided_slice %355 {offsets = [0, 24, 0], sizes = [2, 8, 8], strides = [1, 1, 1]} : vector<2x32x8xbf16> to vector<2x8x8xbf16>
    %366 = vector.extract_strided_slice %332 {offsets = [0, 0, 24], sizes = [2, 8, 8], strides = [1, 1, 1]} : vector<2x8x32xbf16> to vector<2x8x8xbf16>
    "tpu.trace_start"() <{level = 10 : i32, message = "bqk,bkd->bqd"}> : () -> ()
    %cst_128 = arith.constant dense<0.000000e+00> : vector<2x8x8xf32>
    %367 = tpu.matmul %365, %366, %cst_128 {dimension_numbers = #tpu.dot_dimension_numbers<[2], [1], [1], [2], [0, 0, 0, 1, 1, 2], [0], [0]>} : vector<2x8x8xbf16>, vector<2x8x8xbf16>, vector<2x8x8xf32> -> vector<2x8x8xf32>
    "tpu.trace_stop"() : () -> ()
    %368 = tpu.concatenate %358, %361, %364, %367 in 2 : vector<2x8x8xf32>, vector<2x8x8xf32>, vector<2x8x8xf32>, vector<2x8x8xf32> -> vector<2x8x32xf32>
    %369 = vector.shape_cast %368 : vector<2x8x32xf32> to vector<16x32xf32>
    %370 = arith.truncf %369 : vector<16x32xf32> to vector<16x32xbf16>
    %cst_129 = arith.constant dense<0.000000e+00> : vector<16x32xf32>
    %371 = tpu.matmul %370, %323, %cst_129 {dimension_numbers = #tpu.dot_dimension_numbers<[1], [0], [0], [1], [0, 0, 1, 1], [], []>} : vector<16x32xbf16>, vector<32x32xbf16>, vector<16x32xf32> -> vector<16x32xf32>
    %372 = vector.broadcast %324 : vector<1x32xf32> to vector<16x32xf32>
    %373 = arith.addf %371, %372 : vector<16x32xf32>
    %374 = arith.addf %300, %373 : vector<16x32xf32>
    %375 = vector.extract_strided_slice %2 {offsets = [10, 0], sizes = [1, 32], strides = [1, 1]} : vector<32x32xf32> to vector<1x32xf32>
    %376 = vector.extract_strided_slice %2 {offsets = [11, 0], sizes = [1, 32], strides = [1, 1]} : vector<32x32xf32> to vector<1x32xf32>
    %cst_130 = arith.constant dense<0.000000e+00> : vector<16xf32>
    %377 = vector.multi_reduction <add>, %374, %cst_130 [1] : vector<16x32xf32> to vector<16xf32>
    %378 = vector.shape_cast %377 : vector<16xf32> to vector<16x1xf32>
    %cst_131 = arith.constant 3.200000e+01 : f32
    %379 = vector.broadcast %cst_131 : f32 to vector<16x1xf32>
    %380 = arith.divf %378, %379 : vector<16x1xf32>
    %381 = vector.broadcast %380 : vector<16x1xf32> to vector<16x32xf32>
    %382 = arith.subf %374, %381 : vector<16x32xf32>
    %383 = arith.mulf %382, %382 : vector<16x32xf32>
    %cst_132 = arith.constant dense<0.000000e+00> : vector<16xf32>
    %384 = vector.multi_reduction <add>, %383, %cst_132 [1] : vector<16x32xf32> to vector<16xf32>
    %385 = vector.shape_cast %384 : vector<16xf32> to vector<16x1xf32>
    %cst_133 = arith.constant 3.200000e+01 : f32
    %386 = vector.broadcast %cst_133 : f32 to vector<16x1xf32>
    %387 = arith.divf %385, %386 : vector<16x1xf32>
    %cst_134 = arith.constant 9.99999974E-6 : f32
    %388 = vector.broadcast %cst_134 : f32 to vector<16x1xf32>
    %389 = arith.addf %387, %388 : vector<16x1xf32>
    %390 = math.rsqrt %389 : vector<16x1xf32>
    %391 = vector.broadcast %390 : vector<16x1xf32> to vector<16x32xf32>
    %392 = arith.mulf %382, %391 : vector<16x32xf32>
    %393 = vector.broadcast %375 : vector<1x32xf32> to vector<16x32xf32>
    %394 = arith.mulf %392, %393 : vector<16x32xf32>
    %395 = vector.broadcast %376 : vector<1x32xf32> to vector<16x32xf32>
    %396 = arith.addf %394, %395 : vector<16x32xf32>
    %c0_135 = arith.constant 0 : index
    %c4_136 = arith.constant 4 : index
    %c0_137 = arith.constant 0 : index
    %c0_138 = arith.constant 0 : index
    %397 = vector.load %arg6[%c0_135, %c4_136, %c0_137, %c0_138] : memref<1x20x32x32xbf16, #tpu.memory_space<vmem>>, vector<1x1x32x32xbf16>
    %398 = vector.shape_cast %397 : vector<1x1x32x32xbf16> to vector<32x32xbf16>
    %399 = arith.truncf %396 : vector<16x32xf32> to vector<16x32xbf16>
    %cst_139 = arith.constant dense<0.000000e+00> : vector<16x32xf32>
    %400 = tpu.matmul %399, %398, %cst_139 {dimension_numbers = #tpu.dot_dimension_numbers<[1], [0], [0], [1], [0, 0, 1, 1], [], []>} : vector<16x32xbf16>, vector<32x32xbf16>, vector<16x32xf32> -> vector<16x32xf32>
    %401 = vector.extract_strided_slice %2 {offsets = [4, 0], sizes = [1, 32], strides = [1, 1]} : vector<32x32xf32> to vector<1x32xf32>
    %402 = vector.broadcast %401 : vector<1x32xf32> to vector<16x32xf32>
    %403 = arith.addf %400, %402 : vector<16x32xf32>
    %c0_140 = arith.constant 0 : index
    %c5_141 = arith.constant 5 : index
    %c0_142 = arith.constant 0 : index
    %c0_143 = arith.constant 0 : index
    %404 = vector.load %arg6[%c0_140, %c5_141, %c0_142, %c0_143] : memref<1x20x32x32xbf16, #tpu.memory_space<vmem>>, vector<1x1x32x32xbf16>
    %405 = vector.shape_cast %404 : vector<1x1x32x32xbf16> to vector<32x32xbf16>
    %406 = arith.truncf %298 : vector<16x32xf32> to vector<16x32xbf16>
    %cst_144 = arith.constant dense<0.000000e+00> : vector<16x32xf32>
    %407 = tpu.matmul %406, %405, %cst_144 {dimension_numbers = #tpu.dot_dimension_numbers<[1], [0], [0], [1], [0, 0, 1, 1], [], []>} : vector<16x32xbf16>, vector<32x32xbf16>, vector<16x32xf32> -> vector<16x32xf32>
    %408 = vector.extract_strided_slice %2 {offsets = [5, 0], sizes = [1, 32], strides = [1, 1]} : vector<32x32xf32> to vector<1x32xf32>
    %409 = vector.broadcast %408 : vector<1x32xf32> to vector<16x32xf32>
    %410 = arith.addf %407, %409 : vector<16x32xf32>
    %c0_145 = arith.constant 0 : index
    %c6_146 = arith.constant 6 : index
    %c0_147 = arith.constant 0 : index
    %c0_148 = arith.constant 0 : index
    %411 = vector.load %arg6[%c0_145, %c6_146, %c0_147, %c0_148] : memref<1x20x32x32xbf16, #tpu.memory_space<vmem>>, vector<1x1x32x32xbf16>
    %412 = vector.shape_cast %411 : vector<1x1x32x32xbf16> to vector<32x32xbf16>
    %413 = arith.truncf %298 : vector<16x32xf32> to vector<16x32xbf16>
    %cst_149 = arith.constant dense<0.000000e+00> : vector<16x32xf32>
    %414 = tpu.matmul %413, %412, %cst_149 {dimension_numbers = #tpu.dot_dimension_numbers<[1], [0], [0], [1], [0, 0, 1, 1], [], []>} : vector<16x32xbf16>, vector<32x32xbf16>, vector<16x32xf32> -> vector<16x32xf32>
    %415 = vector.extract_strided_slice %2 {offsets = [6, 0], sizes = [1, 32], strides = [1, 1]} : vector<32x32xf32> to vector<1x32xf32>
    %416 = vector.broadcast %415 : vector<1x32xf32> to vector<16x32xf32>
    %417 = arith.addf %414, %416 : vector<16x32xf32>
    %c0_150 = arith.constant 0 : index
    %c7_151 = arith.constant 7 : index
    %c0_152 = arith.constant 0 : index
    %c0_153 = arith.constant 0 : index
    %418 = vector.load %arg6[%c0_150, %c7_151, %c0_152, %c0_153] : memref<1x20x32x32xbf16, #tpu.memory_space<vmem>>, vector<1x1x32x32xbf16>
    %419 = vector.shape_cast %418 : vector<1x1x32x32xbf16> to vector<32x32xbf16>
    %420 = vector.extract_strided_slice %2 {offsets = [7, 0], sizes = [1, 32], strides = [1, 1]} : vector<32x32xf32> to vector<1x32xf32>
    %cst_154 = arith.constant 0.353553385 : f32
    %421 = vector.broadcast %cst_154 : f32 to vector<16x32xf32>
    %422 = arith.mulf %403, %421 : vector<16x32xf32>
    %423 = vector.shape_cast %422 : vector<16x32xf32> to vector<2x8x32xf32>
    %424 = arith.truncf %423 : vector<2x8x32xf32> to vector<2x8x32xbf16>
    %425 = vector.shape_cast %410 : vector<16x32xf32> to vector<2x8x32xf32>
    %426 = arith.truncf %425 : vector<2x8x32xf32> to vector<2x8x32xbf16>
    %427 = vector.shape_cast %417 : vector<16x32xf32> to vector<2x8x32xf32>
    %428 = arith.truncf %427 : vector<2x8x32xf32> to vector<2x8x32xbf16>
    %429 = vector.extract_strided_slice %424 {offsets = [0, 0, 0], sizes = [2, 8, 8], strides = [1, 1, 1]} : vector<2x8x32xbf16> to vector<2x8x8xbf16>
    %430 = vector.extract_strided_slice %426 {offsets = [0, 0, 0], sizes = [2, 8, 8], strides = [1, 1, 1]} : vector<2x8x32xbf16> to vector<2x8x8xbf16>
    "tpu.trace_start"() <{level = 10 : i32, message = "bqd,bkd->bqk"}> : () -> ()
    %cst_155 = arith.constant dense<0.000000e+00> : vector<2x8x8xf32>
    %431 = tpu.matmul %429, %430, %cst_155 {dimension_numbers = #tpu.dot_dimension_numbers<[2], [2], [1], [1], [0, 0, 0, 1, 1, 1], [0], [0]>} : vector<2x8x8xbf16>, vector<2x8x8xbf16>, vector<2x8x8xf32> -> vector<2x8x8xf32>
    "tpu.trace_stop"() : () -> ()
    %432 = vector.extract_strided_slice %424 {offsets = [0, 0, 8], sizes = [2, 8, 8], strides = [1, 1, 1]} : vector<2x8x32xbf16> to vector<2x8x8xbf16>
    %433 = vector.extract_strided_slice %426 {offsets = [0, 0, 8], sizes = [2, 8, 8], strides = [1, 1, 1]} : vector<2x8x32xbf16> to vector<2x8x8xbf16>
    "tpu.trace_start"() <{level = 10 : i32, message = "bqd,bkd->bqk"}> : () -> ()
    %cst_156 = arith.constant dense<0.000000e+00> : vector<2x8x8xf32>
    %434 = tpu.matmul %432, %433, %cst_156 {dimension_numbers = #tpu.dot_dimension_numbers<[2], [2], [1], [1], [0, 0, 0, 1, 1, 1], [0], [0]>} : vector<2x8x8xbf16>, vector<2x8x8xbf16>, vector<2x8x8xf32> -> vector<2x8x8xf32>
    "tpu.trace_stop"() : () -> ()
    %435 = vector.extract_strided_slice %424 {offsets = [0, 0, 16], sizes = [2, 8, 8], strides = [1, 1, 1]} : vector<2x8x32xbf16> to vector<2x8x8xbf16>
    %436 = vector.extract_strided_slice %426 {offsets = [0, 0, 16], sizes = [2, 8, 8], strides = [1, 1, 1]} : vector<2x8x32xbf16> to vector<2x8x8xbf16>
    "tpu.trace_start"() <{level = 10 : i32, message = "bqd,bkd->bqk"}> : () -> ()
    %cst_157 = arith.constant dense<0.000000e+00> : vector<2x8x8xf32>
    %437 = tpu.matmul %435, %436, %cst_157 {dimension_numbers = #tpu.dot_dimension_numbers<[2], [2], [1], [1], [0, 0, 0, 1, 1, 1], [0], [0]>} : vector<2x8x8xbf16>, vector<2x8x8xbf16>, vector<2x8x8xf32> -> vector<2x8x8xf32>
    "tpu.trace_stop"() : () -> ()
    %438 = vector.extract_strided_slice %424 {offsets = [0, 0, 24], sizes = [2, 8, 8], strides = [1, 1, 1]} : vector<2x8x32xbf16> to vector<2x8x8xbf16>
    %439 = vector.extract_strided_slice %426 {offsets = [0, 0, 24], sizes = [2, 8, 8], strides = [1, 1, 1]} : vector<2x8x32xbf16> to vector<2x8x8xbf16>
    "tpu.trace_start"() <{level = 10 : i32, message = "bqd,bkd->bqk"}> : () -> ()
    %cst_158 = arith.constant dense<0.000000e+00> : vector<2x8x8xf32>
    %440 = tpu.matmul %438, %439, %cst_158 {dimension_numbers = #tpu.dot_dimension_numbers<[2], [2], [1], [1], [0, 0, 0, 1, 1, 1], [0], [0]>} : vector<2x8x8xbf16>, vector<2x8x8xbf16>, vector<2x8x8xf32> -> vector<2x8x8xf32>
    "tpu.trace_stop"() : () -> ()
    %441 = tpu.concatenate %431, %434, %437, %440 in 1 : vector<2x8x8xf32>, vector<2x8x8xf32>, vector<2x8x8xf32>, vector<2x8x8xf32> -> vector<2x32x8xf32>
    %cst_159 = arith.constant dense<0xFF800000> : vector<2x32xf32>
    %442 = vector.multi_reduction <maximumf>, %441, %cst_159 [2] : vector<2x32x8xf32> to vector<2x32xf32>
    %443 = vector.shape_cast %442 : vector<2x32xf32> to vector<2x32x1xf32>
    %444 = vector.broadcast %443 : vector<2x32x1xf32> to vector<2x32x8xf32>
    %445 = arith.subf %441, %444 : vector<2x32x8xf32>
    %446 = math.exp %445 : vector<2x32x8xf32>
    %cst_160 = arith.constant dense<0.000000e+00> : vector<2x32xf32>
    %447 = vector.multi_reduction <add>, %446, %cst_160 [2] : vector<2x32x8xf32> to vector<2x32xf32>
    %448 = vector.shape_cast %447 : vector<2x32xf32> to vector<2x32x1xf32>
    %449 = vector.broadcast %448 : vector<2x32x1xf32> to vector<2x32x8xf32>
    %450 = arith.divf %446, %449 : vector<2x32x8xf32>
    %451 = arith.truncf %450 : vector<2x32x8xf32> to vector<2x32x8xbf16>
    %452 = vector.extract_strided_slice %451 {offsets = [0, 0, 0], sizes = [2, 8, 8], strides = [1, 1, 1]} : vector<2x32x8xbf16> to vector<2x8x8xbf16>
    %453 = vector.extract_strided_slice %428 {offsets = [0, 0, 0], sizes = [2, 8, 8], strides = [1, 1, 1]} : vector<2x8x32xbf16> to vector<2x8x8xbf16>
    "tpu.trace_start"() <{level = 10 : i32, message = "bqk,bkd->bqd"}> : () -> ()
    %cst_161 = arith.constant dense<0.000000e+00> : vector<2x8x8xf32>
    %454 = tpu.matmul %452, %453, %cst_161 {dimension_numbers = #tpu.dot_dimension_numbers<[2], [1], [1], [2], [0, 0, 0, 1, 1, 2], [0], [0]>} : vector<2x8x8xbf16>, vector<2x8x8xbf16>, vector<2x8x8xf32> -> vector<2x8x8xf32>
    "tpu.trace_stop"() : () -> ()
    %455 = vector.extract_strided_slice %451 {offsets = [0, 8, 0], sizes = [2, 8, 8], strides = [1, 1, 1]} : vector<2x32x8xbf16> to vector<2x8x8xbf16>
    %456 = vector.extract_strided_slice %428 {offsets = [0, 0, 8], sizes = [2, 8, 8], strides = [1, 1, 1]} : vector<2x8x32xbf16> to vector<2x8x8xbf16>
    "tpu.trace_start"() <{level = 10 : i32, message = "bqk,bkd->bqd"}> : () -> ()
    %cst_162 = arith.constant dense<0.000000e+00> : vector<2x8x8xf32>
    %457 = tpu.matmul %455, %456, %cst_162 {dimension_numbers = #tpu.dot_dimension_numbers<[2], [1], [1], [2], [0, 0, 0, 1, 1, 2], [0], [0]>} : vector<2x8x8xbf16>, vector<2x8x8xbf16>, vector<2x8x8xf32> -> vector<2x8x8xf32>
    "tpu.trace_stop"() : () -> ()
    %458 = vector.extract_strided_slice %451 {offsets = [0, 16, 0], sizes = [2, 8, 8], strides = [1, 1, 1]} : vector<2x32x8xbf16> to vector<2x8x8xbf16>
    %459 = vector.extract_strided_slice %428 {offsets = [0, 0, 16], sizes = [2, 8, 8], strides = [1, 1, 1]} : vector<2x8x32xbf16> to vector<2x8x8xbf16>
    "tpu.trace_start"() <{level = 10 : i32, message = "bqk,bkd->bqd"}> : () -> ()
    %cst_163 = arith.constant dense<0.000000e+00> : vector<2x8x8xf32>
    %460 = tpu.matmul %458, %459, %cst_163 {dimension_numbers = #tpu.dot_dimension_numbers<[2], [1], [1], [2], [0, 0, 0, 1, 1, 2], [0], [0]>} : vector<2x8x8xbf16>, vector<2x8x8xbf16>, vector<2x8x8xf32> -> vector<2x8x8xf32>
    "tpu.trace_stop"() : () -> ()
    %461 = vector.extract_strided_slice %451 {offsets = [0, 24, 0], sizes = [2, 8, 8], strides = [1, 1, 1]} : vector<2x32x8xbf16> to vector<2x8x8xbf16>
    %462 = vector.extract_strided_slice %428 {offsets = [0, 0, 24], sizes = [2, 8, 8], strides = [1, 1, 1]} : vector<2x8x32xbf16> to vector<2x8x8xbf16>
    "tpu.trace_start"() <{level = 10 : i32, message = "bqk,bkd->bqd"}> : () -> ()
    %cst_164 = arith.constant dense<0.000000e+00> : vector<2x8x8xf32>
    %463 = tpu.matmul %461, %462, %cst_164 {dimension_numbers = #tpu.dot_dimension_numbers<[2], [1], [1], [2], [0, 0, 0, 1, 1, 2], [0], [0]>} : vector<2x8x8xbf16>, vector<2x8x8xbf16>, vector<2x8x8xf32> -> vector<2x8x8xf32>
    "tpu.trace_stop"() : () -> ()
    %464 = tpu.concatenate %454, %457, %460, %463 in 2 : vector<2x8x8xf32>, vector<2x8x8xf32>, vector<2x8x8xf32>, vector<2x8x8xf32> -> vector<2x8x32xf32>
    %465 = vector.shape_cast %464 : vector<2x8x32xf32> to vector<16x32xf32>
    %466 = arith.truncf %465 : vector<16x32xf32> to vector<16x32xbf16>
    %cst_165 = arith.constant dense<0.000000e+00> : vector<16x32xf32>
    %467 = tpu.matmul %466, %419, %cst_165 {dimension_numbers = #tpu.dot_dimension_numbers<[1], [0], [0], [1], [0, 0, 1, 1], [], []>} : vector<16x32xbf16>, vector<32x32xbf16>, vector<16x32xf32> -> vector<16x32xf32>
    %468 = vector.broadcast %420 : vector<1x32xf32> to vector<16x32xf32>
    %469 = arith.addf %467, %468 : vector<16x32xf32>
    %470 = arith.addf %396, %469 : vector<16x32xf32>
    %471 = vector.extract_strided_slice %2 {offsets = [12, 0], sizes = [1, 32], strides = [1, 1]} : vector<32x32xf32> to vector<1x32xf32>
    %472 = vector.extract_strided_slice %2 {offsets = [13, 0], sizes = [1, 32], strides = [1, 1]} : vector<32x32xf32> to vector<1x32xf32>
    %cst_166 = arith.constant dense<0.000000e+00> : vector<16xf32>
    %473 = vector.multi_reduction <add>, %470, %cst_166 [1] : vector<16x32xf32> to vector<16xf32>
    %474 = vector.shape_cast %473 : vector<16xf32> to vector<16x1xf32>
    %cst_167 = arith.constant 3.200000e+01 : f32
    %475 = vector.broadcast %cst_167 : f32 to vector<16x1xf32>
    %476 = arith.divf %474, %475 : vector<16x1xf32>
    %477 = vector.broadcast %476 : vector<16x1xf32> to vector<16x32xf32>
    %478 = arith.subf %470, %477 : vector<16x32xf32>
    %479 = arith.mulf %478, %478 : vector<16x32xf32>
    %cst_168 = arith.constant dense<0.000000e+00> : vector<16xf32>
    %480 = vector.multi_reduction <add>, %479, %cst_168 [1] : vector<16x32xf32> to vector<16xf32>
    %481 = vector.shape_cast %480 : vector<16xf32> to vector<16x1xf32>
    %cst_169 = arith.constant 3.200000e+01 : f32
    %482 = vector.broadcast %cst_169 : f32 to vector<16x1xf32>
    %483 = arith.divf %481, %482 : vector<16x1xf32>
    %cst_170 = arith.constant 9.99999974E-6 : f32
    %484 = vector.broadcast %cst_170 : f32 to vector<16x1xf32>
    %485 = arith.addf %483, %484 : vector<16x1xf32>
    %486 = math.rsqrt %485 : vector<16x1xf32>
    %487 = vector.broadcast %486 : vector<16x1xf32> to vector<16x32xf32>
    %488 = arith.mulf %478, %487 : vector<16x32xf32>
    %489 = vector.broadcast %471 : vector<1x32xf32> to vector<16x32xf32>
    %490 = arith.mulf %488, %489 : vector<16x32xf32>
    %491 = vector.broadcast %472 : vector<1x32xf32> to vector<16x32xf32>
    %492 = arith.addf %490, %491 : vector<16x32xf32>
    %c0_171 = arith.constant 0 : index
    %c8_172 = arith.constant 8 : index
    %c0_173 = arith.constant 0 : index
    %c0_174 = arith.constant 0 : index
    %493 = vector.load %arg6[%c0_171, %c8_172, %c0_173, %c0_174] : memref<1x20x32x32xbf16, #tpu.memory_space<vmem>>, vector<1x1x32x32xbf16>
    %494 = vector.shape_cast %493 : vector<1x1x32x32xbf16> to vector<32x32xbf16>
    %495 = arith.truncf %492 : vector<16x32xf32> to vector<16x32xbf16>
    %cst_175 = arith.constant dense<0.000000e+00> : vector<16x32xf32>
    %496 = tpu.matmul %495, %494, %cst_175 {dimension_numbers = #tpu.dot_dimension_numbers<[1], [0], [0], [1], [0, 0, 1, 1], [], []>} : vector<16x32xbf16>, vector<32x32xbf16>, vector<16x32xf32> -> vector<16x32xf32>
    %497 = vector.extract_strided_slice %2 {offsets = [8, 0], sizes = [1, 32], strides = [1, 1]} : vector<32x32xf32> to vector<1x32xf32>
    %498 = vector.broadcast %497 : vector<1x32xf32> to vector<16x32xf32>
    %499 = arith.addf %496, %498 : vector<16x32xf32>
    %cst_176 = arith.constant 0.000000e+00 : f32
    %500 = vector.broadcast %cst_176 : f32 to vector<16x32xf32>
    %501 = arith.maximumf %499, %500 : vector<16x32xf32>
    %c0_177 = arith.constant 0 : index
    %c9_178 = arith.constant 9 : index
    %c0_179 = arith.constant 0 : index
    %c0_180 = arith.constant 0 : index
    %502 = vector.load %arg6[%c0_177, %c9_178, %c0_179, %c0_180] : memref<1x20x32x32xbf16, #tpu.memory_space<vmem>>, vector<1x1x32x32xbf16>
    %503 = vector.shape_cast %502 : vector<1x1x32x32xbf16> to vector<32x32xbf16>
    %504 = arith.truncf %501 : vector<16x32xf32> to vector<16x32xbf16>
    %cst_181 = arith.constant dense<0.000000e+00> : vector<16x32xf32>
    %505 = tpu.matmul %504, %503, %cst_181 {dimension_numbers = #tpu.dot_dimension_numbers<[1], [0], [0], [1], [0, 0, 1, 1], [], []>} : vector<16x32xbf16>, vector<32x32xbf16>, vector<16x32xf32> -> vector<16x32xf32>
    %506 = vector.extract_strided_slice %2 {offsets = [9, 0], sizes = [1, 32], strides = [1, 1]} : vector<32x32xf32> to vector<1x32xf32>
    %507 = vector.broadcast %506 : vector<1x32xf32> to vector<16x32xf32>
    %508 = arith.addf %505, %507 : vector<16x32xf32>
    %509 = arith.addf %492, %508 : vector<16x32xf32>
    %510 = vector.extract_strided_slice %2 {offsets = [14, 0], sizes = [1, 32], strides = [1, 1]} : vector<32x32xf32> to vector<1x32xf32>
    %511 = vector.extract_strided_slice %2 {offsets = [15, 0], sizes = [1, 32], strides = [1, 1]} : vector<32x32xf32> to vector<1x32xf32>
    %cst_182 = arith.constant dense<0.000000e+00> : vector<16xf32>
    %512 = vector.multi_reduction <add>, %509, %cst_182 [1] : vector<16x32xf32> to vector<16xf32>
    %513 = vector.shape_cast %512 : vector<16xf32> to vector<16x1xf32>
    %cst_183 = arith.constant 3.200000e+01 : f32
    %514 = vector.broadcast %cst_183 : f32 to vector<16x1xf32>
    %515 = arith.divf %513, %514 : vector<16x1xf32>
    %516 = vector.broadcast %515 : vector<16x1xf32> to vector<16x32xf32>
    %517 = arith.subf %509, %516 : vector<16x32xf32>
    %518 = arith.mulf %517, %517 : vector<16x32xf32>
    %cst_184 = arith.constant dense<0.000000e+00> : vector<16xf32>
    %519 = vector.multi_reduction <add>, %518, %cst_184 [1] : vector<16x32xf32> to vector<16xf32>
    %520 = vector.shape_cast %519 : vector<16xf32> to vector<16x1xf32>
    %cst_185 = arith.constant 3.200000e+01 : f32
    %521 = vector.broadcast %cst_185 : f32 to vector<16x1xf32>
    %522 = arith.divf %520, %521 : vector<16x1xf32>
    %cst_186 = arith.constant 9.99999974E-6 : f32
    %523 = vector.broadcast %cst_186 : f32 to vector<16x1xf32>
    %524 = arith.addf %522, %523 : vector<16x1xf32>
    %525 = math.rsqrt %524 : vector<16x1xf32>
    %526 = vector.broadcast %525 : vector<16x1xf32> to vector<16x32xf32>
    %527 = arith.mulf %517, %526 : vector<16x32xf32>
    %528 = vector.broadcast %510 : vector<1x32xf32> to vector<16x32xf32>
    %529 = arith.mulf %527, %528 : vector<16x32xf32>
    %530 = vector.broadcast %511 : vector<1x32xf32> to vector<16x32xf32>
    %531 = arith.addf %529, %530 : vector<16x32xf32>
    %c0_187 = arith.constant 0 : index
    %c10_188 = arith.constant 10 : index
    %c0_189 = arith.constant 0 : index
    %c0_190 = arith.constant 0 : index
    %532 = vector.load %arg6[%c0_187, %c10_188, %c0_189, %c0_190] : memref<1x20x32x32xbf16, #tpu.memory_space<vmem>>, vector<1x1x32x32xbf16>
    %533 = vector.shape_cast %532 : vector<1x1x32x32xbf16> to vector<32x32xbf16>
    %534 = arith.truncf %531 : vector<16x32xf32> to vector<16x32xbf16>
    %cst_191 = arith.constant dense<0.000000e+00> : vector<16x32xf32>
    %535 = tpu.matmul %534, %533, %cst_191 {dimension_numbers = #tpu.dot_dimension_numbers<[1], [0], [0], [1], [0, 0, 1, 1], [], []>} : vector<16x32xbf16>, vector<32x32xbf16>, vector<16x32xf32> -> vector<16x32xf32>
    %536 = vector.extract_strided_slice %2 {offsets = [16, 0], sizes = [1, 32], strides = [1, 1]} : vector<32x32xf32> to vector<1x32xf32>
    %537 = vector.broadcast %536 : vector<1x32xf32> to vector<16x32xf32>
    %538 = arith.addf %535, %537 : vector<16x32xf32>
    %c0_192 = arith.constant 0 : index
    %c11_193 = arith.constant 11 : index
    %c0_194 = arith.constant 0 : index
    %c0_195 = arith.constant 0 : index
    %539 = vector.load %arg6[%c0_192, %c11_193, %c0_194, %c0_195] : memref<1x20x32x32xbf16, #tpu.memory_space<vmem>>, vector<1x1x32x32xbf16>
    %540 = vector.shape_cast %539 : vector<1x1x32x32xbf16> to vector<32x32xbf16>
    %541 = arith.truncf %531 : vector<16x32xf32> to vector<16x32xbf16>
    %cst_196 = arith.constant dense<0.000000e+00> : vector<16x32xf32>
    %542 = tpu.matmul %541, %540, %cst_196 {dimension_numbers = #tpu.dot_dimension_numbers<[1], [0], [0], [1], [0, 0, 1, 1], [], []>} : vector<16x32xbf16>, vector<32x32xbf16>, vector<16x32xf32> -> vector<16x32xf32>
    %543 = vector.extract_strided_slice %2 {offsets = [17, 0], sizes = [1, 32], strides = [1, 1]} : vector<32x32xf32> to vector<1x32xf32>
    %544 = vector.broadcast %543 : vector<1x32xf32> to vector<16x32xf32>
    %545 = arith.addf %542, %544 : vector<16x32xf32>
    %c0_197 = arith.constant 0 : index
    %c12 = arith.constant 12 : index
    %c0_198 = arith.constant 0 : index
    %c0_199 = arith.constant 0 : index
    %546 = vector.load %arg6[%c0_197, %c12, %c0_198, %c0_199] : memref<1x20x32x32xbf16, #tpu.memory_space<vmem>>, vector<1x1x32x32xbf16>
    %547 = vector.shape_cast %546 : vector<1x1x32x32xbf16> to vector<32x32xbf16>
    %548 = arith.truncf %531 : vector<16x32xf32> to vector<16x32xbf16>
    %cst_200 = arith.constant dense<0.000000e+00> : vector<16x32xf32>
    %549 = tpu.matmul %548, %547, %cst_200 {dimension_numbers = #tpu.dot_dimension_numbers<[1], [0], [0], [1], [0, 0, 1, 1], [], []>} : vector<16x32xbf16>, vector<32x32xbf16>, vector<16x32xf32> -> vector<16x32xf32>
    %550 = vector.extract_strided_slice %2 {offsets = [18, 0], sizes = [1, 32], strides = [1, 1]} : vector<32x32xf32> to vector<1x32xf32>
    %551 = vector.broadcast %550 : vector<1x32xf32> to vector<16x32xf32>
    %552 = arith.addf %549, %551 : vector<16x32xf32>
    %c0_201 = arith.constant 0 : index
    %c13 = arith.constant 13 : index
    %c0_202 = arith.constant 0 : index
    %c0_203 = arith.constant 0 : index
    %553 = vector.load %arg6[%c0_201, %c13, %c0_202, %c0_203] : memref<1x20x32x32xbf16, #tpu.memory_space<vmem>>, vector<1x1x32x32xbf16>
    %554 = vector.shape_cast %553 : vector<1x1x32x32xbf16> to vector<32x32xbf16>
    %555 = vector.extract_strided_slice %2 {offsets = [19, 0], sizes = [1, 32], strides = [1, 1]} : vector<32x32xf32> to vector<1x32xf32>
    %cst_204 = arith.constant 0.353553385 : f32
    %556 = vector.broadcast %cst_204 : f32 to vector<16x32xf32>
    %557 = arith.mulf %538, %556 : vector<16x32xf32>
    %558 = vector.shape_cast %557 : vector<16x32xf32> to vector<2x8x32xf32>
    %559 = arith.truncf %558 : vector<2x8x32xf32> to vector<2x8x32xbf16>
    %560 = vector.shape_cast %545 : vector<16x32xf32> to vector<2x8x32xf32>
    %561 = arith.truncf %560 : vector<2x8x32xf32> to vector<2x8x32xbf16>
    %562 = vector.shape_cast %552 : vector<16x32xf32> to vector<2x8x32xf32>
    %563 = arith.truncf %562 : vector<2x8x32xf32> to vector<2x8x32xbf16>
    %564 = vector.extract_strided_slice %559 {offsets = [0, 0, 0], sizes = [2, 8, 8], strides = [1, 1, 1]} : vector<2x8x32xbf16> to vector<2x8x8xbf16>
    %565 = vector.extract_strided_slice %561 {offsets = [0, 0, 0], sizes = [2, 8, 8], strides = [1, 1, 1]} : vector<2x8x32xbf16> to vector<2x8x8xbf16>
    "tpu.trace_start"() <{level = 10 : i32, message = "bqd,bkd->bqk"}> : () -> ()
    %cst_205 = arith.constant dense<0.000000e+00> : vector<2x8x8xf32>
    %566 = tpu.matmul %564, %565, %cst_205 {dimension_numbers = #tpu.dot_dimension_numbers<[2], [2], [1], [1], [0, 0, 0, 1, 1, 1], [0], [0]>} : vector<2x8x8xbf16>, vector<2x8x8xbf16>, vector<2x8x8xf32> -> vector<2x8x8xf32>
    "tpu.trace_stop"() : () -> ()
    %567 = vector.extract_strided_slice %559 {offsets = [0, 0, 8], sizes = [2, 8, 8], strides = [1, 1, 1]} : vector<2x8x32xbf16> to vector<2x8x8xbf16>
    %568 = vector.extract_strided_slice %561 {offsets = [0, 0, 8], sizes = [2, 8, 8], strides = [1, 1, 1]} : vector<2x8x32xbf16> to vector<2x8x8xbf16>
    "tpu.trace_start"() <{level = 10 : i32, message = "bqd,bkd->bqk"}> : () -> ()
    %cst_206 = arith.constant dense<0.000000e+00> : vector<2x8x8xf32>
    %569 = tpu.matmul %567, %568, %cst_206 {dimension_numbers = #tpu.dot_dimension_numbers<[2], [2], [1], [1], [0, 0, 0, 1, 1, 1], [0], [0]>} : vector<2x8x8xbf16>, vector<2x8x8xbf16>, vector<2x8x8xf32> -> vector<2x8x8xf32>
    "tpu.trace_stop"() : () -> ()
    %570 = vector.extract_strided_slice %559 {offsets = [0, 0, 16], sizes = [2, 8, 8], strides = [1, 1, 1]} : vector<2x8x32xbf16> to vector<2x8x8xbf16>
    %571 = vector.extract_strided_slice %561 {offsets = [0, 0, 16], sizes = [2, 8, 8], strides = [1, 1, 1]} : vector<2x8x32xbf16> to vector<2x8x8xbf16>
    "tpu.trace_start"() <{level = 10 : i32, message = "bqd,bkd->bqk"}> : () -> ()
    %cst_207 = arith.constant dense<0.000000e+00> : vector<2x8x8xf32>
    %572 = tpu.matmul %570, %571, %cst_207 {dimension_numbers = #tpu.dot_dimension_numbers<[2], [2], [1], [1], [0, 0, 0, 1, 1, 1], [0], [0]>} : vector<2x8x8xbf16>, vector<2x8x8xbf16>, vector<2x8x8xf32> -> vector<2x8x8xf32>
    "tpu.trace_stop"() : () -> ()
    %573 = vector.extract_strided_slice %559 {offsets = [0, 0, 24], sizes = [2, 8, 8], strides = [1, 1, 1]} : vector<2x8x32xbf16> to vector<2x8x8xbf16>
    %574 = vector.extract_strided_slice %561 {offsets = [0, 0, 24], sizes = [2, 8, 8], strides = [1, 1, 1]} : vector<2x8x32xbf16> to vector<2x8x8xbf16>
    "tpu.trace_start"() <{level = 10 : i32, message = "bqd,bkd->bqk"}> : () -> ()
    %cst_208 = arith.constant dense<0.000000e+00> : vector<2x8x8xf32>
    %575 = tpu.matmul %573, %574, %cst_208 {dimension_numbers = #tpu.dot_dimension_numbers<[2], [2], [1], [1], [0, 0, 0, 1, 1, 1], [0], [0]>} : vector<2x8x8xbf16>, vector<2x8x8xbf16>, vector<2x8x8xf32> -> vector<2x8x8xf32>
    "tpu.trace_stop"() : () -> ()
    %576 = tpu.concatenate %566, %569, %572, %575 in 1 : vector<2x8x8xf32>, vector<2x8x8xf32>, vector<2x8x8xf32>, vector<2x8x8xf32> -> vector<2x32x8xf32>
    %cst_209 = arith.constant dense<0xFF800000> : vector<2x32xf32>
    %577 = vector.multi_reduction <maximumf>, %576, %cst_209 [2] : vector<2x32x8xf32> to vector<2x32xf32>
    %578 = vector.shape_cast %577 : vector<2x32xf32> to vector<2x32x1xf32>
    %579 = vector.broadcast %578 : vector<2x32x1xf32> to vector<2x32x8xf32>
    %580 = arith.subf %576, %579 : vector<2x32x8xf32>
    %581 = math.exp %580 : vector<2x32x8xf32>
    %cst_210 = arith.constant dense<0.000000e+00> : vector<2x32xf32>
    %582 = vector.multi_reduction <add>, %581, %cst_210 [2] : vector<2x32x8xf32> to vector<2x32xf32>
    %583 = vector.shape_cast %582 : vector<2x32xf32> to vector<2x32x1xf32>
    %584 = vector.broadcast %583 : vector<2x32x1xf32> to vector<2x32x8xf32>
    %585 = arith.divf %581, %584 : vector<2x32x8xf32>
    %586 = arith.truncf %585 : vector<2x32x8xf32> to vector<2x32x8xbf16>
    %587 = vector.extract_strided_slice %586 {offsets = [0, 0, 0], sizes = [2, 8, 8], strides = [1, 1, 1]} : vector<2x32x8xbf16> to vector<2x8x8xbf16>
    %588 = vector.extract_strided_slice %563 {offsets = [0, 0, 0], sizes = [2, 8, 8], strides = [1, 1, 1]} : vector<2x8x32xbf16> to vector<2x8x8xbf16>
    "tpu.trace_start"() <{level = 10 : i32, message = "bqk,bkd->bqd"}> : () -> ()
    %cst_211 = arith.constant dense<0.000000e+00> : vector<2x8x8xf32>
    %589 = tpu.matmul %587, %588, %cst_211 {dimension_numbers = #tpu.dot_dimension_numbers<[2], [1], [1], [2], [0, 0, 0, 1, 1, 2], [0], [0]>} : vector<2x8x8xbf16>, vector<2x8x8xbf16>, vector<2x8x8xf32> -> vector<2x8x8xf32>
    "tpu.trace_stop"() : () -> ()
    %590 = vector.extract_strided_slice %586 {offsets = [0, 8, 0], sizes = [2, 8, 8], strides = [1, 1, 1]} : vector<2x32x8xbf16> to vector<2x8x8xbf16>
    %591 = vector.extract_strided_slice %563 {offsets = [0, 0, 8], sizes = [2, 8, 8], strides = [1, 1, 1]} : vector<2x8x32xbf16> to vector<2x8x8xbf16>
    "tpu.trace_start"() <{level = 10 : i32, message = "bqk,bkd->bqd"}> : () -> ()
    %cst_212 = arith.constant dense<0.000000e+00> : vector<2x8x8xf32>
    %592 = tpu.matmul %590, %591, %cst_212 {dimension_numbers = #tpu.dot_dimension_numbers<[2], [1], [1], [2], [0, 0, 0, 1, 1, 2], [0], [0]>} : vector<2x8x8xbf16>, vector<2x8x8xbf16>, vector<2x8x8xf32> -> vector<2x8x8xf32>
    "tpu.trace_stop"() : () -> ()
    %593 = vector.extract_strided_slice %586 {offsets = [0, 16, 0], sizes = [2, 8, 8], strides = [1, 1, 1]} : vector<2x32x8xbf16> to vector<2x8x8xbf16>
    %594 = vector.extract_strided_slice %563 {offsets = [0, 0, 16], sizes = [2, 8, 8], strides = [1, 1, 1]} : vector<2x8x32xbf16> to vector<2x8x8xbf16>
    "tpu.trace_start"() <{level = 10 : i32, message = "bqk,bkd->bqd"}> : () -> ()
    %cst_213 = arith.constant dense<0.000000e+00> : vector<2x8x8xf32>
    %595 = tpu.matmul %593, %594, %cst_213 {dimension_numbers = #tpu.dot_dimension_numbers<[2], [1], [1], [2], [0, 0, 0, 1, 1, 2], [0], [0]>} : vector<2x8x8xbf16>, vector<2x8x8xbf16>, vector<2x8x8xf32> -> vector<2x8x8xf32>
    "tpu.trace_stop"() : () -> ()
    %596 = vector.extract_strided_slice %586 {offsets = [0, 24, 0], sizes = [2, 8, 8], strides = [1, 1, 1]} : vector<2x32x8xbf16> to vector<2x8x8xbf16>
    %597 = vector.extract_strided_slice %563 {offsets = [0, 0, 24], sizes = [2, 8, 8], strides = [1, 1, 1]} : vector<2x8x32xbf16> to vector<2x8x8xbf16>
    "tpu.trace_start"() <{level = 10 : i32, message = "bqk,bkd->bqd"}> : () -> ()
    %cst_214 = arith.constant dense<0.000000e+00> : vector<2x8x8xf32>
    %598 = tpu.matmul %596, %597, %cst_214 {dimension_numbers = #tpu.dot_dimension_numbers<[2], [1], [1], [2], [0, 0, 0, 1, 1, 2], [0], [0]>} : vector<2x8x8xbf16>, vector<2x8x8xbf16>, vector<2x8x8xf32> -> vector<2x8x8xf32>
    "tpu.trace_stop"() : () -> ()
    %599 = tpu.concatenate %589, %592, %595, %598 in 2 : vector<2x8x8xf32>, vector<2x8x8xf32>, vector<2x8x8xf32>, vector<2x8x8xf32> -> vector<2x8x32xf32>
    %600 = vector.shape_cast %599 : vector<2x8x32xf32> to vector<16x32xf32>
    %601 = arith.truncf %600 : vector<16x32xf32> to vector<16x32xbf16>
    %cst_215 = arith.constant dense<0.000000e+00> : vector<16x32xf32>
    %602 = tpu.matmul %601, %554, %cst_215 {dimension_numbers = #tpu.dot_dimension_numbers<[1], [0], [0], [1], [0, 0, 1, 1], [], []>} : vector<16x32xbf16>, vector<32x32xbf16>, vector<16x32xf32> -> vector<16x32xf32>
    %603 = vector.broadcast %555 : vector<1x32xf32> to vector<16x32xf32>
    %604 = arith.addf %602, %603 : vector<16x32xf32>
    %605 = arith.addf %531, %604 : vector<16x32xf32>
    %606 = vector.extract_strided_slice %2 {offsets = [26, 0], sizes = [1, 32], strides = [1, 1]} : vector<32x32xf32> to vector<1x32xf32>
    %607 = vector.extract_strided_slice %2 {offsets = [27, 0], sizes = [1, 32], strides = [1, 1]} : vector<32x32xf32> to vector<1x32xf32>
    %cst_216 = arith.constant dense<0.000000e+00> : vector<16xf32>
    %608 = vector.multi_reduction <add>, %605, %cst_216 [1] : vector<16x32xf32> to vector<16xf32>
    %609 = vector.shape_cast %608 : vector<16xf32> to vector<16x1xf32>
    %cst_217 = arith.constant 3.200000e+01 : f32
    %610 = vector.broadcast %cst_217 : f32 to vector<16x1xf32>
    %611 = arith.divf %609, %610 : vector<16x1xf32>
    %612 = vector.broadcast %611 : vector<16x1xf32> to vector<16x32xf32>
    %613 = arith.subf %605, %612 : vector<16x32xf32>
    %614 = arith.mulf %613, %613 : vector<16x32xf32>
    %cst_218 = arith.constant dense<0.000000e+00> : vector<16xf32>
    %615 = vector.multi_reduction <add>, %614, %cst_218 [1] : vector<16x32xf32> to vector<16xf32>
    %616 = vector.shape_cast %615 : vector<16xf32> to vector<16x1xf32>
    %cst_219 = arith.constant 3.200000e+01 : f32
    %617 = vector.broadcast %cst_219 : f32 to vector<16x1xf32>
    %618 = arith.divf %616, %617 : vector<16x1xf32>
    %cst_220 = arith.constant 9.99999974E-6 : f32
    %619 = vector.broadcast %cst_220 : f32 to vector<16x1xf32>
    %620 = arith.addf %618, %619 : vector<16x1xf32>
    %621 = math.rsqrt %620 : vector<16x1xf32>
    %622 = vector.broadcast %621 : vector<16x1xf32> to vector<16x32xf32>
    %623 = arith.mulf %613, %622 : vector<16x32xf32>
    %624 = vector.broadcast %606 : vector<1x32xf32> to vector<16x32xf32>
    %625 = arith.mulf %623, %624 : vector<16x32xf32>
    %626 = vector.broadcast %607 : vector<1x32xf32> to vector<16x32xf32>
    %627 = arith.addf %625, %626 : vector<16x32xf32>
    %c0_221 = arith.constant 0 : index
    %c14 = arith.constant 14 : index
    %c0_222 = arith.constant 0 : index
    %c0_223 = arith.constant 0 : index
    %628 = vector.load %arg6[%c0_221, %c14, %c0_222, %c0_223] : memref<1x20x32x32xbf16, #tpu.memory_space<vmem>>, vector<1x1x32x32xbf16>
    %629 = vector.shape_cast %628 : vector<1x1x32x32xbf16> to vector<32x32xbf16>
    %630 = arith.truncf %627 : vector<16x32xf32> to vector<16x32xbf16>
    %cst_224 = arith.constant dense<0.000000e+00> : vector<16x32xf32>
    %631 = tpu.matmul %630, %629, %cst_224 {dimension_numbers = #tpu.dot_dimension_numbers<[1], [0], [0], [1], [0, 0, 1, 1], [], []>} : vector<16x32xbf16>, vector<32x32xbf16>, vector<16x32xf32> -> vector<16x32xf32>
    %632 = vector.extract_strided_slice %2 {offsets = [20, 0], sizes = [1, 32], strides = [1, 1]} : vector<32x32xf32> to vector<1x32xf32>
    %633 = vector.broadcast %632 : vector<1x32xf32> to vector<16x32xf32>
    %634 = arith.addf %631, %633 : vector<16x32xf32>
    %c0_225 = arith.constant 0 : index
    %c15 = arith.constant 15 : index
    %c0_226 = arith.constant 0 : index
    %c0_227 = arith.constant 0 : index
    %635 = vector.load %arg6[%c0_225, %c15, %c0_226, %c0_227] : memref<1x20x32x32xbf16, #tpu.memory_space<vmem>>, vector<1x1x32x32xbf16>
    %636 = vector.shape_cast %635 : vector<1x1x32x32xbf16> to vector<32x32xbf16>
    %637 = arith.truncf %298 : vector<16x32xf32> to vector<16x32xbf16>
    %cst_228 = arith.constant dense<0.000000e+00> : vector<16x32xf32>
    %638 = tpu.matmul %637, %636, %cst_228 {dimension_numbers = #tpu.dot_dimension_numbers<[1], [0], [0], [1], [0, 0, 1, 1], [], []>} : vector<16x32xbf16>, vector<32x32xbf16>, vector<16x32xf32> -> vector<16x32xf32>
    %639 = vector.extract_strided_slice %2 {offsets = [21, 0], sizes = [1, 32], strides = [1, 1]} : vector<32x32xf32> to vector<1x32xf32>
    %640 = vector.broadcast %639 : vector<1x32xf32> to vector<16x32xf32>
    %641 = arith.addf %638, %640 : vector<16x32xf32>
    %c0_229 = arith.constant 0 : index
    %c16 = arith.constant 16 : index
    %c0_230 = arith.constant 0 : index
    %c0_231 = arith.constant 0 : index
    %642 = vector.load %arg6[%c0_229, %c16, %c0_230, %c0_231] : memref<1x20x32x32xbf16, #tpu.memory_space<vmem>>, vector<1x1x32x32xbf16>
    %643 = vector.shape_cast %642 : vector<1x1x32x32xbf16> to vector<32x32xbf16>
    %644 = arith.truncf %298 : vector<16x32xf32> to vector<16x32xbf16>
    %cst_232 = arith.constant dense<0.000000e+00> : vector<16x32xf32>
    %645 = tpu.matmul %644, %643, %cst_232 {dimension_numbers = #tpu.dot_dimension_numbers<[1], [0], [0], [1], [0, 0, 1, 1], [], []>} : vector<16x32xbf16>, vector<32x32xbf16>, vector<16x32xf32> -> vector<16x32xf32>
    %646 = vector.extract_strided_slice %2 {offsets = [22, 0], sizes = [1, 32], strides = [1, 1]} : vector<32x32xf32> to vector<1x32xf32>
    %647 = vector.broadcast %646 : vector<1x32xf32> to vector<16x32xf32>
    %648 = arith.addf %645, %647 : vector<16x32xf32>
    %c0_233 = arith.constant 0 : index
    %c17 = arith.constant 17 : index
    %c0_234 = arith.constant 0 : index
    %c0_235 = arith.constant 0 : index
    %649 = vector.load %arg6[%c0_233, %c17, %c0_234, %c0_235] : memref<1x20x32x32xbf16, #tpu.memory_space<vmem>>, vector<1x1x32x32xbf16>
    %650 = vector.shape_cast %649 : vector<1x1x32x32xbf16> to vector<32x32xbf16>
    %651 = vector.extract_strided_slice %2 {offsets = [23, 0], sizes = [1, 32], strides = [1, 1]} : vector<32x32xf32> to vector<1x32xf32>
    %cst_236 = arith.constant 0.353553385 : f32
    %652 = vector.broadcast %cst_236 : f32 to vector<16x32xf32>
    %653 = arith.mulf %634, %652 : vector<16x32xf32>
    %654 = vector.shape_cast %653 : vector<16x32xf32> to vector<2x8x32xf32>
    %655 = arith.truncf %654 : vector<2x8x32xf32> to vector<2x8x32xbf16>
    %656 = vector.shape_cast %641 : vector<16x32xf32> to vector<2x8x32xf32>
    %657 = arith.truncf %656 : vector<2x8x32xf32> to vector<2x8x32xbf16>
    %658 = vector.shape_cast %648 : vector<16x32xf32> to vector<2x8x32xf32>
    %659 = arith.truncf %658 : vector<2x8x32xf32> to vector<2x8x32xbf16>
    %660 = vector.extract_strided_slice %655 {offsets = [0, 0, 0], sizes = [2, 8, 8], strides = [1, 1, 1]} : vector<2x8x32xbf16> to vector<2x8x8xbf16>
    %661 = vector.extract_strided_slice %657 {offsets = [0, 0, 0], sizes = [2, 8, 8], strides = [1, 1, 1]} : vector<2x8x32xbf16> to vector<2x8x8xbf16>
    "tpu.trace_start"() <{level = 10 : i32, message = "bqd,bkd->bqk"}> : () -> ()
    %cst_237 = arith.constant dense<0.000000e+00> : vector<2x8x8xf32>
    %662 = tpu.matmul %660, %661, %cst_237 {dimension_numbers = #tpu.dot_dimension_numbers<[2], [2], [1], [1], [0, 0, 0, 1, 1, 1], [0], [0]>} : vector<2x8x8xbf16>, vector<2x8x8xbf16>, vector<2x8x8xf32> -> vector<2x8x8xf32>
    "tpu.trace_stop"() : () -> ()
    %663 = vector.extract_strided_slice %655 {offsets = [0, 0, 8], sizes = [2, 8, 8], strides = [1, 1, 1]} : vector<2x8x32xbf16> to vector<2x8x8xbf16>
    %664 = vector.extract_strided_slice %657 {offsets = [0, 0, 8], sizes = [2, 8, 8], strides = [1, 1, 1]} : vector<2x8x32xbf16> to vector<2x8x8xbf16>
    "tpu.trace_start"() <{level = 10 : i32, message = "bqd,bkd->bqk"}> : () -> ()
    %cst_238 = arith.constant dense<0.000000e+00> : vector<2x8x8xf32>
    %665 = tpu.matmul %663, %664, %cst_238 {dimension_numbers = #tpu.dot_dimension_numbers<[2], [2], [1], [1], [0, 0, 0, 1, 1, 1], [0], [0]>} : vector<2x8x8xbf16>, vector<2x8x8xbf16>, vector<2x8x8xf32> -> vector<2x8x8xf32>
    "tpu.trace_stop"() : () -> ()
    %666 = vector.extract_strided_slice %655 {offsets = [0, 0, 16], sizes = [2, 8, 8], strides = [1, 1, 1]} : vector<2x8x32xbf16> to vector<2x8x8xbf16>
    %667 = vector.extract_strided_slice %657 {offsets = [0, 0, 16], sizes = [2, 8, 8], strides = [1, 1, 1]} : vector<2x8x32xbf16> to vector<2x8x8xbf16>
    "tpu.trace_start"() <{level = 10 : i32, message = "bqd,bkd->bqk"}> : () -> ()
    %cst_239 = arith.constant dense<0.000000e+00> : vector<2x8x8xf32>
    %668 = tpu.matmul %666, %667, %cst_239 {dimension_numbers = #tpu.dot_dimension_numbers<[2], [2], [1], [1], [0, 0, 0, 1, 1, 1], [0], [0]>} : vector<2x8x8xbf16>, vector<2x8x8xbf16>, vector<2x8x8xf32> -> vector<2x8x8xf32>
    "tpu.trace_stop"() : () -> ()
    %669 = vector.extract_strided_slice %655 {offsets = [0, 0, 24], sizes = [2, 8, 8], strides = [1, 1, 1]} : vector<2x8x32xbf16> to vector<2x8x8xbf16>
    %670 = vector.extract_strided_slice %657 {offsets = [0, 0, 24], sizes = [2, 8, 8], strides = [1, 1, 1]} : vector<2x8x32xbf16> to vector<2x8x8xbf16>
    "tpu.trace_start"() <{level = 10 : i32, message = "bqd,bkd->bqk"}> : () -> ()
    %cst_240 = arith.constant dense<0.000000e+00> : vector<2x8x8xf32>
    %671 = tpu.matmul %669, %670, %cst_240 {dimension_numbers = #tpu.dot_dimension_numbers<[2], [2], [1], [1], [0, 0, 0, 1, 1, 1], [0], [0]>} : vector<2x8x8xbf16>, vector<2x8x8xbf16>, vector<2x8x8xf32> -> vector<2x8x8xf32>
    "tpu.trace_stop"() : () -> ()
    %672 = tpu.concatenate %662, %665, %668, %671 in 1 : vector<2x8x8xf32>, vector<2x8x8xf32>, vector<2x8x8xf32>, vector<2x8x8xf32> -> vector<2x32x8xf32>
    %cst_241 = arith.constant dense<0xFF800000> : vector<2x32xf32>
    %673 = vector.multi_reduction <maximumf>, %672, %cst_241 [2] : vector<2x32x8xf32> to vector<2x32xf32>
    %674 = vector.shape_cast %673 : vector<2x32xf32> to vector<2x32x1xf32>
    %675 = vector.broadcast %674 : vector<2x32x1xf32> to vector<2x32x8xf32>
    %676 = arith.subf %672, %675 : vector<2x32x8xf32>
    %677 = math.exp %676 : vector<2x32x8xf32>
    %cst_242 = arith.constant dense<0.000000e+00> : vector<2x32xf32>
    %678 = vector.multi_reduction <add>, %677, %cst_242 [2] : vector<2x32x8xf32> to vector<2x32xf32>
    %679 = vector.shape_cast %678 : vector<2x32xf32> to vector<2x32x1xf32>
    %680 = vector.broadcast %679 : vector<2x32x1xf32> to vector<2x32x8xf32>
    %681 = arith.divf %677, %680 : vector<2x32x8xf32>
    %682 = arith.truncf %681 : vector<2x32x8xf32> to vector<2x32x8xbf16>
    %683 = vector.extract_strided_slice %682 {offsets = [0, 0, 0], sizes = [2, 8, 8], strides = [1, 1, 1]} : vector<2x32x8xbf16> to vector<2x8x8xbf16>
    %684 = vector.extract_strided_slice %659 {offsets = [0, 0, 0], sizes = [2, 8, 8], strides = [1, 1, 1]} : vector<2x8x32xbf16> to vector<2x8x8xbf16>
    "tpu.trace_start"() <{level = 10 : i32, message = "bqk,bkd->bqd"}> : () -> ()
    %cst_243 = arith.constant dense<0.000000e+00> : vector<2x8x8xf32>
    %685 = tpu.matmul %683, %684, %cst_243 {dimension_numbers = #tpu.dot_dimension_numbers<[2], [1], [1], [2], [0, 0, 0, 1, 1, 2], [0], [0]>} : vector<2x8x8xbf16>, vector<2x8x8xbf16>, vector<2x8x8xf32> -> vector<2x8x8xf32>
    "tpu.trace_stop"() : () -> ()
    %686 = vector.extract_strided_slice %682 {offsets = [0, 8, 0], sizes = [2, 8, 8], strides = [1, 1, 1]} : vector<2x32x8xbf16> to vector<2x8x8xbf16>
    %687 = vector.extract_strided_slice %659 {offsets = [0, 0, 8], sizes = [2, 8, 8], strides = [1, 1, 1]} : vector<2x8x32xbf16> to vector<2x8x8xbf16>
    "tpu.trace_start"() <{level = 10 : i32, message = "bqk,bkd->bqd"}> : () -> ()
    %cst_244 = arith.constant dense<0.000000e+00> : vector<2x8x8xf32>
    %688 = tpu.matmul %686, %687, %cst_244 {dimension_numbers = #tpu.dot_dimension_numbers<[2], [1], [1], [2], [0, 0, 0, 1, 1, 2], [0], [0]>} : vector<2x8x8xbf16>, vector<2x8x8xbf16>, vector<2x8x8xf32> -> vector<2x8x8xf32>
    "tpu.trace_stop"() : () -> ()
    %689 = vector.extract_strided_slice %682 {offsets = [0, 16, 0], sizes = [2, 8, 8], strides = [1, 1, 1]} : vector<2x32x8xbf16> to vector<2x8x8xbf16>
    %690 = vector.extract_strided_slice %659 {offsets = [0, 0, 16], sizes = [2, 8, 8], strides = [1, 1, 1]} : vector<2x8x32xbf16> to vector<2x8x8xbf16>
    "tpu.trace_start"() <{level = 10 : i32, message = "bqk,bkd->bqd"}> : () -> ()
    %cst_245 = arith.constant dense<0.000000e+00> : vector<2x8x8xf32>
    %691 = tpu.matmul %689, %690, %cst_245 {dimension_numbers = #tpu.dot_dimension_numbers<[2], [1], [1], [2], [0, 0, 0, 1, 1, 2], [0], [0]>} : vector<2x8x8xbf16>, vector<2x8x8xbf16>, vector<2x8x8xf32> -> vector<2x8x8xf32>
    "tpu.trace_stop"() : () -> ()
    %692 = vector.extract_strided_slice %682 {offsets = [0, 24, 0], sizes = [2, 8, 8], strides = [1, 1, 1]} : vector<2x32x8xbf16> to vector<2x8x8xbf16>
    %693 = vector.extract_strided_slice %659 {offsets = [0, 0, 24], sizes = [2, 8, 8], strides = [1, 1, 1]} : vector<2x8x32xbf16> to vector<2x8x8xbf16>
    "tpu.trace_start"() <{level = 10 : i32, message = "bqk,bkd->bqd"}> : () -> ()
    %cst_246 = arith.constant dense<0.000000e+00> : vector<2x8x8xf32>
    %694 = tpu.matmul %692, %693, %cst_246 {dimension_numbers = #tpu.dot_dimension_numbers<[2], [1], [1], [2], [0, 0, 0, 1, 1, 2], [0], [0]>} : vector<2x8x8xbf16>, vector<2x8x8xbf16>, vector<2x8x8xf32> -> vector<2x8x8xf32>
    "tpu.trace_stop"() : () -> ()
    %695 = tpu.concatenate %685, %688, %691, %694 in 2 : vector<2x8x8xf32>, vector<2x8x8xf32>, vector<2x8x8xf32>, vector<2x8x8xf32> -> vector<2x8x32xf32>
    %696 = vector.shape_cast %695 : vector<2x8x32xf32> to vector<16x32xf32>
    %697 = arith.truncf %696 : vector<16x32xf32> to vector<16x32xbf16>
    %cst_247 = arith.constant dense<0.000000e+00> : vector<16x32xf32>
    %698 = tpu.matmul %697, %650, %cst_247 {dimension_numbers = #tpu.dot_dimension_numbers<[1], [0], [0], [1], [0, 0, 1, 1], [], []>} : vector<16x32xbf16>, vector<32x32xbf16>, vector<16x32xf32> -> vector<16x32xf32>
    %699 = vector.broadcast %651 : vector<1x32xf32> to vector<16x32xf32>
    %700 = arith.addf %698, %699 : vector<16x32xf32>
    %701 = arith.addf %627, %700 : vector<16x32xf32>
    %702 = vector.extract_strided_slice %2 {offsets = [28, 0], sizes = [1, 32], strides = [1, 1]} : vector<32x32xf32> to vector<1x32xf32>
    %703 = vector.extract_strided_slice %2 {offsets = [29, 0], sizes = [1, 32], strides = [1, 1]} : vector<32x32xf32> to vector<1x32xf32>
    %cst_248 = arith.constant dense<0.000000e+00> : vector<16xf32>
    %704 = vector.multi_reduction <add>, %701, %cst_248 [1] : vector<16x32xf32> to vector<16xf32>
    %705 = vector.shape_cast %704 : vector<16xf32> to vector<16x1xf32>
    %cst_249 = arith.constant 3.200000e+01 : f32
    %706 = vector.broadcast %cst_249 : f32 to vector<16x1xf32>
    %707 = arith.divf %705, %706 : vector<16x1xf32>
    %708 = vector.broadcast %707 : vector<16x1xf32> to vector<16x32xf32>
    %709 = arith.subf %701, %708 : vector<16x32xf32>
    %710 = arith.mulf %709, %709 : vector<16x32xf32>
    %cst_250 = arith.constant dense<0.000000e+00> : vector<16xf32>
    %711 = vector.multi_reduction <add>, %710, %cst_250 [1] : vector<16x32xf32> to vector<16xf32>
    %712 = vector.shape_cast %711 : vector<16xf32> to vector<16x1xf32>
    %cst_251 = arith.constant 3.200000e+01 : f32
    %713 = vector.broadcast %cst_251 : f32 to vector<16x1xf32>
    %714 = arith.divf %712, %713 : vector<16x1xf32>
    %cst_252 = arith.constant 9.99999974E-6 : f32
    %715 = vector.broadcast %cst_252 : f32 to vector<16x1xf32>
    %716 = arith.addf %714, %715 : vector<16x1xf32>
    %717 = math.rsqrt %716 : vector<16x1xf32>
    %718 = vector.broadcast %717 : vector<16x1xf32> to vector<16x32xf32>
    %719 = arith.mulf %709, %718 : vector<16x32xf32>
    %720 = vector.broadcast %702 : vector<1x32xf32> to vector<16x32xf32>
    %721 = arith.mulf %719, %720 : vector<16x32xf32>
    %722 = vector.broadcast %703 : vector<1x32xf32> to vector<16x32xf32>
    %723 = arith.addf %721, %722 : vector<16x32xf32>
    %c0_253 = arith.constant 0 : index
    %c18 = arith.constant 18 : index
    %c0_254 = arith.constant 0 : index
    %c0_255 = arith.constant 0 : index
    %724 = vector.load %arg6[%c0_253, %c18, %c0_254, %c0_255] : memref<1x20x32x32xbf16, #tpu.memory_space<vmem>>, vector<1x1x32x32xbf16>
    %725 = vector.shape_cast %724 : vector<1x1x32x32xbf16> to vector<32x32xbf16>
    %726 = arith.truncf %723 : vector<16x32xf32> to vector<16x32xbf16>
    %cst_256 = arith.constant dense<0.000000e+00> : vector<16x32xf32>
    %727 = tpu.matmul %726, %725, %cst_256 {dimension_numbers = #tpu.dot_dimension_numbers<[1], [0], [0], [1], [0, 0, 1, 1], [], []>} : vector<16x32xbf16>, vector<32x32xbf16>, vector<16x32xf32> -> vector<16x32xf32>
    %728 = vector.extract_strided_slice %2 {offsets = [24, 0], sizes = [1, 32], strides = [1, 1]} : vector<32x32xf32> to vector<1x32xf32>
    %729 = vector.broadcast %728 : vector<1x32xf32> to vector<16x32xf32>
    %730 = arith.addf %727, %729 : vector<16x32xf32>
    %cst_257 = arith.constant 0.000000e+00 : f32
    %731 = vector.broadcast %cst_257 : f32 to vector<16x32xf32>
    %732 = arith.maximumf %730, %731 : vector<16x32xf32>
    %c0_258 = arith.constant 0 : index
    %c19 = arith.constant 19 : index
    %c0_259 = arith.constant 0 : index
    %c0_260 = arith.constant 0 : index
    %733 = vector.load %arg6[%c0_258, %c19, %c0_259, %c0_260] : memref<1x20x32x32xbf16, #tpu.memory_space<vmem>>, vector<1x1x32x32xbf16>
    %734 = vector.shape_cast %733 : vector<1x1x32x32xbf16> to vector<32x32xbf16>
    %735 = arith.truncf %732 : vector<16x32xf32> to vector<16x32xbf16>
    %cst_261 = arith.constant dense<0.000000e+00> : vector<16x32xf32>
    %736 = tpu.matmul %735, %734, %cst_261 {dimension_numbers = #tpu.dot_dimension_numbers<[1], [0], [0], [1], [0, 0, 1, 1], [], []>} : vector<16x32xbf16>, vector<32x32xbf16>, vector<16x32xf32> -> vector<16x32xf32>
    %737 = vector.extract_strided_slice %2 {offsets = [25, 0], sizes = [1, 32], strides = [1, 1]} : vector<32x32xf32> to vector<1x32xf32>
    %738 = vector.broadcast %737 : vector<1x32xf32> to vector<16x32xf32>
    %739 = arith.addf %736, %738 : vector<16x32xf32>
    %740 = arith.addf %723, %739 : vector<16x32xf32>
    %741 = vector.extract_strided_slice %2 {offsets = [30, 0], sizes = [1, 32], strides = [1, 1]} : vector<32x32xf32> to vector<1x32xf32>
    %742 = vector.extract_strided_slice %2 {offsets = [31, 0], sizes = [1, 32], strides = [1, 1]} : vector<32x32xf32> to vector<1x32xf32>
    %cst_262 = arith.constant dense<0.000000e+00> : vector<16xf32>
    %743 = vector.multi_reduction <add>, %740, %cst_262 [1] : vector<16x32xf32> to vector<16xf32>
    %744 = vector.shape_cast %743 : vector<16xf32> to vector<16x1xf32>
    %cst_263 = arith.constant 3.200000e+01 : f32
    %745 = vector.broadcast %cst_263 : f32 to vector<16x1xf32>
    %746 = arith.divf %744, %745 : vector<16x1xf32>
    %747 = vector.broadcast %746 : vector<16x1xf32> to vector<16x32xf32>
    %748 = arith.subf %740, %747 : vector<16x32xf32>
    %749 = arith.mulf %748, %748 : vector<16x32xf32>
    %cst_264 = arith.constant dense<0.000000e+00> : vector<16xf32>
    %750 = vector.multi_reduction <add>, %749, %cst_264 [1] : vector<16x32xf32> to vector<16xf32>
    %751 = vector.shape_cast %750 : vector<16xf32> to vector<16x1xf32>
    %cst_265 = arith.constant 3.200000e+01 : f32
    %752 = vector.broadcast %cst_265 : f32 to vector<16x1xf32>
    %753 = arith.divf %751, %752 : vector<16x1xf32>
    %cst_266 = arith.constant 9.99999974E-6 : f32
    %754 = vector.broadcast %cst_266 : f32 to vector<16x1xf32>
    %755 = arith.addf %753, %754 : vector<16x1xf32>
    %756 = math.rsqrt %755 : vector<16x1xf32>
    %757 = vector.broadcast %756 : vector<16x1xf32> to vector<16x32xf32>
    %758 = arith.mulf %748, %757 : vector<16x32xf32>
    %759 = vector.broadcast %741 : vector<1x32xf32> to vector<16x32xf32>
    %760 = arith.mulf %758, %759 : vector<16x32xf32>
    %761 = vector.broadcast %742 : vector<1x32xf32> to vector<16x32xf32>
    %762 = arith.addf %760, %761 : vector<16x32xf32>
    %763 = vector.extract_strided_slice %5 {offsets = [0, 0], sizes = [1, 32], strides = [1, 1]} : vector<2x32xf32> to vector<1x32xf32>
    %764 = vector.extract_strided_slice %5 {offsets = [1, 0], sizes = [1, 32], strides = [1, 1]} : vector<2x32xf32> to vector<1x32xf32>
    %cst_267 = arith.constant dense<0.000000e+00> : vector<16xf32>
    %765 = vector.multi_reduction <add>, %762, %cst_267 [1] : vector<16x32xf32> to vector<16xf32>
    %766 = vector.shape_cast %765 : vector<16xf32> to vector<16x1xf32>
    %cst_268 = arith.constant 3.200000e+01 : f32
    %767 = vector.broadcast %cst_268 : f32 to vector<16x1xf32>
    %768 = arith.divf %766, %767 : vector<16x1xf32>
    %769 = vector.broadcast %768 : vector<16x1xf32> to vector<16x32xf32>
    %770 = arith.subf %762, %769 : vector<16x32xf32>
    %771 = arith.mulf %770, %770 : vector<16x32xf32>
    %cst_269 = arith.constant dense<0.000000e+00> : vector<16xf32>
    %772 = vector.multi_reduction <add>, %771, %cst_269 [1] : vector<16x32xf32> to vector<16xf32>
    %773 = vector.shape_cast %772 : vector<16xf32> to vector<16x1xf32>
    %cst_270 = arith.constant 3.200000e+01 : f32
    %774 = vector.broadcast %cst_270 : f32 to vector<16x1xf32>
    %775 = arith.divf %773, %774 : vector<16x1xf32>
    %cst_271 = arith.constant 9.99999974E-6 : f32
    %776 = vector.broadcast %cst_271 : f32 to vector<16x1xf32>
    %777 = arith.addf %775, %776 : vector<16x1xf32>
    %778 = math.rsqrt %777 : vector<16x1xf32>
    %779 = vector.broadcast %778 : vector<16x1xf32> to vector<16x32xf32>
    %780 = arith.mulf %770, %779 : vector<16x32xf32>
    %781 = vector.broadcast %763 : vector<1x32xf32> to vector<16x32xf32>
    %782 = arith.mulf %780, %781 : vector<16x32xf32>
    %783 = vector.broadcast %764 : vector<1x32xf32> to vector<16x32xf32>
    %784 = arith.addf %782, %783 : vector<16x32xf32>
    %c0_272 = arith.constant 0 : index
    %c0_273 = arith.constant 0 : index
    %c0_274 = arith.constant 0 : index
    %785 = vector.load %arg9[%c0_272, %c0_273, %c0_274] : memref<1x32x128xbf16, #tpu.memory_space<vmem>>, vector<1x32x128xbf16>
    %786 = vector.shape_cast %785 : vector<1x32x128xbf16> to vector<32x128xbf16>
    %787 = arith.truncf %784 : vector<16x32xf32> to vector<16x32xbf16>
    %cst_275 = arith.constant dense<0.000000e+00> : vector<16x128xf32>
    %788 = tpu.matmul %787, %786, %cst_275 {dimension_numbers = #tpu.dot_dimension_numbers<[1], [0], [0], [1], [0, 0, 1, 1], [], []>} : vector<16x32xbf16>, vector<32x128xbf16>, vector<16x128xf32> -> vector<16x128xf32>
    %c0_276 = arith.constant 0 : index
    %c0_277 = arith.constant 0 : index
    %c0_278 = arith.constant 0 : index
    %789 = vector.load %arg10[%c0_276, %c0_277, %c0_278] : memref<1x1x128xf32, #tpu.memory_space<vmem>>, vector<1x1x128xf32>
    %790 = vector.shape_cast %789 : vector<1x1x128xf32> to vector<1x128xf32>
    %791 = vector.broadcast %790 : vector<1x128xf32> to vector<16x128xf32>
    %792 = arith.addf %788, %791 : vector<16x128xf32>
    %cst_279 = arith.constant dense<0xFF800000> : vector<16xf32>
    %793 = vector.multi_reduction <maximumf>, %792, %cst_279 [1] : vector<16x128xf32> to vector<16xf32>
    %794 = vector.shape_cast %793 : vector<16xf32> to vector<16x1xf32>
    %795 = vector.broadcast %794 : vector<16x1xf32> to vector<16x128xf32>
    %796 = arith.subf %792, %795 : vector<16x128xf32>
    %797 = math.exp %796 : vector<16x128xf32>
    %cst_280 = arith.constant dense<0.000000e+00> : vector<16xf32>
    %798 = vector.multi_reduction <add>, %797, %cst_280 [1] : vector<16x128xf32> to vector<16xf32>
    %799 = vector.shape_cast %798 : vector<16xf32> to vector<16x1xf32>
    %800 = math.log %799 : vector<16x1xf32>
    %801 = vector.broadcast %800 : vector<16x1xf32> to vector<16x128xf32>
    %802 = arith.subf %796, %801 : vector<16x128xf32>
    %c0_281 = arith.constant 0 : index
    %c0_282 = arith.constant 0 : index
    %c0_283 = arith.constant 0 : index
    %803 = vector.load %arg11[%c0_281, %c0_282, %c0_283] : memref<1x16x128xf32, #tpu.memory_space<vmem>>, vector<1x16x128xf32>
    %804 = vector.shape_cast %803 : vector<1x16x128xf32> to vector<16x128xf32>
    %805 = vector.shape_cast %802 : vector<16x128xf32> to vector<1x16x128xf32>
    tpu.vector_store %arg11[%c0_281, %c0_282, %c0_283], %805 {strides = array<i32>} : memref<1x16x128xf32, #tpu.memory_space<vmem>>, vector<1x16x128xf32>,
    return
  }
  func.func @transform_0(%arg0: i32) -> (i32, i32) {
    %c0_i32 = arith.constant 0 : i32
    %c0_i32_0 = arith.constant 0 : i32
    %c0_i32_1 = arith.constant 0 : i32
    return %c0_i32, %c0_i32_0 : i32, i32
  }
  func.func @transform_1(%arg0: i32) -> (i32, i32, i32) {
    %c0_i32 = arith.constant 0 : i32
    %c0_i32_0 = arith.constant 0 : i32
    %c0_i32_1 = arith.constant 0 : i32
    return %arg0, %c0_i32, %c0_i32_0 : i32, i32, i32
  }
  func.func @transform_2(%arg0: i32) -> (i32, i32, i32) {
    %c0_i32 = arith.constant 0 : i32
    %c0_i32_0 = arith.constant 0 : i32
    %c0_i32_1 = arith.constant 0 : i32
    %c0_i32_2 = arith.constant 0 : i32
    return %c0_i32, %c0_i32_0, %c0_i32_1 : i32, i32, i32
  }
  func.func @transform_3(%arg0: i32) -> (i32, i32) {
    %c0_i32 = arith.constant 0 : i32
    %c0_i32_0 = arith.constant 0 : i32
    %c0_i32_1 = arith.constant 0 : i32
    return %c0_i32, %c0_i32_0 : i32, i32
  }
  func.func @transform_4(%arg0: i32) -> (i32, i32) {
    %c0_i32 = arith.constant 0 : i32
    %c0_i32_0 = arith.constant 0 : i32
    %c0_i32_1 = arith.constant 0 : i32
    return %c0_i32, %c0_i32_0 : i32, i32
  }
  func.func @transform_5(%arg0: i32) -> (i32, i32, i32, i32) {
    %c0_i32 = arith.constant 0 : i32
    %c0_i32_0 = arith.constant 0 : i32
    %c0_i32_1 = arith.constant 0 : i32
    %c0_i32_2 = arith.constant 0 : i32
    return %arg0, %c0_i32, %c0_i32_0, %c0_i32_1 : i32, i32, i32, i32
  }
  func.func @transform_6(%arg0: i32) -> (i32, i32, i32) {
    %c0_i32 = arith.constant 0 : i32
    %c0_i32_0 = arith.constant 0 : i32
    %c0_i32_1 = arith.constant 0 : i32
    return %arg0, %c0_i32, %c0_i32_0 : i32, i32, i32
  }
  func.func @transform_7(%arg0: i32) -> (i32, i32, i32) {
    %c0_i32 = arith.constant 0 : i32
    %c0_i32_0 = arith.constant 0 : i32
    %c0_i32_1 = arith.constant 0 : i32
    return %arg0, %c0_i32, %c0_i32_0 : i32, i32, i32
  }
  func.func @transform_8(%arg0: i32) -> (i32, i32, i32) {
    %c0_i32 = arith.constant 0 : i32
    %c0_i32_0 = arith.constant 0 : i32
    %c0_i32_1 = arith.constant 0 : i32
    return %arg0, %c0_i32, %c0_i32_0 : i32, i32, i32
  }
  func.func @transform_9(%arg0: i32) -> (i32, i32, i32) {
    %c0_i32 = arith.constant 0 : i32
    %c0_i32_0 = arith.constant 0 : i32
    %c0_i32_1 = arith.constant 0 : i32
    return %arg0, %c0_i32, %c0_i32_0 : i32, i32, i32
  }
  func.func @transform_10(%arg0: i32) -> (i32, i32, i32) {
    %c0_i32 = arith.constant 0 : i32
    %c0_i32_0 = arith.constant 0 : i32
    %c0_i32_1 = arith.constant 0 : i32
    return %arg0, %c0_i32, %c0_i32_0 : i32, i32, i32
  }
}

</mosaic_0001>

<llo_original>
// kernel: forward.1
$region0: #{forward.1}
  #allocation0 [shape = 'u32[]', space=smem, size = 0x4, offset = 0x4, fixed_abs, tag = 'smem constant byte address 0x4 - core index']
  #allocation1 [shape = 'u32[144,128]{1,0:T(1,128)}', space=vmem, size = 0x12000, scoped, tag = 'internal scratch']
  %s0 = inlined_call_operand.vmem [shape: f32[16,32], index: 0, kind: input, shape index: {}]
  %s1 = inlined_call_operand.vmem [shape: f32[4,16,32], index: 1, kind: input, shape index: {}]
  %s2 = inlined_call_operand.hbm [shape: bf16[12,32,32], index: 2, kind: input, shape index: {}]
  %s3 = inlined_call_operand.hbm [shape: f32[20,32], index: 3, kind: input, shape index: {}]
  %s4 = inlined_call_operand.hbm [shape: f32[2,32], index: 4, kind: input, shape index: {}]
  %s5 = inlined_call_operand.vmem [shape: bf16[4,20,32,32], index: 5, kind: input, shape index: {}]
  %s6 = inlined_call_operand.hbm [shape: f32[4,32,32], index: 6, kind: input, shape index: {}]
  %s7 = inlined_call_operand.hbm [shape: f32[4,2,32], index: 7, kind: input, shape index: {}]
  %s8 = inlined_call_operand.hbm [shape: bf16[4,32,128], index: 8, kind: input, shape index: {}]
  %s9 = inlined_call_operand.vmem [shape: f32[4,1,128], index: 9, kind: input, shape index: {}]
  %s10 = inlined_call_operand.vmem [shape: f32[4,16,128], index: 10, kind: output, shape index: {}]
  %s11 = sld [smem:[#allocation0]]
  $region97: #{forward.1} parent=0
    _
  %s13 = ssub.s32 1, %s11
  %s14 = scalar_select 0, %s13, %s11
  $region1: #{forward.1} parent=0
    #allocation2 [shape = 'u8[98304]{0}', space=vmem, size = 0x18000, scoped, tag = 'input window, operand 2, single buffered']
    #allocation3 [shape = 's32[2]{0}', space=sflag, size = 0x8, scoped, tag = 'scoped memory for forward.1']
    #allocation4 [shape = 'u8[12288]{0}', space=vmem, size = 0x3000, scoped, tag = 'input window, operand 3, single buffered']
    #allocation5 [shape = 's32[1]{0}', space=sflag, size = 0x4, scoped, tag = 'scoped memory for forward.1']
    #allocation6 [shape = 'u8[1024]{0}', space=vmem, size = 0x400, scoped, tag = 'input window, operand 4, single buffered']
    #allocation7 [shape = 'u8[32768]{0}', space=vmem, size = 0x8000, scoped, tag = 'input window, operand 6']
    #allocation8 [shape = 's32[2]{0}', space=sflag, size = 0x8, scoped, tag = 'scoped memory for forward.1']
    #allocation9 [shape = 'u8[2048]{0}', space=vmem, size = 0x800, scoped, tag = 'input window, operand 7']
    #allocation10 [shape = 'u8[16384]{0}', space=vmem, size = 0x4000, scoped, tag = 'input window, operand 8']
    #allocation11 [shape = 's32[2]{0}', space=sflag, size = 0x8, scoped, tag = 'scoped memory for forward.1']
    %15 = vsyncpa [#allocation3], 0
    %16 = vsyncpa [#allocation5], 0
    %17 = vsyncpa [#allocation8], 0
    %s18 = scalar_lea.sflag [#allocation8], 1
    %19 = vsyncpa %s18, 0
    %20 = vsyncpa [#allocation11], 0
    %s21 = scalar_lea.sflag [#allocation11], 1
    %22 = vsyncpa %s21, 0
    loop: start=0, step=1, limit=6
    $region2: #{forward.1} parent=1 // loop_pre_header
      _
    $region3: #{forward.1} parent=1 // loop_header
      %s24 = sphi 0, %s28
      %p25 = scmp.ge.s32.totalorder %s24, 6
      %s32 = sphi 0, %s32
      %s34 = sphi 0, %s32
      %s35 = sphi 0, %s34
      %s49 = sphi 0, %s35
      %s55 = sphi 0, %s57
      %s58 = sphi 0, %s55
      %s59 = sphi 0, %s58
      %s75 = sphi 0, %s59
      %s79 = sphi 0, %s79
      %s81 = sphi 0, %s79
      %s82 = sphi 0, %s81
      %s96 = sphi 0, %s82
      %s100 = sphi 0, %s100
      %s102 = sphi 0, %s100
      %s103 = sphi 0, %s102
      %s117 = sphi 0, %s103
      %s121 = sphi 0, %s121
      %s123 = sphi 0, %s121
      %s124 = sphi 0, %s123
      %s138 = sphi 0, %s124
      %s144 = sphi 0, %s146
      %s147 = sphi 0, %s144
      %s148 = sphi 0, %s147
      %s164 = sphi 0, %s148
      %s170 = sphi 0, %s172
      %s173 = sphi 0, %s170
      %s174 = sphi 0, %s173
      %s190 = sphi 0, %s174
      %s196 = sphi 0, %s198
      %s199 = sphi 0, %s196
      %s200 = sphi 0, %s199
      %s216 = sphi 0, %s200
      %s222 = sphi 0, %s224
      %s225 = sphi 0, %s222
      %s226 = sphi 0, %s225
      %s242 = sphi 0, %s226
      %s248 = sphi 0, %s250
      %s251 = sphi 0, %s248
      %s252 = sphi 0, %s251
      %s268 = sphi 0, %s252
      %s274 = sphi 0, %s276
      %s277 = sphi 0, %s274
      %s278 = sphi 0, %s277
      %s294 = sphi 0, %s278
    $region4: #{forward.1} parent=1 // loop_header_branch
      %27 = sbr.rel (%p25) target = $region8
    $region5: #{forward.1} parent=1 // loop_body
      %s29 = ssub.s32 %s24, 1
      %s30 = ssub.s32 %s24, 2
      %s31 = sadd.s32 %s24, 1
      %s33 = sadd.s32 %s32, 1
      %p36 = scmp.eq.s32.totalorder %s24, 3
      %p37 = scmp.ne.s32.totalorder %s32, %s34
      %p38 = scmp.eq.s32.totalorder %s24, 0
      %p39 = por %p37, %p38
      %p40 = scmp.ne.s32.totalorder %s32, %s34
      %p41 = scmp.eq.s32.totalorder %s29, 3
      %p42 = por %p40, %p41
      %p43 = scmp.ne.s32.totalorder %s34, %s35
      %p44 = scmp.eq.s32.totalorder %s29, 0
      %p45 = por %p43, %p44
      %p46 = scmp.ne.s32.totalorder %s34, %s35
      %p47 = scmp.eq.s32.totalorder %s30, 3
      %p48 = por %p46, %p47
      %p50 = scmp.ne.s32.totalorder %s35, %s49
      %p51 = scmp.eq.s32.totalorder %s30, 0
      %p52 = por %p50, %p51
      %s53 = ssub.s32 %s24, %s31
      %p54 = scmp.eq.s32.totalorder %s53, 0
      %s56 = sadd.s32 %s55, 1
      %s57 = scalar_select %p54, %s55, %s56
      %p60 = pneg %p54
      %p61 = scmp.eq.s32.totalorder %s24, 3
      %p62 = por %p60, %p61
      %p63 = scmp.ne.s32.totalorder %s55, %s58
      %p64 = scmp.eq.s32.totalorder %s24, 0
      %p65 = por %p63, %p64
      %p66 = scmp.ne.s32.totalorder %s55, %s58
      %p67 = scmp.eq.s32.totalorder %s29, 3
      %p68 = por %p66, %p67
      %p69 = scmp.ne.s32.totalorder %s58, %s59
      %p70 = scmp.eq.s32.totalorder %s29, 0
      %p71 = por %p69, %p70
      %p72 = scmp.ne.s32.totalorder %s58, %s59
      %p73 = scmp.eq.s32.totalorder %s30, 3
      %p74 = por %p72, %p73
      %p76 = scmp.ne.s32.totalorder %s59, %s75
      %p77 = scmp.eq.s32.totalorder %s30, 0
      %p78 = por %p76, %p77
      %s80 = sadd.s32 %s79, 1
      %p83 = scmp.eq.s32.totalorder %s24, 3
      %p84 = scmp.ne.s32.totalorder %s79, %s81
      %p85 = scmp.eq.s32.totalorder %s24, 0
      %p86 = por %p84, %p85
      %p87 = scmp.ne.s32.totalorder %s79, %s81
      %p88 = scmp.eq.s32.totalorder %s29, 3
      %p89 = por %p87, %p88
      %p90 = scmp.ne.s32.totalorder %s81, %s82
      %p91 = scmp.eq.s32.totalorder %s29, 0
      %p92 = por %p90, %p91
      %p93 = scmp.ne.s32.totalorder %s81, %s82
      %p94 = scmp.eq.s32.totalorder %s30, 3
      %p95 = por %p93, %p94
      %p97 = scmp.ne.s32.totalorder %s82, %s96
      %p98 = scmp.eq.s32.totalorder %s30, 0
      %p99 = por %p97, %p98
      %s101 = sadd.s32 %s100, 1
      %p104 = scmp.eq.s32.totalorder %s24, 3
      %p105 = scmp.ne.s32.totalorder %s100, %s102
      %p106 = scmp.eq.s32.totalorder %s24, 0
      %p107 = por %p105, %p106
      %p108 = scmp.ne.s32.totalorder %s100, %s102
      %p109 = scmp.eq.s32.totalorder %s29, 3
      %p110 = por %p108, %p109
      %p111 = scmp.ne.s32.totalorder %s102, %s103
      %p112 = scmp.eq.s32.totalorder %s29, 0
      %p113 = por %p111, %p112
      %p114 = scmp.ne.s32.totalorder %s102, %s103
      %p115 = scmp.eq.s32.totalorder %s30, 3
      %p116 = por %p114, %p115
      %p118 = scmp.ne.s32.totalorder %s103, %s117
      %p119 = scmp.eq.s32.totalorder %s30, 0
      %p120 = por %p118, %p119
      %s122 = sadd.s32 %s121, 1
      %p125 = scmp.eq.s32.totalorder %s24, 3
      %p126 = scmp.ne.s32.totalorder %s121, %s123
      %p127 = scmp.eq.s32.totalorder %s24, 0
      %p128 = por %p126, %p127
      %p129 = scmp.ne.s32.totalorder %s121, %s123
      %p130 = scmp.eq.s32.totalorder %s29, 3
      %p131 = por %p129, %p130
      %p132 = scmp.ne.s32.totalorder %s123, %s124
      %p133 = scmp.eq.s32.totalorder %s29, 0
      %p134 = por %p132, %p133
      %p135 = scmp.ne.s32.totalorder %s123, %s124
      %p136 = scmp.eq.s32.totalorder %s30, 3
      %p137 = por %p135, %p136
      %p139 = scmp.ne.s32.totalorder %s124, %s138
      %p140 = scmp.eq.s32.totalorder %s30, 0
      %p141 = por %p139, %p140
      %s142 = ssub.s32 %s24, %s31
      %p143 = scmp.eq.s32.totalorder %s142, 0
      %s145 = sadd.s32 %s144, 1
      %s146 = scalar_select %p143, %s144, %s145
      %p149 = pneg %p143
      %p150 = scmp.eq.s32.totalorder %s24, 3
      %p151 = por %p149, %p150
      %p152 = scmp.ne.s32.totalorder %s144, %s147
      %p153 = scmp.eq.s32.totalorder %s24, 0
      %p154 = por %p152, %p153
      %p155 = scmp.ne.s32.totalorder %s144, %s147
      %p156 = scmp.eq.s32.totalorder %s29, 3
      %p157 = por %p155, %p156
      %p158 = scmp.ne.s32.totalorder %s147, %s148
      %p159 = scmp.eq.s32.totalorder %s29, 0
      %p160 = por %p158, %p159
      %p161 = scmp.ne.s32.totalorder %s147, %s148
      %p162 = scmp.eq.s32.totalorder %s30, 3
      %p163 = por %p161, %p162
      %p165 = scmp.ne.s32.totalorder %s148, %s164
      %p166 = scmp.eq.s32.totalorder %s30, 0
      %p167 = por %p165, %p166
      %s168 = ssub.s32 %s24, %s31
      %p169 = scmp.eq.s32.totalorder %s168, 0
      %s171 = sadd.s32 %s170, 1
      %s172 = scalar_select %p169, %s170, %s171
      %p175 = pneg %p169
      %p176 = scmp.eq.s32.totalorder %s24, 3
      %p177 = por %p175, %p176
      %p178 = scmp.ne.s32.totalorder %s170, %s173
      %p179 = scmp.eq.s32.totalorder %s24, 0
      %p180 = por %p178, %p179
      %p181 = scmp.ne.s32.totalorder %s170, %s173
      %p182 = scmp.eq.s32.totalorder %s29, 3
      %p183 = por %p181, %p182
      %p184 = scmp.ne.s32.totalorder %s173, %s174
      %p185 = scmp.eq.s32.totalorder %s29, 0
      %p186 = por %p184, %p185
      %p187 = scmp.ne.s32.totalorder %s173, %s174
      %p188 = scmp.eq.s32.totalorder %s30, 3
      %p189 = por %p187, %p188
      %p191 = scmp.ne.s32.totalorder %s174, %s190
      %p192 = scmp.eq.s32.totalorder %s30, 0
      %p193 = por %p191, %p192
      %s194 = ssub.s32 %s24, %s31
      %p195 = scmp.eq.s32.totalorder %s194, 0
      %s197 = sadd.s32 %s196, 1
      %s198 = scalar_select %p195, %s196, %s197
      %p201 = pneg %p195
      %p202 = scmp.eq.s32.totalorder %s24, 3
      %p203 = por %p201, %p202
      %p204 = scmp.ne.s32.totalorder %s196, %s199
      %p205 = scmp.eq.s32.totalorder %s24, 0
      %p206 = por %p204, %p205
      %p207 = scmp.ne.s32.totalorder %s196, %s199
      %p208 = scmp.eq.s32.totalorder %s29, 3
      %p209 = por %p207, %p208
      %p210 = scmp.ne.s32.totalorder %s199, %s200
      %p211 = scmp.eq.s32.totalorder %s29, 0
      %p212 = por %p210, %p211
      %p213 = scmp.ne.s32.totalorder %s199, %s200
      %p214 = scmp.eq.s32.totalorder %s30, 3
      %p215 = por %p213, %p214
      %p217 = scmp.ne.s32.totalorder %s200, %s216
      %p218 = scmp.eq.s32.totalorder %s30, 0
      %p219 = por %p217, %p218
      %s220 = ssub.s32 %s24, %s31
      %p221 = scmp.eq.s32.totalorder %s220, 0
      %s223 = sadd.s32 %s222, 1
      %s224 = scalar_select %p221, %s222, %s223
      %p227 = pneg %p221
      %p228 = scmp.eq.s32.totalorder %s24, 3
      %p229 = por %p227, %p228
      %p230 = scmp.ne.s32.totalorder %s222, %s225
      %p231 = scmp.eq.s32.totalorder %s24, 0
      %p232 = por %p230, %p231
      %p233 = scmp.ne.s32.totalorder %s222, %s225
      %p234 = scmp.eq.s32.totalorder %s29, 3
      %p235 = por %p233, %p234
      %p236 = scmp.ne.s32.totalorder %s225, %s226
      %p237 = scmp.eq.s32.totalorder %s29, 0
      %p238 = por %p236, %p237
      %p239 = scmp.ne.s32.totalorder %s225, %s226
      %p240 = scmp.eq.s32.totalorder %s30, 3
      %p241 = por %p239, %p240
      %p243 = scmp.ne.s32.totalorder %s226, %s242
      %p244 = scmp.eq.s32.totalorder %s30, 0
      %p245 = por %p243, %p244
      %s246 = ssub.s32 %s24, %s31
      %p247 = scmp.eq.s32.totalorder %s246, 0
      %s249 = sadd.s32 %s248, 1
      %s250 = scalar_select %p247, %s248, %s249
      %p253 = pneg %p247
      %p254 = scmp.eq.s32.totalorder %s24, 3
      %p255 = por %p253, %p254
      %p256 = scmp.ne.s32.totalorder %s248, %s251
      %p257 = scmp.eq.s32.totalorder %s24, 0
      %p258 = por %p256, %p257
      %p259 = scmp.ne.s32.totalorder %s248, %s251
      %p260 = scmp.eq.s32.totalorder %s29, 3
      %p261 = por %p259, %p260
      %p262 = scmp.ne.s32.totalorder %s251, %s252
      %p263 = scmp.eq.s32.totalorder %s29, 0
      %p264 = por %p262, %p263
      %p265 = scmp.ne.s32.totalorder %s251, %s252
      %p266 = scmp.eq.s32.totalorder %s30, 3
      %p267 = por %p265, %p266
      %p269 = scmp.ne.s32.totalorder %s252, %s268
      %p270 = scmp.eq.s32.totalorder %s30, 0
      %p271 = por %p269, %p270
      %s272 = ssub.s32 %s24, %s31
      %p273 = scmp.eq.s32.totalorder %s272, 0
      %s275 = sadd.s32 %s274, 1
      %s276 = scalar_select %p273, %s274, %s275
      %p279 = pneg %p273
      %p280 = scmp.eq.s32.totalorder %s24, 3
      %p281 = por %p279, %p280
      %p282 = scmp.ne.s32.totalorder %s274, %s277
      %p283 = scmp.eq.s32.totalorder %s24, 0
      %p284 = por %p282, %p283
      %p285 = scmp.ne.s32.totalorder %s274, %s277
      %p286 = scmp.eq.s32.totalorder %s29, 3
      %p287 = por %p285, %p286
      %p288 = scmp.ne.s32.totalorder %s277, %s278
      %p289 = scmp.eq.s32.totalorder %s29, 0
      %p290 = por %p288, %p289
      %p291 = scmp.ne.s32.totalorder %s277, %s278
      %p292 = scmp.eq.s32.totalorder %s30, 3
      %p293 = por %p291, %p292
      %p295 = scmp.ne.s32.totalorder %s278, %s294
      %p296 = scmp.eq.s32.totalorder %s30, 0
      %p297 = por %p295, %p296
      %p298 = scmp.le.s32.totalorder 1, %s24
      %p299 = scmp.lt.s32.totalorder %s24, 5
      %p300 = pnand %p298, %p299
      %p301 = pneg %p300
      // Predicated region
      $region9: #{forward.1} parent=5 // pred_check
        _
      $region10: #{forward.1} parent=5 // pred_check_branch
        %303 = sbr.rel (%p300) target = $region12
      $region11: #{forward.1} parent=5 // pred_region
        %s304 = ssub.s32 %s24, 1
        // Predicated region
        $region13: #{forward.1} parent=11 // pred_check
          %p305 = pneg %p45
        $region14: #{forward.1} parent=11 // pred_check_branch
          %307 = sbr.rel (%p305) target = $region16
        $region15: #{forward.1} parent=11 // pred_region
          _
        $region16: #{forward.1} parent=11 // pred_fallthru
          _
        // Predicated region
        $region17: #{forward.1} parent=11 // pred_check
          %p308 = pneg %p92
        $region18: #{forward.1} parent=11 // pred_check_branch
          %310 = sbr.rel (%p308) target = $region20
        $region19: #{forward.1} parent=11 // pred_region
          %s312 = ssub.s32 3072, 3072
          %313 = vsyncadd [#allocation3], %s312
          %s314 = sshll.u32 [#allocation2], 4
          %s315 = int_to_ptr.vmem [resolvable:$true] %s314
          %320 = dma.hbm_to_vmem [thread:$0]  %s2, 3072, %s315, [#allocation3], 64, 64, 4
        $region20: #{forward.1} parent=11 // pred_fallthru
          _
        // Predicated region
        $region21: #{forward.1} parent=11 // pred_check
          %p321 = pneg %p113
        $region22: #{forward.1} parent=11 // pred_check_branch
          %323 = sbr.rel (%p321) target = $region24
        $region23: #{forward.1} parent=11 // pred_region
          %s325 = ssub.s32 384, 384
          %326 = vsyncadd [#allocation5], %s325
          %s327 = sshll.u32 [#allocation4], 4
          %s328 = int_to_ptr.vmem [resolvable:$true] %s327
          %333 = dma.hbm_to_vmem [thread:$0]  %s3, 384, %s328, [#allocation5], 128, 128, 8
        $region24: #{forward.1} parent=11 // pred_fallthru
          _
        // Predicated region
        $region25: #{forward.1} parent=11 // pred_check
          %p334 = pneg %p134
        $region26: #{forward.1} parent=11 // pred_check_branch
          %336 = sbr.rel (%p334) target = $region28
        $region27: #{forward.1} parent=11 // pred_region
          %s338 = ssub.s32 32, 32
          %339 = vsyncadd [#allocation5], %s338
          %s341 = sshll.u32 [#allocation6], 4
          %s342 = int_to_ptr.vmem [resolvable:$true] %s341
          %344 = dma.hbm_to_vmem [thread:$0]  %s4, 32, %s342, [#allocation5]
        $region28: #{forward.1} parent=11 // pred_fallthru
          _
      $region12: #{forward.1} parent=5 // pred_fallthru
        _
      %p345 = scmp.lt.s32.totalorder %s24, 4
      // Predicated region
      $region29: #{forward.1} parent=5 // pred_check
        %p346 = pneg %p345
      $region30: #{forward.1} parent=5 // pred_check_branch
        %348 = sbr.rel (%p346) target = $region32
      $region31: #{forward.1} parent=5 // pred_region
        // Predicated region
        $region33: #{forward.1} parent=31 // pred_check
          %p349 = pneg %p65
        $region34: #{forward.1} parent=31 // pred_check_branch
          %351 = sbr.rel (%p349) target = $region36
        $region35: #{forward.1} parent=31 // pred_region
          %p352 = scmp.lt.s32.totalorder %s24, 3
          %s353 = scalar_select %p352, %s24, 3
          %s354 = smul.addr %s353, 2
          %s355 = smul.addr %s354, 8
          %s356 = scalar_lea.vmem %s1, %s355
        $region36: #{forward.1} parent=31 // pred_fallthru
          _
        // Predicated region
        $region37: #{forward.1} parent=31 // pred_check
          %p357 = pneg %p154
        $region38: #{forward.1} parent=31 // pred_check_branch
          %359 = sbr.rel (%p357) target = $region40
        $region39: #{forward.1} parent=31 // pred_region
          %p360 = scmp.lt.s32.totalorder %s24, 3
          %s361 = scalar_select %p360, %s24, 3
          %s362 = smul.addr %s361, 80
          %s363 = smul.addr %s362, 4
          %s364 = scalar_lea.vmem %s5, %s363
        $region40: #{forward.1} parent=31 // pred_fallthru
          _
        // Predicated region
        $region41: #{forward.1} parent=31 // pred_check
          %p365 = pneg %p180
        $region42: #{forward.1} parent=31 // pred_check_branch
          %367 = sbr.rel (%p365) target = $region44
        $region43: #{forward.1} parent=31 // pred_region
          %s368 = sand.u32 %s24, 1
          %s369 = scalar_lea.sflag [#allocation8], %s368
          %s370 = sand.u32 %s170, 1
          %s371 = smul.addr %s370, 32
          %s372 = scalar_lea.vmem [#allocation7], %s371
          %s374 = ssub.s32 512, 512
          %375 = vsyncadd %s369, %s374
          %s376 = smul.addr %s24, 4
          %s377 = smul.addr %s376, 128
          %s378 = scalar_lea.hbm %s6, %s377
          %s379 = sshll.u32 %s372, 4
          %s380 = int_to_ptr.vmem [resolvable:$true] %s379
          %385 = dma.hbm_to_vmem [thread:$0]  %s378, 512, %s380, %s369, 128, 128, 8
        $region44: #{forward.1} parent=31 // pred_fallthru
          _
        // Predicated region
        $region45: #{forward.1} parent=31 // pred_check
          %p386 = pneg %p206
        $region46: #{forward.1} parent=31 // pred_check_branch
          %388 = sbr.rel (%p386) target = $region48
        $region47: #{forward.1} parent=31 // pred_region
          %s389 = sand.u32 %s24, 1
          %s390 = scalar_lea.sflag [#allocation8], %s389
          %s391 = sand.u32 %s196, 1
          %s392 = smul.addr %s391, 2
          %s393 = scalar_lea.vmem [#allocation9], %s392
          %s395 = ssub.s32 32, 32
          %396 = vsyncadd %s390, %s395
          %s397 = smul.addr %s24, 32
          %s398 = scalar_lea.hbm %s7, %s397
          %s400 = sshll.u32 %s393, 4
          %s401 = int_to_ptr.vmem [resolvable:$true] %s400
          %403 = dma.hbm_to_vmem [thread:$0]  %s398, 32, %s401, %s390
        $region48: #{forward.1} parent=31 // pred_fallthru
          _
        // Predicated region
        $region49: #{forward.1} parent=31 // pred_check
          %p404 = pneg %p232
        $region50: #{forward.1} parent=31 // pred_check_branch
          %406 = sbr.rel (%p404) target = $region52
        $region51: #{forward.1} parent=31 // pred_region
          %s407 = sand.u32 %s222, 1
          %s408 = scalar_lea.sflag [#allocation11], %s407
          %s409 = sand.u32 %s222, 1
          %s410 = smul.addr %s409, 16
          %s411 = scalar_lea.vmem [#allocation10], %s410
          %s413 = ssub.s32 256, 256
          %414 = vsyncadd %s408, %s413
          %s415 = smul.addr %s24, 4
          %s416 = smul.addr %s415, 64
          %s417 = scalar_lea.hbm %s8, %s416
          %s418 = sshll.u32 %s411, 4
          %s419 = int_to_ptr.vmem [resolvable:$true] %s418
          %424 = dma.hbm_to_vmem [thread:$0]  %s417, 256, %s419, %s408, 64, 64, 4
        $region52: #{forward.1} parent=31 // pred_fallthru
          _
        // Predicated region
        $region53: #{forward.1} parent=31 // pred_check
          %p425 = pneg %p258
        $region54: #{forward.1} parent=31 // pred_check_branch
          %427 = sbr.rel (%p425) target = $region56
        $region55: #{forward.1} parent=31 // pred_region
          %p428 = scmp.lt.s32.totalorder %s24, 3
          %s429 = scalar_select %p428, %s24, 3
          %s430 = scalar_lea.vmem %s9, %s429
        $region56: #{forward.1} parent=31 // pred_fallthru
          _
      $region32: #{forward.1} parent=5 // pred_fallthru
        _
      %p431 = scmp.le.s32.totalorder 1, %s24
      %p432 = scmp.lt.s32.totalorder %s24, 5
      %p433 = pnand %p431, %p432
      %p434 = pneg %p433
      // Predicated region
      $region57: #{forward.1} parent=5 // pred_check
        _
      $region58: #{forward.1} parent=5 // pred_check_branch
        %436 = sbr.rel (%p433) target = $region60
      $region59: #{forward.1} parent=5 // pred_region
        %s437 = ssub.s32 %s24, 1
        // Predicated region
        $region61: #{forward.1} parent=59 // pred_check
          %p438 = pneg %p92
        $region62: #{forward.1} parent=59 // pred_check_branch
          %440 = sbr.rel (%p438) target = $region64
        $region63: #{forward.1} parent=59 // pred_region
          %441 = dma.done [#allocation3], 3072
        $region64: #{forward.1} parent=59 // pred_fallthru
          _
        // Predicated region
        $region65: #{forward.1} parent=59 // pred_check
          %p442 = pneg %p113
        $region66: #{forward.1} parent=59 // pred_check_branch
          %444 = sbr.rel (%p442) target = $region68
        $region67: #{forward.1} parent=59 // pred_region
          %445 = dma.done [#allocation5], 384
        $region68: #{forward.1} parent=59 // pred_fallthru
          _
        // Predicated region
        $region69: #{forward.1} parent=59 // pred_check
          %p446 = pneg %p134
        $region70: #{forward.1} parent=59 // pred_check_branch
          %448 = sbr.rel (%p446) target = $region72
        $region71: #{forward.1} parent=59 // pred_region
          %449 = dma.done [#allocation5], 32
        $region72: #{forward.1} parent=59 // pred_fallthru
          _
        %s450 = sand.u32 %s29, 1
        %s451 = scalar_lea.sflag [#allocation8], %s450
        %s452 = sand.u32 %s173, 1
        %s453 = smul.addr %s452, 32
        %s454 = scalar_lea.vmem [#allocation7], %s453
        // Predicated region
        $region73: #{forward.1} parent=59 // pred_check
          %p455 = pneg %p186
        $region74: #{forward.1} parent=59 // pred_check_branch
          %457 = sbr.rel (%p455) target = $region76
        $region75: #{forward.1} parent=59 // pred_region
          %458 = dma.done %s451, 512
        $region76: #{forward.1} parent=59 // pred_fallthru
          _
        %s459 = sand.u32 %s29, 1
        %s460 = scalar_lea.sflag [#allocation8], %s459
        %s461 = sand.u32 %s199, 1
        %s462 = smul.addr %s461, 2
        %s463 = scalar_lea.vmem [#allocation9], %s462
        // Predicated region
        $region77: #{forward.1} parent=59 // pred_check
          %p464 = pneg %p212
        $region78: #{forward.1} parent=59 // pred_check_branch
          %466 = sbr.rel (%p464) target = $region80
        $region79: #{forward.1} parent=59 // pred_region
          %467 = dma.done %s460, 32
        $region80: #{forward.1} parent=59 // pred_fallthru
          _
        %s468 = sand.u32 %s225, 1
        %s469 = scalar_lea.sflag [#allocation11], %s468
        %s470 = sand.u32 %s225, 1
        %s471 = smul.addr %s470, 16
        %s472 = scalar_lea.vmem [#allocation10], %s471
        // Predicated region
        $region81: #{forward.1} parent=59 // pred_check
          %p473 = pneg %p238
        $region82: #{forward.1} parent=59 // pred_check_branch
          %475 = sbr.rel (%p473) target = $region84
        $region83: #{forward.1} parent=59 // pred_region
          %476 = dma.done %s469, 256
        $region84: #{forward.1} parent=59 // pred_fallthru
          _
        %p477 = pneg %p45
        %p478 = pneg %p42
        %p479 = scmp.lt.s32.totalorder %s29, 3
        %s480 = scalar_select %p479, %s29, 3
        %s481 = smul.addr %s480, 2
        %s482 = smul.addr %s481, 8
        %s483 = scalar_lea.vmem %s1, %s482
        %p484 = pneg %p71
        %p485 = pneg %p68
        %p486 = pneg %p92
        %p487 = pneg %p89
        %p488 = pneg %p113
        %p489 = pneg %p110
        %p490 = pneg %p134
        %p491 = pneg %p131
        %p492 = scmp.lt.s32.totalorder %s29, 3
        %s493 = scalar_select %p492, %s29, 3
        %s494 = smul.addr %s493, 80
        %s495 = smul.addr %s494, 4
        %s496 = scalar_lea.vmem %s5, %s495
        %p497 = pneg %p160
        %p498 = pneg %p157
        %s499 = sand.u32 %s29, 1
        %s500 = scalar_lea.sflag [#allocation8], %s499
        %s501 = sand.u32 %s173, 1
        %s502 = smul.addr %s501, 32
        %s503 = scalar_lea.vmem [#allocation7], %s502
        %p504 = pneg %p186
        %p505 = pneg %p183
        %s506 = sand.u32 %s29, 1
        %s507 = scalar_lea.sflag [#allocation8], %s506
        %s508 = sand.u32 %s199, 1
        %s509 = smul.addr %s508, 2
        %s510 = scalar_lea.vmem [#allocation9], %s509
        %p511 = pneg %p212
        %p512 = pneg %p209
        %s513 = sand.u32 %s225, 1
        %s514 = scalar_lea.sflag [#allocation11], %s513
        %s515 = sand.u32 %s225, 1
        %s516 = smul.addr %s515, 16
        %s517 = scalar_lea.vmem [#allocation10], %s516
        %p518 = pneg %p238
        %p519 = pneg %p235
        %p520 = scmp.lt.s32.totalorder %s29, 3
        %s521 = scalar_select %p520, %s29, 3
        %s522 = scalar_lea.vmem %s9, %s521
        %p523 = pneg %p264
        %p524 = pneg %p261
        %p525 = pneg %p290
        %p526 = pneg %p287
        %p527 = scmp.lt.s32.totalorder %s29, 3
        %s528 = scalar_select %p527, %s29, 3
        %s529 = smul.addr %s528, 2
        %s530 = smul.addr %s529, 8
        %s531 = scalar_lea.vmem %s10, %s530
        %p532 = scmp.lt.s32.totalorder %s29, 3
        %s533 = scalar_select %p532, %s29, 3
        %s534 = smul.addr %s533, 2
        %s535 = smul.addr %s534, 8
        %s536 = scalar_lea.vmem %s1, %s535
        %p537 = scmp.lt.s32.totalorder %s29, 3
        %s538 = scalar_select %p537, %s29, 3
        %s539 = smul.addr %s538, 80
        %s540 = smul.addr %s539, 4
        %s541 = scalar_lea.vmem %s5, %s540
        %p542 = scmp.lt.s32.totalorder %s29, 3
        %s543 = scalar_select %p542, %s29, 3
        %s544 = scalar_lea.vmem %s9, %s543
        %p545 = scmp.lt.s32.totalorder %s29, 3
        %s546 = scalar_select %p545, %s29, 3
        %s547 = smul.addr %s546, 2
        %s548 = smul.addr %s547, 8
        %s549 = scalar_lea.vmem %s10, %s548
        %v551 = vld [vmem:[#allocation4] sm:$0xff]
        %v552 = vld [vmem:[#allocation4 + $0x8] sm:$0xff]
        %v553 = vld [vmem:[#allocation4 + $0x10] sm:$0xf]
        %v554 = vld [vmem:[%s454] sm:$0xff]
        %v555 = vld [vmem:[%s454 + $0x8] sm:$0xff]
        %v556 = vld [vmem:[%s454 + $0x10] sm:$0xff]
        %v557 = vld [vmem:[%s454 + $0x18] sm:$0xff]
        %v558 = vld [vmem:[#allocation6] sm:$0x3]
        %v559 = vld [vmem:[%s463] sm:$0x3]
        %v560 = vld [vmem:[%s0] sm:$0xff]
        %v561 = vld [vmem:[%s0 + $0x8] sm:$0xff]
        %v562 = vld [vmem:[#allocation2] sm:$0xf]
        %v563 = vld [vmem:[#allocation2 + $0x4] sm:$0xf]
        %v564 = vld [vmem:[#allocation2 + $0x8] sm:$0xf]
        %v565 = vld [vmem:[#allocation2 + $0xc] sm:$0xf]
        %v566 = vpack.c.bf16 %v561, %v560
        %v567 = vlaneseq
        %v568 = vshrl.u32 %v567, 7
        %v569 = vsub.s32 0, %v568
        %v570 = vrot.slane %v551, %v569
        %v575 = vunpack.c.l.b16 %v562
        %v576 = vunpack.c.l.b16 %v563
        %v577 = vunpack.c.l.b16 %v564
        %v578 = vunpack.c.l.b16 %v565
        %v579 = vpack.c.b16 %v576, %v575
        %v580 = vpack.c.b16 %v578, %v577
        %vm583 = vcmask 261120
        %v585 = vsel %vm583, %v566, 0
        %587 = vmatprep.subr.bf16.mxu0 0
        %588 = vmatpush1.bf16.msra.mxu0 %v579
        %589 = vmatprep.subr.bf16.mxu0 0
        %590 = vmatpush1.bf16.msra.mxu0 %v580
        %591 = vmatprep.subr.bf16.mxu0 0
        %592 = vmatpush1.bf16.msra.mxu0 0
        %593 = vmatprep.subr.bf16.mxu0 0
        %594 = vmatpush1.bf16.msra.mxu0 0
        %595 = vmatprep.subr.bf16.mxu0 0
        %596 = vmatpush1.bf16.msra.mxu0 0
        %597 = vmatprep.subr.bf16.mxu0 0
        %598 = vmatpush1.bf16.msra.mxu0 0
        %599 = vmatprep.subr.bf16.mxu0 0
        %600 = vmatpush1.bf16.msra.mxu0 0
        %601 = vmatprep.subr.bf16.mxu0 0
        %602 = vmatpush1.bf16.msra.mxu0 0
        %603 = vmatprep.subr.bf16.mxu0 0
        %604 = vmatpush1.bf16.msra.mxu0 0
        %605 = vmatprep.subr.bf16.mxu0 0
        %606 = vmatpush1.bf16.msra.mxu0 0
        %607 = vmatprep.subr.bf16.mxu0 0
        %608 = vmatpush1.bf16.msra.mxu0 0
        %609 = vmatprep.subr.bf16.mxu0 0
        %610 = vmatpush1.bf16.msra.mxu0 0
        %611 = vmatprep.subr.bf16.mxu0 0
        %612 = vmatpush1.bf16.msra.mxu0 0
        %613 = vmatprep.subr.bf16.mxu0 0
        %614 = vmatpush1.bf16.msra.mxu0 0
        %615 = vmatprep.subr.bf16.mxu0 0
        %616 = vmatpush1.bf16.msra.mxu0 0
        %617 = vmatprep.subr.bf16.mxu0 0
        %618 = vmatpush1.bf16.msra.mxu0 0
        %619 = vmatprep.mubr.bf16.mxu0 0
        %620 = vmatmul.mubr.bf16.gmra.mrb[0].mxu0 %v585
        %v621 = vpop.f32.mrb[0].mxu0
        %v622 = vadd.f32 %v570, %v621
        %v623 = vpop.f32.mrb[0].mxu0
        %v624 = vpop.f32.mrb[0].mxu0
        %v625 = vadd.f32 %v570, %v624
        %v626 = vpop.f32.mrb[0].mxu0
        %627 = vdwg.mxu0
        %s628 = scalar_lea.vmem [#allocation2], 16
        %v629 = vld [vmem:[%s628] sm:$0xf]
        %v630 = vld [vmem:[%s628 + $0x4] sm:$0xf]
        %v631 = vld [vmem:[%s628 + $0x8] sm:$0xf]
        %v632 = vld [vmem:[%s628 + $0xc] sm:$0xf]
        %v633 = vlaneseq
        %v634 = vshrl.u32 %v633, 7
        %v635 = vsub.s32 1, %v634
        %v636 = vrot.slane %v551, %v635
        %v641 = vunpack.c.l.b16 %v629
        %v642 = vunpack.c.l.b16 %v630
        %v643 = vunpack.c.l.b16 %v631
        %v644 = vunpack.c.l.b16 %v632
        %v645 = vpack.c.b16 %v642, %v641
        %v646 = vpack.c.b16 %v644, %v643
        %649 = vmatprep.subr.bf16.mxu0 0
        %650 = vmatpush1.bf16.msra.mxu0 %v645
        %651 = vmatprep.subr.bf16.mxu0 0
        %652 = vmatpush1.bf16.msra.mxu0 %v646
        %653 = vmatprep.subr.bf16.mxu0 0
        %654 = vmatpush1.bf16.msra.mxu0 0
        %655 = vmatprep.subr.bf16.mxu0 0
        %656 = vmatpush1.bf16.msra.mxu0 0
        %657 = vmatprep.subr.bf16.mxu0 0
        %658 = vmatpush1.bf16.msra.mxu0 0
        %659 = vmatprep.subr.bf16.mxu0 0
        %660 = vmatpush1.bf16.msra.mxu0 0
        %661 = vmatprep.subr.bf16.mxu0 0
        %662 = vmatpush1.bf16.msra.mxu0 0
        %663 = vmatprep.subr.bf16.mxu0 0
        %664 = vmatpush1.bf16.msra.mxu0 0
        %665 = vmatprep.subr.bf16.mxu0 0
        %666 = vmatpush1.bf16.msra.mxu0 0
        %667 = vmatprep.subr.bf16.mxu0 0
        %668 = vmatpush1.bf16.msra.mxu0 0
        %669 = vmatprep.subr.bf16.mxu0 0
        %670 = vmatpush1.bf16.msra.mxu0 0
        %671 = vmatprep.subr.bf16.mxu0 0
        %672 = vmatpush1.bf16.msra.mxu0 0
        %673 = vmatprep.subr.bf16.mxu0 0
        %674 = vmatpush1.bf16.msra.mxu0 0
        %675 = vmatprep.subr.bf16.mxu0 0
        %676 = vmatpush1.bf16.msra.mxu0 0
        %677 = vmatprep.subr.bf16.mxu0 0
        %678 = vmatpush1.bf16.msra.mxu0 0
        %679 = vmatprep.subr.bf16.mxu0 0
        %680 = vmatpush1.bf16.msra.mxu0 0
        %681 = vmatprep.mubr.bf16.mxu0 0
        %682 = vmatmul.mubr.bf16.gmra.mrb[0].mxu0 %v585
        %v683 = vpop.f32.mrb[0].mxu0
        %v684 = vadd.f32 %v636, %v683
        %v685 = vpop.f32.mrb[0].mxu0
        %v686 = vpop.f32.mrb[0].mxu0
        %v687 = vadd.f32 %v636, %v686
        %v688 = vpop.f32.mrb[0].mxu0
        %689 = vdwg.mxu0
        %s690 = scalar_lea.vmem [#allocation2], 32
        %v691 = vld [vmem:[%s690] sm:$0xf]
        %v692 = vld [vmem:[%s690 + $0x4] sm:$0xf]
        %v693 = vld [vmem:[%s690 + $0x8] sm:$0xf]
        %v694 = vld [vmem:[%s690 + $0xc] sm:$0xf]
        %v695 = vlaneseq
        %v696 = vshrl.u32 %v695, 7
        %v697 = vsub.s32 2, %v696
        %v698 = vrot.slane %v551, %v697
        %v703 = vunpack.c.l.b16 %v691
        %v704 = vunpack.c.l.b16 %v692
        %v705 = vunpack.c.l.b16 %v693
        %v706 = vunpack.c.l.b16 %v694
        %v707 = vpack.c.b16 %v704, %v703
        %v708 = vpack.c.b16 %v706, %v705
        %711 = vmatprep.subr.bf16.mxu0 0
        %712 = vmatpush1.bf16.msra.mxu0 %v707
        %713 = vmatprep.subr.bf16.mxu0 0
        %714 = vmatpush1.bf16.msra.mxu0 %v708
        %715 = vmatprep.subr.bf16.mxu0 0
        %716 = vmatpush1.bf16.msra.mxu0 0
        %717 = vmatprep.subr.bf16.mxu0 0
        %718 = vmatpush1.bf16.msra.mxu0 0
        %719 = vmatprep.subr.bf16.mxu0 0
        %720 = vmatpush1.bf16.msra.mxu0 0
        %721 = vmatprep.subr.bf16.mxu0 0
        %722 = vmatpush1.bf16.msra.mxu0 0
        %723 = vmatprep.subr.bf16.mxu0 0
        %724 = vmatpush1.bf16.msra.mxu0 0
        %725 = vmatprep.subr.bf16.mxu0 0
        %726 = vmatpush1.bf16.msra.mxu0 0
        %727 = vmatprep.subr.bf16.mxu0 0
        %728 = vmatpush1.bf16.msra.mxu0 0
        %729 = vmatprep.subr.bf16.mxu0 0
        %730 = vmatpush1.bf16.msra.mxu0 0
        %731 = vmatprep.subr.bf16.mxu0 0
        %732 = vmatpush1.bf16.msra.mxu0 0
        %733 = vmatprep.subr.bf16.mxu0 0
        %734 = vmatpush1.bf16.msra.mxu0 0
        %735 = vmatprep.subr.bf16.mxu0 0
        %736 = vmatpush1.bf16.msra.mxu0 0
        %737 = vmatprep.subr.bf16.mxu0 0
        %738 = vmatpush1.bf16.msra.mxu0 0
        %739 = vmatprep.subr.bf16.mxu0 0
        %740 = vmatpush1.bf16.msra.mxu0 0
        %741 = vmatprep.subr.bf16.mxu0 0
        %742 = vmatpush1.bf16.msra.mxu0 0
        %743 = vmatprep.mubr.bf16.mxu0 0
        %744 = vmatmul.mubr.bf16.gmra.mrb[0].mxu0 %v585
        %v745 = vpop.f32.mrb[0].mxu0
        %v746 = vadd.f32 %v698, %v745
        %v747 = vpop.f32.mrb[0].mxu0
        %v748 = vpop.f32.mrb[0].mxu0
        %v749 = vadd.f32 %v698, %v748
        %v750 = vpop.f32.mrb[0].mxu0
        %751 = vdwg.mxu0
        %s752 = scalar_lea.vmem [#allocation2], 48
        %v753 = vld [vmem:[%s752] sm:$0xf]
        %v754 = vld [vmem:[%s752 + $0x4] sm:$0xf]
        %v755 = vld [vmem:[%s752 + $0x8] sm:$0xf]
        %v756 = vld [vmem:[%s752 + $0xc] sm:$0xf]
        %v757 = vmul.f32 %v622, 0.35355338
        %v758 = vmul.f32 %v625, 0.35355338
        %v759 = vpack.c.bf16 %v757, %v757
        %v760 = vpack.c.bf16 %v758, %v758
        %v761 = vpack.c.bf16 %v684, %v684
        %v762 = vpack.c.bf16 %v687, %v687
        %v763 = vpack.c.bf16 %v746, %v746
        %v764 = vpack.c.bf16 %v749, %v749
        %vm765 = vcmask 64512
        %v767 = vsel %vm765, %v759, 0
        %v770 = vsel %vm765, %v761, 0
        %772 = vmatprep.subr.bf16.mxu0 0
        %773 = vmatpush1.bf16.xpose.msra.mxu0 %v770
        %774 = vmatprep.subr.bf16.mxu0 0
        %775 = vmatpush1.bf16.xpose.msra.mxu0 0
        %776 = vmatprep.subr.bf16.mxu0 0
        %777 = vmatpush1.bf16.xpose.msra.mxu0 0
        %778 = vmatprep.subr.bf16.mxu0 0
        %779 = vmatpush1.bf16.xpose.msra.mxu0 0
        %780 = vmatprep.subr.bf16.mxu0 0
        %781 = vmatpush1.bf16.xpose.msra.mxu0 0
        %782 = vmatprep.subr.bf16.mxu0 0
        %783 = vmatpush1.bf16.xpose.msra.mxu0 0
        %784 = vmatprep.subr.bf16.mxu0 0
        %785 = vmatpush1.bf16.xpose.msra.mxu0 0
        %786 = vmatprep.subr.bf16.mxu0 0
        %787 = vmatpush1.bf16.xpose.msra.mxu0 0
        %788 = vmatprep.subr.bf16.mxu0 0
        %789 = vmatpush1.bf16.xpose.msra.mxu0 0
        %790 = vmatprep.subr.bf16.mxu0 0
        %791 = vmatpush1.bf16.xpose.msra.mxu0 0
        %792 = vmatprep.subr.bf16.mxu0 0
        %793 = vmatpush1.bf16.xpose.msra.mxu0 0
        %794 = vmatprep.subr.bf16.mxu0 0
        %795 = vmatpush1.bf16.xpose.msra.mxu0 0
        %796 = vmatprep.subr.bf16.mxu0 0
        %797 = vmatpush1.bf16.xpose.msra.mxu0 0
        %798 = vmatprep.subr.bf16.mxu0 0
        %799 = vmatpush1.bf16.xpose.msra.mxu0 0
        %800 = vmatprep.subr.bf16.mxu0 0
        %801 = vmatpush1.bf16.xpose.msra.mxu0 0
        %802 = vmatprep.subr.bf16.mxu0 0
        %803 = vmatpush1.bf16.xpose.msra.mxu0 0
        %804 = vmatprep.mubr.bf16.mxu0 0
        %805 = vmatmul.mubr.bf16.gmra.mrb[0].mxu0 %v767
        %v806 = vpop.f32.mrb[0].mxu0
        %v807 = vadd.f32 0.0, %v806
        %v808 = vpop.f32.mrb[0].mxu0
        %v809 = vpop.f32.mrb[0].mxu0
        %v810 = vpop.f32.mrb[0].mxu0
        %811 = vdwg.mxu0
        %v813 = vsel %vm765, %v760, 0
        %v816 = vsel %vm765, %v762, 0
        %818 = vmatprep.subr.bf16.mxu0 0
        %819 = vmatpush1.bf16.xpose.msra.mxu0 %v816
        %820 = vmatprep.subr.bf16.mxu0 0
        %821 = vmatpush1.bf16.xpose.msra.mxu0 0
        %822 = vmatprep.subr.bf16.mxu0 0
        %823 = vmatpush1.bf16.xpose.msra.mxu0 0
        %824 = vmatprep.subr.bf16.mxu0 0
        %825 = vmatpush1.bf16.xpose.msra.mxu0 0
        %826 = vmatprep.subr.bf16.mxu0 0
        %827 = vmatpush1.bf16.xpose.msra.mxu0 0
        %828 = vmatprep.subr.bf16.mxu0 0
        %829 = vmatpush1.bf16.xpose.msra.mxu0 0
        %830 = vmatprep.subr.bf16.mxu0 0
        %831 = vmatpush1.bf16.xpose.msra.mxu0 0
        %832 = vmatprep.subr.bf16.mxu0 0
        %833 = vmatpush1.bf16.xpose.msra.mxu0 0
        %834 = vmatprep.subr.bf16.mxu0 0
        %835 = vmatpush1.bf16.xpose.msra.mxu0 0
        %836 = vmatprep.subr.bf16.mxu0 0
        %837 = vmatpush1.bf16.xpose.msra.mxu0 0
        %838 = vmatprep.subr.bf16.mxu0 0
        %839 = vmatpush1.bf16.xpose.msra.mxu0 0
        %840 = vmatprep.subr.bf16.mxu0 0
        %841 = vmatpush1.bf16.xpose.msra.mxu0 0
        %842 = vmatprep.subr.bf16.mxu0 0
        %843 = vmatpush1.bf16.xpose.msra.mxu0 0
        %844 = vmatprep.subr.bf16.mxu0 0
        %845 = vmatpush1.bf16.xpose.msra.mxu0 0
        %846 = vmatprep.subr.bf16.mxu0 0
        %847 = vmatpush1.bf16.xpose.msra.mxu0 0
        %848 = vmatprep.subr.bf16.mxu0 0
        %849 = vmatpush1.bf16.xpose.msra.mxu0 0
        %850 = vmatprep.mubr.bf16.mxu0 0
        %851 = vmatmul.mubr.bf16.gmra.mrb[0].mxu0 %v813
        %v852 = vpop.f32.mrb[0].mxu0
        %v853 = vadd.f32 0.0, %v852
        %v854 = vpop.f32.mrb[0].mxu0
        %v855 = vpop.f32.mrb[0].mxu0
        %v856 = vpop.f32.mrb[0].mxu0
        %857 = vdwg.mxu0
        %859 = vrot.lane.b32.xlu0 %v759, 120
        %v860 = vpop.permute.xlu0 %859
        %862 = vrot.lane.b32.xlu0 %v761, 120
        %v863 = vpop.permute.xlu0 %862
        %v865 = vsel %vm765, %v860, 0
        %v868 = vsel %vm765, %v863, 0
        %870 = vmatprep.subr.bf16.mxu0 0
        %871 = vmatpush1.bf16.xpose.msra.mxu0 %v868
        %872 = vmatprep.subr.bf16.mxu0 0
        %873 = vmatpush1.bf16.xpose.msra.mxu0 0
        %874 = vmatprep.subr.bf16.mxu0 0
        %875 = vmatpush1.bf16.xpose.msra.mxu0 0
        %876 = vmatprep.subr.bf16.mxu0 0
        %877 = vmatpush1.bf16.xpose.msra.mxu0 0
        %878 = vmatprep.subr.bf16.mxu0 0
        %879 = vmatpush1.bf16.xpose.msra.mxu0 0
        %880 = vmatprep.subr.bf16.mxu0 0
        %881 = vmatpush1.bf16.xpose.msra.mxu0 0
        %882 = vmatprep.subr.bf16.mxu0 0
        %883 = vmatpush1.bf16.xpose.msra.mxu0 0
        %884 = vmatprep.subr.bf16.mxu0 0
        %885 = vmatpush1.bf16.xpose.msra.mxu0 0
        %886 = vmatprep.subr.bf16.mxu0 0
        %887 = vmatpush1.bf16.xpose.msra.mxu0 0
        %888 = vmatprep.subr.bf16.mxu0 0
        %889 = vmatpush1.bf16.xpose.msra.mxu0 0
        %890 = vmatprep.subr.bf16.mxu0 0
        %891 = vmatpush1.bf16.xpose.msra.mxu0 0
        %892 = vmatprep.subr.bf16.mxu0 0
        %893 = vmatpush1.bf16.xpose.msra.mxu0 0
        %894 = vmatprep.subr.bf16.mxu0 0
        %895 = vmatpush1.bf16.xpose.msra.mxu0 0
        %896 = vmatprep.subr.bf16.mxu0 0
        %897 = vmatpush1.bf16.xpose.msra.mxu0 0
        %898 = vmatprep.subr.bf16.mxu0 0
        %899 = vmatpush1.bf16.xpose.msra.mxu0 0
        %900 = vmatprep.subr.bf16.mxu0 0
        %901 = vmatpush1.bf16.xpose.msra.mxu0 0
        %902 = vmatprep.mubr.bf16.mxu0 0
        %903 = vmatmul.mubr.bf16.gmra.mrb[0].mxu0 %v865
        %v904 = vpop.f32.mrb[0].mxu0
        %v905 = vadd.f32 0.0, %v904
        %v906 = vpop.f32.mrb[0].mxu0
        %v907 = vpop.f32.mrb[0].mxu0
        %v908 = vpop.f32.mrb[0].mxu0
        %909 = vdwg.mxu0
        %911 = vrot.lane.b32.xlu0 %v760, 120
        %v912 = vpop.permute.xlu0 %911
        %914 = vrot.lane.b32.xlu0 %v762, 120
        %v915 = vpop.permute.xlu0 %914
        %v917 = vsel %vm765, %v912, 0
        %v920 = vsel %vm765, %v915, 0
        %922 = vmatprep.subr.bf16.mxu0 0
        %923 = vmatpush1.bf16.xpose.msra.mxu0 %v920
        %924 = vmatprep.subr.bf16.mxu0 0
        %925 = vmatpush1.bf16.xpose.msra.mxu0 0
        %926 = vmatprep.subr.bf16.mxu0 0
        %927 = vmatpush1.bf16.xpose.msra.mxu0 0
        %928 = vmatprep.subr.bf16.mxu0 0
        %929 = vmatpush1.bf16.xpose.msra.mxu0 0
        %930 = vmatprep.subr.bf16.mxu0 0
        %931 = vmatpush1.bf16.xpose.msra.mxu0 0
        %932 = vmatprep.subr.bf16.mxu0 0
        %933 = vmatpush1.bf16.xpose.msra.mxu0 0
        %934 = vmatprep.subr.bf16.mxu0 0
        %935 = vmatpush1.bf16.xpose.msra.mxu0 0
        %936 = vmatprep.subr.bf16.mxu0 0
        %937 = vmatpush1.bf16.xpose.msra.mxu0 0
        %938 = vmatprep.subr.bf16.mxu0 0
        %939 = vmatpush1.bf16.xpose.msra.mxu0 0
        %940 = vmatprep.subr.bf16.mxu0 0
        %941 = vmatpush1.bf16.xpose.msra.mxu0 0
        %942 = vmatprep.subr.bf16.mxu0 0
        %943 = vmatpush1.bf16.xpose.msra.mxu0 0
        %944 = vmatprep.subr.bf16.mxu0 0
        %945 = vmatpush1.bf16.xpose.msra.mxu0 0
        %946 = vmatprep.subr.bf16.mxu0 0
        %947 = vmatpush1.bf16.xpose.msra.mxu0 0
        %948 = vmatprep.subr.bf16.mxu0 0
        %949 = vmatpush1.bf16.xpose.msra.mxu0 0
        %950 = vmatprep.subr.bf16.mxu0 0
        %951 = vmatpush1.bf16.xpose.msra.mxu0 0
        %952 = vmatprep.subr.bf16.mxu0 0
        %953 = vmatpush1.bf16.xpose.msra.mxu0 0
        %954 = vmatprep.mubr.bf16.mxu0 0
        %955 = vmatmul.mubr.bf16.gmra.mrb[0].mxu0 %v917
        %v956 = vpop.f32.mrb[0].mxu0
        %v957 = vadd.f32 0.0, %v956
        %v958 = vpop.f32.mrb[0].mxu0
        %v959 = vpop.f32.mrb[0].mxu0
        %v960 = vpop.f32.mrb[0].mxu0
        %961 = vdwg.mxu0
        %962 = vrot.lane.b32.xlu0 %v759, 112
        %v963 = vpop.permute.xlu0 %962
        %964 = vrot.lane.b32.xlu0 %v761, 112
        %v965 = vpop.permute.xlu0 %964
        %v967 = vsel %vm765, %v963, 0
        %v970 = vsel %vm765, %v965, 0
        %972 = vmatprep.subr.bf16.mxu0 0
        %973 = vmatpush1.bf16.xpose.msra.mxu0 %v970
        %974 = vmatprep.subr.bf16.mxu0 0
        %975 = vmatpush1.bf16.xpose.msra.mxu0 0
        %976 = vmatprep.subr.bf16.mxu0 0
        %977 = vmatpush1.bf16.xpose.msra.mxu0 0
        %978 = vmatprep.subr.bf16.mxu0 0
        %979 = vmatpush1.bf16.xpose.msra.mxu0 0
        %980 = vmatprep.subr.bf16.mxu0 0
        %981 = vmatpush1.bf16.xpose.msra.mxu0 0
        %982 = vmatprep.subr.bf16.mxu0 0
        %983 = vmatpush1.bf16.xpose.msra.mxu0 0
        %984 = vmatprep.subr.bf16.mxu0 0
        %985 = vmatpush1.bf16.xpose.msra.mxu0 0
        %986 = vmatprep.subr.bf16.mxu0 0
        %987 = vmatpush1.bf16.xpose.msra.mxu0 0
        %988 = vmatprep.subr.bf16.mxu0 0
        %989 = vmatpush1.bf16.xpose.msra.mxu0 0
        %990 = vmatprep.subr.bf16.mxu0 0
        %991 = vmatpush1.bf16.xpose.msra.mxu0 0
        %992 = vmatprep.subr.bf16.mxu0 0
        %993 = vmatpush1.bf16.xpose.msra.mxu0 0
        %994 = vmatprep.subr.bf16.mxu0 0
        %995 = vmatpush1.bf16.xpose.msra.mxu0 0
        %996 = vmatprep.subr.bf16.mxu0 0
        %997 = vmatpush1.bf16.xpose.msra.mxu0 0
        %998 = vmatprep.subr.bf16.mxu0 0
        %999 = vmatpush1.bf16.xpose.msra.mxu0 0
        %1000 = vmatprep.subr.bf16.mxu0 0
        %1001 = vmatpush1.bf16.xpose.msra.mxu0 0
        %1002 = vmatprep.subr.bf16.mxu0 0
        %1003 = vmatpush1.bf16.xpose.msra.mxu0 0
        %1004 = vmatprep.mubr.bf16.mxu0 0
        %1005 = vmatmul.mubr.bf16.gmra.mrb[0].mxu0 %v967
        %v1006 = vpop.f32.mrb[0].mxu0
        %v1007 = vadd.f32 0.0, %v1006
        %v1008 = vpop.f32.mrb[0].mxu0
        %v1009 = vpop.f32.mrb[0].mxu0
        %v1010 = vpop.f32.mrb[0].mxu0
        %1011 = vdwg.mxu0
        %1012 = vrot.lane.b32.xlu0 %v760, 112
        %v1013 = vpop.permute.xlu0 %1012
        %1014 = vrot.lane.b32.xlu0 %v762, 112
        %v1015 = vpop.permute.xlu0 %1014
        %v1017 = vsel %vm765, %v1013, 0
        %v1020 = vsel %vm765, %v1015, 0
        %1022 = vmatprep.subr.bf16.mxu0 0
        %1023 = vmatpush1.bf16.xpose.msra.mxu0 %v1020
        %1024 = vmatprep.subr.bf16.mxu0 0
        %1025 = vmatpush1.bf16.xpose.msra.mxu0 0
        %1026 = vmatprep.subr.bf16.mxu0 0
        %1027 = vmatpush1.bf16.xpose.msra.mxu0 0
        %1028 = vmatprep.subr.bf16.mxu0 0
        %1029 = vmatpush1.bf16.xpose.msra.mxu0 0
        %1030 = vmatprep.subr.bf16.mxu0 0
        %1031 = vmatpush1.bf16.xpose.msra.mxu0 0
        %1032 = vmatprep.subr.bf16.mxu0 0
        %1033 = vmatpush1.bf16.xpose.msra.mxu0 0
        %1034 = vmatprep.subr.bf16.mxu0 0
        %1035 = vmatpush1.bf16.xpose.msra.mxu0 0
        %1036 = vmatprep.subr.bf16.mxu0 0
        %1037 = vmatpush1.bf16.xpose.msra.mxu0 0
        %1038 = vmatprep.subr.bf16.mxu0 0
        %1039 = vmatpush1.bf16.xpose.msra.mxu0 0
        %1040 = vmatprep.subr.bf16.mxu0 0
        %1041 = vmatpush1.bf16.xpose.msra.mxu0 0
        %1042 = vmatprep.subr.bf16.mxu0 0
        %1043 = vmatpush1.bf16.xpose.msra.mxu0 0
        %1044 = vmatprep.subr.bf16.mxu0 0
        %1045 = vmatpush1.bf16.xpose.msra.mxu0 0
        %1046 = vmatprep.subr.bf16.mxu0 0
        %1047 = vmatpush1.bf16.xpose.msra.mxu0 0
        %1048 = vmatprep.subr.bf16.mxu0 0
        %1049 = vmatpush1.bf16.xpose.msra.mxu0 0
        %1050 = vmatprep.subr.bf16.mxu0 0
        %1051 = vmatpush1.bf16.xpose.msra.mxu0 0
        %1052 = vmatprep.subr.bf16.mxu0 0
        %1053 = vmatpush1.bf16.xpose.msra.mxu0 0
        %1054 = vmatprep.mubr.bf16.mxu0 0
        %1055 = vmatmul.mubr.bf16.gmra.mrb[0].mxu0 %v1017
        %v1056 = vpop.f32.mrb[0].mxu0
        %v1057 = vadd.f32 0.0, %v1056
        %v1058 = vpop.f32.mrb[0].mxu0
        %v1059 = vpop.f32.mrb[0].mxu0
        %v1060 = vpop.f32.mrb[0].mxu0
        %1061 = vdwg.mxu0
        %1062 = vrot.lane.b32.xlu0 %v759, 104
        %v1063 = vpop.permute.xlu0 %1062
        %1064 = vrot.lane.b32.xlu0 %v761, 104
        %v1065 = vpop.permute.xlu0 %1064
        %v1067 = vsel %vm765, %v1063, 0
        %v1070 = vsel %vm765, %v1065, 0
        %1072 = vmatprep.subr.bf16.mxu0 0
        %1073 = vmatpush1.bf16.xpose.msra.mxu0 %v1070
        %1074 = vmatprep.subr.bf16.mxu0 0
        %1075 = vmatpush1.bf16.xpose.msra.mxu0 0
        %1076 = vmatprep.subr.bf16.mxu0 0
        %1077 = vmatpush1.bf16.xpose.msra.mxu0 0
        %1078 = vmatprep.subr.bf16.mxu0 0
        %1079 = vmatpush1.bf16.xpose.msra.mxu0 0
        %1080 = vmatprep.subr.bf16.mxu0 0
        %1081 = vmatpush1.bf16.xpose.msra.mxu0 0
        %1082 = vmatprep.subr.bf16.mxu0 0
        %1083 = vmatpush1.bf16.xpose.msra.mxu0 0
        %1084 = vmatprep.subr.bf16.mxu0 0
        %1085 = vmatpush1.bf16.xpose.msra.mxu0 0
        %1086 = vmatprep.subr.bf16.mxu0 0
        %1087 = vmatpush1.bf16.xpose.msra.mxu0 0
        %1088 = vmatprep.subr.bf16.mxu0 0
        %1089 = vmatpush1.bf16.xpose.msra.mxu0 0
        %1090 = vmatprep.subr.bf16.mxu0 0
        %1091 = vmatpush1.bf16.xpose.msra.mxu0 0
        %1092 = vmatprep.subr.bf16.mxu0 0
        %1093 = vmatpush1.bf16.xpose.msra.mxu0 0
        %1094 = vmatprep.subr.bf16.mxu0 0
        %1095 = vmatpush1.bf16.xpose.msra.mxu0 0
        %1096 = vmatprep.subr.bf16.mxu0 0
        %1097 = vmatpush1.bf16.xpose.msra.mxu0 0
        %1098 = vmatprep.subr.bf16.mxu0 0
        %1099 = vmatpush1.bf16.xpose.msra.mxu0 0
        %1100 = vmatprep.subr.bf16.mxu0 0
        %1101 = vmatpush1.bf16.xpose.msra.mxu0 0
        %1102 = vmatprep.subr.bf16.mxu0 0
        %1103 = vmatpush1.bf16.xpose.msra.mxu0 0
        %1104 = vmatprep.mubr.bf16.mxu0 0
        %1105 = vmatmul.mubr.bf16.gmra.mrb[0].mxu0 %v1067
        %v1106 = vpop.f32.mrb[0].mxu0
        %v1107 = vadd.f32 0.0, %v1106
        %v1108 = vpop.f32.mrb[0].mxu0
        %v1109 = vpop.f32.mrb[0].mxu0
        %v1110 = vpop.f32.mrb[0].mxu0
        %1111 = vdwg.mxu0
        %1112 = vrot.lane.b32.xlu0 %v760, 104
        %v1113 = vpop.permute.xlu0 %1112
        %1114 = vrot.lane.b32.xlu0 %v762, 104
        %v1115 = vpop.permute.xlu0 %1114
        %v1117 = vsel %vm765, %v1113, 0
        %v1120 = vsel %vm765, %v1115, 0
        %1122 = vmatprep.subr.bf16.mxu0 0
        %1123 = vmatpush1.bf16.xpose.msra.mxu0 %v1120
        %1124 = vmatprep.subr.bf16.mxu0 0
        %1125 = vmatpush1.bf16.xpose.msra.mxu0 0
        %1126 = vmatprep.subr.bf16.mxu0 0
        %1127 = vmatpush1.bf16.xpose.msra.mxu0 0
        %1128 = vmatprep.subr.bf16.mxu0 0
        %1129 = vmatpush1.bf16.xpose.msra.mxu0 0
        %1130 = vmatprep.subr.bf16.mxu0 0
        %1131 = vmatpush1.bf16.xpose.msra.mxu0 0
        %1132 = vmatprep.subr.bf16.mxu0 0
        %1133 = vmatpush1.bf16.xpose.msra.mxu0 0
        %1134 = vmatprep.subr.bf16.mxu0 0
        %1135 = vmatpush1.bf16.xpose.msra.mxu0 0
        %1136 = vmatprep.subr.bf16.mxu0 0
        %1137 = vmatpush1.bf16.xpose.msra.mxu0 0
        %1138 = vmatprep.subr.bf16.mxu0 0
        %1139 = vmatpush1.bf16.xpose.msra.mxu0 0
        %1140 = vmatprep.subr.bf16.mxu0 0
        %1141 = vmatpush1.bf16.xpose.msra.mxu0 0
        %1142 = vmatprep.subr.bf16.mxu0 0
        %1143 = vmatpush1.bf16.xpose.msra.mxu0 0
        %1144 = vmatprep.subr.bf16.mxu0 0
        %1145 = vmatpush1.bf16.xpose.msra.mxu0 0
        %1146 = vmatprep.subr.bf16.mxu0 0
        %1147 = vmatpush1.bf16.xpose.msra.mxu0 0
        %1148 = vmatprep.subr.bf16.mxu0 0
        %1149 = vmatpush1.bf16.xpose.msra.mxu0 0
        %1150 = vmatprep.subr.bf16.mxu0 0
        %1151 = vmatpush1.bf16.xpose.msra.mxu0 0
        %1152 = vmatprep.subr.bf16.mxu0 0
        %1153 = vmatpush1.bf16.xpose.msra.mxu0 0
        %1154 = vmatprep.mubr.bf16.mxu0 0
        %1155 = vmatmul.mubr.bf16.gmra.mrb[0].mxu0 %v1117
        %v1156 = vpop.f32.mrb[0].mxu0
        %v1157 = vadd.f32 0.0, %v1156
        %v1158 = vpop.f32.mrb[0].mxu0
        %v1159 = vpop.f32.mrb[0].mxu0
        %v1160 = vpop.f32.mrb[0].mxu0
        %1161 = vdwg.mxu0
        %v1162 = vsel %vm765, %v807, -inf
        %1163 = vmax.xlane.f32.xlu0 %v1162
        %v1164 = vpop.xlane.xlu0 %1163
        %v1165 = vsel %vm765, %v905, -inf
        %1166 = vmax.xlane.f32.xlu0 %v1165
        %v1167 = vpop.xlane.xlu0 %1166
        %v1168 = vsel %vm765, %v1007, -inf
        %1169 = vmax.xlane.f32.xlu0 %v1168
        %v1170 = vpop.xlane.xlu0 %1169
        %v1171 = vsel %vm765, %v1107, -inf
        %1172 = vmax.xlane.f32.xlu0 %v1171
        %v1173 = vpop.xlane.xlu0 %1172
        %v1174 = vsel %vm765, %v853, -inf
        %1175 = vmax.xlane.f32.xlu0 %v1174
        %v1176 = vpop.xlane.xlu0 %1175
        %v1177 = vsel %vm765, %v957, -inf
        %1178 = vmax.xlane.f32.xlu0 %v1177
        %v1179 = vpop.xlane.xlu0 %1178
        %v1180 = vsel %vm765, %v1057, -inf
        %1181 = vmax.xlane.f32.xlu0 %v1180
        %v1182 = vpop.xlane.xlu0 %1181
        %v1183 = vsel %vm765, %v1157, -inf
        %1184 = vmax.xlane.f32.xlu0 %v1183
        %v1185 = vpop.xlane.xlu0 %1184
        %v1186 = vsub.f32 %v807, %v1164
        %v1187 = vsub.f32 %v905, %v1167
        %v1188 = vsub.f32 %v1007, %v1170
        %v1189 = vsub.f32 %v1107, %v1173
        %v1190 = vsub.f32 %v853, %v1176
        %v1191 = vsub.f32 %v957, %v1179
        %v1192 = vsub.f32 %v1057, %v1182
        %v1193 = vsub.f32 %v1157, %v1185
        %v1194 = vmul.f32 %v1186, 1.442695
        %v1195 = vpow.pop %v1194
        %v1196 = vmul.f32 %v1187, 1.442695
        %v1197 = vpow.pop %v1196
        %v1198 = vmul.f32 %v1188, 1.442695
        %v1199 = vpow.pop %v1198
        %v1200 = vmul.f32 %v1189, 1.442695
        %v1201 = vpow.pop %v1200
        %v1202 = vmul.f32 %v1190, 1.442695
        %v1203 = vpow.pop %v1202
        %v1204 = vmul.f32 %v1191, 1.442695
        %v1205 = vpow.pop %v1204
        %v1206 = vmul.f32 %v1192, 1.442695
        %v1207 = vpow.pop %v1206
        %v1208 = vmul.f32 %v1193, 1.442695
        %v1209 = vpow.pop %v1208
        %v1210 = vsel %vm765, %v1195, 0.0
        %1211 = vadd.xlane.f32.xlu0 %v1210
        %v1212 = vpop.xlane.xlu0 %1211
        %v1213 = vsel %vm765, %v1197, 0.0
        %1214 = vadd.xlane.f32.xlu0 %v1213
        %v1215 = vpop.xlane.xlu0 %1214
        %v1216 = vsel %vm765, %v1199, 0.0
        %1217 = vadd.xlane.f32.xlu0 %v1216
        %v1218 = vpop.xlane.xlu0 %1217
        %v1219 = vsel %vm765, %v1201, 0.0
        %1220 = vadd.xlane.f32.xlu0 %v1219
        %v1221 = vpop.xlane.xlu0 %1220
        %v1222 = vsel %vm765, %v1203, 0.0
        %1223 = vadd.xlane.f32.xlu0 %v1222
        %v1224 = vpop.xlane.xlu0 %1223
        %v1225 = vsel %vm765, %v1205, 0.0
        %1226 = vadd.xlane.f32.xlu0 %v1225
        %v1227 = vpop.xlane.xlu0 %1226
        %v1228 = vsel %vm765, %v1207, 0.0
        %1229 = vadd.xlane.f32.xlu0 %v1228
        %v1230 = vpop.xlane.xlu0 %1229
        %v1231 = vsel %vm765, %v1209, 0.0
        %1232 = vadd.xlane.f32.xlu0 %v1231
        %v1233 = vpop.xlane.xlu0 %1232
        %v1234 = vrcp.pop %v1212
        %v1235 = vmul.f32 %v1195, %v1234
        %v1236 = vrcp.pop %v1215
        %v1237 = vmul.f32 %v1197, %v1236
        %v1238 = vrcp.pop %v1218
        %v1239 = vmul.f32 %v1199, %v1238
        %v1240 = vrcp.pop %v1221
        %v1241 = vmul.f32 %v1201, %v1240
        %v1242 = vrcp.pop %v1224
        %v1243 = vmul.f32 %v1203, %v1242
        %v1244 = vrcp.pop %v1227
        %v1245 = vmul.f32 %v1205, %v1244
        %v1246 = vrcp.pop %v1230
        %v1247 = vmul.f32 %v1207, %v1246
        %v1248 = vrcp.pop %v1233
        %v1249 = vmul.f32 %v1209, %v1248
        %v1250 = vpack.c.bf16 %v1237, %v1235
        %v1251 = vpack.c.bf16 %v1241, %v1239
        %v1252 = vpack.c.bf16 %v1245, %v1243
        %v1253 = vpack.c.bf16 %v1249, %v1247
        %v1255 = vsel %vm765, %v1250, 0
        %vm1257 = vcmask 1043456
        %v1259 = vsel %vm1257, %v763, 0
        %1261 = vmatprep.subr.bf16.mxu0 0
        %1262 = vmatpush1.bf16.msra.mxu0 %v1259
        %1263 = vmatprep.subr.bf16.mxu0 0
        %1264 = vmatpush1.bf16.msra.mxu0 0
        %1265 = vmatprep.subr.bf16.mxu0 0
        %1266 = vmatpush1.bf16.msra.mxu0 0
        %1267 = vmatprep.subr.bf16.mxu0 0
        %1268 = vmatpush1.bf16.msra.mxu0 0
        %1269 = vmatprep.subr.bf16.mxu0 0
        %1270 = vmatpush1.bf16.msra.mxu0 0
        %1271 = vmatprep.subr.bf16.mxu0 0
        %1272 = vmatpush1.bf16.msra.mxu0 0
        %1273 = vmatprep.subr.bf16.mxu0 0
        %1274 = vmatpush1.bf16.msra.mxu0 0
        %1275 = vmatprep.subr.bf16.mxu0 0
        %1276 = vmatpush1.bf16.msra.mxu0 0
        %1277 = vmatprep.subr.bf16.mxu0 0
        %1278 = vmatpush1.bf16.msra.mxu0 0
        %1279 = vmatprep.subr.bf16.mxu0 0
        %1280 = vmatpush1.bf16.msra.mxu0 0
        %1281 = vmatprep.subr.bf16.mxu0 0
        %1282 = vmatpush1.bf16.msra.mxu0 0
        %1283 = vmatprep.subr.bf16.mxu0 0
        %1284 = vmatpush1.bf16.msra.mxu0 0
        %1285 = vmatprep.subr.bf16.mxu0 0
        %1286 = vmatpush1.bf16.msra.mxu0 0
        %1287 = vmatprep.subr.bf16.mxu0 0
        %1288 = vmatpush1.bf16.msra.mxu0 0
        %1289 = vmatprep.subr.bf16.mxu0 0
        %1290 = vmatpush1.bf16.msra.mxu0 0
        %1291 = vmatprep.subr.bf16.mxu0 0
        %1292 = vmatpush1.bf16.msra.mxu0 0
        %1293 = vmatprep.mubr.bf16.mxu0 0
        %1294 = vmatmul.mubr.bf16.gmra.mrb[0].mxu0 %v1255
        %v1295 = vpop.f32.mrb[0].mxu0
        %v1296 = vadd.f32 0.0, %v1295
        %v1297 = vpop.f32.mrb[0].mxu0
        %v1298 = vpop.f32.mrb[0].mxu0
        %v1299 = vpop.f32.mrb[0].mxu0
        %1300 = vdwg.mxu0
        %v1302 = vsel %vm765, %v1252, 0
        %v1305 = vsel %vm1257, %v764, 0
        %1307 = vmatprep.subr.bf16.mxu0 0
        %1308 = vmatpush1.bf16.msra.mxu0 %v1305
        %1309 = vmatprep.subr.bf16.mxu0 0
        %1310 = vmatpush1.bf16.msra.mxu0 0
        %1311 = vmatprep.subr.bf16.mxu0 0
        %1312 = vmatpush1.bf16.msra.mxu0 0
        %1313 = vmatprep.subr.bf16.mxu0 0
        %1314 = vmatpush1.bf16.msra.mxu0 0
        %1315 = vmatprep.subr.bf16.mxu0 0
        %1316 = vmatpush1.bf16.msra.mxu0 0
        %1317 = vmatprep.subr.bf16.mxu0 0
        %1318 = vmatpush1.bf16.msra.mxu0 0
        %1319 = vmatprep.subr.bf16.mxu0 0
        %1320 = vmatpush1.bf16.msra.mxu0 0
        %1321 = vmatprep.subr.bf16.mxu0 0
        %1322 = vmatpush1.bf16.msra.mxu0 0
        %1323 = vmatprep.subr.bf16.mxu0 0
        %1324 = vmatpush1.bf16.msra.mxu0 0
        %1325 = vmatprep.subr.bf16.mxu0 0
        %1326 = vmatpush1.bf16.msra.mxu0 0
        %1327 = vmatprep.subr.bf16.mxu0 0
        %1328 = vmatpush1.bf16.msra.mxu0 0
        %1329 = vmatprep.subr.bf16.mxu0 0
        %1330 = vmatpush1.bf16.msra.mxu0 0
        %1331 = vmatprep.subr.bf16.mxu0 0
        %1332 = vmatpush1.bf16.msra.mxu0 0
        %1333 = vmatprep.subr.bf16.mxu0 0
        %1334 = vmatpush1.bf16.msra.mxu0 0
        %1335 = vmatprep.subr.bf16.mxu0 0
        %1336 = vmatpush1.bf16.msra.mxu0 0
        %1337 = vmatprep.subr.bf16.mxu0 0
        %1338 = vmatpush1.bf16.msra.mxu0 0
        %1339 = vmatprep.mubr.bf16.mxu0 0
        %1340 = vmatmul.mubr.bf16.gmra.mrb[0].mxu0 %v1302
        %v1341 = vpop.f32.mrb[0].mxu0
        %v1342 = vadd.f32 0.0, %v1341
        %v1343 = vpop.f32.mrb[0].mxu0
        %v1344 = vpop.f32.mrb[0].mxu0
        %v1345 = vpop.f32.mrb[0].mxu0
        %1346 = vdwg.mxu0
        %v1348 = vrot.slane %v1250, 4
        %1350 = vrot.lane.b32.xlu0 %v763, 120
        %v1351 = vpop.permute.xlu0 %1350
        %v1353 = vsel %vm765, %v1348, 0
        %v1356 = vsel %vm1257, %v1351, 0
        %1358 = vmatprep.subr.bf16.mxu0 0
        %1359 = vmatpush1.bf16.msra.mxu0 %v1356
        %1360 = vmatprep.subr.bf16.mxu0 0
        %1361 = vmatpush1.bf16.msra.mxu0 0
        %1362 = vmatprep.subr.bf16.mxu0 0
        %1363 = vmatpush1.bf16.msra.mxu0 0
        %1364 = vmatprep.subr.bf16.mxu0 0
        %1365 = vmatpush1.bf16.msra.mxu0 0
        %1366 = vmatprep.subr.bf16.mxu0 0
        %1367 = vmatpush1.bf16.msra.mxu0 0
        %1368 = vmatprep.subr.bf16.mxu0 0
        %1369 = vmatpush1.bf16.msra.mxu0 0
        %1370 = vmatprep.subr.bf16.mxu0 0
        %1371 = vmatpush1.bf16.msra.mxu0 0
        %1372 = vmatprep.subr.bf16.mxu0 0
        %1373 = vmatpush1.bf16.msra.mxu0 0
        %1374 = vmatprep.subr.bf16.mxu0 0
        %1375 = vmatpush1.bf16.msra.mxu0 0
        %1376 = vmatprep.subr.bf16.mxu0 0
        %1377 = vmatpush1.bf16.msra.mxu0 0
        %1378 = vmatprep.subr.bf16.mxu0 0
        %1379 = vmatpush1.bf16.msra.mxu0 0
        %1380 = vmatprep.subr.bf16.mxu0 0
        %1381 = vmatpush1.bf16.msra.mxu0 0
        %1382 = vmatprep.subr.bf16.mxu0 0
        %1383 = vmatpush1.bf16.msra.mxu0 0
        %1384 = vmatprep.subr.bf16.mxu0 0
        %1385 = vmatpush1.bf16.msra.mxu0 0
        %1386 = vmatprep.subr.bf16.mxu0 0
        %1387 = vmatpush1.bf16.msra.mxu0 0
        %1388 = vmatprep.subr.bf16.mxu0 0
        %1389 = vmatpush1.bf16.msra.mxu0 0
        %1390 = vmatprep.mubr.bf16.mxu0 0
        %1391 = vmatmul.mubr.bf16.gmra.mrb[0].mxu0 %v1353
        %v1392 = vpop.f32.mrb[0].mxu0
        %v1393 = vadd.f32 0.0, %v1392
        %v1394 = vpop.f32.mrb[0].mxu0
        %v1395 = vpop.f32.mrb[0].mxu0
        %v1396 = vpop.f32.mrb[0].mxu0
        %1397 = vdwg.mxu0
        %v1399 = vrot.slane %v1252, 4
        %1401 = vrot.lane.b32.xlu0 %v764, 120
        %v1402 = vpop.permute.xlu0 %1401
        %v1404 = vsel %vm765, %v1399, 0
        %v1407 = vsel %vm1257, %v1402, 0
        %1409 = vmatprep.subr.bf16.mxu0 0
        %1410 = vmatpush1.bf16.msra.mxu0 %v1407
        %1411 = vmatprep.subr.bf16.mxu0 0
        %1412 = vmatpush1.bf16.msra.mxu0 0
        %1413 = vmatprep.subr.bf16.mxu0 0
        %1414 = vmatpush1.bf16.msra.mxu0 0
        %1415 = vmatprep.subr.bf16.mxu0 0
        %1416 = vmatpush1.bf16.msra.mxu0 0
        %1417 = vmatprep.subr.bf16.mxu0 0
        %1418 = vmatpush1.bf16.msra.mxu0 0
        %1419 = vmatprep.subr.bf16.mxu0 0
        %1420 = vmatpush1.bf16.msra.mxu0 0
        %1421 = vmatprep.subr.bf16.mxu0 0
        %1422 = vmatpush1.bf16.msra.mxu0 0
        %1423 = vmatprep.subr.bf16.mxu0 0
        %1424 = vmatpush1.bf16.msra.mxu0 0
        %1425 = vmatprep.subr.bf16.mxu0 0
        %1426 = vmatpush1.bf16.msra.mxu0 0
        %1427 = vmatprep.subr.bf16.mxu0 0
        %1428 = vmatpush1.bf16.msra.mxu0 0
        %1429 = vmatprep.subr.bf16.mxu0 0
        %1430 = vmatpush1.bf16.msra.mxu0 0
        %1431 = vmatprep.subr.bf16.mxu0 0
        %1432 = vmatpush1.bf16.msra.mxu0 0
        %1433 = vmatprep.subr.bf16.mxu0 0
        %1434 = vmatpush1.bf16.msra.mxu0 0
        %1435 = vmatprep.subr.bf16.mxu0 0
        %1436 = vmatpush1.bf16.msra.mxu0 0
        %1437 = vmatprep.subr.bf16.mxu0 0
        %1438 = vmatpush1.bf16.msra.mxu0 0
        %1439 = vmatprep.subr.bf16.mxu0 0
        %1440 = vmatpush1.bf16.msra.mxu0 0
        %1441 = vmatprep.mubr.bf16.mxu0 0
        %1442 = vmatmul.mubr.bf16.gmra.mrb[0].mxu0 %v1404
        %v1443 = vpop.f32.mrb[0].mxu0
        %v1444 = vadd.f32 0.0, %v1443
        %v1445 = vpop.f32.mrb[0].mxu0
        %v1446 = vpop.f32.mrb[0].mxu0
        %v1447 = vpop.f32.mrb[0].mxu0
        %1448 = vdwg.mxu0
        %1449 = vrot.lane.b32.xlu0 %v763, 112
        %v1450 = vpop.permute.xlu0 %1449
        %v1452 = vsel %vm765, %v1251, 0
        %v1455 = vsel %vm1257, %v1450, 0
        %1457 = vmatprep.subr.bf16.mxu0 0
        %1458 = vmatpush1.bf16.msra.mxu0 %v1455
        %1459 = vmatprep.subr.bf16.mxu0 0
        %1460 = vmatpush1.bf16.msra.mxu0 0
        %1461 = vmatprep.subr.bf16.mxu0 0
        %1462 = vmatpush1.bf16.msra.mxu0 0
        %1463 = vmatprep.subr.bf16.mxu0 0
        %1464 = vmatpush1.bf16.msra.mxu0 0
        %1465 = vmatprep.subr.bf16.mxu0 0
        %1466 = vmatpush1.bf16.msra.mxu0 0
        %1467 = vmatprep.subr.bf16.mxu0 0
        %1468 = vmatpush1.bf16.msra.mxu0 0
        %1469 = vmatprep.subr.bf16.mxu0 0
        %1470 = vmatpush1.bf16.msra.mxu0 0
        %1471 = vmatprep.subr.bf16.mxu0 0
        %1472 = vmatpush1.bf16.msra.mxu0 0
        %1473 = vmatprep.subr.bf16.mxu0 0
        %1474 = vmatpush1.bf16.msra.mxu0 0
        %1475 = vmatprep.subr.bf16.mxu0 0
        %1476 = vmatpush1.bf16.msra.mxu0 0
        %1477 = vmatprep.subr.bf16.mxu0 0
        %1478 = vmatpush1.bf16.msra.mxu0 0
        %1479 = vmatprep.subr.bf16.mxu0 0
        %1480 = vmatpush1.bf16.msra.mxu0 0
        %1481 = vmatprep.subr.bf16.mxu0 0
        %1482 = vmatpush1.bf16.msra.mxu0 0
        %1483 = vmatprep.subr.bf16.mxu0 0
        %1484 = vmatpush1.bf16.msra.mxu0 0
        %1485 = vmatprep.subr.bf16.mxu0 0
        %1486 = vmatpush1.bf16.msra.mxu0 0
        %1487 = vmatprep.subr.bf16.mxu0 0
        %1488 = vmatpush1.bf16.msra.mxu0 0
        %1489 = vmatprep.mubr.bf16.mxu0 0
        %1490 = vmatmul.mubr.bf16.gmra.mrb[0].mxu0 %v1452
        %v1491 = vpop.f32.mrb[0].mxu0
        %v1492 = vadd.f32 0.0, %v1491
        %v1493 = vpop.f32.mrb[0].mxu0
        %v1494 = vpop.f32.mrb[0].mxu0
        %v1495 = vpop.f32.mrb[0].mxu0
        %1496 = vdwg.mxu0
        %1497 = vrot.lane.b32.xlu0 %v764, 112
        %v1498 = vpop.permute.xlu0 %1497
        %v1500 = vsel %vm765, %v1253, 0
        %v1503 = vsel %vm1257, %v1498, 0
        %1505 = vmatprep.subr.bf16.mxu0 0
        %1506 = vmatpush1.bf16.msra.mxu0 %v1503
        %1507 = vmatprep.subr.bf16.mxu0 0
        %1508 = vmatpush1.bf16.msra.mxu0 0
        %1509 = vmatprep.subr.bf16.mxu0 0
        %1510 = vmatpush1.bf16.msra.mxu0 0
        %1511 = vmatprep.subr.bf16.mxu0 0
        %1512 = vmatpush1.bf16.msra.mxu0 0
        %1513 = vmatprep.subr.bf16.mxu0 0
        %1514 = vmatpush1.bf16.msra.mxu0 0
        %1515 = vmatprep.subr.bf16.mxu0 0
        %1516 = vmatpush1.bf16.msra.mxu0 0
        %1517 = vmatprep.subr.bf16.mxu0 0
        %1518 = vmatpush1.bf16.msra.mxu0 0
        %1519 = vmatprep.subr.bf16.mxu0 0
        %1520 = vmatpush1.bf16.msra.mxu0 0
        %1521 = vmatprep.subr.bf16.mxu0 0
        %1522 = vmatpush1.bf16.msra.mxu0 0
        %1523 = vmatprep.subr.bf16.mxu0 0
        %1524 = vmatpush1.bf16.msra.mxu0 0
        %1525 = vmatprep.subr.bf16.mxu0 0
        %1526 = vmatpush1.bf16.msra.mxu0 0
        %1527 = vmatprep.subr.bf16.mxu0 0
        %1528 = vmatpush1.bf16.msra.mxu0 0
        %1529 = vmatprep.subr.bf16.mxu0 0
        %1530 = vmatpush1.bf16.msra.mxu0 0
        %1531 = vmatprep.subr.bf16.mxu0 0
        %1532 = vmatpush1.bf16.msra.mxu0 0
        %1533 = vmatprep.subr.bf16.mxu0 0
        %1534 = vmatpush1.bf16.msra.mxu0 0
        %1535 = vmatprep.subr.bf16.mxu0 0
        %1536 = vmatpush1.bf16.msra.mxu0 0
        %1537 = vmatprep.mubr.bf16.mxu0 0
        %1538 = vmatmul.mubr.bf16.gmra.mrb[0].mxu0 %v1500
        %v1539 = vpop.f32.mrb[0].mxu0
        %v1540 = vadd.f32 0.0, %v1539
        %v1541 = vpop.f32.mrb[0].mxu0
        %v1542 = vpop.f32.mrb[0].mxu0
        %v1543 = vpop.f32.mrb[0].mxu0
        %1544 = vdwg.mxu0
        %v1546 = vrot.slane %v1251, 4
        %1547 = vrot.lane.b32.xlu0 %v763, 104
        %v1548 = vpop.permute.xlu0 %1547
        %v1550 = vsel %vm765, %v1546, 0
        %v1553 = vsel %vm1257, %v1548, 0
        %1555 = vmatprep.subr.bf16.mxu0 0
        %1556 = vmatpush1.bf16.msra.mxu0 %v1553
        %1557 = vmatprep.subr.bf16.mxu0 0
        %1558 = vmatpush1.bf16.msra.mxu0 0
        %1559 = vmatprep.subr.bf16.mxu0 0
        %1560 = vmatpush1.bf16.msra.mxu0 0
        %1561 = vmatprep.subr.bf16.mxu0 0
        %1562 = vmatpush1.bf16.msra.mxu0 0
        %1563 = vmatprep.subr.bf16.mxu0 0
        %1564 = vmatpush1.bf16.msra.mxu0 0
        %1565 = vmatprep.subr.bf16.mxu0 0
        %1566 = vmatpush1.bf16.msra.mxu0 0
        %1567 = vmatprep.subr.bf16.mxu0 0
        %1568 = vmatpush1.bf16.msra.mxu0 0
        %1569 = vmatprep.subr.bf16.mxu0 0
        %1570 = vmatpush1.bf16.msra.mxu0 0
        %1571 = vmatprep.subr.bf16.mxu0 0
        %1572 = vmatpush1.bf16.msra.mxu0 0
        %1573 = vmatprep.subr.bf16.mxu0 0
        %1574 = vmatpush1.bf16.msra.mxu0 0
        %1575 = vmatprep.subr.bf16.mxu0 0
        %1576 = vmatpush1.bf16.msra.mxu0 0
        %1577 = vmatprep.subr.bf16.mxu0 0
        %1578 = vmatpush1.bf16.msra.mxu0 0
        %1579 = vmatprep.subr.bf16.mxu0 0
        %1580 = vmatpush1.bf16.msra.mxu0 0
        %1581 = vmatprep.subr.bf16.mxu0 0
        %1582 = vmatpush1.bf16.msra.mxu0 0
        %1583 = vmatprep.subr.bf16.mxu0 0
        %1584 = vmatpush1.bf16.msra.mxu0 0
        %1585 = vmatprep.subr.bf16.mxu0 0
        %1586 = vmatpush1.bf16.msra.mxu0 0
        %1587 = vmatprep.mubr.bf16.mxu0 0
        %1588 = vmatmul.mubr.bf16.gmra.mrb[0].mxu0 %v1550
        %v1589 = vpop.f32.mrb[0].mxu0
        %v1590 = vadd.f32 0.0, %v1589
        %v1591 = vpop.f32.mrb[0].mxu0
        %v1592 = vpop.f32.mrb[0].mxu0
        %v1593 = vpop.f32.mrb[0].mxu0
        %1594 = vdwg.mxu0
        %v1596 = vrot.slane %v1253, 4
        %1597 = vrot.lane.b32.xlu0 %v764, 104
        %v1598 = vpop.permute.xlu0 %1597
        %v1600 = vsel %vm765, %v1596, 0
        %v1603 = vsel %vm1257, %v1598, 0
        %1605 = vmatprep.subr.bf16.mxu0 0
        %1606 = vmatpush1.bf16.msra.mxu0 %v1603
        %1607 = vmatprep.subr.bf16.mxu0 0
        %1608 = vmatpush1.bf16.msra.mxu0 0
        %1609 = vmatprep.subr.bf16.mxu0 0
        %1610 = vmatpush1.bf16.msra.mxu0 0
        %1611 = vmatprep.subr.bf16.mxu0 0
        %1612 = vmatpush1.bf16.msra.mxu0 0
        %1613 = vmatprep.subr.bf16.mxu0 0
        %1614 = vmatpush1.bf16.msra.mxu0 0
        %1615 = vmatprep.subr.bf16.mxu0 0
        %1616 = vmatpush1.bf16.msra.mxu0 0
        %1617 = vmatprep.subr.bf16.mxu0 0
        %1618 = vmatpush1.bf16.msra.mxu0 0
        %1619 = vmatprep.subr.bf16.mxu0 0
        %1620 = vmatpush1.bf16.msra.mxu0 0
        %1621 = vmatprep.subr.bf16.mxu0 0
        %1622 = vmatpush1.bf16.msra.mxu0 0
        %1623 = vmatprep.subr.bf16.mxu0 0
        %1624 = vmatpush1.bf16.msra.mxu0 0
        %1625 = vmatprep.subr.bf16.mxu0 0
        %1626 = vmatpush1.bf16.msra.mxu0 0
        %1627 = vmatprep.subr.bf16.mxu0 0
        %1628 = vmatpush1.bf16.msra.mxu0 0
        %1629 = vmatprep.subr.bf16.mxu0 0
        %1630 = vmatpush1.bf16.msra.mxu0 0
        %1631 = vmatprep.subr.bf16.mxu0 0
        %1632 = vmatpush1.bf16.msra.mxu0 0
        %1633 = vmatprep.subr.bf16.mxu0 0
        %1634 = vmatpush1.bf16.msra.mxu0 0
        %1635 = vmatprep.subr.bf16.mxu0 0
        %1636 = vmatpush1.bf16.msra.mxu0 0
        %1637 = vmatprep.mubr.bf16.mxu0 0
        %1638 = vmatmul.mubr.bf16.gmra.mrb[0].mxu0 %v1600
        %v1639 = vpop.f32.mrb[0].mxu0
        %v1640 = vadd.f32 0.0, %v1639
        %v1641 = vpop.f32.mrb[0].mxu0
        %v1642 = vpop.f32.mrb[0].mxu0
        %v1643 = vpop.f32.mrb[0].mxu0
        %1644 = vdwg.mxu0
        %1647 = vrot.lane.b32.xlu0 %v1393, 8
        %v1648 = vpop.permute.xlu0 %1647
        %1649 = vrot.lane.b32.xlu0 %v1444, 8
        %v1650 = vpop.permute.xlu0 %1649
        %1655 = vrot.lane.b32.xlu0 %v1492, 16
        %v1656 = vpop.permute.xlu0 %1655
        %1657 = vrot.lane.b32.xlu0 %v1540, 16
        %v1658 = vpop.permute.xlu0 %1657
        %1663 = vrot.lane.b32.xlu0 %v1590, 24
        %v1664 = vpop.permute.xlu0 %1663
        %1665 = vrot.lane.b32.xlu0 %v1640, 24
        %v1666 = vpop.permute.xlu0 %1665
        %v1669 = vsel %vm765, %v1296, %v1648
        %v1670 = vsel %vm765, %v1342, %v1650
        %vm1671 = vcmask 130048
        %v1672 = vsel %vm1671, %v1669, %v1656
        %v1673 = vsel %vm1671, %v1670, %v1658
        %vm1674 = vcmask 195584
        %v1675 = vsel %vm1674, %v1672, %v1664
        %v1676 = vsel %vm1674, %v1673, %v1666
        %v1677 = vpack.c.bf16 %v1676, %v1675
        %v1678 = vlaneseq
        %v1679 = vshrl.u32 %v1678, 7
        %v1680 = vsub.s32 3, %v1679
        %v1681 = vrot.slane %v551, %v1680
        %v1686 = vunpack.c.l.b16 %v753
        %v1687 = vunpack.c.l.b16 %v754
        %v1688 = vunpack.c.l.b16 %v755
        %v1689 = vunpack.c.l.b16 %v756
        %v1690 = vpack.c.b16 %v1687, %v1686
        %v1691 = vpack.c.b16 %v1689, %v1688
        %v1695 = vsel %vm583, %v1677, 0
        %1697 = vmatprep.subr.bf16.mxu0 0
        %1698 = vmatpush1.bf16.msra.mxu0 %v1690
        %1699 = vmatprep.subr.bf16.mxu0 0
        %1700 = vmatpush1.bf16.msra.mxu0 %v1691
        %1701 = vmatprep.subr.bf16.mxu0 0
        %1702 = vmatpush1.bf16.msra.mxu0 0
        %1703 = vmatprep.subr.bf16.mxu0 0
        %1704 = vmatpush1.bf16.msra.mxu0 0
        %1705 = vmatprep.subr.bf16.mxu0 0
        %1706 = vmatpush1.bf16.msra.mxu0 0
        %1707 = vmatprep.subr.bf16.mxu0 0
        %1708 = vmatpush1.bf16.msra.mxu0 0
        %1709 = vmatprep.subr.bf16.mxu0 0
        %1710 = vmatpush1.bf16.msra.mxu0 0
        %1711 = vmatprep.subr.bf16.mxu0 0
        %1712 = vmatpush1.bf16.msra.mxu0 0
        %1713 = vmatprep.subr.bf16.mxu0 0
        %1714 = vmatpush1.bf16.msra.mxu0 0
        %1715 = vmatprep.subr.bf16.mxu0 0
        %1716 = vmatpush1.bf16.msra.mxu0 0
        %1717 = vmatprep.subr.bf16.mxu0 0
        %1718 = vmatpush1.bf16.msra.mxu0 0
        %1719 = vmatprep.subr.bf16.mxu0 0
        %1720 = vmatpush1.bf16.msra.mxu0 0
        %1721 = vmatprep.subr.bf16.mxu0 0
        %1722 = vmatpush1.bf16.msra.mxu0 0
        %1723 = vmatprep.subr.bf16.mxu0 0
        %1724 = vmatpush1.bf16.msra.mxu0 0
        %1725 = vmatprep.subr.bf16.mxu0 0
        %1726 = vmatpush1.bf16.msra.mxu0 0
        %1727 = vmatprep.subr.bf16.mxu0 0
        %1728 = vmatpush1.bf16.msra.mxu0 0
        %1729 = vmatprep.mubr.bf16.mxu0 0
        %1730 = vmatmul.mubr.bf16.gmra.mrb[0].mxu0 %v1695
        %v1731 = vpop.f32.mrb[0].mxu0
        %v1732 = vadd.f32 %v1681, %v1731
        %v1733 = vpop.f32.mrb[0].mxu0
        %v1734 = vpop.f32.mrb[0].mxu0
        %v1735 = vadd.f32 %v1681, %v1734
        %v1736 = vpop.f32.mrb[0].mxu0
        %1737 = vdwg.mxu0
        %v1738 = vadd.f32 %v560, %v1732
        %v1739 = vadd.f32 %v561, %v1735
        %v1740 = vsel %vm583, %v1738, 0.0
        %1741 = vadd.xlane.f32.xlu0 %v1740
        %v1742 = vpop.xlane.xlu0 %1741
        %v1743 = vsel %vm583, %v1739, 0.0
        %1744 = vadd.xlane.f32.xlu0 %v1743
        %v1745 = vpop.xlane.xlu0 %1744
        %v1746 = vrcp.pop 32.0
        %v1747 = vmul.f32 %v1742, %v1746
        %v1748 = vmul.f32 %v1745, %v1746
        %v1749 = vsub.f32 %v1738, %v1747
        %v1750 = vsub.f32 %v1739, %v1748
        %v1751 = vmul.f32 %v1749, %v1749
        %v1752 = vmul.f32 %v1750, %v1750
        %v1753 = vsel %vm583, %v1751, 0.0
        %1754 = vadd.xlane.f32.xlu0 %v1753
        %v1755 = vpop.xlane.xlu0 %1754
        %v1756 = vsel %vm583, %v1752, 0.0
        %1757 = vadd.xlane.f32.xlu0 %v1756
        %v1758 = vpop.xlane.xlu0 %1757
        %v1759 = vmul.f32 %v1755, %v1746
        %v1760 = vmul.f32 %v1758, %v1746
        %v1761 = vadd.f32 %v1759, 1e-05
        %v1762 = vadd.f32 %v1760, 1e-05
        %v1763 = vrsqrt.pop %v1761
        %v1764 = vrsqrt.pop %v1762
        %v1765 = vmul.f32 %v1749, %v1763
        %v1766 = vmul.f32 %v1750, %v1764
        %v1767 = vlaneseq
        %v1768 = vshrl.u32 %v1767, 7
        %v1769 = vsub.s32 6, %v1768
        %v1770 = vrot.slane %v551, %v1769
        %v1771 = vmul.f32 %v1765, %v1770
        %v1772 = vmul.f32 %v1766, %v1770
        %v1773 = vlaneseq
        %v1774 = vshrl.u32 %v1773, 7
        %v1775 = vsub.s32 7, %v1774
        %v1776 = vrot.slane %v551, %v1775
        %v1777 = vadd.f32 %v1771, %v1776
        %v1778 = vadd.f32 %v1772, %v1776
        %s1779 = scalar_lea.vmem [#allocation2], 64
        %v1780 = vld [vmem:[%s1779] sm:$0xf]
        %v1781 = vld [vmem:[%s1779 + $0x4] sm:$0xf]
        %v1782 = vld [vmem:[%s1779 + $0x8] sm:$0xf]
        %v1783 = vld [vmem:[%s1779 + $0xc] sm:$0xf]
        %v1784 = vpack.c.bf16 %v1778, %v1777
        %v1785 = vlaneseq
        %v1786 = vshrl.u32 %v1785, 7
        %v1787 = vsub.s32 4, %v1786
        %v1788 = vrot.slane %v551, %v1787
        %v1793 = vunpack.c.l.b16 %v1780
        %v1794 = vunpack.c.l.b16 %v1781
        %v1795 = vunpack.c.l.b16 %v1782
        %v1796 = vunpack.c.l.b16 %v1783
        %v1797 = vpack.c.b16 %v1794, %v1793
        %v1798 = vpack.c.b16 %v1796, %v1795
        %v1802 = vsel %vm583, %v1784, 0
        %1804 = vmatprep.subr.bf16.mxu0 0
        %1805 = vmatpush1.bf16.msra.mxu0 %v1797
        %1806 = vmatprep.subr.bf16.mxu0 0
        %1807 = vmatpush1.bf16.msra.mxu0 %v1798
        %1808 = vmatprep.subr.bf16.mxu0 0
        %1809 = vmatpush1.bf16.msra.mxu0 0
        %1810 = vmatprep.subr.bf16.mxu0 0
        %1811 = vmatpush1.bf16.msra.mxu0 0
        %1812 = vmatprep.subr.bf16.mxu0 0
        %1813 = vmatpush1.bf16.msra.mxu0 0
        %1814 = vmatprep.subr.bf16.mxu0 0
        %1815 = vmatpush1.bf16.msra.mxu0 0
        %1816 = vmatprep.subr.bf16.mxu0 0
        %1817 = vmatpush1.bf16.msra.mxu0 0
        %1818 = vmatprep.subr.bf16.mxu0 0
        %1819 = vmatpush1.bf16.msra.mxu0 0
        %1820 = vmatprep.subr.bf16.mxu0 0
        %1821 = vmatpush1.bf16.msra.mxu0 0
        %1822 = vmatprep.subr.bf16.mxu0 0
        %1823 = vmatpush1.bf16.msra.mxu0 0
        %1824 = vmatprep.subr.bf16.mxu0 0
        %1825 = vmatpush1.bf16.msra.mxu0 0
        %1826 = vmatprep.subr.bf16.mxu0 0
        %1827 = vmatpush1.bf16.msra.mxu0 0
        %1828 = vmatprep.subr.bf16.mxu0 0
        %1829 = vmatpush1.bf16.msra.mxu0 0
        %1830 = vmatprep.subr.bf16.mxu0 0
        %1831 = vmatpush1.bf16.msra.mxu0 0
        %1832 = vmatprep.subr.bf16.mxu0 0
        %1833 = vmatpush1.bf16.msra.mxu0 0
        %1834 = vmatprep.subr.bf16.mxu0 0
        %1835 = vmatpush1.bf16.msra.mxu0 0
        %1836 = vmatprep.mubr.bf16.mxu0 0
        %1837 = vmatmul.mubr.bf16.gmra.mrb[0].mxu0 %v1802
        %v1838 = vpop.f32.mrb[0].mxu0
        %v1839 = vadd.f32 %v1788, %v1838
        %v1840 = vpop.f32.mrb[0].mxu0
        %v1841 = vpop.f32.mrb[0].mxu0
        %v1842 = vadd.f32 %v1788, %v1841
        %v1843 = vpop.f32.mrb[0].mxu0
        %1844 = vdwg.mxu0
        %v1845 = vmax.f32 %v1839, 0.0
        %v1846 = vmax.f32 %v1842, 0.0
        %s1847 = scalar_lea.vmem [#allocation2], 80
        %v1848 = vld [vmem:[%s1847] sm:$0xf]
        %v1849 = vld [vmem:[%s1847 + $0x4] sm:$0xf]
        %v1850 = vld [vmem:[%s1847 + $0x8] sm:$0xf]
        %v1851 = vld [vmem:[%s1847 + $0xc] sm:$0xf]
        %v1852 = vpack.c.bf16 %v1846, %v1845
        %v1853 = vlaneseq
        %v1854 = vshrl.u32 %v1853, 7
        %v1855 = vsub.s32 5, %v1854
        %v1856 = vrot.slane %v551, %v1855
        %v1861 = vunpack.c.l.b16 %v1848
        %v1862 = vunpack.c.l.b16 %v1849
        %v1863 = vunpack.c.l.b16 %v1850
        %v1864 = vunpack.c.l.b16 %v1851
        %v1865 = vpack.c.b16 %v1862, %v1861
        %v1866 = vpack.c.b16 %v1864, %v1863
        %v1870 = vsel %vm583, %v1852, 0
        %1872 = vmatprep.subr.bf16.mxu0 0
        %1873 = vmatpush1.bf16.msra.mxu0 %v1865
        %1874 = vmatprep.subr.bf16.mxu0 0
        %1875 = vmatpush1.bf16.msra.mxu0 %v1866
        %1876 = vmatprep.subr.bf16.mxu0 0
        %1877 = vmatpush1.bf16.msra.mxu0 0
        %1878 = vmatprep.subr.bf16.mxu0 0
        %1879 = vmatpush1.bf16.msra.mxu0 0
        %1880 = vmatprep.subr.bf16.mxu0 0
        %1881 = vmatpush1.bf16.msra.mxu0 0
        %1882 = vmatprep.subr.bf16.mxu0 0
        %1883 = vmatpush1.bf16.msra.mxu0 0
        %1884 = vmatprep.subr.bf16.mxu0 0
        %1885 = vmatpush1.bf16.msra.mxu0 0
        %1886 = vmatprep.subr.bf16.mxu0 0
        %1887 = vmatpush1.bf16.msra.mxu0 0
        %1888 = vmatprep.subr.bf16.mxu0 0
        %1889 = vmatpush1.bf16.msra.mxu0 0
        %1890 = vmatprep.subr.bf16.mxu0 0
        %1891 = vmatpush1.bf16.msra.mxu0 0
        %1892 = vmatprep.subr.bf16.mxu0 0
        %1893 = vmatpush1.bf16.msra.mxu0 0
        %1894 = vmatprep.subr.bf16.mxu0 0
        %1895 = vmatpush1.bf16.msra.mxu0 0
        %1896 = vmatprep.subr.bf16.mxu0 0
        %1897 = vmatpush1.bf16.msra.mxu0 0
        %1898 = vmatprep.subr.bf16.mxu0 0
        %1899 = vmatpush1.bf16.msra.mxu0 0
        %1900 = vmatprep.subr.bf16.mxu0 0
        %1901 = vmatpush1.bf16.msra.mxu0 0
        %1902 = vmatprep.subr.bf16.mxu0 0
        %1903 = vmatpush1.bf16.msra.mxu0 0
        %1904 = vmatprep.mubr.bf16.mxu0 0
        %1905 = vmatmul.mubr.bf16.gmra.mrb[0].mxu0 %v1870
        %v1906 = vpop.f32.mrb[0].mxu0
        %v1907 = vadd.f32 %v1856, %v1906
        %v1908 = vpop.f32.mrb[0].mxu0
        %v1909 = vpop.f32.mrb[0].mxu0
        %v1910 = vadd.f32 %v1856, %v1909
        %v1911 = vpop.f32.mrb[0].mxu0
        %1912 = vdwg.mxu0
        %v1913 = vadd.f32 %v1777, %v1907
        %v1914 = vadd.f32 %v1778, %v1910
        %v1915 = vsel %vm583, %v1913, 0.0
        %1916 = vadd.xlane.f32.xlu0 %v1915
        %v1917 = vpop.xlane.xlu0 %1916
        %v1918 = vsel %vm583, %v1914, 0.0
        %1919 = vadd.xlane.f32.xlu0 %v1918
        %v1920 = vpop.xlane.xlu0 %1919
        %v1921 = vmul.f32 %v1917, %v1746
        %v1922 = vmul.f32 %v1920, %v1746
        %v1923 = vsub.f32 %v1913, %v1921
        %v1924 = vsub.f32 %v1914, %v1922
        %v1925 = vmul.f32 %v1923, %v1923
        %v1926 = vmul.f32 %v1924, %v1924
        %v1927 = vsel %vm583, %v1925, 0.0
        %1928 = vadd.xlane.f32.xlu0 %v1927
        %v1929 = vpop.xlane.xlu0 %1928
        %v1930 = vsel %vm583, %v1926, 0.0
        %1931 = vadd.xlane.f32.xlu0 %v1930
        %v1932 = vpop.xlane.xlu0 %1931
        %v1933 = vmul.f32 %v1929, %v1746
        %v1934 = vmul.f32 %v1932, %v1746
        %v1935 = vadd.f32 %v1933, 1e-05
        %v1936 = vadd.f32 %v1934, 1e-05
        %v1937 = vrsqrt.pop %v1935
        %v1938 = vrsqrt.pop %v1936
        %v1939 = vmul.f32 %v1923, %v1937
        %v1940 = vmul.f32 %v1924, %v1938
        %v1941 = vlaneseq
        %v1942 = vshrl.u32 %v1941, 7
        %v1943 = vsub.s32 0, %v1942
        %v1944 = vrot.slane %v552, %v1943
        %v1945 = vmul.f32 %v1939, %v1944
        %v1946 = vmul.f32 %v1940, %v1944
        %v1947 = vlaneseq
        %v1948 = vshrl.u32 %v1947, 7
        %v1949 = vsub.s32 1, %v1948
        %v1950 = vrot.slane %v552, %v1949
        %v1951 = vadd.f32 %v1945, %v1950
        %v1952 = vadd.f32 %v1946, %v1950
        %s1953 = scalar_lea.vmem [#allocation2], 96
        %v1954 = vld [vmem:[%s1953] sm:$0xf]
        %v1955 = vld [vmem:[%s1953 + $0x4] sm:$0xf]
        %v1956 = vld [vmem:[%s1953 + $0x8] sm:$0xf]
        %v1957 = vld [vmem:[%s1953 + $0xc] sm:$0xf]
        %v1958 = vpack.c.bf16 %v1952, %v1951
        %v1959 = vlaneseq
        %v1960 = vshrl.u32 %v1959, 7
        %v1961 = vsub.s32 2, %v1960
        %v1962 = vrot.slane %v552, %v1961
        %v1967 = vunpack.c.l.b16 %v1954
        %v1968 = vunpack.c.l.b16 %v1955
        %v1969 = vunpack.c.l.b16 %v1956
        %v1970 = vunpack.c.l.b16 %v1957
        %v1971 = vpack.c.b16 %v1968, %v1967
        %v1972 = vpack.c.b16 %v1970, %v1969
        %v1976 = vsel %vm583, %v1958, 0
        %1978 = vmatprep.subr.bf16.mxu0 0
        %1979 = vmatpush1.bf16.msra.mxu0 %v1971
        %1980 = vmatprep.subr.bf16.mxu0 0
        %1981 = vmatpush1.bf16.msra.mxu0 %v1972
        %1982 = vmatprep.subr.bf16.mxu0 0
        %1983 = vmatpush1.bf16.msra.mxu0 0
        %1984 = vmatprep.subr.bf16.mxu0 0
        %1985 = vmatpush1.bf16.msra.mxu0 0
        %1986 = vmatprep.subr.bf16.mxu0 0
        %1987 = vmatpush1.bf16.msra.mxu0 0
        %1988 = vmatprep.subr.bf16.mxu0 0
        %1989 = vmatpush1.bf16.msra.mxu0 0
        %1990 = vmatprep.subr.bf16.mxu0 0
        %1991 = vmatpush1.bf16.msra.mxu0 0
        %1992 = vmatprep.subr.bf16.mxu0 0
        %1993 = vmatpush1.bf16.msra.mxu0 0
        %1994 = vmatprep.subr.bf16.mxu0 0
        %1995 = vmatpush1.bf16.msra.mxu0 0
        %1996 = vmatprep.subr.bf16.mxu0 0
        %1997 = vmatpush1.bf16.msra.mxu0 0
        %1998 = vmatprep.subr.bf16.mxu0 0
        %1999 = vmatpush1.bf16.msra.mxu0 0
        %2000 = vmatprep.subr.bf16.mxu0 0
        %2001 = vmatpush1.bf16.msra.mxu0 0
        %2002 = vmatprep.subr.bf16.mxu0 0
        %2003 = vmatpush1.bf16.msra.mxu0 0
        %2004 = vmatprep.subr.bf16.mxu0 0
        %2005 = vmatpush1.bf16.msra.mxu0 0
        %2006 = vmatprep.subr.bf16.mxu0 0
        %2007 = vmatpush1.bf16.msra.mxu0 0
        %2008 = vmatprep.subr.bf16.mxu0 0
        %2009 = vmatpush1.bf16.msra.mxu0 0
        %2010 = vmatprep.mubr.bf16.mxu0 0
        %2011 = vmatmul.mubr.bf16.gmra.mrb[0].mxu0 %v1976
        %v2012 = vpop.f32.mrb[0].mxu0
        %v2013 = vadd.f32 %v1962, %v2012
        %v2014 = vpop.f32.mrb[0].mxu0
        %v2015 = vpop.f32.mrb[0].mxu0
        %v2016 = vadd.f32 %v1962, %v2015
        %v2017 = vpop.f32.mrb[0].mxu0
        %2018 = vdwg.mxu0
        %s2019 = scalar_lea.vmem [#allocation2], 112
        %v2020 = vld [vmem:[%s2019] sm:$0xf]
        %v2021 = vld [vmem:[%s2019 + $0x4] sm:$0xf]
        %v2022 = vld [vmem:[%s2019 + $0x8] sm:$0xf]
        %v2023 = vld [vmem:[%s2019 + $0xc] sm:$0xf]
        %v2024 = vlaneseq
        %v2025 = vshrl.u32 %v2024, 7
        %v2026 = vsub.s32 3, %v2025
        %v2027 = vrot.slane %v552, %v2026
        %v2032 = vunpack.c.l.b16 %v2020
        %v2033 = vunpack.c.l.b16 %v2021
        %v2034 = vunpack.c.l.b16 %v2022
        %v2035 = vunpack.c.l.b16 %v2023
        %v2036 = vpack.c.b16 %v2033, %v2032
        %v2037 = vpack.c.b16 %v2035, %v2034
        %2040 = vmatprep.subr.bf16.mxu0 0
        %2041 = vmatpush1.bf16.msra.mxu0 %v2036
        %2042 = vmatprep.subr.bf16.mxu0 0
        %2043 = vmatpush1.bf16.msra.mxu0 %v2037
        %2044 = vmatprep.subr.bf16.mxu0 0
        %2045 = vmatpush1.bf16.msra.mxu0 0
        %2046 = vmatprep.subr.bf16.mxu0 0
        %2047 = vmatpush1.bf16.msra.mxu0 0
        %2048 = vmatprep.subr.bf16.mxu0 0
        %2049 = vmatpush1.bf16.msra.mxu0 0
        %2050 = vmatprep.subr.bf16.mxu0 0
        %2051 = vmatpush1.bf16.msra.mxu0 0
        %2052 = vmatprep.subr.bf16.mxu0 0
        %2053 = vmatpush1.bf16.msra.mxu0 0
        %2054 = vmatprep.subr.bf16.mxu0 0
        %2055 = vmatpush1.bf16.msra.mxu0 0
        %2056 = vmatprep.subr.bf16.mxu0 0
        %2057 = vmatpush1.bf16.msra.mxu0 0
        %2058 = vmatprep.subr.bf16.mxu0 0
        %2059 = vmatpush1.bf16.msra.mxu0 0
        %2060 = vmatprep.subr.bf16.mxu0 0
        %2061 = vmatpush1.bf16.msra.mxu0 0
        %2062 = vmatprep.subr.bf16.mxu0 0
        %2063 = vmatpush1.bf16.msra.mxu0 0
        %2064 = vmatprep.subr.bf16.mxu0 0
        %2065 = vmatpush1.bf16.msra.mxu0 0
        %2066 = vmatprep.subr.bf16.mxu0 0
        %2067 = vmatpush1.bf16.msra.mxu0 0
        %2068 = vmatprep.subr.bf16.mxu0 0
        %2069 = vmatpush1.bf16.msra.mxu0 0
        %2070 = vmatprep.subr.bf16.mxu0 0
        %2071 = vmatpush1.bf16.msra.mxu0 0
        %2072 = vmatprep.mubr.bf16.mxu0 0
        %2073 = vmatmul.mubr.bf16.gmra.mrb[0].mxu0 %v1976
        %v2074 = vpop.f32.mrb[0].mxu0
        %v2075 = vadd.f32 %v2027, %v2074
        %v2076 = vpop.f32.mrb[0].mxu0
        %v2077 = vpop.f32.mrb[0].mxu0
        %v2078 = vadd.f32 %v2027, %v2077
        %v2079 = vpop.f32.mrb[0].mxu0
        %2080 = vdwg.mxu0
        %s2081 = scalar_lea.vmem [#allocation2], 128
        %v2082 = vld [vmem:[%s2081] sm:$0xf]
        %v2083 = vld [vmem:[%s2081 + $0x4] sm:$0xf]
        %v2084 = vld [vmem:[%s2081 + $0x8] sm:$0xf]
        %v2085 = vld [vmem:[%s2081 + $0xc] sm:$0xf]
        %v2086 = vlaneseq
        %v2087 = vshrl.u32 %v2086, 7
        %v2088 = vsub.s32 4, %v2087
        %v2089 = vrot.slane %v552, %v2088
        %v2094 = vunpack.c.l.b16 %v2082
        %v2095 = vunpack.c.l.b16 %v2083
        %v2096 = vunpack.c.l.b16 %v2084
        %v2097 = vunpack.c.l.b16 %v2085
        %v2098 = vpack.c.b16 %v2095, %v2094
        %v2099 = vpack.c.b16 %v2097, %v2096
        %2102 = vmatprep.subr.bf16.mxu0 0
        %2103 = vmatpush1.bf16.msra.mxu0 %v2098
        %2104 = vmatprep.subr.bf16.mxu0 0
        %2105 = vmatpush1.bf16.msra.mxu0 %v2099
        %2106 = vmatprep.subr.bf16.mxu0 0
        %2107 = vmatpush1.bf16.msra.mxu0 0
        %2108 = vmatprep.subr.bf16.mxu0 0
        %2109 = vmatpush1.bf16.msra.mxu0 0
        %2110 = vmatprep.subr.bf16.mxu0 0
        %2111 = vmatpush1.bf16.msra.mxu0 0
        %2112 = vmatprep.subr.bf16.mxu0 0
        %2113 = vmatpush1.bf16.msra.mxu0 0
        %2114 = vmatprep.subr.bf16.mxu0 0
        %2115 = vmatpush1.bf16.msra.mxu0 0
        %2116 = vmatprep.subr.bf16.mxu0 0
        %2117 = vmatpush1.bf16.msra.mxu0 0
        %2118 = vmatprep.subr.bf16.mxu0 0
        %2119 = vmatpush1.bf16.msra.mxu0 0
        %2120 = vmatprep.subr.bf16.mxu0 0
        %2121 = vmatpush1.bf16.msra.mxu0 0
        %2122 = vmatprep.subr.bf16.mxu0 0
        %2123 = vmatpush1.bf16.msra.mxu0 0
        %2124 = vmatprep.subr.bf16.mxu0 0
        %2125 = vmatpush1.bf16.msra.mxu0 0
        %2126 = vmatprep.subr.bf16.mxu0 0
        %2127 = vmatpush1.bf16.msra.mxu0 0
        %2128 = vmatprep.subr.bf16.mxu0 0
        %2129 = vmatpush1.bf16.msra.mxu0 0
        %2130 = vmatprep.subr.bf16.mxu0 0
        %2131 = vmatpush1.bf16.msra.mxu0 0
        %2132 = vmatprep.subr.bf16.mxu0 0
        %2133 = vmatpush1.bf16.msra.mxu0 0
        %2134 = vmatprep.mubr.bf16.mxu0 0
        %2135 = vmatmul.mubr.bf16.gmra.mrb[0].mxu0 %v1976
        %v2136 = vpop.f32.mrb[0].mxu0
        %v2137 = vadd.f32 %v2089, %v2136
        %v2138 = vpop.f32.mrb[0].mxu0
        %v2139 = vpop.f32.mrb[0].mxu0
        %v2140 = vadd.f32 %v2089, %v2139
        %v2141 = vpop.f32.mrb[0].mxu0
        %2142 = vdwg.mxu0
        %s2143 = scalar_lea.vmem [#allocation2], 144
        %v2144 = vld [vmem:[%s2143] sm:$0xf]
        %v2145 = vld [vmem:[%s2143 + $0x4] sm:$0xf]
        %v2146 = vld [vmem:[%s2143 + $0x8] sm:$0xf]
        %v2147 = vld [vmem:[%s2143 + $0xc] sm:$0xf]
        %v2148 = vmul.f32 %v2013, 0.35355338
        %v2149 = vmul.f32 %v2016, 0.35355338
        %v2150 = vpack.c.bf16 %v2148, %v2148
        %v2151 = vpack.c.bf16 %v2149, %v2149
        %v2152 = vpack.c.bf16 %v2075, %v2075
        %v2153 = vpack.c.bf16 %v2078, %v2078
        %v2154 = vpack.c.bf16 %v2137, %v2137
        %v2155 = vpack.c.bf16 %v2140, %v2140
        %v2157 = vsel %vm765, %v2150, 0
        %v2160 = vsel %vm765, %v2152, 0
        %2162 = vmatprep.subr.bf16.mxu0 0
        %2163 = vmatpush1.bf16.xpose.msra.mxu0 %v2160
        %2164 = vmatprep.subr.bf16.mxu0 0
        %2165 = vmatpush1.bf16.xpose.msra.mxu0 0
        %2166 = vmatprep.subr.bf16.mxu0 0
        %2167 = vmatpush1.bf16.xpose.msra.mxu0 0
        %2168 = vmatprep.subr.bf16.mxu0 0
        %2169 = vmatpush1.bf16.xpose.msra.mxu0 0
        %2170 = vmatprep.subr.bf16.mxu0 0
        %2171 = vmatpush1.bf16.xpose.msra.mxu0 0
        %2172 = vmatprep.subr.bf16.mxu0 0
        %2173 = vmatpush1.bf16.xpose.msra.mxu0 0
        %2174 = vmatprep.subr.bf16.mxu0 0
        %2175 = vmatpush1.bf16.xpose.msra.mxu0 0
        %2176 = vmatprep.subr.bf16.mxu0 0
        %2177 = vmatpush1.bf16.xpose.msra.mxu0 0
        %2178 = vmatprep.subr.bf16.mxu0 0
        %2179 = vmatpush1.bf16.xpose.msra.mxu0 0
        %2180 = vmatprep.subr.bf16.mxu0 0
        %2181 = vmatpush1.bf16.xpose.msra.mxu0 0
        %2182 = vmatprep.subr.bf16.mxu0 0
        %2183 = vmatpush1.bf16.xpose.msra.mxu0 0
        %2184 = vmatprep.subr.bf16.mxu0 0
        %2185 = vmatpush1.bf16.xpose.msra.mxu0 0
        %2186 = vmatprep.subr.bf16.mxu0 0
        %2187 = vmatpush1.bf16.xpose.msra.mxu0 0
        %2188 = vmatprep.subr.bf16.mxu0 0
        %2189 = vmatpush1.bf16.xpose.msra.mxu0 0
        %2190 = vmatprep.subr.bf16.mxu0 0
        %2191 = vmatpush1.bf16.xpose.msra.mxu0 0
        %2192 = vmatprep.subr.bf16.mxu0 0
        %2193 = vmatpush1.bf16.xpose.msra.mxu0 0
        %2194 = vmatprep.mubr.bf16.mxu0 0
        %2195 = vmatmul.mubr.bf16.gmra.mrb[0].mxu0 %v2157
        %v2196 = vpop.f32.mrb[0].mxu0
        %v2197 = vadd.f32 0.0, %v2196
        %v2198 = vpop.f32.mrb[0].mxu0
        %v2199 = vpop.f32.mrb[0].mxu0
        %v2200 = vpop.f32.mrb[0].mxu0
        %2201 = vdwg.mxu0
        %v2203 = vsel %vm765, %v2151, 0
        %v2206 = vsel %vm765, %v2153, 0
        %2208 = vmatprep.subr.bf16.mxu0 0
        %2209 = vmatpush1.bf16.xpose.msra.mxu0 %v2206
        %2210 = vmatprep.subr.bf16.mxu0 0
        %2211 = vmatpush1.bf16.xpose.msra.mxu0 0
        %2212 = vmatprep.subr.bf16.mxu0 0
        %2213 = vmatpush1.bf16.xpose.msra.mxu0 0
        %2214 = vmatprep.subr.bf16.mxu0 0
        %2215 = vmatpush1.bf16.xpose.msra.mxu0 0
        %2216 = vmatprep.subr.bf16.mxu0 0
        %2217 = vmatpush1.bf16.xpose.msra.mxu0 0
        %2218 = vmatprep.subr.bf16.mxu0 0
        %2219 = vmatpush1.bf16.xpose.msra.mxu0 0
        %2220 = vmatprep.subr.bf16.mxu0 0
        %2221 = vmatpush1.bf16.xpose.msra.mxu0 0
        %2222 = vmatprep.subr.bf16.mxu0 0
        %2223 = vmatpush1.bf16.xpose.msra.mxu0 0
        %2224 = vmatprep.subr.bf16.mxu0 0
        %2225 = vmatpush1.bf16.xpose.msra.mxu0 0
        %2226 = vmatprep.subr.bf16.mxu0 0
        %2227 = vmatpush1.bf16.xpose.msra.mxu0 0
        %2228 = vmatprep.subr.bf16.mxu0 0
        %2229 = vmatpush1.bf16.xpose.msra.mxu0 0
        %2230 = vmatprep.subr.bf16.mxu0 0
        %2231 = vmatpush1.bf16.xpose.msra.mxu0 0
        %2232 = vmatprep.subr.bf16.mxu0 0
        %2233 = vmatpush1.bf16.xpose.msra.mxu0 0
        %2234 = vmatprep.subr.bf16.mxu0 0
        %2235 = vmatpush1.bf16.xpose.msra.mxu0 0
        %2236 = vmatprep.subr.bf16.mxu0 0
        %2237 = vmatpush1.bf16.xpose.msra.mxu0 0
        %2238 = vmatprep.subr.bf16.mxu0 0
        %2239 = vmatpush1.bf16.xpose.msra.mxu0 0
        %2240 = vmatprep.mubr.bf16.mxu0 0
        %2241 = vmatmul.mubr.bf16.gmra.mrb[0].mxu0 %v2203
        %v2242 = vpop.f32.mrb[0].mxu0
        %v2243 = vadd.f32 0.0, %v2242
        %v2244 = vpop.f32.mrb[0].mxu0
        %v2245 = vpop.f32.mrb[0].mxu0
        %v2246 = vpop.f32.mrb[0].mxu0
        %2247 = vdwg.mxu0
        %2249 = vrot.lane.b32.xlu0 %v2150, 120
        %v2250 = vpop.permute.xlu0 %2249
        %2252 = vrot.lane.b32.xlu0 %v2152, 120
        %v2253 = vpop.permute.xlu0 %2252
        %v2255 = vsel %vm765, %v2250, 0
        %v2258 = vsel %vm765, %v2253, 0
        %2260 = vmatprep.subr.bf16.mxu0 0
        %2261 = vmatpush1.bf16.xpose.msra.mxu0 %v2258
        %2262 = vmatprep.subr.bf16.mxu0 0
        %2263 = vmatpush1.bf16.xpose.msra.mxu0 0
        %2264 = vmatprep.subr.bf16.mxu0 0
        %2265 = vmatpush1.bf16.xpose.msra.mxu0 0
        %2266 = vmatprep.subr.bf16.mxu0 0
        %2267 = vmatpush1.bf16.xpose.msra.mxu0 0
        %2268 = vmatprep.subr.bf16.mxu0 0
        %2269 = vmatpush1.bf16.xpose.msra.mxu0 0
        %2270 = vmatprep.subr.bf16.mxu0 0
        %2271 = vmatpush1.bf16.xpose.msra.mxu0 0
        %2272 = vmatprep.subr.bf16.mxu0 0
        %2273 = vmatpush1.bf16.xpose.msra.mxu0 0
        %2274 = vmatprep.subr.bf16.mxu0 0
        %2275 = vmatpush1.bf16.xpose.msra.mxu0 0
        %2276 = vmatprep.subr.bf16.mxu0 0
        %2277 = vmatpush1.bf16.xpose.msra.mxu0 0
        %2278 = vmatprep.subr.bf16.mxu0 0
        %2279 = vmatpush1.bf16.xpose.msra.mxu0 0
        %2280 = vmatprep.subr.bf16.mxu0 0
        %2281 = vmatpush1.bf16.xpose.msra.mxu0 0
        %2282 = vmatprep.subr.bf16.mxu0 0
        %2283 = vmatpush1.bf16.xpose.msra.mxu0 0
        %2284 = vmatprep.subr.bf16.mxu0 0
        %2285 = vmatpush1.bf16.xpose.msra.mxu0 0
        %2286 = vmatprep.subr.bf16.mxu0 0
        %2287 = vmatpush1.bf16.xpose.msra.mxu0 0
        %2288 = vmatprep.subr.bf16.mxu0 0
        %2289 = vmatpush1.bf16.xpose.msra.mxu0 0
        %2290 = vmatprep.subr.bf16.mxu0 0
        %2291 = vmatpush1.bf16.xpose.msra.mxu0 0
        %2292 = vmatprep.mubr.bf16.mxu0 0
        %2293 = vmatmul.mubr.bf16.gmra.mrb[0].mxu0 %v2255
        %v2294 = vpop.f32.mrb[0].mxu0
        %v2295 = vadd.f32 0.0, %v2294
        %v2296 = vpop.f32.mrb[0].mxu0
        %v2297 = vpop.f32.mrb[0].mxu0
        %v2298 = vpop.f32.mrb[0].mxu0
        %2299 = vdwg.mxu0
        %2301 = vrot.lane.b32.xlu0 %v2151, 120
        %v2302 = vpop.permute.xlu0 %2301
        %2304 = vrot.lane.b32.xlu0 %v2153, 120
        %v2305 = vpop.permute.xlu0 %2304
        %v2307 = vsel %vm765, %v2302, 0
        %v2310 = vsel %vm765, %v2305, 0
        %2312 = vmatprep.subr.bf16.mxu0 0
        %2313 = vmatpush1.bf16.xpose.msra.mxu0 %v2310
        %2314 = vmatprep.subr.bf16.mxu0 0
        %2315 = vmatpush1.bf16.xpose.msra.mxu0 0
        %2316 = vmatprep.subr.bf16.mxu0 0
        %2317 = vmatpush1.bf16.xpose.msra.mxu0 0
        %2318 = vmatprep.subr.bf16.mxu0 0
        %2319 = vmatpush1.bf16.xpose.msra.mxu0 0
        %2320 = vmatprep.subr.bf16.mxu0 0
        %2321 = vmatpush1.bf16.xpose.msra.mxu0 0
        %2322 = vmatprep.subr.bf16.mxu0 0
        %2323 = vmatpush1.bf16.xpose.msra.mxu0 0
        %2324 = vmatprep.subr.bf16.mxu0 0
        %2325 = vmatpush1.bf16.xpose.msra.mxu0 0
        %2326 = vmatprep.subr.bf16.mxu0 0
        %2327 = vmatpush1.bf16.xpose.msra.mxu0 0
        %2328 = vmatprep.subr.bf16.mxu0 0
        %2329 = vmatpush1.bf16.xpose.msra.mxu0 0
        %2330 = vmatprep.subr.bf16.mxu0 0
        %2331 = vmatpush1.bf16.xpose.msra.mxu0 0
        %2332 = vmatprep.subr.bf16.mxu0 0
        %2333 = vmatpush1.bf16.xpose.msra.mxu0 0
        %2334 = vmatprep.subr.bf16.mxu0 0
        %2335 = vmatpush1.bf16.xpose.msra.mxu0 0
        %2336 = vmatprep.subr.bf16.mxu0 0
        %2337 = vmatpush1.bf16.xpose.msra.mxu0 0
        %2338 = vmatprep.subr.bf16.mxu0 0
        %2339 = vmatpush1.bf16.xpose.msra.mxu0 0
        %2340 = vmatprep.subr.bf16.mxu0 0
        %2341 = vmatpush1.bf16.xpose.msra.mxu0 0
        %2342 = vmatprep.subr.bf16.mxu0 0
        %2343 = vmatpush1.bf16.xpose.msra.mxu0 0
        %2344 = vmatprep.mubr.bf16.mxu0 0
        %2345 = vmatmul.mubr.bf16.gmra.mrb[0].mxu0 %v2307
        %v2346 = vpop.f32.mrb[0].mxu0
        %v2347 = vadd.f32 0.0, %v2346
        %v2348 = vpop.f32.mrb[0].mxu0
        %v2349 = vpop.f32.mrb[0].mxu0
        %v2350 = vpop.f32.mrb[0].mxu0
        %2351 = vdwg.mxu0
        %2352 = vrot.lane.b32.xlu0 %v2150, 112
        %v2353 = vpop.permute.xlu0 %2352
        %2354 = vrot.lane.b32.xlu0 %v2152, 112
        %v2355 = vpop.permute.xlu0 %2354
        %v2357 = vsel %vm765, %v2353, 0
        %v2360 = vsel %vm765, %v2355, 0
        %2362 = vmatprep.subr.bf16.mxu0 0
        %2363 = vmatpush1.bf16.xpose.msra.mxu0 %v2360
        %2364 = vmatprep.subr.bf16.mxu0 0
        %2365 = vmatpush1.bf16.xpose.msra.mxu0 0
        %2366 = vmatprep.subr.bf16.mxu0 0
        %2367 = vmatpush1.bf16.xpose.msra.mxu0 0
        %2368 = vmatprep.subr.bf16.mxu0 0
        %2369 = vmatpush1.bf16.xpose.msra.mxu0 0
        %2370 = vmatprep.subr.bf16.mxu0 0
        %2371 = vmatpush1.bf16.xpose.msra.mxu0 0
        %2372 = vmatprep.subr.bf16.mxu0 0
        %2373 = vmatpush1.bf16.xpose.msra.mxu0 0
        %2374 = vmatprep.subr.bf16.mxu0 0
        %2375 = vmatpush1.bf16.xpose.msra.mxu0 0
        %2376 = vmatprep.subr.bf16.mxu0 0
        %2377 = vmatpush1.bf16.xpose.msra.mxu0 0
        %2378 = vmatprep.subr.bf16.mxu0 0
        %2379 = vmatpush1.bf16.xpose.msra.mxu0 0
        %2380 = vmatprep.subr.bf16.mxu0 0
        %2381 = vmatpush1.bf16.xpose.msra.mxu0 0
        %2382 = vmatprep.subr.bf16.mxu0 0
        %2383 = vmatpush1.bf16.xpose.msra.mxu0 0
        %2384 = vmatprep.subr.bf16.mxu0 0
        %2385 = vmatpush1.bf16.xpose.msra.mxu0 0
        %2386 = vmatprep.subr.bf16.mxu0 0
        %2387 = vmatpush1.bf16.xpose.msra.mxu0 0
        %2388 = vmatprep.subr.bf16.mxu0 0
        %2389 = vmatpush1.bf16.xpose.msra.mxu0 0
        %2390 = vmatprep.subr.bf16.mxu0 0
        %2391 = vmatpush1.bf16.xpose.msra.mxu0 0
        %2392 = vmatprep.subr.bf16.mxu0 0
        %2393 = vmatpush1.bf16.xpose.msra.mxu0 0
        %2394 = vmatprep.mubr.bf16.mxu0 0
        %2395 = vmatmul.mubr.bf16.gmra.mrb[0].mxu0 %v2357
        %v2396 = vpop.f32.mrb[0].mxu0
        %v2397 = vadd.f32 0.0, %v2396
        %v2398 = vpop.f32.mrb[0].mxu0
        %v2399 = vpop.f32.mrb[0].mxu0
        %v2400 = vpop.f32.mrb[0].mxu0
        %2401 = vdwg.mxu0
        %2402 = vrot.lane.b32.xlu0 %v2151, 112
        %v2403 = vpop.permute.xlu0 %2402
        %2404 = vrot.lane.b32.xlu0 %v2153, 112
        %v2405 = vpop.permute.xlu0 %2404
        %v2407 = vsel %vm765, %v2403, 0
        %v2410 = vsel %vm765, %v2405, 0
        %2412 = vmatprep.subr.bf16.mxu0 0
        %2413 = vmatpush1.bf16.xpose.msra.mxu0 %v2410
        %2414 = vmatprep.subr.bf16.mxu0 0
        %2415 = vmatpush1.bf16.xpose.msra.mxu0 0
        %2416 = vmatprep.subr.bf16.mxu0 0
        %2417 = vmatpush1.bf16.xpose.msra.mxu0 0
        %2418 = vmatprep.subr.bf16.mxu0 0
        %2419 = vmatpush1.bf16.xpose.msra.mxu0 0
        %2420 = vmatprep.subr.bf16.mxu0 0
        %2421 = vmatpush1.bf16.xpose.msra.mxu0 0
        %2422 = vmatprep.subr.bf16.mxu0 0
        %2423 = vmatpush1.bf16.xpose.msra.mxu0 0
        %2424 = vmatprep.subr.bf16.mxu0 0
        %2425 = vmatpush1.bf16.xpose.msra.mxu0 0
        %2426 = vmatprep.subr.bf16.mxu0 0
        %2427 = vmatpush1.bf16.xpose.msra.mxu0 0
        %2428 = vmatprep.subr.bf16.mxu0 0
        %2429 = vmatpush1.bf16.xpose.msra.mxu0 0
        %2430 = vmatprep.subr.bf16.mxu0 0
        %2431 = vmatpush1.bf16.xpose.msra.mxu0 0
        %2432 = vmatprep.subr.bf16.mxu0 0
        %2433 = vmatpush1.bf16.xpose.msra.mxu0 0
        %2434 = vmatprep.subr.bf16.mxu0 0
        %2435 = vmatpush1.bf16.xpose.msra.mxu0 0
        %2436 = vmatprep.subr.bf16.mxu0 0
        %2437 = vmatpush1.bf16.xpose.msra.mxu0 0
        %2438 = vmatprep.subr.bf16.mxu0 0
        %2439 = vmatpush1.bf16.xpose.msra.mxu0 0
        %2440 = vmatprep.subr.bf16.mxu0 0
        %2441 = vmatpush1.bf16.xpose.msra.mxu0 0
        %2442 = vmatprep.subr.bf16.mxu0 0
        %2443 = vmatpush1.bf16.xpose.msra.mxu0 0
        %2444 = vmatprep.mubr.bf16.mxu0 0
        %2445 = vmatmul.mubr.bf16.gmra.mrb[0].mxu0 %v2407
        %v2446 = vpop.f32.mrb[0].mxu0
        %v2447 = vadd.f32 0.0, %v2446
        %v2448 = vpop.f32.mrb[0].mxu0
        %v2449 = vpop.f32.mrb[0].mxu0
        %v2450 = vpop.f32.mrb[0].mxu0
        %2451 = vdwg.mxu0
        %2452 = vrot.lane.b32.xlu0 %v2150, 104
        %v2453 = vpop.permute.xlu0 %2452
        %2454 = vrot.lane.b32.xlu0 %v2152, 104
        %v2455 = vpop.permute.xlu0 %2454
        %v2457 = vsel %vm765, %v2453, 0
        %v2460 = vsel %vm765, %v2455, 0
        %2462 = vmatprep.subr.bf16.mxu0 0
        %2463 = vmatpush1.bf16.xpose.msra.mxu0 %v2460
        %2464 = vmatprep.subr.bf16.mxu0 0
        %2465 = vmatpush1.bf16.xpose.msra.mxu0 0
        %2466 = vmatprep.subr.bf16.mxu0 0
        %2467 = vmatpush1.bf16.xpose.msra.mxu0 0
        %2468 = vmatprep.subr.bf16.mxu0 0
        %2469 = vmatpush1.bf16.xpose.msra.mxu0 0
        %2470 = vmatprep.subr.bf16.mxu0 0
        %2471 = vmatpush1.bf16.xpose.msra.mxu0 0
        %2472 = vmatprep.subr.bf16.mxu0 0
        %2473 = vmatpush1.bf16.xpose.msra.mxu0 0
        %2474 = vmatprep.subr.bf16.mxu0 0
        %2475 = vmatpush1.bf16.xpose.msra.mxu0 0
        %2476 = vmatprep.subr.bf16.mxu0 0
        %2477 = vmatpush1.bf16.xpose.msra.mxu0 0
        %2478 = vmatprep.subr.bf16.mxu0 0
        %2479 = vmatpush1.bf16.xpose.msra.mxu0 0
        %2480 = vmatprep.subr.bf16.mxu0 0
        %2481 = vmatpush1.bf16.xpose.msra.mxu0 0
        %2482 = vmatprep.subr.bf16.mxu0 0
        %2483 = vmatpush1.bf16.xpose.msra.mxu0 0
        %2484 = vmatprep.subr.bf16.mxu0 0
        %2485 = vmatpush1.bf16.xpose.msra.mxu0 0
        %2486 = vmatprep.subr.bf16.mxu0 0
        %2487 = vmatpush1.bf16.xpose.msra.mxu0 0
        %2488 = vmatprep.subr.bf16.mxu0 0
        %2489 = vmatpush1.bf16.xpose.msra.mxu0 0
        %2490 = vmatprep.subr.bf16.mxu0 0
        %2491 = vmatpush1.bf16.xpose.msra.mxu0 0
        %2492 = vmatprep.subr.bf16.mxu0 0
        %2493 = vmatpush1.bf16.xpose.msra.mxu0 0
        %2494 = vmatprep.mubr.bf16.mxu0 0
        %2495 = vmatmul.mubr.bf16.gmra.mrb[0].mxu0 %v2457
        %v2496 = vpop.f32.mrb[0].mxu0
        %v2497 = vadd.f32 0.0, %v2496
        %v2498 = vpop.f32.mrb[0].mxu0
        %v2499 = vpop.f32.mrb[0].mxu0
        %v2500 = vpop.f32.mrb[0].mxu0
        %2501 = vdwg.mxu0
        %2502 = vrot.lane.b32.xlu0 %v2151, 104
        %v2503 = vpop.permute.xlu0 %2502
        %2504 = vrot.lane.b32.xlu0 %v2153, 104
        %v2505 = vpop.permute.xlu0 %2504
        %v2507 = vsel %vm765, %v2503, 0
        %v2510 = vsel %vm765, %v2505, 0
        %2512 = vmatprep.subr.bf16.mxu0 0
        %2513 = vmatpush1.bf16.xpose.msra.mxu0 %v2510
        %2514 = vmatprep.subr.bf16.mxu0 0
        %2515 = vmatpush1.bf16.xpose.msra.mxu0 0
        %2516 = vmatprep.subr.bf16.mxu0 0
        %2517 = vmatpush1.bf16.xpose.msra.mxu0 0
        %2518 = vmatprep.subr.bf16.mxu0 0
        %2519 = vmatpush1.bf16.xpose.msra.mxu0 0
        %2520 = vmatprep.subr.bf16.mxu0 0
        %2521 = vmatpush1.bf16.xpose.msra.mxu0 0
        %2522 = vmatprep.subr.bf16.mxu0 0
        %2523 = vmatpush1.bf16.xpose.msra.mxu0 0
        %2524 = vmatprep.subr.bf16.mxu0 0
        %2525 = vmatpush1.bf16.xpose.msra.mxu0 0
        %2526 = vmatprep.subr.bf16.mxu0 0
        %2527 = vmatpush1.bf16.xpose.msra.mxu0 0
        %2528 = vmatprep.subr.bf16.mxu0 0
        %2529 = vmatpush1.bf16.xpose.msra.mxu0 0
        %2530 = vmatprep.subr.bf16.mxu0 0
        %2531 = vmatpush1.bf16.xpose.msra.mxu0 0
        %2532 = vmatprep.subr.bf16.mxu0 0
        %2533 = vmatpush1.bf16.xpose.msra.mxu0 0
        %2534 = vmatprep.subr.bf16.mxu0 0
        %2535 = vmatpush1.bf16.xpose.msra.mxu0 0
        %2536 = vmatprep.subr.bf16.mxu0 0
        %2537 = vmatpush1.bf16.xpose.msra.mxu0 0
        %2538 = vmatprep.subr.bf16.mxu0 0
        %2539 = vmatpush1.bf16.xpose.msra.mxu0 0
        %2540 = vmatprep.subr.bf16.mxu0 0
        %2541 = vmatpush1.bf16.xpose.msra.mxu0 0
        %2542 = vmatprep.subr.bf16.mxu0 0
        %2543 = vmatpush1.bf16.xpose.msra.mxu0 0
        %2544 = vmatprep.mubr.bf16.mxu0 0
        %2545 = vmatmul.mubr.bf16.gmra.mrb[0].mxu0 %v2507
        %v2546 = vpop.f32.mrb[0].mxu0
        %v2547 = vadd.f32 0.0, %v2546
        %v2548 = vpop.f32.mrb[0].mxu0
        %v2549 = vpop.f32.mrb[0].mxu0
        %v2550 = vpop.f32.mrb[0].mxu0
        %2551 = vdwg.mxu0
        %v2552 = vsel %vm765, %v2197, -inf
        %2553 = vmax.xlane.f32.xlu0 %v2552
        %v2554 = vpop.xlane.xlu0 %2553
        %v2555 = vsel %vm765, %v2295, -inf
        %2556 = vmax.xlane.f32.xlu0 %v2555
        %v2557 = vpop.xlane.xlu0 %2556
        %v2558 = vsel %vm765, %v2397, -inf
        %2559 = vmax.xlane.f32.xlu0 %v2558
        %v2560 = vpop.xlane.xlu0 %2559
        %v2561 = vsel %vm765, %v2497, -inf
        %2562 = vmax.xlane.f32.xlu0 %v2561
        %v2563 = vpop.xlane.xlu0 %2562
        %v2564 = vsel %vm765, %v2243, -inf
        %2565 = vmax.xlane.f32.xlu0 %v2564
        %v2566 = vpop.xlane.xlu0 %2565
        %v2567 = vsel %vm765, %v2347, -inf
        %2568 = vmax.xlane.f32.xlu0 %v2567
        %v2569 = vpop.xlane.xlu0 %2568
        %v2570 = vsel %vm765, %v2447, -inf
        %2571 = vmax.xlane.f32.xlu0 %v2570
        %v2572 = vpop.xlane.xlu0 %2571
        %v2573 = vsel %vm765, %v2547, -inf
        %2574 = vmax.xlane.f32.xlu0 %v2573
        %v2575 = vpop.xlane.xlu0 %2574
        %v2576 = vsub.f32 %v2197, %v2554
        %v2577 = vsub.f32 %v2295, %v2557
        %v2578 = vsub.f32 %v2397, %v2560
        %v2579 = vsub.f32 %v2497, %v2563
        %v2580 = vsub.f32 %v2243, %v2566
        %v2581 = vsub.f32 %v2347, %v2569
        %v2582 = vsub.f32 %v2447, %v2572
        %v2583 = vsub.f32 %v2547, %v2575
        %v2584 = vmul.f32 %v2576, 1.442695
        %v2585 = vpow.pop %v2584
        %v2586 = vmul.f32 %v2577, 1.442695
        %v2587 = vpow.pop %v2586
        %v2588 = vmul.f32 %v2578, 1.442695
        %v2589 = vpow.pop %v2588
        %v2590 = vmul.f32 %v2579, 1.442695
        %v2591 = vpow.pop %v2590
        %v2592 = vmul.f32 %v2580, 1.442695
        %v2593 = vpow.pop %v2592
        %v2594 = vmul.f32 %v2581, 1.442695
        %v2595 = vpow.pop %v2594
        %v2596 = vmul.f32 %v2582, 1.442695
        %v2597 = vpow.pop %v2596
        %v2598 = vmul.f32 %v2583, 1.442695
        %v2599 = vpow.pop %v2598
        %v2600 = vsel %vm765, %v2585, 0.0
        %2601 = vadd.xlane.f32.xlu0 %v2600
        %v2602 = vpop.xlane.xlu0 %2601
        %v2603 = vsel %vm765, %v2587, 0.0
        %2604 = vadd.xlane.f32.xlu0 %v2603
        %v2605 = vpop.xlane.xlu0 %2604
        %v2606 = vsel %vm765, %v2589, 0.0
        %2607 = vadd.xlane.f32.xlu0 %v2606
        %v2608 = vpop.xlane.xlu0 %2607
        %v2609 = vsel %vm765, %v2591, 0.0
        %2610 = vadd.xlane.f32.xlu0 %v2609
        %v2611 = vpop.xlane.xlu0 %2610
        %v2612 = vsel %vm765, %v2593, 0.0
        %2613 = vadd.xlane.f32.xlu0 %v2612
        %v2614 = vpop.xlane.xlu0 %2613
        %v2615 = vsel %vm765, %v2595, 0.0
        %2616 = vadd.xlane.f32.xlu0 %v2615
        %v2617 = vpop.xlane.xlu0 %2616
        %v2618 = vsel %vm765, %v2597, 0.0
        %2619 = vadd.xlane.f32.xlu0 %v2618
        %v2620 = vpop.xlane.xlu0 %2619
        %v2621 = vsel %vm765, %v2599, 0.0
        %2622 = vadd.xlane.f32.xlu0 %v2621
        %v2623 = vpop.xlane.xlu0 %2622
        %v2624 = vrcp.pop %v2602
        %v2625 = vmul.f32 %v2585, %v2624
        %v2626 = vrcp.pop %v2605
        %v2627 = vmul.f32 %v2587, %v2626
        %v2628 = vrcp.pop %v2608
        %v2629 = vmul.f32 %v2589, %v2628
        %v2630 = vrcp.pop %v2611
        %v2631 = vmul.f32 %v2591, %v2630
        %v2632 = vrcp.pop %v2614
        %v2633 = vmul.f32 %v2593, %v2632
        %v2634 = vrcp.pop %v2617
        %v2635 = vmul.f32 %v2595, %v2634
        %v2636 = vrcp.pop %v2620
        %v2637 = vmul.f32 %v2597, %v2636
        %v2638 = vrcp.pop %v2623
        %v2639 = vmul.f32 %v2599, %v2638
        %v2640 = vpack.c.bf16 %v2627, %v2625
        %v2641 = vpack.c.bf16 %v2631, %v2629
        %v2642 = vpack.c.bf16 %v2635, %v2633
        %v2643 = vpack.c.bf16 %v2639, %v2637
        %v2645 = vsel %vm765, %v2640, 0
        %v2648 = vsel %vm1257, %v2154, 0
        %2650 = vmatprep.subr.bf16.mxu0 0
        %2651 = vmatpush1.bf16.msra.mxu0 %v2648
        %2652 = vmatprep.subr.bf16.mxu0 0
        %2653 = vmatpush1.bf16.msra.mxu0 0
        %2654 = vmatprep.subr.bf16.mxu0 0
        %2655 = vmatpush1.bf16.msra.mxu0 0
        %2656 = vmatprep.subr.bf16.mxu0 0
        %2657 = vmatpush1.bf16.msra.mxu0 0
        %2658 = vmatprep.subr.bf16.mxu0 0
        %2659 = vmatpush1.bf16.msra.mxu0 0
        %2660 = vmatprep.subr.bf16.mxu0 0
        %2661 = vmatpush1.bf16.msra.mxu0 0
        %2662 = vmatprep.subr.bf16.mxu0 0
        %2663 = vmatpush1.bf16.msra.mxu0 0
        %2664 = vmatprep.subr.bf16.mxu0 0
        %2665 = vmatpush1.bf16.msra.mxu0 0
        %2666 = vmatprep.subr.bf16.mxu0 0
        %2667 = vmatpush1.bf16.msra.mxu0 0
        %2668 = vmatprep.subr.bf16.mxu0 0
        %2669 = vmatpush1.bf16.msra.mxu0 0
        %2670 = vmatprep.subr.bf16.mxu0 0
        %2671 = vmatpush1.bf16.msra.mxu0 0
        %2672 = vmatprep.subr.bf16.mxu0 0
        %2673 = vmatpush1.bf16.msra.mxu0 0
        %2674 = vmatprep.subr.bf16.mxu0 0
        %2675 = vmatpush1.bf16.msra.mxu0 0
        %2676 = vmatprep.subr.bf16.mxu0 0
        %2677 = vmatpush1.bf16.msra.mxu0 0
        %2678 = vmatprep.subr.bf16.mxu0 0
        %2679 = vmatpush1.bf16.msra.mxu0 0
        %2680 = vmatprep.subr.bf16.mxu0 0
        %2681 = vmatpush1.bf16.msra.mxu0 0
        %2682 = vmatprep.mubr.bf16.mxu0 0
        %2683 = vmatmul.mubr.bf16.gmra.mrb[0].mxu0 %v2645
        %v2684 = vpop.f32.mrb[0].mxu0
        %v2685 = vadd.f32 0.0, %v2684
        %v2686 = vpop.f32.mrb[0].mxu0
        %v2687 = vpop.f32.mrb[0].mxu0
        %v2688 = vpop.f32.mrb[0].mxu0
        %2689 = vdwg.mxu0
        %v2691 = vsel %vm765, %v2642, 0
        %v2694 = vsel %vm1257, %v2155, 0
        %2696 = vmatprep.subr.bf16.mxu0 0
        %2697 = vmatpush1.bf16.msra.mxu0 %v2694
        %2698 = vmatprep.subr.bf16.mxu0 0
        %2699 = vmatpush1.bf16.msra.mxu0 0
        %2700 = vmatprep.subr.bf16.mxu0 0
        %2701 = vmatpush1.bf16.msra.mxu0 0
        %2702 = vmatprep.subr.bf16.mxu0 0
        %2703 = vmatpush1.bf16.msra.mxu0 0
        %2704 = vmatprep.subr.bf16.mxu0 0
        %2705 = vmatpush1.bf16.msra.mxu0 0
        %2706 = vmatprep.subr.bf16.mxu0 0
        %2707 = vmatpush1.bf16.msra.mxu0 0
        %2708 = vmatprep.subr.bf16.mxu0 0
        %2709 = vmatpush1.bf16.msra.mxu0 0
        %2710 = vmatprep.subr.bf16.mxu0 0
        %2711 = vmatpush1.bf16.msra.mxu0 0
        %2712 = vmatprep.subr.bf16.mxu0 0
        %2713 = vmatpush1.bf16.msra.mxu0 0
        %2714 = vmatprep.subr.bf16.mxu0 0
        %2715 = vmatpush1.bf16.msra.mxu0 0
        %2716 = vmatprep.subr.bf16.mxu0 0
        %2717 = vmatpush1.bf16.msra.mxu0 0
        %2718 = vmatprep.subr.bf16.mxu0 0
        %2719 = vmatpush1.bf16.msra.mxu0 0
        %2720 = vmatprep.subr.bf16.mxu0 0
        %2721 = vmatpush1.bf16.msra.mxu0 0
        %2722 = vmatprep.subr.bf16.mxu0 0
        %2723 = vmatpush1.bf16.msra.mxu0 0
        %2724 = vmatprep.subr.bf16.mxu0 0
        %2725 = vmatpush1.bf16.msra.mxu0 0
        %2726 = vmatprep.subr.bf16.mxu0 0
        %2727 = vmatpush1.bf16.msra.mxu0 0
        %2728 = vmatprep.mubr.bf16.mxu0 0
        %2729 = vmatmul.mubr.bf16.gmra.mrb[0].mxu0 %v2691
        %v2730 = vpop.f32.mrb[0].mxu0
        %v2731 = vadd.f32 0.0, %v2730
        %v2732 = vpop.f32.mrb[0].mxu0
        %v2733 = vpop.f32.mrb[0].mxu0
        %v2734 = vpop.f32.mrb[0].mxu0
        %2735 = vdwg.mxu0
        %v2737 = vrot.slane %v2640, 4
        %2739 = vrot.lane.b32.xlu0 %v2154, 120
        %v2740 = vpop.permute.xlu0 %2739
        %v2742 = vsel %vm765, %v2737, 0
        %v2745 = vsel %vm1257, %v2740, 0
        %2747 = vmatprep.subr.bf16.mxu0 0
        %2748 = vmatpush1.bf16.msra.mxu0 %v2745
        %2749 = vmatprep.subr.bf16.mxu0 0
        %2750 = vmatpush1.bf16.msra.mxu0 0
        %2751 = vmatprep.subr.bf16.mxu0 0
        %2752 = vmatpush1.bf16.msra.mxu0 0
        %2753 = vmatprep.subr.bf16.mxu0 0
        %2754 = vmatpush1.bf16.msra.mxu0 0
        %2755 = vmatprep.subr.bf16.mxu0 0
        %2756 = vmatpush1.bf16.msra.mxu0 0
        %2757 = vmatprep.subr.bf16.mxu0 0
        %2758 = vmatpush1.bf16.msra.mxu0 0
        %2759 = vmatprep.subr.bf16.mxu0 0
        %2760 = vmatpush1.bf16.msra.mxu0 0
        %2761 = vmatprep.subr.bf16.mxu0 0
        %2762 = vmatpush1.bf16.msra.mxu0 0
        %2763 = vmatprep.subr.bf16.mxu0 0
        %2764 = vmatpush1.bf16.msra.mxu0 0
        %2765 = vmatprep.subr.bf16.mxu0 0
        %2766 = vmatpush1.bf16.msra.mxu0 0
        %2767 = vmatprep.subr.bf16.mxu0 0
        %2768 = vmatpush1.bf16.msra.mxu0 0
        %2769 = vmatprep.subr.bf16.mxu0 0
        %2770 = vmatpush1.bf16.msra.mxu0 0
        %2771 = vmatprep.subr.bf16.mxu0 0
        %2772 = vmatpush1.bf16.msra.mxu0 0
        %2773 = vmatprep.subr.bf16.mxu0 0
        %2774 = vmatpush1.bf16.msra.mxu0 0
        %2775 = vmatprep.subr.bf16.mxu0 0
        %2776 = vmatpush1.bf16.msra.mxu0 0
        %2777 = vmatprep.subr.bf16.mxu0 0
        %2778 = vmatpush1.bf16.msra.mxu0 0
        %2779 = vmatprep.mubr.bf16.mxu0 0
        %2780 = vmatmul.mubr.bf16.gmra.mrb[0].mxu0 %v2742
        %v2781 = vpop.f32.mrb[0].mxu0
        %v2782 = vadd.f32 0.0, %v2781
        %v2783 = vpop.f32.mrb[0].mxu0
        %v2784 = vpop.f32.mrb[0].mxu0
        %v2785 = vpop.f32.mrb[0].mxu0
        %2786 = vdwg.mxu0
        %v2788 = vrot.slane %v2642, 4
        %2790 = vrot.lane.b32.xlu0 %v2155, 120
        %v2791 = vpop.permute.xlu0 %2790
        %v2793 = vsel %vm765, %v2788, 0
        %v2796 = vsel %vm1257, %v2791, 0
        %2798 = vmatprep.subr.bf16.mxu0 0
        %2799 = vmatpush1.bf16.msra.mxu0 %v2796
        %2800 = vmatprep.subr.bf16.mxu0 0
        %2801 = vmatpush1.bf16.msra.mxu0 0
        %2802 = vmatprep.subr.bf16.mxu0 0
        %2803 = vmatpush1.bf16.msra.mxu0 0
        %2804 = vmatprep.subr.bf16.mxu0 0
        %2805 = vmatpush1.bf16.msra.mxu0 0
        %2806 = vmatprep.subr.bf16.mxu0 0
        %2807 = vmatpush1.bf16.msra.mxu0 0
        %2808 = vmatprep.subr.bf16.mxu0 0
        %2809 = vmatpush1.bf16.msra.mxu0 0
        %2810 = vmatprep.subr.bf16.mxu0 0
        %2811 = vmatpush1.bf16.msra.mxu0 0
        %2812 = vmatprep.subr.bf16.mxu0 0
        %2813 = vmatpush1.bf16.msra.mxu0 0
        %2814 = vmatprep.subr.bf16.mxu0 0
        %2815 = vmatpush1.bf16.msra.mxu0 0
        %2816 = vmatprep.subr.bf16.mxu0 0
        %2817 = vmatpush1.bf16.msra.mxu0 0
        %2818 = vmatprep.subr.bf16.mxu0 0
        %2819 = vmatpush1.bf16.msra.mxu0 0
        %2820 = vmatprep.subr.bf16.mxu0 0
        %2821 = vmatpush1.bf16.msra.mxu0 0
        %2822 = vmatprep.subr.bf16.mxu0 0
        %2823 = vmatpush1.bf16.msra.mxu0 0
        %2824 = vmatprep.subr.bf16.mxu0 0
        %2825 = vmatpush1.bf16.msra.mxu0 0
        %2826 = vmatprep.subr.bf16.mxu0 0
        %2827 = vmatpush1.bf16.msra.mxu0 0
        %2828 = vmatprep.subr.bf16.mxu0 0
        %2829 = vmatpush1.bf16.msra.mxu0 0
        %2830 = vmatprep.mubr.bf16.mxu0 0
        %2831 = vmatmul.mubr.bf16.gmra.mrb[0].mxu0 %v2793
        %v2832 = vpop.f32.mrb[0].mxu0
        %v2833 = vadd.f32 0.0, %v2832
        %v2834 = vpop.f32.mrb[0].mxu0
        %v2835 = vpop.f32.mrb[0].mxu0
        %v2836 = vpop.f32.mrb[0].mxu0
        %2837 = vdwg.mxu0
        %2838 = vrot.lane.b32.xlu0 %v2154, 112
        %v2839 = vpop.permute.xlu0 %2838
        %v2841 = vsel %vm765, %v2641, 0
        %v2844 = vsel %vm1257, %v2839, 0
        %2846 = vmatprep.subr.bf16.mxu0 0
        %2847 = vmatpush1.bf16.msra.mxu0 %v2844
        %2848 = vmatprep.subr.bf16.mxu0 0
        %2849 = vmatpush1.bf16.msra.mxu0 0
        %2850 = vmatprep.subr.bf16.mxu0 0
        %2851 = vmatpush1.bf16.msra.mxu0 0
        %2852 = vmatprep.subr.bf16.mxu0 0
        %2853 = vmatpush1.bf16.msra.mxu0 0
        %2854 = vmatprep.subr.bf16.mxu0 0
        %2855 = vmatpush1.bf16.msra.mxu0 0
        %2856 = vmatprep.subr.bf16.mxu0 0
        %2857 = vmatpush1.bf16.msra.mxu0 0
        %2858 = vmatprep.subr.bf16.mxu0 0
        %2859 = vmatpush1.bf16.msra.mxu0 0
        %2860 = vmatprep.subr.bf16.mxu0 0
        %2861 = vmatpush1.bf16.msra.mxu0 0
        %2862 = vmatprep.subr.bf16.mxu0 0
        %2863 = vmatpush1.bf16.msra.mxu0 0
        %2864 = vmatprep.subr.bf16.mxu0 0
        %2865 = vmatpush1.bf16.msra.mxu0 0
        %2866 = vmatprep.subr.bf16.mxu0 0
        %2867 = vmatpush1.bf16.msra.mxu0 0
        %2868 = vmatprep.subr.bf16.mxu0 0
        %2869 = vmatpush1.bf16.msra.mxu0 0
        %2870 = vmatprep.subr.bf16.mxu0 0
        %2871 = vmatpush1.bf16.msra.mxu0 0
        %2872 = vmatprep.subr.bf16.mxu0 0
        %2873 = vmatpush1.bf16.msra.mxu0 0
        %2874 = vmatprep.subr.bf16.mxu0 0
        %2875 = vmatpush1.bf16.msra.mxu0 0
        %2876 = vmatprep.subr.bf16.mxu0 0
        %2877 = vmatpush1.bf16.msra.mxu0 0
        %2878 = vmatprep.mubr.bf16.mxu0 0
        %2879 = vmatmul.mubr.bf16.gmra.mrb[0].mxu0 %v2841
        %v2880 = vpop.f32.mrb[0].mxu0
        %v2881 = vadd.f32 0.0, %v2880
        %v2882 = vpop.f32.mrb[0].mxu0
        %v2883 = vpop.f32.mrb[0].mxu0
        %v2884 = vpop.f32.mrb[0].mxu0
        %2885 = vdwg.mxu0
        %2886 = vrot.lane.b32.xlu0 %v2155, 112
        %v2887 = vpop.permute.xlu0 %2886
        %v2889 = vsel %vm765, %v2643, 0
        %v2892 = vsel %vm1257, %v2887, 0
        %2894 = vmatprep.subr.bf16.mxu0 0
        %2895 = vmatpush1.bf16.msra.mxu0 %v2892
        %2896 = vmatprep.subr.bf16.mxu0 0
        %2897 = vmatpush1.bf16.msra.mxu0 0
        %2898 = vmatprep.subr.bf16.mxu0 0
        %2899 = vmatpush1.bf16.msra.mxu0 0
        %2900 = vmatprep.subr.bf16.mxu0 0
        %2901 = vmatpush1.bf16.msra.mxu0 0
        %2902 = vmatprep.subr.bf16.mxu0 0
        %2903 = vmatpush1.bf16.msra.mxu0 0
        %2904 = vmatprep.subr.bf16.mxu0 0
        %2905 = vmatpush1.bf16.msra.mxu0 0
        %2906 = vmatprep.subr.bf16.mxu0 0
        %2907 = vmatpush1.bf16.msra.mxu0 0
        %2908 = vmatprep.subr.bf16.mxu0 0
        %2909 = vmatpush1.bf16.msra.mxu0 0
        %2910 = vmatprep.subr.bf16.mxu0 0
        %2911 = vmatpush1.bf16.msra.mxu0 0
        %2912 = vmatprep.subr.bf16.mxu0 0
        %2913 = vmatpush1.bf16.msra.mxu0 0
        %2914 = vmatprep.subr.bf16.mxu0 0
        %2915 = vmatpush1.bf16.msra.mxu0 0
        %2916 = vmatprep.subr.bf16.mxu0 0
        %2917 = vmatpush1.bf16.msra.mxu0 0
        %2918 = vmatprep.subr.bf16.mxu0 0
        %2919 = vmatpush1.bf16.msra.mxu0 0
        %2920 = vmatprep.subr.bf16.mxu0 0
        %2921 = vmatpush1.bf16.msra.mxu0 0
        %2922 = vmatprep.subr.bf16.mxu0 0
        %2923 = vmatpush1.bf16.msra.mxu0 0
        %2924 = vmatprep.subr.bf16.mxu0 0
        %2925 = vmatpush1.bf16.msra.mxu0 0
        %2926 = vmatprep.mubr.bf16.mxu0 0
        %2927 = vmatmul.mubr.bf16.gmra.mrb[0].mxu0 %v2889
        %v2928 = vpop.f32.mrb[0].mxu0
        %v2929 = vadd.f32 0.0, %v2928
        %v2930 = vpop.f32.mrb[0].mxu0
        %v2931 = vpop.f32.mrb[0].mxu0
        %v2932 = vpop.f32.mrb[0].mxu0
        %2933 = vdwg.mxu0
        %v2935 = vrot.slane %v2641, 4
        %2936 = vrot.lane.b32.xlu0 %v2154, 104
        %v2937 = vpop.permute.xlu0 %2936
        %v2939 = vsel %vm765, %v2935, 0
        %v2942 = vsel %vm1257, %v2937, 0
        %2944 = vmatprep.subr.bf16.mxu0 0
        %2945 = vmatpush1.bf16.msra.mxu0 %v2942
        %2946 = vmatprep.subr.bf16.mxu0 0
        %2947 = vmatpush1.bf16.msra.mxu0 0
        %2948 = vmatprep.subr.bf16.mxu0 0
        %2949 = vmatpush1.bf16.msra.mxu0 0
        %2950 = vmatprep.subr.bf16.mxu0 0
        %2951 = vmatpush1.bf16.msra.mxu0 0
        %2952 = vmatprep.subr.bf16.mxu0 0
        %2953 = vmatpush1.bf16.msra.mxu0 0
        %2954 = vmatprep.subr.bf16.mxu0 0
        %2955 = vmatpush1.bf16.msra.mxu0 0
        %2956 = vmatprep.subr.bf16.mxu0 0
        %2957 = vmatpush1.bf16.msra.mxu0 0
        %2958 = vmatprep.subr.bf16.mxu0 0
        %2959 = vmatpush1.bf16.msra.mxu0 0
        %2960 = vmatprep.subr.bf16.mxu0 0
        %2961 = vmatpush1.bf16.msra.mxu0 0
        %2962 = vmatprep.subr.bf16.mxu0 0
        %2963 = vmatpush1.bf16.msra.mxu0 0
        %2964 = vmatprep.subr.bf16.mxu0 0
        %2965 = vmatpush1.bf16.msra.mxu0 0
        %2966 = vmatprep.subr.bf16.mxu0 0
        %2967 = vmatpush1.bf16.msra.mxu0 0
        %2968 = vmatprep.subr.bf16.mxu0 0
        %2969 = vmatpush1.bf16.msra.mxu0 0
        %2970 = vmatprep.subr.bf16.mxu0 0
        %2971 = vmatpush1.bf16.msra.mxu0 0
        %2972 = vmatprep.subr.bf16.mxu0 0
        %2973 = vmatpush1.bf16.msra.mxu0 0
        %2974 = vmatprep.subr.bf16.mxu0 0
        %2975 = vmatpush1.bf16.msra.mxu0 0
        %2976 = vmatprep.mubr.bf16.mxu0 0
        %2977 = vmatmul.mubr.bf16.gmra.mrb[0].mxu0 %v2939
        %v2978 = vpop.f32.mrb[0].mxu0
        %v2979 = vadd.f32 0.0, %v2978
        %v2980 = vpop.f32.mrb[0].mxu0
        %v2981 = vpop.f32.mrb[0].mxu0
        %v2982 = vpop.f32.mrb[0].mxu0
        %2983 = vdwg.mxu0
        %v2985 = vrot.slane %v2643, 4
        %2986 = vrot.lane.b32.xlu0 %v2155, 104
        %v2987 = vpop.permute.xlu0 %2986
        %v2989 = vsel %vm765, %v2985, 0
        %v2992 = vsel %vm1257, %v2987, 0
        %2994 = vmatprep.subr.bf16.mxu0 0
        %2995 = vmatpush1.bf16.msra.mxu0 %v2992
        %2996 = vmatprep.subr.bf16.mxu0 0
        %2997 = vmatpush1.bf16.msra.mxu0 0
        %2998 = vmatprep.subr.bf16.mxu0 0
        %2999 = vmatpush1.bf16.msra.mxu0 0
        %3000 = vmatprep.subr.bf16.mxu0 0
        %3001 = vmatpush1.bf16.msra.mxu0 0
        %3002 = vmatprep.subr.bf16.mxu0 0
        %3003 = vmatpush1.bf16.msra.mxu0 0
        %3004 = vmatprep.subr.bf16.mxu0 0
        %3005 = vmatpush1.bf16.msra.mxu0 0
        %3006 = vmatprep.subr.bf16.mxu0 0
        %3007 = vmatpush1.bf16.msra.mxu0 0
        %3008 = vmatprep.subr.bf16.mxu0 0
        %3009 = vmatpush1.bf16.msra.mxu0 0
        %3010 = vmatprep.subr.bf16.mxu0 0
        %3011 = vmatpush1.bf16.msra.mxu0 0
        %3012 = vmatprep.subr.bf16.mxu0 0
        %3013 = vmatpush1.bf16.msra.mxu0 0
        %3014 = vmatprep.subr.bf16.mxu0 0
        %3015 = vmatpush1.bf16.msra.mxu0 0
        %3016 = vmatprep.subr.bf16.mxu0 0
        %3017 = vmatpush1.bf16.msra.mxu0 0
        %3018 = vmatprep.subr.bf16.mxu0 0
        %3019 = vmatpush1.bf16.msra.mxu0 0
        %3020 = vmatprep.subr.bf16.mxu0 0
        %3021 = vmatpush1.bf16.msra.mxu0 0
        %3022 = vmatprep.subr.bf16.mxu0 0
        %3023 = vmatpush1.bf16.msra.mxu0 0
        %3024 = vmatprep.subr.bf16.mxu0 0
        %3025 = vmatpush1.bf16.msra.mxu0 0
        %3026 = vmatprep.mubr.bf16.mxu0 0
        %3027 = vmatmul.mubr.bf16.gmra.mrb[0].mxu0 %v2989
        %v3028 = vpop.f32.mrb[0].mxu0
        %v3029 = vadd.f32 0.0, %v3028
        %v3030 = vpop.f32.mrb[0].mxu0
        %v3031 = vpop.f32.mrb[0].mxu0
        %v3032 = vpop.f32.mrb[0].mxu0
        %3033 = vdwg.mxu0
        %3036 = vrot.lane.b32.xlu0 %v2782, 8
        %v3037 = vpop.permute.xlu0 %3036
        %3038 = vrot.lane.b32.xlu0 %v2833, 8
        %v3039 = vpop.permute.xlu0 %3038
        %3044 = vrot.lane.b32.xlu0 %v2881, 16
        %v3045 = vpop.permute.xlu0 %3044
        %3046 = vrot.lane.b32.xlu0 %v2929, 16
        %v3047 = vpop.permute.xlu0 %3046
        %3052 = vrot.lane.b32.xlu0 %v2979, 24
        %v3053 = vpop.permute.xlu0 %3052
        %3054 = vrot.lane.b32.xlu0 %v3029, 24
        %v3055 = vpop.permute.xlu0 %3054
        %v3058 = vsel %vm765, %v2685, %v3037
        %v3059 = vsel %vm765, %v2731, %v3039
        %v3060 = vsel %vm1671, %v3058, %v3045
        %v3061 = vsel %vm1671, %v3059, %v3047
        %v3062 = vsel %vm1674, %v3060, %v3053
        %v3063 = vsel %vm1674, %v3061, %v3055
        %v3064 = vpack.c.bf16 %v3063, %v3062
        %v3065 = vlaneseq
        %v3066 = vshrl.u32 %v3065, 7
        %v3067 = vsub.s32 5, %v3066
        %v3068 = vrot.slane %v552, %v3067
        %v3073 = vunpack.c.l.b16 %v2144
        %v3074 = vunpack.c.l.b16 %v2145
        %v3075 = vunpack.c.l.b16 %v2146
        %v3076 = vunpack.c.l.b16 %v2147
        %v3077 = vpack.c.b16 %v3074, %v3073
        %v3078 = vpack.c.b16 %v3076, %v3075
        %v3082 = vsel %vm583, %v3064, 0
        %3084 = vmatprep.subr.bf16.mxu0 0
        %3085 = vmatpush1.bf16.msra.mxu0 %v3077
        %3086 = vmatprep.subr.bf16.mxu0 0
        %3087 = vmatpush1.bf16.msra.mxu0 %v3078
        %3088 = vmatprep.subr.bf16.mxu0 0
        %3089 = vmatpush1.bf16.msra.mxu0 0
        %3090 = vmatprep.subr.bf16.mxu0 0
        %3091 = vmatpush1.bf16.msra.mxu0 0
        %3092 = vmatprep.subr.bf16.mxu0 0
        %3093 = vmatpush1.bf16.msra.mxu0 0
        %3094 = vmatprep.subr.bf16.mxu0 0
        %3095 = vmatpush1.bf16.msra.mxu0 0
        %3096 = vmatprep.subr.bf16.mxu0 0
        %3097 = vmatpush1.bf16.msra.mxu0 0
        %3098 = vmatprep.subr.bf16.mxu0 0
        %3099 = vmatpush1.bf16.msra.mxu0 0
        %3100 = vmatprep.subr.bf16.mxu0 0
        %3101 = vmatpush1.bf16.msra.mxu0 0
        %3102 = vmatprep.subr.bf16.mxu0 0
        %3103 = vmatpush1.bf16.msra.mxu0 0
        %3104 = vmatprep.subr.bf16.mxu0 0
        %3105 = vmatpush1.bf16.msra.mxu0 0
        %3106 = vmatprep.subr.bf16.mxu0 0
        %3107 = vmatpush1.bf16.msra.mxu0 0
        %3108 = vmatprep.subr.bf16.mxu0 0
        %3109 = vmatpush1.bf16.msra.mxu0 0
        %3110 = vmatprep.subr.bf16.mxu0 0
        %3111 = vmatpush1.bf16.msra.mxu0 0
        %3112 = vmatprep.subr.bf16.mxu0 0
        %3113 = vmatpush1.bf16.msra.mxu0 0
        %3114 = vmatprep.subr.bf16.mxu0 0
        %3115 = vmatpush1.bf16.msra.mxu0 0
        %3116 = vmatprep.mubr.bf16.mxu0 0
        %3117 = vmatmul.mubr.bf16.gmra.mrb[0].mxu0 %v3082
        %v3118 = vpop.f32.mrb[0].mxu0
        %v3119 = vadd.f32 %v3068, %v3118
        %v3120 = vpop.f32.mrb[0].mxu0
        %v3121 = vpop.f32.mrb[0].mxu0
        %v3122 = vadd.f32 %v3068, %v3121
        %v3123 = vpop.f32.mrb[0].mxu0
        %3124 = vdwg.mxu0
        %v3125 = vadd.f32 %v1951, %v3119
        %v3126 = vadd.f32 %v1952, %v3122
        %v3127 = vsel %vm583, %v3125, 0.0
        %3128 = vadd.xlane.f32.xlu0 %v3127
        %v3129 = vpop.xlane.xlu0 %3128
        %v3130 = vsel %vm583, %v3126, 0.0
        %3131 = vadd.xlane.f32.xlu0 %v3130
        %v3132 = vpop.xlane.xlu0 %3131
        %v3133 = vmul.f32 %v3129, %v1746
        %v3134 = vmul.f32 %v3132, %v1746
        %v3135 = vsub.f32 %v3125, %v3133
        %v3136 = vsub.f32 %v3126, %v3134
        %v3137 = vmul.f32 %v3135, %v3135
        %v3138 = vmul.f32 %v3136, %v3136
        %v3139 = vsel %vm583, %v3137, 0.0
        %3140 = vadd.xlane.f32.xlu0 %v3139
        %v3141 = vpop.xlane.xlu0 %3140
        %v3142 = vsel %vm583, %v3138, 0.0
        %3143 = vadd.xlane.f32.xlu0 %v3142
        %v3144 = vpop.xlane.xlu0 %3143
        %v3145 = vmul.f32 %v3141, %v1746
        %v3146 = vmul.f32 %v3144, %v1746
        %v3147 = vadd.f32 %v3145, 1e-05
        %v3148 = vadd.f32 %v3146, 1e-05
        %v3149 = vrsqrt.pop %v3147
        %v3150 = vrsqrt.pop %v3148
        %v3151 = vmul.f32 %v3135, %v3149
        %v3152 = vmul.f32 %v3136, %v3150
        %v3153 = vlaneseq
        %v3154 = vshrl.u32 %v3153, 7
        %v3155 = vsub.s32 0, %v3154
        %v3156 = vrot.slane %v553, %v3155
        %v3157 = vmul.f32 %v3151, %v3156
        %v3158 = vmul.f32 %v3152, %v3156
        %v3159 = vlaneseq
        %v3160 = vshrl.u32 %v3159, 7
        %v3161 = vsub.s32 1, %v3160
        %v3162 = vrot.slane %v553, %v3161
        %v3163 = vadd.f32 %v3157, %v3162
        %v3164 = vadd.f32 %v3158, %v3162
        %s3165 = scalar_lea.vmem [#allocation2], 160
        %v3166 = vld [vmem:[%s3165] sm:$0xf]
        %v3167 = vld [vmem:[%s3165 + $0x4] sm:$0xf]
        %v3168 = vld [vmem:[%s3165 + $0x8] sm:$0xf]
        %v3169 = vld [vmem:[%s3165 + $0xc] sm:$0xf]
        %v3170 = vpack.c.bf16 %v3164, %v3163
        %v3171 = vlaneseq
        %v3172 = vshrl.u32 %v3171, 7
        %v3173 = vsub.s32 6, %v3172
        %v3174 = vrot.slane %v552, %v3173
        %v3179 = vunpack.c.l.b16 %v3166
        %v3180 = vunpack.c.l.b16 %v3167
        %v3181 = vunpack.c.l.b16 %v3168
        %v3182 = vunpack.c.l.b16 %v3169
        %v3183 = vpack.c.b16 %v3180, %v3179
        %v3184 = vpack.c.b16 %v3182, %v3181
        %v3188 = vsel %vm583, %v3170, 0
        %3190 = vmatprep.subr.bf16.mxu0 0
        %3191 = vmatpush1.bf16.msra.mxu0 %v3183
        %3192 = vmatprep.subr.bf16.mxu0 0
        %3193 = vmatpush1.bf16.msra.mxu0 %v3184
        %3194 = vmatprep.subr.bf16.mxu0 0
        %3195 = vmatpush1.bf16.msra.mxu0 0
        %3196 = vmatprep.subr.bf16.mxu0 0
        %3197 = vmatpush1.bf16.msra.mxu0 0
        %3198 = vmatprep.subr.bf16.mxu0 0
        %3199 = vmatpush1.bf16.msra.mxu0 0
        %3200 = vmatprep.subr.bf16.mxu0 0
        %3201 = vmatpush1.bf16.msra.mxu0 0
        %3202 = vmatprep.subr.bf16.mxu0 0
        %3203 = vmatpush1.bf16.msra.mxu0 0
        %3204 = vmatprep.subr.bf16.mxu0 0
        %3205 = vmatpush1.bf16.msra.mxu0 0
        %3206 = vmatprep.subr.bf16.mxu0 0
        %3207 = vmatpush1.bf16.msra.mxu0 0
        %3208 = vmatprep.subr.bf16.mxu0 0
        %3209 = vmatpush1.bf16.msra.mxu0 0
        %3210 = vmatprep.subr.bf16.mxu0 0
        %3211 = vmatpush1.bf16.msra.mxu0 0
        %3212 = vmatprep.subr.bf16.mxu0 0
        %3213 = vmatpush1.bf16.msra.mxu0 0
        %3214 = vmatprep.subr.bf16.mxu0 0
        %3215 = vmatpush1.bf16.msra.mxu0 0
        %3216 = vmatprep.subr.bf16.mxu0 0
        %3217 = vmatpush1.bf16.msra.mxu0 0
        %3218 = vmatprep.subr.bf16.mxu0 0
        %3219 = vmatpush1.bf16.msra.mxu0 0
        %3220 = vmatprep.subr.bf16.mxu0 0
        %3221 = vmatpush1.bf16.msra.mxu0 0
        %3222 = vmatprep.mubr.bf16.mxu0 0
        %3223 = vmatmul.mubr.bf16.gmra.mrb[0].mxu0 %v3188
        %v3224 = vpop.f32.mrb[0].mxu0
        %v3225 = vadd.f32 %v3174, %v3224
        %v3226 = vpop.f32.mrb[0].mxu0
        %v3227 = vpop.f32.mrb[0].mxu0
        %v3228 = vadd.f32 %v3174, %v3227
        %v3229 = vpop.f32.mrb[0].mxu0
        %3230 = vdwg.mxu0
        %v3231 = vmax.f32 %v3225, 0.0
        %v3232 = vmax.f32 %v3228, 0.0
        %s3233 = scalar_lea.vmem [#allocation2], 176
        %v3234 = vld [vmem:[%s3233] sm:$0xf]
        %v3235 = vld [vmem:[%s3233 + $0x4] sm:$0xf]
        %v3236 = vld [vmem:[%s3233 + $0x8] sm:$0xf]
        %v3237 = vld [vmem:[%s3233 + $0xc] sm:$0xf]
        %v3238 = vpack.c.bf16 %v3232, %v3231
        %v3239 = vlaneseq
        %v3240 = vshrl.u32 %v3239, 7
        %v3241 = vsub.s32 7, %v3240
        %v3242 = vrot.slane %v552, %v3241
        %v3247 = vunpack.c.l.b16 %v3234
        %v3248 = vunpack.c.l.b16 %v3235
        %v3249 = vunpack.c.l.b16 %v3236
        %v3250 = vunpack.c.l.b16 %v3237
        %v3251 = vpack.c.b16 %v3248, %v3247
        %v3252 = vpack.c.b16 %v3250, %v3249
        %v3256 = vsel %vm583, %v3238, 0
        %3258 = vmatprep.subr.bf16.mxu0 0
        %3259 = vmatpush1.bf16.msra.mxu0 %v3251
        %3260 = vmatprep.subr.bf16.mxu0 0
        %3261 = vmatpush1.bf16.msra.mxu0 %v3252
        %3262 = vmatprep.subr.bf16.mxu0 0
        %3263 = vmatpush1.bf16.msra.mxu0 0
        %3264 = vmatprep.subr.bf16.mxu0 0
        %3265 = vmatpush1.bf16.msra.mxu0 0
        %3266 = vmatprep.subr.bf16.mxu0 0
        %3267 = vmatpush1.bf16.msra.mxu0 0
        %3268 = vmatprep.subr.bf16.mxu0 0
        %3269 = vmatpush1.bf16.msra.mxu0 0
        %3270 = vmatprep.subr.bf16.mxu0 0
        %3271 = vmatpush1.bf16.msra.mxu0 0
        %3272 = vmatprep.subr.bf16.mxu0 0
        %3273 = vmatpush1.bf16.msra.mxu0 0
        %3274 = vmatprep.subr.bf16.mxu0 0
        %3275 = vmatpush1.bf16.msra.mxu0 0
        %3276 = vmatprep.subr.bf16.mxu0 0
        %3277 = vmatpush1.bf16.msra.mxu0 0
        %3278 = vmatprep.subr.bf16.mxu0 0
        %3279 = vmatpush1.bf16.msra.mxu0 0
        %3280 = vmatprep.subr.bf16.mxu0 0
        %3281 = vmatpush1.bf16.msra.mxu0 0
        %3282 = vmatprep.subr.bf16.mxu0 0
        %3283 = vmatpush1.bf16.msra.mxu0 0
        %3284 = vmatprep.subr.bf16.mxu0 0
        %3285 = vmatpush1.bf16.msra.mxu0 0
        %3286 = vmatprep.subr.bf16.mxu0 0
        %3287 = vmatpush1.bf16.msra.mxu0 0
        %3288 = vmatprep.subr.bf16.mxu0 0
        %3289 = vmatpush1.bf16.msra.mxu0 0
        %3290 = vmatprep.mubr.bf16.mxu0 0
        %3291 = vmatmul.mubr.bf16.gmra.mrb[0].mxu0 %v3256
        %v3292 = vpop.f32.mrb[0].mxu0
        %v3293 = vadd.f32 %v3242, %v3292
        %v3294 = vpop.f32.mrb[0].mxu0
        %v3295 = vpop.f32.mrb[0].mxu0
        %v3296 = vadd.f32 %v3242, %v3295
        %v3297 = vpop.f32.mrb[0].mxu0
        %3298 = vdwg.mxu0
        %v3299 = vadd.f32 %v3163, %v3293
        %v3300 = vadd.f32 %v3164, %v3296
        %v3301 = vsel %vm583, %v3299, 0.0
        %3302 = vadd.xlane.f32.xlu0 %v3301
        %v3303 = vpop.xlane.xlu0 %3302
        %v3304 = vsel %vm583, %v3300, 0.0
        %3305 = vadd.xlane.f32.xlu0 %v3304
        %v3306 = vpop.xlane.xlu0 %3305
        %v3307 = vmul.f32 %v3303, %v1746
        %v3308 = vmul.f32 %v3306, %v1746
        %v3309 = vsub.f32 %v3299, %v3307
        %v3310 = vsub.f32 %v3300, %v3308
        %v3311 = vmul.f32 %v3309, %v3309
        %v3312 = vmul.f32 %v3310, %v3310
        %v3313 = vsel %vm583, %v3311, 0.0
        %3314 = vadd.xlane.f32.xlu0 %v3313
        %v3315 = vpop.xlane.xlu0 %3314
        %v3316 = vsel %vm583, %v3312, 0.0
        %3317 = vadd.xlane.f32.xlu0 %v3316
        %v3318 = vpop.xlane.xlu0 %3317
        %v3319 = vmul.f32 %v3315, %v1746
        %v3320 = vmul.f32 %v3318, %v1746
        %v3321 = vadd.f32 %v3319, 1e-05
        %v3322 = vadd.f32 %v3320, 1e-05
        %v3323 = vrsqrt.pop %v3321
        %v3324 = vrsqrt.pop %v3322
        %v3325 = vmul.f32 %v3309, %v3323
        %v3326 = vmul.f32 %v3310, %v3324
        %v3327 = vlaneseq
        %v3328 = vshrl.u32 %v3327, 7
        %v3329 = vsub.s32 2, %v3328
        %v3330 = vrot.slane %v553, %v3329
        %v3331 = vmul.f32 %v3325, %v3330
        %v3332 = vmul.f32 %v3326, %v3330
        %v3333 = vlaneseq
        %v3334 = vshrl.u32 %v3333, 7
        %v3335 = vsub.s32 3, %v3334
        %v3336 = vrot.slane %v553, %v3335
        %v3337 = vadd.f32 %v3331, %v3336
        %v3338 = vadd.f32 %v3332, %v3336
        %v3339 = vsel %vm583, %v3337, 0.0
        %3340 = vadd.xlane.f32.xlu0 %v3339
        %v3341 = vpop.xlane.xlu0 %3340
        %v3342 = vsel %vm583, %v3338, 0.0
        %3343 = vadd.xlane.f32.xlu0 %v3342
        %v3344 = vpop.xlane.xlu0 %3343
        %v3345 = vmul.f32 %v3341, %v1746
        %v3346 = vmul.f32 %v3344, %v1746
        %v3347 = vsub.f32 %v3337, %v3345
        %v3348 = vsub.f32 %v3338, %v3346
        %v3349 = vmul.f32 %v3347, %v3347
        %v3350 = vmul.f32 %v3348, %v3348
        %v3351 = vsel %vm583, %v3349, 0.0
        %3352 = vadd.xlane.f32.xlu0 %v3351
        %v3353 = vpop.xlane.xlu0 %3352
        %v3354 = vsel %vm583, %v3350, 0.0
        %3355 = vadd.xlane.f32.xlu0 %v3354
        %v3356 = vpop.xlane.xlu0 %3355
        %v3357 = vmul.f32 %v3353, %v1746
        %v3358 = vmul.f32 %v3356, %v1746
        %v3359 = vadd.f32 %v3357, 1e-05
        %v3360 = vadd.f32 %v3358, 1e-05
        %v3361 = vrsqrt.pop %v3359
        %v3362 = vrsqrt.pop %v3360
        %v3363 = vmul.f32 %v3347, %v3361
        %v3364 = vmul.f32 %v3348, %v3362
        %v3365 = vlaneseq
        %v3366 = vshrl.u32 %v3365, 7
        %v3367 = vsub.s32 0, %v3366
        %v3368 = vrot.slane %v558, %v3367
        %v3369 = vmul.f32 %v3363, %v3368
        %v3370 = vmul.f32 %v3364, %v3368
        %v3371 = vlaneseq
        %v3372 = vshrl.u32 %v3371, 7
        %v3373 = vsub.s32 1, %v3372
        %v3374 = vrot.slane %v558, %v3373
        %v3375 = vadd.f32 %v3369, %v3374
        %v3376 = vadd.f32 %v3370, %v3374
        %v3377 = vld [vmem:[%s536] sm:$0xff]
        %v3378 = vld [vmem:[%s536 + $0x8] sm:$0xff]
        %v3379 = vld [vmem:[%s541] sm:$0xf]
        %v3380 = vld [vmem:[%s541 + $0x4] sm:$0xf]
        %v3381 = vld [vmem:[%s541 + $0x8] sm:$0xf]
        %v3382 = vld [vmem:[%s541 + $0xc] sm:$0xf]
        %v3383 = vpack.c.bf16 %v3378, %v3377
        %v3384 = vlaneseq
        %v3385 = vshrl.u32 %v3384, 7
        %v3386 = vsub.s32 0, %v3385
        %v3387 = vrot.slane %v554, %v3386
        %v3392 = vunpack.c.l.b16 %v3379
        %v3393 = vunpack.c.l.b16 %v3380
        %v3394 = vunpack.c.l.b16 %v3381
        %v3395 = vunpack.c.l.b16 %v3382
        %v3396 = vpack.c.b16 %v3393, %v3392
        %v3397 = vpack.c.b16 %v3395, %v3394
        %v3401 = vsel %vm583, %v3383, 0
        %3403 = vmatprep.subr.bf16.mxu0 0
        %3404 = vmatpush1.bf16.msra.mxu0 %v3396
        %3405 = vmatprep.subr.bf16.mxu0 0
        %3406 = vmatpush1.bf16.msra.mxu0 %v3397
        %3407 = vmatprep.subr.bf16.mxu0 0
        %3408 = vmatpush1.bf16.msra.mxu0 0
        %3409 = vmatprep.subr.bf16.mxu0 0
        %3410 = vmatpush1.bf16.msra.mxu0 0
        %3411 = vmatprep.subr.bf16.mxu0 0
        %3412 = vmatpush1.bf16.msra.mxu0 0
        %3413 = vmatprep.subr.bf16.mxu0 0
        %3414 = vmatpush1.bf16.msra.mxu0 0
        %3415 = vmatprep.subr.bf16.mxu0 0
        %3416 = vmatpush1.bf16.msra.mxu0 0
        %3417 = vmatprep.subr.bf16.mxu0 0
        %3418 = vmatpush1.bf16.msra.mxu0 0
        %3419 = vmatprep.subr.bf16.mxu0 0
        %3420 = vmatpush1.bf16.msra.mxu0 0
        %3421 = vmatprep.subr.bf16.mxu0 0
        %3422 = vmatpush1.bf16.msra.mxu0 0
        %3423 = vmatprep.subr.bf16.mxu0 0
        %3424 = vmatpush1.bf16.msra.mxu0 0
        %3425 = vmatprep.subr.bf16.mxu0 0
        %3426 = vmatpush1.bf16.msra.mxu0 0
        %3427 = vmatprep.subr.bf16.mxu0 0
        %3428 = vmatpush1.bf16.msra.mxu0 0
        %3429 = vmatprep.subr.bf16.mxu0 0
        %3430 = vmatpush1.bf16.msra.mxu0 0
        %3431 = vmatprep.subr.bf16.mxu0 0
        %3432 = vmatpush1.bf16.msra.mxu0 0
        %3433 = vmatprep.subr.bf16.mxu0 0
        %3434 = vmatpush1.bf16.msra.mxu0 0
        %3435 = vmatprep.mubr.bf16.mxu0 0
        %3436 = vmatmul.mubr.bf16.gmra.mrb[0].mxu0 %v3401
        %v3437 = vpop.f32.mrb[0].mxu0
        %v3438 = vadd.f32 %v3387, %v3437
        %v3439 = vpop.f32.mrb[0].mxu0
        %v3440 = vpop.f32.mrb[0].mxu0
        %v3441 = vadd.f32 %v3387, %v3440
        %v3442 = vpop.f32.mrb[0].mxu0
        %3443 = vdwg.mxu0
        %s3444 = scalar_lea.vmem %s541, 16
        %v3445 = vld [vmem:[%s3444] sm:$0xf]
        %v3446 = vld [vmem:[%s3444 + $0x4] sm:$0xf]
        %v3447 = vld [vmem:[%s3444 + $0x8] sm:$0xf]
        %v3448 = vld [vmem:[%s3444 + $0xc] sm:$0xf]
        %v3449 = vlaneseq
        %v3450 = vshrl.u32 %v3449, 7
        %v3451 = vsub.s32 1, %v3450
        %v3452 = vrot.slane %v554, %v3451
        %v3457 = vunpack.c.l.b16 %v3445
        %v3458 = vunpack.c.l.b16 %v3446
        %v3459 = vunpack.c.l.b16 %v3447
        %v3460 = vunpack.c.l.b16 %v3448
        %v3461 = vpack.c.b16 %v3458, %v3457
        %v3462 = vpack.c.b16 %v3460, %v3459
        %3465 = vmatprep.subr.bf16.mxu0 0
        %3466 = vmatpush1.bf16.msra.mxu0 %v3461
        %3467 = vmatprep.subr.bf16.mxu0 0
        %3468 = vmatpush1.bf16.msra.mxu0 %v3462
        %3469 = vmatprep.subr.bf16.mxu0 0
        %3470 = vmatpush1.bf16.msra.mxu0 0
        %3471 = vmatprep.subr.bf16.mxu0 0
        %3472 = vmatpush1.bf16.msra.mxu0 0
        %3473 = vmatprep.subr.bf16.mxu0 0
        %3474 = vmatpush1.bf16.msra.mxu0 0
        %3475 = vmatprep.subr.bf16.mxu0 0
        %3476 = vmatpush1.bf16.msra.mxu0 0
        %3477 = vmatprep.subr.bf16.mxu0 0
        %3478 = vmatpush1.bf16.msra.mxu0 0
        %3479 = vmatprep.subr.bf16.mxu0 0
        %3480 = vmatpush1.bf16.msra.mxu0 0
        %3481 = vmatprep.subr.bf16.mxu0 0
        %3482 = vmatpush1.bf16.msra.mxu0 0
        %3483 = vmatprep.subr.bf16.mxu0 0
        %3484 = vmatpush1.bf16.msra.mxu0 0
        %3485 = vmatprep.subr.bf16.mxu0 0
        %3486 = vmatpush1.bf16.msra.mxu0 0
        %3487 = vmatprep.subr.bf16.mxu0 0
        %3488 = vmatpush1.bf16.msra.mxu0 0
        %3489 = vmatprep.subr.bf16.mxu0 0
        %3490 = vmatpush1.bf16.msra.mxu0 0
        %3491 = vmatprep.subr.bf16.mxu0 0
        %3492 = vmatpush1.bf16.msra.mxu0 0
        %3493 = vmatprep.subr.bf16.mxu0 0
        %3494 = vmatpush1.bf16.msra.mxu0 0
        %3495 = vmatprep.subr.bf16.mxu0 0
        %3496 = vmatpush1.bf16.msra.mxu0 0
        %3497 = vmatprep.mubr.bf16.mxu0 0
        %3498 = vmatmul.mubr.bf16.gmra.mrb[0].mxu0 %v3401
        %v3499 = vpop.f32.mrb[0].mxu0
        %v3500 = vadd.f32 %v3452, %v3499
        %v3501 = vpop.f32.mrb[0].mxu0
        %v3502 = vpop.f32.mrb[0].mxu0
        %v3503 = vadd.f32 %v3452, %v3502
        %v3504 = vpop.f32.mrb[0].mxu0
        %3505 = vdwg.mxu0
        %s3506 = scalar_lea.vmem %s541, 32
        %v3507 = vld [vmem:[%s3506] sm:$0xf]
        %v3508 = vld [vmem:[%s3506 + $0x4] sm:$0xf]
        %v3509 = vld [vmem:[%s3506 + $0x8] sm:$0xf]
        %v3510 = vld [vmem:[%s3506 + $0xc] sm:$0xf]
        %v3511 = vlaneseq
        %v3512 = vshrl.u32 %v3511, 7
        %v3513 = vsub.s32 2, %v3512
        %v3514 = vrot.slane %v554, %v3513
        %v3519 = vunpack.c.l.b16 %v3507
        %v3520 = vunpack.c.l.b16 %v3508
        %v3521 = vunpack.c.l.b16 %v3509
        %v3522 = vunpack.c.l.b16 %v3510
        %v3523 = vpack.c.b16 %v3520, %v3519
        %v3524 = vpack.c.b16 %v3522, %v3521
        %3527 = vmatprep.subr.bf16.mxu0 0
        %3528 = vmatpush1.bf16.msra.mxu0 %v3523
        %3529 = vmatprep.subr.bf16.mxu0 0
        %3530 = vmatpush1.bf16.msra.mxu0 %v3524
        %3531 = vmatprep.subr.bf16.mxu0 0
        %3532 = vmatpush1.bf16.msra.mxu0 0
        %3533 = vmatprep.subr.bf16.mxu0 0
        %3534 = vmatpush1.bf16.msra.mxu0 0
        %3535 = vmatprep.subr.bf16.mxu0 0
        %3536 = vmatpush1.bf16.msra.mxu0 0
        %3537 = vmatprep.subr.bf16.mxu0 0
        %3538 = vmatpush1.bf16.msra.mxu0 0
        %3539 = vmatprep.subr.bf16.mxu0 0
        %3540 = vmatpush1.bf16.msra.mxu0 0
        %3541 = vmatprep.subr.bf16.mxu0 0
        %3542 = vmatpush1.bf16.msra.mxu0 0
        %3543 = vmatprep.subr.bf16.mxu0 0
        %3544 = vmatpush1.bf16.msra.mxu0 0
        %3545 = vmatprep.subr.bf16.mxu0 0
        %3546 = vmatpush1.bf16.msra.mxu0 0
        %3547 = vmatprep.subr.bf16.mxu0 0
        %3548 = vmatpush1.bf16.msra.mxu0 0
        %3549 = vmatprep.subr.bf16.mxu0 0
        %3550 = vmatpush1.bf16.msra.mxu0 0
        %3551 = vmatprep.subr.bf16.mxu0 0
        %3552 = vmatpush1.bf16.msra.mxu0 0
        %3553 = vmatprep.subr.bf16.mxu0 0
        %3554 = vmatpush1.bf16.msra.mxu0 0
        %3555 = vmatprep.subr.bf16.mxu0 0
        %3556 = vmatpush1.bf16.msra.mxu0 0
        %3557 = vmatprep.subr.bf16.mxu0 0
        %3558 = vmatpush1.bf16.msra.mxu0 0
        %3559 = vmatprep.mubr.bf16.mxu0 0
        %3560 = vmatmul.mubr.bf16.gmra.mrb[0].mxu0 %v3401
        %v3561 = vpop.f32.mrb[0].mxu0
        %v3562 = vadd.f32 %v3514, %v3561
        %v3563 = vpop.f32.mrb[0].mxu0
        %v3564 = vpop.f32.mrb[0].mxu0
        %v3565 = vadd.f32 %v3514, %v3564
        %v3566 = vpop.f32.mrb[0].mxu0
        %3567 = vdwg.mxu0
        %s3568 = scalar_lea.vmem %s541, 48
        %v3569 = vld [vmem:[%s3568] sm:$0xf]
        %v3570 = vld [vmem:[%s3568 + $0x4] sm:$0xf]
        %v3571 = vld [vmem:[%s3568 + $0x8] sm:$0xf]
        %v3572 = vld [vmem:[%s3568 + $0xc] sm:$0xf]
        %v3573 = vmul.f32 %v3438, 0.35355338
        %v3574 = vmul.f32 %v3441, 0.35355338
        %v3575 = vpack.c.bf16 %v3573, %v3573
        %v3576 = vpack.c.bf16 %v3574, %v3574
        %v3577 = vpack.c.bf16 %v3500, %v3500
        %v3578 = vpack.c.bf16 %v3503, %v3503
        %v3579 = vpack.c.bf16 %v3562, %v3562
        %v3580 = vpack.c.bf16 %v3565, %v3565
        %v3582 = vsel %vm765, %v3575, 0
        %v3585 = vsel %vm765, %v3577, 0
        %3587 = vmatprep.subr.bf16.mxu0 0
        %3588 = vmatpush1.bf16.xpose.msra.mxu0 %v3585
        %3589 = vmatprep.subr.bf16.mxu0 0
        %3590 = vmatpush1.bf16.xpose.msra.mxu0 0
        %3591 = vmatprep.subr.bf16.mxu0 0
        %3592 = vmatpush1.bf16.xpose.msra.mxu0 0
        %3593 = vmatprep.subr.bf16.mxu0 0
        %3594 = vmatpush1.bf16.xpose.msra.mxu0 0
        %3595 = vmatprep.subr.bf16.mxu0 0
        %3596 = vmatpush1.bf16.xpose.msra.mxu0 0
        %3597 = vmatprep.subr.bf16.mxu0 0
        %3598 = vmatpush1.bf16.xpose.msra.mxu0 0
        %3599 = vmatprep.subr.bf16.mxu0 0
        %3600 = vmatpush1.bf16.xpose.msra.mxu0 0
        %3601 = vmatprep.subr.bf16.mxu0 0
        %3602 = vmatpush1.bf16.xpose.msra.mxu0 0
        %3603 = vmatprep.subr.bf16.mxu0 0
        %3604 = vmatpush1.bf16.xpose.msra.mxu0 0
        %3605 = vmatprep.subr.bf16.mxu0 0
        %3606 = vmatpush1.bf16.xpose.msra.mxu0 0
        %3607 = vmatprep.subr.bf16.mxu0 0
        %3608 = vmatpush1.bf16.xpose.msra.mxu0 0
        %3609 = vmatprep.subr.bf16.mxu0 0
        %3610 = vmatpush1.bf16.xpose.msra.mxu0 0
        %3611 = vmatprep.subr.bf16.mxu0 0
        %3612 = vmatpush1.bf16.xpose.msra.mxu0 0
        %3613 = vmatprep.subr.bf16.mxu0 0
        %3614 = vmatpush1.bf16.xpose.msra.mxu0 0
        %3615 = vmatprep.subr.bf16.mxu0 0
        %3616 = vmatpush1.bf16.xpose.msra.mxu0 0
        %3617 = vmatprep.subr.bf16.mxu0 0
        %3618 = vmatpush1.bf16.xpose.msra.mxu0 0
        %3619 = vmatprep.mubr.bf16.mxu0 0
        %3620 = vmatmul.mubr.bf16.gmra.mrb[0].mxu0 %v3582
        %v3621 = vpop.f32.mrb[0].mxu0
        %v3622 = vadd.f32 0.0, %v3621
        %v3623 = vpop.f32.mrb[0].mxu0
        %v3624 = vpop.f32.mrb[0].mxu0
        %v3625 = vpop.f32.mrb[0].mxu0
        %3626 = vdwg.mxu0
        %v3628 = vsel %vm765, %v3576, 0
        %v3631 = vsel %vm765, %v3578, 0
        %3633 = vmatprep.subr.bf16.mxu0 0
        %3634 = vmatpush1.bf16.xpose.msra.mxu0 %v3631
        %3635 = vmatprep.subr.bf16.mxu0 0
        %3636 = vmatpush1.bf16.xpose.msra.mxu0 0
        %3637 = vmatprep.subr.bf16.mxu0 0
        %3638 = vmatpush1.bf16.xpose.msra.mxu0 0
        %3639 = vmatprep.subr.bf16.mxu0 0
        %3640 = vmatpush1.bf16.xpose.msra.mxu0 0
        %3641 = vmatprep.subr.bf16.mxu0 0
        %3642 = vmatpush1.bf16.xpose.msra.mxu0 0
        %3643 = vmatprep.subr.bf16.mxu0 0
        %3644 = vmatpush1.bf16.xpose.msra.mxu0 0
        %3645 = vmatprep.subr.bf16.mxu0 0
        %3646 = vmatpush1.bf16.xpose.msra.mxu0 0
        %3647 = vmatprep.subr.bf16.mxu0 0
        %3648 = vmatpush1.bf16.xpose.msra.mxu0 0
        %3649 = vmatprep.subr.bf16.mxu0 0
        %3650 = vmatpush1.bf16.xpose.msra.mxu0 0
        %3651 = vmatprep.subr.bf16.mxu0 0
        %3652 = vmatpush1.bf16.xpose.msra.mxu0 0
        %3653 = vmatprep.subr.bf16.mxu0 0
        %3654 = vmatpush1.bf16.xpose.msra.mxu0 0
        %3655 = vmatprep.subr.bf16.mxu0 0
        %3656 = vmatpush1.bf16.xpose.msra.mxu0 0
        %3657 = vmatprep.subr.bf16.mxu0 0
        %3658 = vmatpush1.bf16.xpose.msra.mxu0 0
        %3659 = vmatprep.subr.bf16.mxu0 0
        %3660 = vmatpush1.bf16.xpose.msra.mxu0 0
        %3661 = vmatprep.subr.bf16.mxu0 0
        %3662 = vmatpush1.bf16.xpose.msra.mxu0 0
        %3663 = vmatprep.subr.bf16.mxu0 0
        %3664 = vmatpush1.bf16.xpose.msra.mxu0 0
        %3665 = vmatprep.mubr.bf16.mxu0 0
        %3666 = vmatmul.mubr.bf16.gmra.mrb[0].mxu0 %v3628
        %v3667 = vpop.f32.mrb[0].mxu0
        %v3668 = vadd.f32 0.0, %v3667
        %v3669 = vpop.f32.mrb[0].mxu0
        %v3670 = vpop.f32.mrb[0].mxu0
        %v3671 = vpop.f32.mrb[0].mxu0
        %3672 = vdwg.mxu0
        %3674 = vrot.lane.b32.xlu0 %v3575, 120
        %v3675 = vpop.permute.xlu0 %3674
        %3677 = vrot.lane.b32.xlu0 %v3577, 120
        %v3678 = vpop.permute.xlu0 %3677
        %v3680 = vsel %vm765, %v3675, 0
        %v3683 = vsel %vm765, %v3678, 0
        %3685 = vmatprep.subr.bf16.mxu0 0
        %3686 = vmatpush1.bf16.xpose.msra.mxu0 %v3683
        %3687 = vmatprep.subr.bf16.mxu0 0
        %3688 = vmatpush1.bf16.xpose.msra.mxu0 0
        %3689 = vmatprep.subr.bf16.mxu0 0
        %3690 = vmatpush1.bf16.xpose.msra.mxu0 0
        %3691 = vmatprep.subr.bf16.mxu0 0
        %3692 = vmatpush1.bf16.xpose.msra.mxu0 0
        %3693 = vmatprep.subr.bf16.mxu0 0
        %3694 = vmatpush1.bf16.xpose.msra.mxu0 0
        %3695 = vmatprep.subr.bf16.mxu0 0
        %3696 = vmatpush1.bf16.xpose.msra.mxu0 0
        %3697 = vmatprep.subr.bf16.mxu0 0
        %3698 = vmatpush1.bf16.xpose.msra.mxu0 0
        %3699 = vmatprep.subr.bf16.mxu0 0
        %3700 = vmatpush1.bf16.xpose.msra.mxu0 0
        %3701 = vmatprep.subr.bf16.mxu0 0
        %3702 = vmatpush1.bf16.xpose.msra.mxu0 0
        %3703 = vmatprep.subr.bf16.mxu0 0
        %3704 = vmatpush1.bf16.xpose.msra.mxu0 0
        %3705 = vmatprep.subr.bf16.mxu0 0
        %3706 = vmatpush1.bf16.xpose.msra.mxu0 0
        %3707 = vmatprep.subr.bf16.mxu0 0
        %3708 = vmatpush1.bf16.xpose.msra.mxu0 0
        %3709 = vmatprep.subr.bf16.mxu0 0
        %3710 = vmatpush1.bf16.xpose.msra.mxu0 0
        %3711 = vmatprep.subr.bf16.mxu0 0
        %3712 = vmatpush1.bf16.xpose.msra.mxu0 0
        %3713 = vmatprep.subr.bf16.mxu0 0
        %3714 = vmatpush1.bf16.xpose.msra.mxu0 0
        %3715 = vmatprep.subr.bf16.mxu0 0
        %3716 = vmatpush1.bf16.xpose.msra.mxu0 0
        %3717 = vmatprep.mubr.bf16.mxu0 0
        %3718 = vmatmul.mubr.bf16.gmra.mrb[0].mxu0 %v3680
        %v3719 = vpop.f32.mrb[0].mxu0
        %v3720 = vadd.f32 0.0, %v3719
        %v3721 = vpop.f32.mrb[0].mxu0
        %v3722 = vpop.f32.mrb[0].mxu0
        %v3723 = vpop.f32.mrb[0].mxu0
        %3724 = vdwg.mxu0
        %3726 = vrot.lane.b32.xlu0 %v3576, 120
        %v3727 = vpop.permute.xlu0 %3726
        %3729 = vrot.lane.b32.xlu0 %v3578, 120
        %v3730 = vpop.permute.xlu0 %3729
        %v3732 = vsel %vm765, %v3727, 0
        %v3735 = vsel %vm765, %v3730, 0
        %3737 = vmatprep.subr.bf16.mxu0 0
        %3738 = vmatpush1.bf16.xpose.msra.mxu0 %v3735
        %3739 = vmatprep.subr.bf16.mxu0 0
        %3740 = vmatpush1.bf16.xpose.msra.mxu0 0
        %3741 = vmatprep.subr.bf16.mxu0 0
        %3742 = vmatpush1.bf16.xpose.msra.mxu0 0
        %3743 = vmatprep.subr.bf16.mxu0 0
        %3744 = vmatpush1.bf16.xpose.msra.mxu0 0
        %3745 = vmatprep.subr.bf16.mxu0 0
        %3746 = vmatpush1.bf16.xpose.msra.mxu0 0
        %3747 = vmatprep.subr.bf16.mxu0 0
        %3748 = vmatpush1.bf16.xpose.msra.mxu0 0
        %3749 = vmatprep.subr.bf16.mxu0 0
        %3750 = vmatpush1.bf16.xpose.msra.mxu0 0
        %3751 = vmatprep.subr.bf16.mxu0 0
        %3752 = vmatpush1.bf16.xpose.msra.mxu0 0
        %3753 = vmatprep.subr.bf16.mxu0 0
        %3754 = vmatpush1.bf16.xpose.msra.mxu0 0
        %3755 = vmatprep.subr.bf16.mxu0 0
        %3756 = vmatpush1.bf16.xpose.msra.mxu0 0
        %3757 = vmatprep.subr.bf16.mxu0 0
        %3758 = vmatpush1.bf16.xpose.msra.mxu0 0
        %3759 = vmatprep.subr.bf16.mxu0 0
        %3760 = vmatpush1.bf16.xpose.msra.mxu0 0
        %3761 = vmatprep.subr.bf16.mxu0 0
        %3762 = vmatpush1.bf16.xpose.msra.mxu0 0
        %3763 = vmatprep.subr.bf16.mxu0 0
        %3764 = vmatpush1.bf16.xpose.msra.mxu0 0
        %3765 = vmatprep.subr.bf16.mxu0 0
        %3766 = vmatpush1.bf16.xpose.msra.mxu0 0
        %3767 = vmatprep.subr.bf16.mxu0 0
        %3768 = vmatpush1.bf16.xpose.msra.mxu0 0
        %3769 = vmatprep.mubr.bf16.mxu0 0
        %3770 = vmatmul.mubr.bf16.gmra.mrb[0].mxu0 %v3732
        %v3771 = vpop.f32.mrb[0].mxu0
        %v3772 = vadd.f32 0.0, %v3771
        %v3773 = vpop.f32.mrb[0].mxu0
        %v3774 = vpop.f32.mrb[0].mxu0
        %v3775 = vpop.f32.mrb[0].mxu0
        %3776 = vdwg.mxu0
        %3777 = vrot.lane.b32.xlu0 %v3575, 112
        %v3778 = vpop.permute.xlu0 %3777
        %3779 = vrot.lane.b32.xlu0 %v3577, 112
        %v3780 = vpop.permute.xlu0 %3779
        %v3782 = vsel %vm765, %v3778, 0
        %v3785 = vsel %vm765, %v3780, 0
        %3787 = vmatprep.subr.bf16.mxu0 0
        %3788 = vmatpush1.bf16.xpose.msra.mxu0 %v3785
        %3789 = vmatprep.subr.bf16.mxu0 0
        %3790 = vmatpush1.bf16.xpose.msra.mxu0 0
        %3791 = vmatprep.subr.bf16.mxu0 0
        %3792 = vmatpush1.bf16.xpose.msra.mxu0 0
        %3793 = vmatprep.subr.bf16.mxu0 0
        %3794 = vmatpush1.bf16.xpose.msra.mxu0 0
        %3795 = vmatprep.subr.bf16.mxu0 0
        %3796 = vmatpush1.bf16.xpose.msra.mxu0 0
        %3797 = vmatprep.subr.bf16.mxu0 0
        %3798 = vmatpush1.bf16.xpose.msra.mxu0 0
        %3799 = vmatprep.subr.bf16.mxu0 0
        %3800 = vmatpush1.bf16.xpose.msra.mxu0 0
        %3801 = vmatprep.subr.bf16.mxu0 0
        %3802 = vmatpush1.bf16.xpose.msra.mxu0 0
        %3803 = vmatprep.subr.bf16.mxu0 0
        %3804 = vmatpush1.bf16.xpose.msra.mxu0 0
        %3805 = vmatprep.subr.bf16.mxu0 0
        %3806 = vmatpush1.bf16.xpose.msra.mxu0 0
        %3807 = vmatprep.subr.bf16.mxu0 0
        %3808 = vmatpush1.bf16.xpose.msra.mxu0 0
        %3809 = vmatprep.subr.bf16.mxu0 0
        %3810 = vmatpush1.bf16.xpose.msra.mxu0 0
        %3811 = vmatprep.subr.bf16.mxu0 0
        %3812 = vmatpush1.bf16.xpose.msra.mxu0 0
        %3813 = vmatprep.subr.bf16.mxu0 0
        %3814 = vmatpush1.bf16.xpose.msra.mxu0 0
        %3815 = vmatprep.subr.bf16.mxu0 0
        %3816 = vmatpush1.bf16.xpose.msra.mxu0 0
        %3817 = vmatprep.subr.bf16.mxu0 0
        %3818 = vmatpush1.bf16.xpose.msra.mxu0 0
        %3819 = vmatprep.mubr.bf16.mxu0 0
        %3820 = vmatmul.mubr.bf16.gmra.mrb[0].mxu0 %v3782
        %v3821 = vpop.f32.mrb[0].mxu0
        %v3822 = vadd.f32 0.0, %v3821
        %v3823 = vpop.f32.mrb[0].mxu0
        %v3824 = vpop.f32.mrb[0].mxu0
        %v3825 = vpop.f32.mrb[0].mxu0
        %3826 = vdwg.mxu0
        %3827 = vrot.lane.b32.xlu0 %v3576, 112
        %v3828 = vpop.permute.xlu0 %3827
        %3829 = vrot.lane.b32.xlu0 %v3578, 112
        %v3830 = vpop.permute.xlu0 %3829
        %v3832 = vsel %vm765, %v3828, 0
        %v3835 = vsel %vm765, %v3830, 0
        %3837 = vmatprep.subr.bf16.mxu0 0
        %3838 = vmatpush1.bf16.xpose.msra.mxu0 %v3835
        %3839 = vmatprep.subr.bf16.mxu0 0
        %3840 = vmatpush1.bf16.xpose.msra.mxu0 0
        %3841 = vmatprep.subr.bf16.mxu0 0
        %3842 = vmatpush1.bf16.xpose.msra.mxu0 0
        %3843 = vmatprep.subr.bf16.mxu0 0
        %3844 = vmatpush1.bf16.xpose.msra.mxu0 0
        %3845 = vmatprep.subr.bf16.mxu0 0
        %3846 = vmatpush1.bf16.xpose.msra.mxu0 0
        %3847 = vmatprep.subr.bf16.mxu0 0
        %3848 = vmatpush1.bf16.xpose.msra.mxu0 0
        %3849 = vmatprep.subr.bf16.mxu0 0
        %3850 = vmatpush1.bf16.xpose.msra.mxu0 0
        %3851 = vmatprep.subr.bf16.mxu0 0
        %3852 = vmatpush1.bf16.xpose.msra.mxu0 0
        %3853 = vmatprep.subr.bf16.mxu0 0
        %3854 = vmatpush1.bf16.xpose.msra.mxu0 0
        %3855 = vmatprep.subr.bf16.mxu0 0
        %3856 = vmatpush1.bf16.xpose.msra.mxu0 0
        %3857 = vmatprep.subr.bf16.mxu0 0
        %3858 = vmatpush1.bf16.xpose.msra.mxu0 0
        %3859 = vmatprep.subr.bf16.mxu0 0
        %3860 = vmatpush1.bf16.xpose.msra.mxu0 0
        %3861 = vmatprep.subr.bf16.mxu0 0
        %3862 = vmatpush1.bf16.xpose.msra.mxu0 0
        %3863 = vmatprep.subr.bf16.mxu0 0
        %3864 = vmatpush1.bf16.xpose.msra.mxu0 0
        %3865 = vmatprep.subr.bf16.mxu0 0
        %3866 = vmatpush1.bf16.xpose.msra.mxu0 0
        %3867 = vmatprep.subr.bf16.mxu0 0
        %3868 = vmatpush1.bf16.xpose.msra.mxu0 0
        %3869 = vmatprep.mubr.bf16.mxu0 0
        %3870 = vmatmul.mubr.bf16.gmra.mrb[0].mxu0 %v3832
        %v3871 = vpop.f32.mrb[0].mxu0
        %v3872 = vadd.f32 0.0, %v3871
        %v3873 = vpop.f32.mrb[0].mxu0
        %v3874 = vpop.f32.mrb[0].mxu0
        %v3875 = vpop.f32.mrb[0].mxu0
        %3876 = vdwg.mxu0
        %3877 = vrot.lane.b32.xlu0 %v3575, 104
        %v3878 = vpop.permute.xlu0 %3877
        %3879 = vrot.lane.b32.xlu0 %v3577, 104
        %v3880 = vpop.permute.xlu0 %3879
        %v3882 = vsel %vm765, %v3878, 0
        %v3885 = vsel %vm765, %v3880, 0
        %3887 = vmatprep.subr.bf16.mxu0 0
        %3888 = vmatpush1.bf16.xpose.msra.mxu0 %v3885
        %3889 = vmatprep.subr.bf16.mxu0 0
        %3890 = vmatpush1.bf16.xpose.msra.mxu0 0
        %3891 = vmatprep.subr.bf16.mxu0 0
        %3892 = vmatpush1.bf16.xpose.msra.mxu0 0
        %3893 = vmatprep.subr.bf16.mxu0 0
        %3894 = vmatpush1.bf16.xpose.msra.mxu0 0
        %3895 = vmatprep.subr.bf16.mxu0 0
        %3896 = vmatpush1.bf16.xpose.msra.mxu0 0
        %3897 = vmatprep.subr.bf16.mxu0 0
        %3898 = vmatpush1.bf16.xpose.msra.mxu0 0
        %3899 = vmatprep.subr.bf16.mxu0 0
        %3900 = vmatpush1.bf16.xpose.msra.mxu0 0
        %3901 = vmatprep.subr.bf16.mxu0 0
        %3902 = vmatpush1.bf16.xpose.msra.mxu0 0
        %3903 = vmatprep.subr.bf16.mxu0 0
        %3904 = vmatpush1.bf16.xpose.msra.mxu0 0
        %3905 = vmatprep.subr.bf16.mxu0 0
        %3906 = vmatpush1.bf16.xpose.msra.mxu0 0
        %3907 = vmatprep.subr.bf16.mxu0 0
        %3908 = vmatpush1.bf16.xpose.msra.mxu0 0
        %3909 = vmatprep.subr.bf16.mxu0 0
        %3910 = vmatpush1.bf16.xpose.msra.mxu0 0
        %3911 = vmatprep.subr.bf16.mxu0 0
        %3912 = vmatpush1.bf16.xpose.msra.mxu0 0
        %3913 = vmatprep.subr.bf16.mxu0 0
        %3914 = vmatpush1.bf16.xpose.msra.mxu0 0
        %3915 = vmatprep.subr.bf16.mxu0 0
        %3916 = vmatpush1.bf16.xpose.msra.mxu0 0
        %3917 = vmatprep.subr.bf16.mxu0 0
        %3918 = vmatpush1.bf16.xpose.msra.mxu0 0
        %3919 = vmatprep.mubr.bf16.mxu0 0
        %3920 = vmatmul.mubr.bf16.gmra.mrb[0].mxu0 %v3882
        %v3921 = vpop.f32.mrb[0].mxu0
        %v3922 = vadd.f32 0.0, %v3921
        %v3923 = vpop.f32.mrb[0].mxu0
        %v3924 = vpop.f32.mrb[0].mxu0
        %v3925 = vpop.f32.mrb[0].mxu0
        %3926 = vdwg.mxu0
        %3927 = vrot.lane.b32.xlu0 %v3576, 104
        %v3928 = vpop.permute.xlu0 %3927
        %3929 = vrot.lane.b32.xlu0 %v3578, 104
        %v3930 = vpop.permute.xlu0 %3929
        %v3932 = vsel %vm765, %v3928, 0
        %v3935 = vsel %vm765, %v3930, 0
        %3937 = vmatprep.subr.bf16.mxu0 0
        %3938 = vmatpush1.bf16.xpose.msra.mxu0 %v3935
        %3939 = vmatprep.subr.bf16.mxu0 0
        %3940 = vmatpush1.bf16.xpose.msra.mxu0 0
        %3941 = vmatprep.subr.bf16.mxu0 0
        %3942 = vmatpush1.bf16.xpose.msra.mxu0 0
        %3943 = vmatprep.subr.bf16.mxu0 0
        %3944 = vmatpush1.bf16.xpose.msra.mxu0 0
        %3945 = vmatprep.subr.bf16.mxu0 0
        %3946 = vmatpush1.bf16.xpose.msra.mxu0 0
        %3947 = vmatprep.subr.bf16.mxu0 0
        %3948 = vmatpush1.bf16.xpose.msra.mxu0 0
        %3949 = vmatprep.subr.bf16.mxu0 0
        %3950 = vmatpush1.bf16.xpose.msra.mxu0 0
        %3951 = vmatprep.subr.bf16.mxu0 0
        %3952 = vmatpush1.bf16.xpose.msra.mxu0 0
        %3953 = vmatprep.subr.bf16.mxu0 0
        %3954 = vmatpush1.bf16.xpose.msra.mxu0 0
        %3955 = vmatprep.subr.bf16.mxu0 0
        %3956 = vmatpush1.bf16.xpose.msra.mxu0 0
        %3957 = vmatprep.subr.bf16.mxu0 0
        %3958 = vmatpush1.bf16.xpose.msra.mxu0 0
        %3959 = vmatprep.subr.bf16.mxu0 0
        %3960 = vmatpush1.bf16.xpose.msra.mxu0 0
        %3961 = vmatprep.subr.bf16.mxu0 0
        %3962 = vmatpush1.bf16.xpose.msra.mxu0 0
        %3963 = vmatprep.subr.bf16.mxu0 0
        %3964 = vmatpush1.bf16.xpose.msra.mxu0 0
        %3965 = vmatprep.subr.bf16.mxu0 0
        %3966 = vmatpush1.bf16.xpose.msra.mxu0 0
        %3967 = vmatprep.subr.bf16.mxu0 0
        %3968 = vmatpush1.bf16.xpose.msra.mxu0 0
        %3969 = vmatprep.mubr.bf16.mxu0 0
        %3970 = vmatmul.mubr.bf16.gmra.mrb[0].mxu0 %v3932
        %v3971 = vpop.f32.mrb[0].mxu0
        %v3972 = vadd.f32 0.0, %v3971
        %v3973 = vpop.f32.mrb[0].mxu0
        %v3974 = vpop.f32.mrb[0].mxu0
        %v3975 = vpop.f32.mrb[0].mxu0
        %3976 = vdwg.mxu0
        %v3977 = vsel %vm765, %v3622, -inf
        %3978 = vmax.xlane.f32.xlu0 %v3977
        %v3979 = vpop.xlane.xlu0 %3978
        %v3980 = vsel %vm765, %v3720, -inf
        %3981 = vmax.xlane.f32.xlu0 %v3980
        %v3982 = vpop.xlane.xlu0 %3981
        %v3983 = vsel %vm765, %v3822, -inf
        %3984 = vmax.xlane.f32.xlu0 %v3983
        %v3985 = vpop.xlane.xlu0 %3984
        %v3986 = vsel %vm765, %v3922, -inf
        %3987 = vmax.xlane.f32.xlu0 %v3986
        %v3988 = vpop.xlane.xlu0 %3987
        %v3989 = vsel %vm765, %v3668, -inf
        %3990 = vmax.xlane.f32.xlu0 %v3989
        %v3991 = vpop.xlane.xlu0 %3990
        %v3992 = vsel %vm765, %v3772, -inf
        %3993 = vmax.xlane.f32.xlu0 %v3992
        %v3994 = vpop.xlane.xlu0 %3993
        %v3995 = vsel %vm765, %v3872, -inf
        %3996 = vmax.xlane.f32.xlu0 %v3995
        %v3997 = vpop.xlane.xlu0 %3996
        %v3998 = vsel %vm765, %v3972, -inf
        %3999 = vmax.xlane.f32.xlu0 %v3998
        %v4000 = vpop.xlane.xlu0 %3999
        %v4001 = vsub.f32 %v3622, %v3979
        %v4002 = vsub.f32 %v3720, %v3982
        %v4003 = vsub.f32 %v3822, %v3985
        %v4004 = vsub.f32 %v3922, %v3988
        %v4005 = vsub.f32 %v3668, %v3991
        %v4006 = vsub.f32 %v3772, %v3994
        %v4007 = vsub.f32 %v3872, %v3997
        %v4008 = vsub.f32 %v3972, %v4000
        %v4009 = vmul.f32 %v4001, 1.442695
        %v4010 = vpow.pop %v4009
        %v4011 = vmul.f32 %v4002, 1.442695
        %v4012 = vpow.pop %v4011
        %v4013 = vmul.f32 %v4003, 1.442695
        %v4014 = vpow.pop %v4013
        %v4015 = vmul.f32 %v4004, 1.442695
        %v4016 = vpow.pop %v4015
        %v4017 = vmul.f32 %v4005, 1.442695
        %v4018 = vpow.pop %v4017
        %v4019 = vmul.f32 %v4006, 1.442695
        %v4020 = vpow.pop %v4019
        %v4021 = vmul.f32 %v4007, 1.442695
        %v4022 = vpow.pop %v4021
        %v4023 = vmul.f32 %v4008, 1.442695
        %v4024 = vpow.pop %v4023
        %v4025 = vsel %vm765, %v4010, 0.0
        %4026 = vadd.xlane.f32.xlu0 %v4025
        %v4027 = vpop.xlane.xlu0 %4026
        %v4028 = vsel %vm765, %v4012, 0.0
        %4029 = vadd.xlane.f32.xlu0 %v4028
        %v4030 = vpop.xlane.xlu0 %4029
        %v4031 = vsel %vm765, %v4014, 0.0
        %4032 = vadd.xlane.f32.xlu0 %v4031
        %v4033 = vpop.xlane.xlu0 %4032
        %v4034 = vsel %vm765, %v4016, 0.0
        %4035 = vadd.xlane.f32.xlu0 %v4034
        %v4036 = vpop.xlane.xlu0 %4035
        %v4037 = vsel %vm765, %v4018, 0.0
        %4038 = vadd.xlane.f32.xlu0 %v4037
        %v4039 = vpop.xlane.xlu0 %4038
        %v4040 = vsel %vm765, %v4020, 0.0
        %4041 = vadd.xlane.f32.xlu0 %v4040
        %v4042 = vpop.xlane.xlu0 %4041
        %v4043 = vsel %vm765, %v4022, 0.0
        %4044 = vadd.xlane.f32.xlu0 %v4043
        %v4045 = vpop.xlane.xlu0 %4044
        %v4046 = vsel %vm765, %v4024, 0.0
        %4047 = vadd.xlane.f32.xlu0 %v4046
        %v4048 = vpop.xlane.xlu0 %4047
        %v4049 = vrcp.pop %v4027
        %v4050 = vmul.f32 %v4010, %v4049
        %v4051 = vrcp.pop %v4030
        %v4052 = vmul.f32 %v4012, %v4051
        %v4053 = vrcp.pop %v4033
        %v4054 = vmul.f32 %v4014, %v4053
        %v4055 = vrcp.pop %v4036
        %v4056 = vmul.f32 %v4016, %v4055
        %v4057 = vrcp.pop %v4039
        %v4058 = vmul.f32 %v4018, %v4057
        %v4059 = vrcp.pop %v4042
        %v4060 = vmul.f32 %v4020, %v4059
        %v4061 = vrcp.pop %v4045
        %v4062 = vmul.f32 %v4022, %v4061
        %v4063 = vrcp.pop %v4048
        %v4064 = vmul.f32 %v4024, %v4063
        %v4065 = vpack.c.bf16 %v4052, %v4050
        %v4066 = vpack.c.bf16 %v4056, %v4054
        %v4067 = vpack.c.bf16 %v4060, %v4058
        %v4068 = vpack.c.bf16 %v4064, %v4062
        %v4070 = vsel %vm765, %v4065, 0
        %v4073 = vsel %vm1257, %v3579, 0
        %4075 = vmatprep.subr.bf16.mxu0 0
        %4076 = vmatpush1.bf16.msra.mxu0 %v4073
        %4077 = vmatprep.subr.bf16.mxu0 0
        %4078 = vmatpush1.bf16.msra.mxu0 0
        %4079 = vmatprep.subr.bf16.mxu0 0
        %4080 = vmatpush1.bf16.msra.mxu0 0
        %4081 = vmatprep.subr.bf16.mxu0 0
        %4082 = vmatpush1.bf16.msra.mxu0 0
        %4083 = vmatprep.subr.bf16.mxu0 0
        %4084 = vmatpush1.bf16.msra.mxu0 0
        %4085 = vmatprep.subr.bf16.mxu0 0
        %4086 = vmatpush1.bf16.msra.mxu0 0
        %4087 = vmatprep.subr.bf16.mxu0 0
        %4088 = vmatpush1.bf16.msra.mxu0 0
        %4089 = vmatprep.subr.bf16.mxu0 0
        %4090 = vmatpush1.bf16.msra.mxu0 0
        %4091 = vmatprep.subr.bf16.mxu0 0
        %4092 = vmatpush1.bf16.msra.mxu0 0
        %4093 = vmatprep.subr.bf16.mxu0 0
        %4094 = vmatpush1.bf16.msra.mxu0 0
        %4095 = vmatprep.subr.bf16.mxu0 0
        %4096 = vmatpush1.bf16.msra.mxu0 0
        %4097 = vmatprep.subr.bf16.mxu0 0
        %4098 = vmatpush1.bf16.msra.mxu0 0
        %4099 = vmatprep.subr.bf16.mxu0 0
        %4100 = vmatpush1.bf16.msra.mxu0 0
        %4101 = vmatprep.subr.bf16.mxu0 0
        %4102 = vmatpush1.bf16.msra.mxu0 0
        %4103 = vmatprep.subr.bf16.mxu0 0
        %4104 = vmatpush1.bf16.msra.mxu0 0
        %4105 = vmatprep.subr.bf16.mxu0 0
        %4106 = vmatpush1.bf16.msra.mxu0 0
        %4107 = vmatprep.mubr.bf16.mxu0 0
        %4108 = vmatmul.mubr.bf16.gmra.mrb[0].mxu0 %v4070
        %v4109 = vpop.f32.mrb[0].mxu0
        %v4110 = vadd.f32 0.0, %v4109
        %v4111 = vpop.f32.mrb[0].mxu0
        %v4112 = vpop.f32.mrb[0].mxu0
        %v4113 = vpop.f32.mrb[0].mxu0
        %4114 = vdwg.mxu0
        %v4116 = vsel %vm765, %v4067, 0
        %v4119 = vsel %vm1257, %v3580, 0
        %4121 = vmatprep.subr.bf16.mxu0 0
        %4122 = vmatpush1.bf16.msra.mxu0 %v4119
        %4123 = vmatprep.subr.bf16.mxu0 0
        %4124 = vmatpush1.bf16.msra.mxu0 0
        %4125 = vmatprep.subr.bf16.mxu0 0
        %4126 = vmatpush1.bf16.msra.mxu0 0
        %4127 = vmatprep.subr.bf16.mxu0 0
        %4128 = vmatpush1.bf16.msra.mxu0 0
        %4129 = vmatprep.subr.bf16.mxu0 0
        %4130 = vmatpush1.bf16.msra.mxu0 0
        %4131 = vmatprep.subr.bf16.mxu0 0
        %4132 = vmatpush1.bf16.msra.mxu0 0
        %4133 = vmatprep.subr.bf16.mxu0 0
        %4134 = vmatpush1.bf16.msra.mxu0 0
        %4135 = vmatprep.subr.bf16.mxu0 0
        %4136 = vmatpush1.bf16.msra.mxu0 0
        %4137 = vmatprep.subr.bf16.mxu0 0
        %4138 = vmatpush1.bf16.msra.mxu0 0
        %4139 = vmatprep.subr.bf16.mxu0 0
        %4140 = vmatpush1.bf16.msra.mxu0 0
        %4141 = vmatprep.subr.bf16.mxu0 0
        %4142 = vmatpush1.bf16.msra.mxu0 0
        %4143 = vmatprep.subr.bf16.mxu0 0
        %4144 = vmatpush1.bf16.msra.mxu0 0
        %4145 = vmatprep.subr.bf16.mxu0 0
        %4146 = vmatpush1.bf16.msra.mxu0 0
        %4147 = vmatprep.subr.bf16.mxu0 0
        %4148 = vmatpush1.bf16.msra.mxu0 0
        %4149 = vmatprep.subr.bf16.mxu0 0
        %4150 = vmatpush1.bf16.msra.mxu0 0
        %4151 = vmatprep.subr.bf16.mxu0 0
        %4152 = vmatpush1.bf16.msra.mxu0 0
        %4153 = vmatprep.mubr.bf16.mxu0 0
        %4154 = vmatmul.mubr.bf16.gmra.mrb[0].mxu0 %v4116
        %v4155 = vpop.f32.mrb[0].mxu0
        %v4156 = vadd.f32 0.0, %v4155
        %v4157 = vpop.f32.mrb[0].mxu0
        %v4158 = vpop.f32.mrb[0].mxu0
        %v4159 = vpop.f32.mrb[0].mxu0
        %4160 = vdwg.mxu0
        %v4162 = vrot.slane %v4065, 4
        %4164 = vrot.lane.b32.xlu0 %v3579, 120
        %v4165 = vpop.permute.xlu0 %4164
        %v4167 = vsel %vm765, %v4162, 0
        %v4170 = vsel %vm1257, %v4165, 0
        %4172 = vmatprep.subr.bf16.mxu0 0
        %4173 = vmatpush1.bf16.msra.mxu0 %v4170
        %4174 = vmatprep.subr.bf16.mxu0 0
        %4175 = vmatpush1.bf16.msra.mxu0 0
        %4176 = vmatprep.subr.bf16.mxu0 0
        %4177 = vmatpush1.bf16.msra.mxu0 0
        %4178 = vmatprep.subr.bf16.mxu0 0
        %4179 = vmatpush1.bf16.msra.mxu0 0
        %4180 = vmatprep.subr.bf16.mxu0 0
        %4181 = vmatpush1.bf16.msra.mxu0 0
        %4182 = vmatprep.subr.bf16.mxu0 0
        %4183 = vmatpush1.bf16.msra.mxu0 0
        %4184 = vmatprep.subr.bf16.mxu0 0
        %4185 = vmatpush1.bf16.msra.mxu0 0
        %4186 = vmatprep.subr.bf16.mxu0 0
        %4187 = vmatpush1.bf16.msra.mxu0 0
        %4188 = vmatprep.subr.bf16.mxu0 0
        %4189 = vmatpush1.bf16.msra.mxu0 0
        %4190 = vmatprep.subr.bf16.mxu0 0
        %4191 = vmatpush1.bf16.msra.mxu0 0
        %4192 = vmatprep.subr.bf16.mxu0 0
        %4193 = vmatpush1.bf16.msra.mxu0 0
        %4194 = vmatprep.subr.bf16.mxu0 0
        %4195 = vmatpush1.bf16.msra.mxu0 0
        %4196 = vmatprep.subr.bf16.mxu0 0
        %4197 = vmatpush1.bf16.msra.mxu0 0
        %4198 = vmatprep.subr.bf16.mxu0 0
        %4199 = vmatpush1.bf16.msra.mxu0 0
        %4200 = vmatprep.subr.bf16.mxu0 0
        %4201 = vmatpush1.bf16.msra.mxu0 0
        %4202 = vmatprep.subr.bf16.mxu0 0
        %4203 = vmatpush1.bf16.msra.mxu0 0
        %4204 = vmatprep.mubr.bf16.mxu0 0
        %4205 = vmatmul.mubr.bf16.gmra.mrb[0].mxu0 %v4167
        %v4206 = vpop.f32.mrb[0].mxu0
        %v4207 = vadd.f32 0.0, %v4206
        %v4208 = vpop.f32.mrb[0].mxu0
        %v4209 = vpop.f32.mrb[0].mxu0
        %v4210 = vpop.f32.mrb[0].mxu0
        %4211 = vdwg.mxu0
        %v4213 = vrot.slane %v4067, 4
        %4215 = vrot.lane.b32.xlu0 %v3580, 120
        %v4216 = vpop.permute.xlu0 %4215
        %v4218 = vsel %vm765, %v4213, 0
        %v4221 = vsel %vm1257, %v4216, 0
        %4223 = vmatprep.subr.bf16.mxu0 0
        %4224 = vmatpush1.bf16.msra.mxu0 %v4221
        %4225 = vmatprep.subr.bf16.mxu0 0
        %4226 = vmatpush1.bf16.msra.mxu0 0
        %4227 = vmatprep.subr.bf16.mxu0 0
        %4228 = vmatpush1.bf16.msra.mxu0 0
        %4229 = vmatprep.subr.bf16.mxu0 0
        %4230 = vmatpush1.bf16.msra.mxu0 0
        %4231 = vmatprep.subr.bf16.mxu0 0
        %4232 = vmatpush1.bf16.msra.mxu0 0
        %4233 = vmatprep.subr.bf16.mxu0 0
        %4234 = vmatpush1.bf16.msra.mxu0 0
        %4235 = vmatprep.subr.bf16.mxu0 0
        %4236 = vmatpush1.bf16.msra.mxu0 0
        %4237 = vmatprep.subr.bf16.mxu0 0
        %4238 = vmatpush1.bf16.msra.mxu0 0
        %4239 = vmatprep.subr.bf16.mxu0 0
        %4240 = vmatpush1.bf16.msra.mxu0 0
        %4241 = vmatprep.subr.bf16.mxu0 0
        %4242 = vmatpush1.bf16.msra.mxu0 0
        %4243 = vmatprep.subr.bf16.mxu0 0
        %4244 = vmatpush1.bf16.msra.mxu0 0
        %4245 = vmatprep.subr.bf16.mxu0 0
        %4246 = vmatpush1.bf16.msra.mxu0 0
        %4247 = vmatprep.subr.bf16.mxu0 0
        %4248 = vmatpush1.bf16.msra.mxu0 0
        %4249 = vmatprep.subr.bf16.mxu0 0
        %4250 = vmatpush1.bf16.msra.mxu0 0
        %4251 = vmatprep.subr.bf16.mxu0 0
        %4252 = vmatpush1.bf16.msra.mxu0 0
        %4253 = vmatprep.subr.bf16.mxu0 0
        %4254 = vmatpush1.bf16.msra.mxu0 0
        %4255 = vmatprep.mubr.bf16.mxu0 0
        %4256 = vmatmul.mubr.bf16.gmra.mrb[0].mxu0 %v4218
        %v4257 = vpop.f32.mrb[0].mxu0
        %v4258 = vadd.f32 0.0, %v4257
        %v4259 = vpop.f32.mrb[0].mxu0
        %v4260 = vpop.f32.mrb[0].mxu0
        %v4261 = vpop.f32.mrb[0].mxu0
        %4262 = vdwg.mxu0
        %4263 = vrot.lane.b32.xlu0 %v3579, 112
        %v4264 = vpop.permute.xlu0 %4263
        %v4266 = vsel %vm765, %v4066, 0
        %v4269 = vsel %vm1257, %v4264, 0
        %4271 = vmatprep.subr.bf16.mxu0 0
        %4272 = vmatpush1.bf16.msra.mxu0 %v4269
        %4273 = vmatprep.subr.bf16.mxu0 0
        %4274 = vmatpush1.bf16.msra.mxu0 0
        %4275 = vmatprep.subr.bf16.mxu0 0
        %4276 = vmatpush1.bf16.msra.mxu0 0
        %4277 = vmatprep.subr.bf16.mxu0 0
        %4278 = vmatpush1.bf16.msra.mxu0 0
        %4279 = vmatprep.subr.bf16.mxu0 0
        %4280 = vmatpush1.bf16.msra.mxu0 0
        %4281 = vmatprep.subr.bf16.mxu0 0
        %4282 = vmatpush1.bf16.msra.mxu0 0
        %4283 = vmatprep.subr.bf16.mxu0 0
        %4284 = vmatpush1.bf16.msra.mxu0 0
        %4285 = vmatprep.subr.bf16.mxu0 0
        %4286 = vmatpush1.bf16.msra.mxu0 0
        %4287 = vmatprep.subr.bf16.mxu0 0
        %4288 = vmatpush1.bf16.msra.mxu0 0
        %4289 = vmatprep.subr.bf16.mxu0 0
        %4290 = vmatpush1.bf16.msra.mxu0 0
        %4291 = vmatprep.subr.bf16.mxu0 0
        %4292 = vmatpush1.bf16.msra.mxu0 0
        %4293 = vmatprep.subr.bf16.mxu0 0
        %4294 = vmatpush1.bf16.msra.mxu0 0
        %4295 = vmatprep.subr.bf16.mxu0 0
        %4296 = vmatpush1.bf16.msra.mxu0 0
        %4297 = vmatprep.subr.bf16.mxu0 0
        %4298 = vmatpush1.bf16.msra.mxu0 0
        %4299 = vmatprep.subr.bf16.mxu0 0
        %4300 = vmatpush1.bf16.msra.mxu0 0
        %4301 = vmatprep.subr.bf16.mxu0 0
        %4302 = vmatpush1.bf16.msra.mxu0 0
        %4303 = vmatprep.mubr.bf16.mxu0 0
        %4304 = vmatmul.mubr.bf16.gmra.mrb[0].mxu0 %v4266
        %v4305 = vpop.f32.mrb[0].mxu0
        %v4306 = vadd.f32 0.0, %v4305
        %v4307 = vpop.f32.mrb[0].mxu0
        %v4308 = vpop.f32.mrb[0].mxu0
        %v4309 = vpop.f32.mrb[0].mxu0
        %4310 = vdwg.mxu0
        %4311 = vrot.lane.b32.xlu0 %v3580, 112
        %v4312 = vpop.permute.xlu0 %4311
        %v4314 = vsel %vm765, %v4068, 0
        %v4317 = vsel %vm1257, %v4312, 0
        %4319 = vmatprep.subr.bf16.mxu0 0
        %4320 = vmatpush1.bf16.msra.mxu0 %v4317
        %4321 = vmatprep.subr.bf16.mxu0 0
        %4322 = vmatpush1.bf16.msra.mxu0 0
        %4323 = vmatprep.subr.bf16.mxu0 0
        %4324 = vmatpush1.bf16.msra.mxu0 0
        %4325 = vmatprep.subr.bf16.mxu0 0
        %4326 = vmatpush1.bf16.msra.mxu0 0
        %4327 = vmatprep.subr.bf16.mxu0 0
        %4328 = vmatpush1.bf16.msra.mxu0 0
        %4329 = vmatprep.subr.bf16.mxu0 0
        %4330 = vmatpush1.bf16.msra.mxu0 0
        %4331 = vmatprep.subr.bf16.mxu0 0
        %4332 = vmatpush1.bf16.msra.mxu0 0
        %4333 = vmatprep.subr.bf16.mxu0 0
        %4334 = vmatpush1.bf16.msra.mxu0 0
        %4335 = vmatprep.subr.bf16.mxu0 0
        %4336 = vmatpush1.bf16.msra.mxu0 0
        %4337 = vmatprep.subr.bf16.mxu0 0
        %4338 = vmatpush1.bf16.msra.mxu0 0
        %4339 = vmatprep.subr.bf16.mxu0 0
        %4340 = vmatpush1.bf16.msra.mxu0 0
        %4341 = vmatprep.subr.bf16.mxu0 0
        %4342 = vmatpush1.bf16.msra.mxu0 0
        %4343 = vmatprep.subr.bf16.mxu0 0
        %4344 = vmatpush1.bf16.msra.mxu0 0
        %4345 = vmatprep.subr.bf16.mxu0 0
        %4346 = vmatpush1.bf16.msra.mxu0 0
        %4347 = vmatprep.subr.bf16.mxu0 0
        %4348 = vmatpush1.bf16.msra.mxu0 0
        %4349 = vmatprep.subr.bf16.mxu0 0
        %4350 = vmatpush1.bf16.msra.mxu0 0
        %4351 = vmatprep.mubr.bf16.mxu0 0
        %4352 = vmatmul.mubr.bf16.gmra.mrb[0].mxu0 %v4314
        %v4353 = vpop.f32.mrb[0].mxu0
        %v4354 = vadd.f32 0.0, %v4353
        %v4355 = vpop.f32.mrb[0].mxu0
        %v4356 = vpop.f32.mrb[0].mxu0
        %v4357 = vpop.f32.mrb[0].mxu0
        %4358 = vdwg.mxu0
        %v4360 = vrot.slane %v4066, 4
        %4361 = vrot.lane.b32.xlu0 %v3579, 104
        %v4362 = vpop.permute.xlu0 %4361
        %v4364 = vsel %vm765, %v4360, 0
        %v4367 = vsel %vm1257, %v4362, 0
        %4369 = vmatprep.subr.bf16.mxu0 0
        %4370 = vmatpush1.bf16.msra.mxu0 %v4367
        %4371 = vmatprep.subr.bf16.mxu0 0
        %4372 = vmatpush1.bf16.msra.mxu0 0
        %4373 = vmatprep.subr.bf16.mxu0 0
        %4374 = vmatpush1.bf16.msra.mxu0 0
        %4375 = vmatprep.subr.bf16.mxu0 0
        %4376 = vmatpush1.bf16.msra.mxu0 0
        %4377 = vmatprep.subr.bf16.mxu0 0
        %4378 = vmatpush1.bf16.msra.mxu0 0
        %4379 = vmatprep.subr.bf16.mxu0 0
        %4380 = vmatpush1.bf16.msra.mxu0 0
        %4381 = vmatprep.subr.bf16.mxu0 0
        %4382 = vmatpush1.bf16.msra.mxu0 0
        %4383 = vmatprep.subr.bf16.mxu0 0
        %4384 = vmatpush1.bf16.msra.mxu0 0
        %4385 = vmatprep.subr.bf16.mxu0 0
        %4386 = vmatpush1.bf16.msra.mxu0 0
        %4387 = vmatprep.subr.bf16.mxu0 0
        %4388 = vmatpush1.bf16.msra.mxu0 0
        %4389 = vmatprep.subr.bf16.mxu0 0
        %4390 = vmatpush1.bf16.msra.mxu0 0
        %4391 = vmatprep.subr.bf16.mxu0 0
        %4392 = vmatpush1.bf16.msra.mxu0 0
        %4393 = vmatprep.subr.bf16.mxu0 0
        %4394 = vmatpush1.bf16.msra.mxu0 0
        %4395 = vmatprep.subr.bf16.mxu0 0
        %4396 = vmatpush1.bf16.msra.mxu0 0
        %4397 = vmatprep.subr.bf16.mxu0 0
        %4398 = vmatpush1.bf16.msra.mxu0 0
        %4399 = vmatprep.subr.bf16.mxu0 0
        %4400 = vmatpush1.bf16.msra.mxu0 0
        %4401 = vmatprep.mubr.bf16.mxu0 0
        %4402 = vmatmul.mubr.bf16.gmra.mrb[0].mxu0 %v4364
        %v4403 = vpop.f32.mrb[0].mxu0
        %v4404 = vadd.f32 0.0, %v4403
        %v4405 = vpop.f32.mrb[0].mxu0
        %v4406 = vpop.f32.mrb[0].mxu0
        %v4407 = vpop.f32.mrb[0].mxu0
        %4408 = vdwg.mxu0
        %v4410 = vrot.slane %v4068, 4
        %4411 = vrot.lane.b32.xlu0 %v3580, 104
        %v4412 = vpop.permute.xlu0 %4411
        %v4414 = vsel %vm765, %v4410, 0
        %v4417 = vsel %vm1257, %v4412, 0
        %4419 = vmatprep.subr.bf16.mxu0 0
        %4420 = vmatpush1.bf16.msra.mxu0 %v4417
        %4421 = vmatprep.subr.bf16.mxu0 0
        %4422 = vmatpush1.bf16.msra.mxu0 0
        %4423 = vmatprep.subr.bf16.mxu0 0
        %4424 = vmatpush1.bf16.msra.mxu0 0
        %4425 = vmatprep.subr.bf16.mxu0 0
        %4426 = vmatpush1.bf16.msra.mxu0 0
        %4427 = vmatprep.subr.bf16.mxu0 0
        %4428 = vmatpush1.bf16.msra.mxu0 0
        %4429 = vmatprep.subr.bf16.mxu0 0
        %4430 = vmatpush1.bf16.msra.mxu0 0
        %4431 = vmatprep.subr.bf16.mxu0 0
        %4432 = vmatpush1.bf16.msra.mxu0 0
        %4433 = vmatprep.subr.bf16.mxu0 0
        %4434 = vmatpush1.bf16.msra.mxu0 0
        %4435 = vmatprep.subr.bf16.mxu0 0
        %4436 = vmatpush1.bf16.msra.mxu0 0
        %4437 = vmatprep.subr.bf16.mxu0 0
        %4438 = vmatpush1.bf16.msra.mxu0 0
        %4439 = vmatprep.subr.bf16.mxu0 0
        %4440 = vmatpush1.bf16.msra.mxu0 0
        %4441 = vmatprep.subr.bf16.mxu0 0
        %4442 = vmatpush1.bf16.msra.mxu0 0
        %4443 = vmatprep.subr.bf16.mxu0 0
        %4444 = vmatpush1.bf16.msra.mxu0 0
        %4445 = vmatprep.subr.bf16.mxu0 0
        %4446 = vmatpush1.bf16.msra.mxu0 0
        %4447 = vmatprep.subr.bf16.mxu0 0
        %4448 = vmatpush1.bf16.msra.mxu0 0
        %4449 = vmatprep.subr.bf16.mxu0 0
        %4450 = vmatpush1.bf16.msra.mxu0 0
        %4451 = vmatprep.mubr.bf16.mxu0 0
        %4452 = vmatmul.mubr.bf16.gmra.mrb[0].mxu0 %v4414
        %v4453 = vpop.f32.mrb[0].mxu0
        %v4454 = vadd.f32 0.0, %v4453
        %v4455 = vpop.f32.mrb[0].mxu0
        %v4456 = vpop.f32.mrb[0].mxu0
        %v4457 = vpop.f32.mrb[0].mxu0
        %4458 = vdwg.mxu0
        %4461 = vrot.lane.b32.xlu0 %v4207, 8
        %v4462 = vpop.permute.xlu0 %4461
        %4463 = vrot.lane.b32.xlu0 %v4258, 8
        %v4464 = vpop.permute.xlu0 %4463
        %4469 = vrot.lane.b32.xlu0 %v4306, 16
        %v4470 = vpop.permute.xlu0 %4469
        %4471 = vrot.lane.b32.xlu0 %v4354, 16
        %v4472 = vpop.permute.xlu0 %4471
        %4477 = vrot.lane.b32.xlu0 %v4404, 24
        %v4478 = vpop.permute.xlu0 %4477
        %4479 = vrot.lane.b32.xlu0 %v4454, 24
        %v4480 = vpop.permute.xlu0 %4479
        %v4483 = vsel %vm765, %v4110, %v4462
        %v4484 = vsel %vm765, %v4156, %v4464
        %v4485 = vsel %vm1671, %v4483, %v4470
        %v4486 = vsel %vm1671, %v4484, %v4472
        %v4487 = vsel %vm1674, %v4485, %v4478
        %v4488 = vsel %vm1674, %v4486, %v4480
        %v4489 = vpack.c.bf16 %v4488, %v4487
        %v4490 = vlaneseq
        %v4491 = vshrl.u32 %v4490, 7
        %v4492 = vsub.s32 3, %v4491
        %v4493 = vrot.slane %v554, %v4492
        %v4498 = vunpack.c.l.b16 %v3569
        %v4499 = vunpack.c.l.b16 %v3570
        %v4500 = vunpack.c.l.b16 %v3571
        %v4501 = vunpack.c.l.b16 %v3572
        %v4502 = vpack.c.b16 %v4499, %v4498
        %v4503 = vpack.c.b16 %v4501, %v4500
        %v4507 = vsel %vm583, %v4489, 0
        %4509 = vmatprep.subr.bf16.mxu0 0
        %4510 = vmatpush1.bf16.msra.mxu0 %v4502
        %4511 = vmatprep.subr.bf16.mxu0 0
        %4512 = vmatpush1.bf16.msra.mxu0 %v4503
        %4513 = vmatprep.subr.bf16.mxu0 0
        %4514 = vmatpush1.bf16.msra.mxu0 0
        %4515 = vmatprep.subr.bf16.mxu0 0
        %4516 = vmatpush1.bf16.msra.mxu0 0
        %4517 = vmatprep.subr.bf16.mxu0 0
        %4518 = vmatpush1.bf16.msra.mxu0 0
        %4519 = vmatprep.subr.bf16.mxu0 0
        %4520 = vmatpush1.bf16.msra.mxu0 0
        %4521 = vmatprep.subr.bf16.mxu0 0
        %4522 = vmatpush1.bf16.msra.mxu0 0
        %4523 = vmatprep.subr.bf16.mxu0 0
        %4524 = vmatpush1.bf16.msra.mxu0 0
        %4525 = vmatprep.subr.bf16.mxu0 0
        %4526 = vmatpush1.bf16.msra.mxu0 0
        %4527 = vmatprep.subr.bf16.mxu0 0
        %4528 = vmatpush1.bf16.msra.mxu0 0
        %4529 = vmatprep.subr.bf16.mxu0 0
        %4530 = vmatpush1.bf16.msra.mxu0 0
        %4531 = vmatprep.subr.bf16.mxu0 0
        %4532 = vmatpush1.bf16.msra.mxu0 0
        %4533 = vmatprep.subr.bf16.mxu0 0
        %4534 = vmatpush1.bf16.msra.mxu0 0
        %4535 = vmatprep.subr.bf16.mxu0 0
        %4536 = vmatpush1.bf16.msra.mxu0 0
        %4537 = vmatprep.subr.bf16.mxu0 0
        %4538 = vmatpush1.bf16.msra.mxu0 0
        %4539 = vmatprep.subr.bf16.mxu0 0
        %4540 = vmatpush1.bf16.msra.mxu0 0
        %4541 = vmatprep.mubr.bf16.mxu0 0
        %4542 = vmatmul.mubr.bf16.gmra.mrb[0].mxu0 %v4507
        %v4543 = vpop.f32.mrb[0].mxu0
        %v4544 = vadd.f32 %v4493, %v4543
        %v4545 = vpop.f32.mrb[0].mxu0
        %v4546 = vpop.f32.mrb[0].mxu0
        %v4547 = vadd.f32 %v4493, %v4546
        %v4548 = vpop.f32.mrb[0].mxu0
        %4549 = vdwg.mxu0
        %v4550 = vadd.f32 %v3377, %v4544
        %v4551 = vadd.f32 %v3378, %v4547
        %v4552 = vsel %vm583, %v4550, 0.0
        %4553 = vadd.xlane.f32.xlu0 %v4552
        %v4554 = vpop.xlane.xlu0 %4553
        %v4555 = vsel %vm583, %v4551, 0.0
        %4556 = vadd.xlane.f32.xlu0 %v4555
        %v4557 = vpop.xlane.xlu0 %4556
        %v4558 = vmul.f32 %v4554, %v1746
        %v4559 = vmul.f32 %v4557, %v1746
        %v4560 = vsub.f32 %v4550, %v4558
        %v4561 = vsub.f32 %v4551, %v4559
        %v4562 = vmul.f32 %v4560, %v4560
        %v4563 = vmul.f32 %v4561, %v4561
        %v4564 = vsel %vm583, %v4562, 0.0
        %4565 = vadd.xlane.f32.xlu0 %v4564
        %v4566 = vpop.xlane.xlu0 %4565
        %v4567 = vsel %vm583, %v4563, 0.0
        %4568 = vadd.xlane.f32.xlu0 %v4567
        %v4569 = vpop.xlane.xlu0 %4568
        %v4570 = vmul.f32 %v4566, %v1746
        %v4571 = vmul.f32 %v4569, %v1746
        %v4572 = vadd.f32 %v4570, 1e-05
        %v4573 = vadd.f32 %v4571, 1e-05
        %v4574 = vrsqrt.pop %v4572
        %v4575 = vrsqrt.pop %v4573
        %v4576 = vmul.f32 %v4560, %v4574
        %v4577 = vmul.f32 %v4561, %v4575
        %v4578 = vlaneseq
        %v4579 = vshrl.u32 %v4578, 7
        %v4580 = vsub.s32 2, %v4579
        %v4581 = vrot.slane %v555, %v4580
        %v4582 = vmul.f32 %v4576, %v4581
        %v4583 = vmul.f32 %v4577, %v4581
        %v4584 = vlaneseq
        %v4585 = vshrl.u32 %v4584, 7
        %v4586 = vsub.s32 3, %v4585
        %v4587 = vrot.slane %v555, %v4586
        %v4588 = vadd.f32 %v4582, %v4587
        %v4589 = vadd.f32 %v4583, %v4587
        %s4590 = scalar_lea.vmem %s541, 64
        %v4591 = vld [vmem:[%s4590] sm:$0xf]
        %v4592 = vld [vmem:[%s4590 + $0x4] sm:$0xf]
        %v4593 = vld [vmem:[%s4590 + $0x8] sm:$0xf]
        %v4594 = vld [vmem:[%s4590 + $0xc] sm:$0xf]
        %v4595 = vpack.c.bf16 %v4589, %v4588
        %v4596 = vlaneseq
        %v4597 = vshrl.u32 %v4596, 7
        %v4598 = vsub.s32 4, %v4597
        %v4599 = vrot.slane %v554, %v4598
        %v4604 = vunpack.c.l.b16 %v4591
        %v4605 = vunpack.c.l.b16 %v4592
        %v4606 = vunpack.c.l.b16 %v4593
        %v4607 = vunpack.c.l.b16 %v4594
        %v4608 = vpack.c.b16 %v4605, %v4604
        %v4609 = vpack.c.b16 %v4607, %v4606
        %v4613 = vsel %vm583, %v4595, 0
        %4615 = vmatprep.subr.bf16.mxu0 0
        %4616 = vmatpush1.bf16.msra.mxu0 %v4608
        %4617 = vmatprep.subr.bf16.mxu0 0
        %4618 = vmatpush1.bf16.msra.mxu0 %v4609
        %4619 = vmatprep.subr.bf16.mxu0 0
        %4620 = vmatpush1.bf16.msra.mxu0 0
        %4621 = vmatprep.subr.bf16.mxu0 0
        %4622 = vmatpush1.bf16.msra.mxu0 0
        %4623 = vmatprep.subr.bf16.mxu0 0
        %4624 = vmatpush1.bf16.msra.mxu0 0
        %4625 = vmatprep.subr.bf16.mxu0 0
        %4626 = vmatpush1.bf16.msra.mxu0 0
        %4627 = vmatprep.subr.bf16.mxu0 0
        %4628 = vmatpush1.bf16.msra.mxu0 0
        %4629 = vmatprep.subr.bf16.mxu0 0
        %4630 = vmatpush1.bf16.msra.mxu0 0
        %4631 = vmatprep.subr.bf16.mxu0 0
        %4632 = vmatpush1.bf16.msra.mxu0 0
        %4633 = vmatprep.subr.bf16.mxu0 0
        %4634 = vmatpush1.bf16.msra.mxu0 0
        %4635 = vmatprep.subr.bf16.mxu0 0
        %4636 = vmatpush1.bf16.msra.mxu0 0
        %4637 = vmatprep.subr.bf16.mxu0 0
        %4638 = vmatpush1.bf16.msra.mxu0 0
        %4639 = vmatprep.subr.bf16.mxu0 0
        %4640 = vmatpush1.bf16.msra.mxu0 0
        %4641 = vmatprep.subr.bf16.mxu0 0
        %4642 = vmatpush1.bf16.msra.mxu0 0
        %4643 = vmatprep.subr.bf16.mxu0 0
        %4644 = vmatpush1.bf16.msra.mxu0 0
        %4645 = vmatprep.subr.bf16.mxu0 0
        %4646 = vmatpush1.bf16.msra.mxu0 0
        %4647 = vmatprep.mubr.bf16.mxu0 0
        %4648 = vmatmul.mubr.bf16.gmra.mrb[0].mxu0 %v4613
        %v4649 = vpop.f32.mrb[0].mxu0
        %v4650 = vadd.f32 %v4599, %v4649
        %v4651 = vpop.f32.mrb[0].mxu0
        %v4652 = vpop.f32.mrb[0].mxu0
        %v4653 = vadd.f32 %v4599, %v4652
        %v4654 = vpop.f32.mrb[0].mxu0
        %4655 = vdwg.mxu0
        %s4656 = scalar_lea.vmem %s541, 80
        %v4657 = vld [vmem:[%s4656] sm:$0xf]
        %v4658 = vld [vmem:[%s4656 + $0x4] sm:$0xf]
        %v4659 = vld [vmem:[%s4656 + $0x8] sm:$0xf]
        %v4660 = vld [vmem:[%s4656 + $0xc] sm:$0xf]
        %v4661 = vpack.c.bf16 %v3376, %v3375
        %v4662 = vlaneseq
        %v4663 = vshrl.u32 %v4662, 7
        %v4664 = vsub.s32 5, %v4663
        %v4665 = vrot.slane %v554, %v4664
        %v4670 = vunpack.c.l.b16 %v4657
        %v4671 = vunpack.c.l.b16 %v4658
        %v4672 = vunpack.c.l.b16 %v4659
        %v4673 = vunpack.c.l.b16 %v4660
        %v4674 = vpack.c.b16 %v4671, %v4670
        %v4675 = vpack.c.b16 %v4673, %v4672
        %v4679 = vsel %vm583, %v4661, 0
        %4681 = vmatprep.subr.bf16.mxu0 0
        %4682 = vmatpush1.bf16.msra.mxu0 %v4674
        %4683 = vmatprep.subr.bf16.mxu0 0
        %4684 = vmatpush1.bf16.msra.mxu0 %v4675
        %4685 = vmatprep.subr.bf16.mxu0 0
        %4686 = vmatpush1.bf16.msra.mxu0 0
        %4687 = vmatprep.subr.bf16.mxu0 0
        %4688 = vmatpush1.bf16.msra.mxu0 0
        %4689 = vmatprep.subr.bf16.mxu0 0
        %4690 = vmatpush1.bf16.msra.mxu0 0
        %4691 = vmatprep.subr.bf16.mxu0 0
        %4692 = vmatpush1.bf16.msra.mxu0 0
        %4693 = vmatprep.subr.bf16.mxu0 0
        %4694 = vmatpush1.bf16.msra.mxu0 0
        %4695 = vmatprep.subr.bf16.mxu0 0
        %4696 = vmatpush1.bf16.msra.mxu0 0
        %4697 = vmatprep.subr.bf16.mxu0 0
        %4698 = vmatpush1.bf16.msra.mxu0 0
        %4699 = vmatprep.subr.bf16.mxu0 0
        %4700 = vmatpush1.bf16.msra.mxu0 0
        %4701 = vmatprep.subr.bf16.mxu0 0
        %4702 = vmatpush1.bf16.msra.mxu0 0
        %4703 = vmatprep.subr.bf16.mxu0 0
        %4704 = vmatpush1.bf16.msra.mxu0 0
        %4705 = vmatprep.subr.bf16.mxu0 0
        %4706 = vmatpush1.bf16.msra.mxu0 0
        %4707 = vmatprep.subr.bf16.mxu0 0
        %4708 = vmatpush1.bf16.msra.mxu0 0
        %4709 = vmatprep.subr.bf16.mxu0 0
        %4710 = vmatpush1.bf16.msra.mxu0 0
        %4711 = vmatprep.subr.bf16.mxu0 0
        %4712 = vmatpush1.bf16.msra.mxu0 0
        %4713 = vmatprep.mubr.bf16.mxu0 0
        %4714 = vmatmul.mubr.bf16.gmra.mrb[0].mxu0 %v4679
        %v4715 = vpop.f32.mrb[0].mxu0
        %v4716 = vadd.f32 %v4665, %v4715
        %v4717 = vpop.f32.mrb[0].mxu0
        %v4718 = vpop.f32.mrb[0].mxu0
        %v4719 = vadd.f32 %v4665, %v4718
        %v4720 = vpop.f32.mrb[0].mxu0
        %4721 = vdwg.mxu0
        %s4722 = scalar_lea.vmem %s541, 96
        %v4723 = vld [vmem:[%s4722] sm:$0xf]
        %v4724 = vld [vmem:[%s4722 + $0x4] sm:$0xf]
        %v4725 = vld [vmem:[%s4722 + $0x8] sm:$0xf]
        %v4726 = vld [vmem:[%s4722 + $0xc] sm:$0xf]
        %v4727 = vlaneseq
        %v4728 = vshrl.u32 %v4727, 7
        %v4729 = vsub.s32 6, %v4728
        %v4730 = vrot.slane %v554, %v4729
        %v4735 = vunpack.c.l.b16 %v4723
        %v4736 = vunpack.c.l.b16 %v4724
        %v4737 = vunpack.c.l.b16 %v4725
        %v4738 = vunpack.c.l.b16 %v4726
        %v4739 = vpack.c.b16 %v4736, %v4735
        %v4740 = vpack.c.b16 %v4738, %v4737
        %4743 = vmatprep.subr.bf16.mxu0 0
        %4744 = vmatpush1.bf16.msra.mxu0 %v4739
        %4745 = vmatprep.subr.bf16.mxu0 0
        %4746 = vmatpush1.bf16.msra.mxu0 %v4740
        %4747 = vmatprep.subr.bf16.mxu0 0
        %4748 = vmatpush1.bf16.msra.mxu0 0
        %4749 = vmatprep.subr.bf16.mxu0 0
        %4750 = vmatpush1.bf16.msra.mxu0 0
        %4751 = vmatprep.subr.bf16.mxu0 0
        %4752 = vmatpush1.bf16.msra.mxu0 0
        %4753 = vmatprep.subr.bf16.mxu0 0
        %4754 = vmatpush1.bf16.msra.mxu0 0
        %4755 = vmatprep.subr.bf16.mxu0 0
        %4756 = vmatpush1.bf16.msra.mxu0 0
        %4757 = vmatprep.subr.bf16.mxu0 0
        %4758 = vmatpush1.bf16.msra.mxu0 0
        %4759 = vmatprep.subr.bf16.mxu0 0
        %4760 = vmatpush1.bf16.msra.mxu0 0
        %4761 = vmatprep.subr.bf16.mxu0 0
        %4762 = vmatpush1.bf16.msra.mxu0 0
        %4763 = vmatprep.subr.bf16.mxu0 0
        %4764 = vmatpush1.bf16.msra.mxu0 0
        %4765 = vmatprep.subr.bf16.mxu0 0
        %4766 = vmatpush1.bf16.msra.mxu0 0
        %4767 = vmatprep.subr.bf16.mxu0 0
        %4768 = vmatpush1.bf16.msra.mxu0 0
        %4769 = vmatprep.subr.bf16.mxu0 0
        %4770 = vmatpush1.bf16.msra.mxu0 0
        %4771 = vmatprep.subr.bf16.mxu0 0
        %4772 = vmatpush1.bf16.msra.mxu0 0
        %4773 = vmatprep.subr.bf16.mxu0 0
        %4774 = vmatpush1.bf16.msra.mxu0 0
        %4775 = vmatprep.mubr.bf16.mxu0 0
        %4776 = vmatmul.mubr.bf16.gmra.mrb[0].mxu0 %v4679
        %v4777 = vpop.f32.mrb[0].mxu0
        %v4778 = vadd.f32 %v4730, %v4777
        %v4779 = vpop.f32.mrb[0].mxu0
        %v4780 = vpop.f32.mrb[0].mxu0
        %v4781 = vadd.f32 %v4730, %v4780
        %v4782 = vpop.f32.mrb[0].mxu0
        %4783 = vdwg.mxu0
        %s4784 = scalar_lea.vmem %s541, 112
        %v4785 = vld [vmem:[%s4784] sm:$0xf]
        %v4786 = vld [vmem:[%s4784 + $0x4] sm:$0xf]
        %v4787 = vld [vmem:[%s4784 + $0x8] sm:$0xf]
        %v4788 = vld [vmem:[%s4784 + $0xc] sm:$0xf]
        %v4789 = vmul.f32 %v4650, 0.35355338
        %v4790 = vmul.f32 %v4653, 0.35355338
        %v4791 = vpack.c.bf16 %v4789, %v4789
        %v4792 = vpack.c.bf16 %v4790, %v4790
        %v4793 = vpack.c.bf16 %v4716, %v4716
        %v4794 = vpack.c.bf16 %v4719, %v4719
        %v4795 = vpack.c.bf16 %v4778, %v4778
        %v4796 = vpack.c.bf16 %v4781, %v4781
        %v4798 = vsel %vm765, %v4791, 0
        %v4801 = vsel %vm765, %v4793, 0
        %4803 = vmatprep.subr.bf16.mxu0 0
        %4804 = vmatpush1.bf16.xpose.msra.mxu0 %v4801
        %4805 = vmatprep.subr.bf16.mxu0 0
        %4806 = vmatpush1.bf16.xpose.msra.mxu0 0
        %4807 = vmatprep.subr.bf16.mxu0 0
        %4808 = vmatpush1.bf16.xpose.msra.mxu0 0
        %4809 = vmatprep.subr.bf16.mxu0 0
        %4810 = vmatpush1.bf16.xpose.msra.mxu0 0
        %4811 = vmatprep.subr.bf16.mxu0 0
        %4812 = vmatpush1.bf16.xpose.msra.mxu0 0
        %4813 = vmatprep.subr.bf16.mxu0 0
        %4814 = vmatpush1.bf16.xpose.msra.mxu0 0
        %4815 = vmatprep.subr.bf16.mxu0 0
        %4816 = vmatpush1.bf16.xpose.msra.mxu0 0
        %4817 = vmatprep.subr.bf16.mxu0 0
        %4818 = vmatpush1.bf16.xpose.msra.mxu0 0
        %4819 = vmatprep.subr.bf16.mxu0 0
        %4820 = vmatpush1.bf16.xpose.msra.mxu0 0
        %4821 = vmatprep.subr.bf16.mxu0 0
        %4822 = vmatpush1.bf16.xpose.msra.mxu0 0
        %4823 = vmatprep.subr.bf16.mxu0 0
        %4824 = vmatpush1.bf16.xpose.msra.mxu0 0
        %4825 = vmatprep.subr.bf16.mxu0 0
        %4826 = vmatpush1.bf16.xpose.msra.mxu0 0
        %4827 = vmatprep.subr.bf16.mxu0 0
        %4828 = vmatpush1.bf16.xpose.msra.mxu0 0
        %4829 = vmatprep.subr.bf16.mxu0 0
        %4830 = vmatpush1.bf16.xpose.msra.mxu0 0
        %4831 = vmatprep.subr.bf16.mxu0 0
        %4832 = vmatpush1.bf16.xpose.msra.mxu0 0
        %4833 = vmatprep.subr.bf16.mxu0 0
        %4834 = vmatpush1.bf16.xpose.msra.mxu0 0
        %4835 = vmatprep.mubr.bf16.mxu0 0
        %4836 = vmatmul.mubr.bf16.gmra.mrb[0].mxu0 %v4798
        %v4837 = vpop.f32.mrb[0].mxu0
        %v4838 = vadd.f32 0.0, %v4837
        %v4839 = vpop.f32.mrb[0].mxu0
        %v4840 = vpop.f32.mrb[0].mxu0
        %v4841 = vpop.f32.mrb[0].mxu0
        %4842 = vdwg.mxu0
        %v4844 = vsel %vm765, %v4792, 0
        %v4847 = vsel %vm765, %v4794, 0
        %4849 = vmatprep.subr.bf16.mxu0 0
        %4850 = vmatpush1.bf16.xpose.msra.mxu0 %v4847
        %4851 = vmatprep.subr.bf16.mxu0 0
        %4852 = vmatpush1.bf16.xpose.msra.mxu0 0
        %4853 = vmatprep.subr.bf16.mxu0 0
        %4854 = vmatpush1.bf16.xpose.msra.mxu0 0
        %4855 = vmatprep.subr.bf16.mxu0 0
        %4856 = vmatpush1.bf16.xpose.msra.mxu0 0
        %4857 = vmatprep.subr.bf16.mxu0 0
        %4858 = vmatpush1.bf16.xpose.msra.mxu0 0
        %4859 = vmatprep.subr.bf16.mxu0 0
        %4860 = vmatpush1.bf16.xpose.msra.mxu0 0
        %4861 = vmatprep.subr.bf16.mxu0 0
        %4862 = vmatpush1.bf16.xpose.msra.mxu0 0
        %4863 = vmatprep.subr.bf16.mxu0 0
        %4864 = vmatpush1.bf16.xpose.msra.mxu0 0
        %4865 = vmatprep.subr.bf16.mxu0 0
        %4866 = vmatpush1.bf16.xpose.msra.mxu0 0
        %4867 = vmatprep.subr.bf16.mxu0 0
        %4868 = vmatpush1.bf16.xpose.msra.mxu0 0
        %4869 = vmatprep.subr.bf16.mxu0 0
        %4870 = vmatpush1.bf16.xpose.msra.mxu0 0
        %4871 = vmatprep.subr.bf16.mxu0 0
        %4872 = vmatpush1.bf16.xpose.msra.mxu0 0
        %4873 = vmatprep.subr.bf16.mxu0 0
        %4874 = vmatpush1.bf16.xpose.msra.mxu0 0
        %4875 = vmatprep.subr.bf16.mxu0 0
        %4876 = vmatpush1.bf16.xpose.msra.mxu0 0
        %4877 = vmatprep.subr.bf16.mxu0 0
        %4878 = vmatpush1.bf16.xpose.msra.mxu0 0
        %4879 = vmatprep.subr.bf16.mxu0 0
        %4880 = vmatpush1.bf16.xpose.msra.mxu0 0
        %4881 = vmatprep.mubr.bf16.mxu0 0
        %4882 = vmatmul.mubr.bf16.gmra.mrb[0].mxu0 %v4844
        %v4883 = vpop.f32.mrb[0].mxu0
        %v4884 = vadd.f32 0.0, %v4883
        %v4885 = vpop.f32.mrb[0].mxu0
        %v4886 = vpop.f32.mrb[0].mxu0
        %v4887 = vpop.f32.mrb[0].mxu0
        %4888 = vdwg.mxu0
        %4890 = vrot.lane.b32.xlu0 %v4791, 120
        %v4891 = vpop.permute.xlu0 %4890
        %4893 = vrot.lane.b32.xlu0 %v4793, 120
        %v4894 = vpop.permute.xlu0 %4893
        %v4896 = vsel %vm765, %v4891, 0
        %v4899 = vsel %vm765, %v4894, 0
        %4901 = vmatprep.subr.bf16.mxu0 0
        %4902 = vmatpush1.bf16.xpose.msra.mxu0 %v4899
        %4903 = vmatprep.subr.bf16.mxu0 0
        %4904 = vmatpush1.bf16.xpose.msra.mxu0 0
        %4905 = vmatprep.subr.bf16.mxu0 0
        %4906 = vmatpush1.bf16.xpose.msra.mxu0 0
        %4907 = vmatprep.subr.bf16.mxu0 0
        %4908 = vmatpush1.bf16.xpose.msra.mxu0 0
        %4909 = vmatprep.subr.bf16.mxu0 0
        %4910 = vmatpush1.bf16.xpose.msra.mxu0 0
        %4911 = vmatprep.subr.bf16.mxu0 0
        %4912 = vmatpush1.bf16.xpose.msra.mxu0 0
        %4913 = vmatprep.subr.bf16.mxu0 0
        %4914 = vmatpush1.bf16.xpose.msra.mxu0 0
        %4915 = vmatprep.subr.bf16.mxu0 0
        %4916 = vmatpush1.bf16.xpose.msra.mxu0 0
        %4917 = vmatprep.subr.bf16.mxu0 0
        %4918 = vmatpush1.bf16.xpose.msra.mxu0 0
        %4919 = vmatprep.subr.bf16.mxu0 0
        %4920 = vmatpush1.bf16.xpose.msra.mxu0 0
        %4921 = vmatprep.subr.bf16.mxu0 0
        %4922 = vmatpush1.bf16.xpose.msra.mxu0 0
        %4923 = vmatprep.subr.bf16.mxu0 0
        %4924 = vmatpush1.bf16.xpose.msra.mxu0 0
        %4925 = vmatprep.subr.bf16.mxu0 0
        %4926 = vmatpush1.bf16.xpose.msra.mxu0 0
        %4927 = vmatprep.subr.bf16.mxu0 0
        %4928 = vmatpush1.bf16.xpose.msra.mxu0 0
        %4929 = vmatprep.subr.bf16.mxu0 0
        %4930 = vmatpush1.bf16.xpose.msra.mxu0 0
        %4931 = vmatprep.subr.bf16.mxu0 0
        %4932 = vmatpush1.bf16.xpose.msra.mxu0 0
        %4933 = vmatprep.mubr.bf16.mxu0 0
        %4934 = vmatmul.mubr.bf16.gmra.mrb[0].mxu0 %v4896
        %v4935 = vpop.f32.mrb[0].mxu0
        %v4936 = vadd.f32 0.0, %v4935
        %v4937 = vpop.f32.mrb[0].mxu0
        %v4938 = vpop.f32.mrb[0].mxu0
        %v4939 = vpop.f32.mrb[0].mxu0
        %4940 = vdwg.mxu0
        %4942 = vrot.lane.b32.xlu0 %v4792, 120
        %v4943 = vpop.permute.xlu0 %4942
        %4945 = vrot.lane.b32.xlu0 %v4794, 120
        %v4946 = vpop.permute.xlu0 %4945
        %v4948 = vsel %vm765, %v4943, 0
        %v4951 = vsel %vm765, %v4946, 0
        %4953 = vmatprep.subr.bf16.mxu0 0
        %4954 = vmatpush1.bf16.xpose.msra.mxu0 %v4951
        %4955 = vmatprep.subr.bf16.mxu0 0
        %4956 = vmatpush1.bf16.xpose.msra.mxu0 0
        %4957 = vmatprep.subr.bf16.mxu0 0
        %4958 = vmatpush1.bf16.xpose.msra.mxu0 0
        %4959 = vmatprep.subr.bf16.mxu0 0
        %4960 = vmatpush1.bf16.xpose.msra.mxu0 0
        %4961 = vmatprep.subr.bf16.mxu0 0
        %4962 = vmatpush1.bf16.xpose.msra.mxu0 0
        %4963 = vmatprep.subr.bf16.mxu0 0
        %4964 = vmatpush1.bf16.xpose.msra.mxu0 0
        %4965 = vmatprep.subr.bf16.mxu0 0
        %4966 = vmatpush1.bf16.xpose.msra.mxu0 0
        %4967 = vmatprep.subr.bf16.mxu0 0
        %4968 = vmatpush1.bf16.xpose.msra.mxu0 0
        %4969 = vmatprep.subr.bf16.mxu0 0
        %4970 = vmatpush1.bf16.xpose.msra.mxu0 0
        %4971 = vmatprep.subr.bf16.mxu0 0
        %4972 = vmatpush1.bf16.xpose.msra.mxu0 0
        %4973 = vmatprep.subr.bf16.mxu0 0
        %4974 = vmatpush1.bf16.xpose.msra.mxu0 0
        %4975 = vmatprep.subr.bf16.mxu0 0
        %4976 = vmatpush1.bf16.xpose.msra.mxu0 0
        %4977 = vmatprep.subr.bf16.mxu0 0
        %4978 = vmatpush1.bf16.xpose.msra.mxu0 0
        %4979 = vmatprep.subr.bf16.mxu0 0
        %4980 = vmatpush1.bf16.xpose.msra.mxu0 0
        %4981 = vmatprep.subr.bf16.mxu0 0
        %4982 = vmatpush1.bf16.xpose.msra.mxu0 0
        %4983 = vmatprep.subr.bf16.mxu0 0
        %4984 = vmatpush1.bf16.xpose.msra.mxu0 0
        %4985 = vmatprep.mubr.bf16.mxu0 0
        %4986 = vmatmul.mubr.bf16.gmra.mrb[0].mxu0 %v4948
        %v4987 = vpop.f32.mrb[0].mxu0
        %v4988 = vadd.f32 0.0, %v4987
        %v4989 = vpop.f32.mrb[0].mxu0
        %v4990 = vpop.f32.mrb[0].mxu0
        %v4991 = vpop.f32.mrb[0].mxu0
        %4992 = vdwg.mxu0
        %4993 = vrot.lane.b32.xlu0 %v4791, 112
        %v4994 = vpop.permute.xlu0 %4993
        %4995 = vrot.lane.b32.xlu0 %v4793, 112
        %v4996 = vpop.permute.xlu0 %4995
        %v4998 = vsel %vm765, %v4994, 0
        %v5001 = vsel %vm765, %v4996, 0
        %5003 = vmatprep.subr.bf16.mxu0 0
        %5004 = vmatpush1.bf16.xpose.msra.mxu0 %v5001
        %5005 = vmatprep.subr.bf16.mxu0 0
        %5006 = vmatpush1.bf16.xpose.msra.mxu0 0
        %5007 = vmatprep.subr.bf16.mxu0 0
        %5008 = vmatpush1.bf16.xpose.msra.mxu0 0
        %5009 = vmatprep.subr.bf16.mxu0 0
        %5010 = vmatpush1.bf16.xpose.msra.mxu0 0
        %5011 = vmatprep.subr.bf16.mxu0 0
        %5012 = vmatpush1.bf16.xpose.msra.mxu0 0
        %5013 = vmatprep.subr.bf16.mxu0 0
        %5014 = vmatpush1.bf16.xpose.msra.mxu0 0
        %5015 = vmatprep.subr.bf16.mxu0 0
        %5016 = vmatpush1.bf16.xpose.msra.mxu0 0
        %5017 = vmatprep.subr.bf16.mxu0 0
        %5018 = vmatpush1.bf16.xpose.msra.mxu0 0
        %5019 = vmatprep.subr.bf16.mxu0 0
        %5020 = vmatpush1.bf16.xpose.msra.mxu0 0
        %5021 = vmatprep.subr.bf16.mxu0 0
        %5022 = vmatpush1.bf16.xpose.msra.mxu0 0
        %5023 = vmatprep.subr.bf16.mxu0 0
        %5024 = vmatpush1.bf16.xpose.msra.mxu0 0
        %5025 = vmatprep.subr.bf16.mxu0 0
        %5026 = vmatpush1.bf16.xpose.msra.mxu0 0
        %5027 = vmatprep.subr.bf16.mxu0 0
        %5028 = vmatpush1.bf16.xpose.msra.mxu0 0
        %5029 = vmatprep.subr.bf16.mxu0 0
        %5030 = vmatpush1.bf16.xpose.msra.mxu0 0
        %5031 = vmatprep.subr.bf16.mxu0 0
        %5032 = vmatpush1.bf16.xpose.msra.mxu0 0
        %5033 = vmatprep.subr.bf16.mxu0 0
        %5034 = vmatpush1.bf16.xpose.msra.mxu0 0
        %5035 = vmatprep.mubr.bf16.mxu0 0
        %5036 = vmatmul.mubr.bf16.gmra.mrb[0].mxu0 %v4998
        %v5037 = vpop.f32.mrb[0].mxu0
        %v5038 = vadd.f32 0.0, %v5037
        %v5039 = vpop.f32.mrb[0].mxu0
        %v5040 = vpop.f32.mrb[0].mxu0
        %v5041 = vpop.f32.mrb[0].mxu0
        %5042 = vdwg.mxu0
        %5043 = vrot.lane.b32.xlu0 %v4792, 112
        %v5044 = vpop.permute.xlu0 %5043
        %5045 = vrot.lane.b32.xlu0 %v4794, 112
        %v5046 = vpop.permute.xlu0 %5045
        %v5048 = vsel %vm765, %v5044, 0
        %v5051 = vsel %vm765, %v5046, 0
        %5053 = vmatprep.subr.bf16.mxu0 0
        %5054 = vmatpush1.bf16.xpose.msra.mxu0 %v5051
        %5055 = vmatprep.subr.bf16.mxu0 0
        %5056 = vmatpush1.bf16.xpose.msra.mxu0 0
        %5057 = vmatprep.subr.bf16.mxu0 0
        %5058 = vmatpush1.bf16.xpose.msra.mxu0 0
        %5059 = vmatprep.subr.bf16.mxu0 0
        %5060 = vmatpush1.bf16.xpose.msra.mxu0 0
        %5061 = vmatprep.subr.bf16.mxu0 0
        %5062 = vmatpush1.bf16.xpose.msra.mxu0 0
        %5063 = vmatprep.subr.bf16.mxu0 0
        %5064 = vmatpush1.bf16.xpose.msra.mxu0 0
        %5065 = vmatprep.subr.bf16.mxu0 0
        %5066 = vmatpush1.bf16.xpose.msra.mxu0 0
        %5067 = vmatprep.subr.bf16.mxu0 0
        %5068 = vmatpush1.bf16.xpose.msra.mxu0 0
        %5069 = vmatprep.subr.bf16.mxu0 0
        %5070 = vmatpush1.bf16.xpose.msra.mxu0 0
        %5071 = vmatprep.subr.bf16.mxu0 0
        %5072 = vmatpush1.bf16.xpose.msra.mxu0 0
        %5073 = vmatprep.subr.bf16.mxu0 0
        %5074 = vmatpush1.bf16.xpose.msra.mxu0 0
        %5075 = vmatprep.subr.bf16.mxu0 0
        %5076 = vmatpush1.bf16.xpose.msra.mxu0 0
        %5077 = vmatprep.subr.bf16.mxu0 0
        %5078 = vmatpush1.bf16.xpose.msra.mxu0 0
        %5079 = vmatprep.subr.bf16.mxu0 0
        %5080 = vmatpush1.bf16.xpose.msra.mxu0 0
        %5081 = vmatprep.subr.bf16.mxu0 0
        %5082 = vmatpush1.bf16.xpose.msra.mxu0 0
        %5083 = vmatprep.subr.bf16.mxu0 0
        %5084 = vmatpush1.bf16.xpose.msra.mxu0 0
        %5085 = vmatprep.mubr.bf16.mxu0 0
        %5086 = vmatmul.mubr.bf16.gmra.mrb[0].mxu0 %v5048
        %v5087 = vpop.f32.mrb[0].mxu0
        %v5088 = vadd.f32 0.0, %v5087
        %v5089 = vpop.f32.mrb[0].mxu0
        %v5090 = vpop.f32.mrb[0].mxu0
        %v5091 = vpop.f32.mrb[0].mxu0
        %5092 = vdwg.mxu0
        %5093 = vrot.lane.b32.xlu0 %v4791, 104
        %v5094 = vpop.permute.xlu0 %5093
        %5095 = vrot.lane.b32.xlu0 %v4793, 104
        %v5096 = vpop.permute.xlu0 %5095
        %v5098 = vsel %vm765, %v5094, 0
        %v5101 = vsel %vm765, %v5096, 0
        %5103 = vmatprep.subr.bf16.mxu0 0
        %5104 = vmatpush1.bf16.xpose.msra.mxu0 %v5101
        %5105 = vmatprep.subr.bf16.mxu0 0
        %5106 = vmatpush1.bf16.xpose.msra.mxu0 0
        %5107 = vmatprep.subr.bf16.mxu0 0
        %5108 = vmatpush1.bf16.xpose.msra.mxu0 0
        %5109 = vmatprep.subr.bf16.mxu0 0
        %5110 = vmatpush1.bf16.xpose.msra.mxu0 0
        %5111 = vmatprep.subr.bf16.mxu0 0
        %5112 = vmatpush1.bf16.xpose.msra.mxu0 0
        %5113 = vmatprep.subr.bf16.mxu0 0
        %5114 = vmatpush1.bf16.xpose.msra.mxu0 0
        %5115 = vmatprep.subr.bf16.mxu0 0
        %5116 = vmatpush1.bf16.xpose.msra.mxu0 0
        %5117 = vmatprep.subr.bf16.mxu0 0
        %5118 = vmatpush1.bf16.xpose.msra.mxu0 0
        %5119 = vmatprep.subr.bf16.mxu0 0
        %5120 = vmatpush1.bf16.xpose.msra.mxu0 0
        %5121 = vmatprep.subr.bf16.mxu0 0
        %5122 = vmatpush1.bf16.xpose.msra.mxu0 0
        %5123 = vmatprep.subr.bf16.mxu0 0
        %5124 = vmatpush1.bf16.xpose.msra.mxu0 0
        %5125 = vmatprep.subr.bf16.mxu0 0
        %5126 = vmatpush1.bf16.xpose.msra.mxu0 0
        %5127 = vmatprep.subr.bf16.mxu0 0
        %5128 = vmatpush1.bf16.xpose.msra.mxu0 0
        %5129 = vmatprep.subr.bf16.mxu0 0
        %5130 = vmatpush1.bf16.xpose.msra.mxu0 0
        %5131 = vmatprep.subr.bf16.mxu0 0
        %5132 = vmatpush1.bf16.xpose.msra.mxu0 0
        %5133 = vmatprep.subr.bf16.mxu0 0
        %5134 = vmatpush1.bf16.xpose.msra.mxu0 0
        %5135 = vmatprep.mubr.bf16.mxu0 0
        %5136 = vmatmul.mubr.bf16.gmra.mrb[0].mxu0 %v5098
        %v5137 = vpop.f32.mrb[0].mxu0
        %v5138 = vadd.f32 0.0, %v5137
        %v5139 = vpop.f32.mrb[0].mxu0
        %v5140 = vpop.f32.mrb[0].mxu0
        %v5141 = vpop.f32.mrb[0].mxu0
        %5142 = vdwg.mxu0
        %5143 = vrot.lane.b32.xlu0 %v4792, 104
        %v5144 = vpop.permute.xlu0 %5143
        %5145 = vrot.lane.b32.xlu0 %v4794, 104
        %v5146 = vpop.permute.xlu0 %5145
        %v5148 = vsel %vm765, %v5144, 0
        %v5151 = vsel %vm765, %v5146, 0
        %5153 = vmatprep.subr.bf16.mxu0 0
        %5154 = vmatpush1.bf16.xpose.msra.mxu0 %v5151
        %5155 = vmatprep.subr.bf16.mxu0 0
        %5156 = vmatpush1.bf16.xpose.msra.mxu0 0
        %5157 = vmatprep.subr.bf16.mxu0 0
        %5158 = vmatpush1.bf16.xpose.msra.mxu0 0
        %5159 = vmatprep.subr.bf16.mxu0 0
        %5160 = vmatpush1.bf16.xpose.msra.mxu0 0
        %5161 = vmatprep.subr.bf16.mxu0 0
        %5162 = vmatpush1.bf16.xpose.msra.mxu0 0
        %5163 = vmatprep.subr.bf16.mxu0 0
        %5164 = vmatpush1.bf16.xpose.msra.mxu0 0
        %5165 = vmatprep.subr.bf16.mxu0 0
        %5166 = vmatpush1.bf16.xpose.msra.mxu0 0
        %5167 = vmatprep.subr.bf16.mxu0 0
        %5168 = vmatpush1.bf16.xpose.msra.mxu0 0
        %5169 = vmatprep.subr.bf16.mxu0 0
        %5170 = vmatpush1.bf16.xpose.msra.mxu0 0
        %5171 = vmatprep.subr.bf16.mxu0 0
        %5172 = vmatpush1.bf16.xpose.msra.mxu0 0
        %5173 = vmatprep.subr.bf16.mxu0 0
        %5174 = vmatpush1.bf16.xpose.msra.mxu0 0
        %5175 = vmatprep.subr.bf16.mxu0 0
        %5176 = vmatpush1.bf16.xpose.msra.mxu0 0
        %5177 = vmatprep.subr.bf16.mxu0 0
        %5178 = vmatpush1.bf16.xpose.msra.mxu0 0
        %5179 = vmatprep.subr.bf16.mxu0 0
        %5180 = vmatpush1.bf16.xpose.msra.mxu0 0
        %5181 = vmatprep.subr.bf16.mxu0 0
        %5182 = vmatpush1.bf16.xpose.msra.mxu0 0
        %5183 = vmatprep.subr.bf16.mxu0 0
        %5184 = vmatpush1.bf16.xpose.msra.mxu0 0
        %5185 = vmatprep.mubr.bf16.mxu0 0
        %5186 = vmatmul.mubr.bf16.gmra.mrb[0].mxu0 %v5148
        %v5187 = vpop.f32.mrb[0].mxu0
        %v5188 = vadd.f32 0.0, %v5187
        %v5189 = vpop.f32.mrb[0].mxu0
        %v5190 = vpop.f32.mrb[0].mxu0
        %v5191 = vpop.f32.mrb[0].mxu0
        %5192 = vdwg.mxu0
        %v5193 = vsel %vm765, %v4838, -inf
        %5194 = vmax.xlane.f32.xlu0 %v5193
        %v5195 = vpop.xlane.xlu0 %5194
        %v5196 = vsel %vm765, %v4936, -inf
        %5197 = vmax.xlane.f32.xlu0 %v5196
        %v5198 = vpop.xlane.xlu0 %5197
        %v5199 = vsel %vm765, %v5038, -inf
        %5200 = vmax.xlane.f32.xlu0 %v5199
        %v5201 = vpop.xlane.xlu0 %5200
        %v5202 = vsel %vm765, %v5138, -inf
        %5203 = vmax.xlane.f32.xlu0 %v5202
        %v5204 = vpop.xlane.xlu0 %5203
        %v5205 = vsel %vm765, %v4884, -inf
        %5206 = vmax.xlane.f32.xlu0 %v5205
        %v5207 = vpop.xlane.xlu0 %5206
        %v5208 = vsel %vm765, %v4988, -inf
        %5209 = vmax.xlane.f32.xlu0 %v5208
        %v5210 = vpop.xlane.xlu0 %5209
        %v5211 = vsel %vm765, %v5088, -inf
        %5212 = vmax.xlane.f32.xlu0 %v5211
        %v5213 = vpop.xlane.xlu0 %5212
        %v5214 = vsel %vm765, %v5188, -inf
        %5215 = vmax.xlane.f32.xlu0 %v5214
        %v5216 = vpop.xlane.xlu0 %5215
        %v5217 = vsub.f32 %v4838, %v5195
        %v5218 = vsub.f32 %v4936, %v5198
        %v5219 = vsub.f32 %v5038, %v5201
        %v5220 = vsub.f32 %v5138, %v5204
        %v5221 = vsub.f32 %v4884, %v5207
        %v5222 = vsub.f32 %v4988, %v5210
        %v5223 = vsub.f32 %v5088, %v5213
        %v5224 = vsub.f32 %v5188, %v5216
        %v5225 = vmul.f32 %v5217, 1.442695
        %v5226 = vpow.pop %v5225
        %v5227 = vmul.f32 %v5218, 1.442695
        %v5228 = vpow.pop %v5227
        %v5229 = vmul.f32 %v5219, 1.442695
        %v5230 = vpow.pop %v5229
        %v5231 = vmul.f32 %v5220, 1.442695
        %v5232 = vpow.pop %v5231
        %v5233 = vmul.f32 %v5221, 1.442695
        %v5234 = vpow.pop %v5233
        %v5235 = vmul.f32 %v5222, 1.442695
        %v5236 = vpow.pop %v5235
        %v5237 = vmul.f32 %v5223, 1.442695
        %v5238 = vpow.pop %v5237
        %v5239 = vmul.f32 %v5224, 1.442695
        %v5240 = vpow.pop %v5239
        %v5241 = vsel %vm765, %v5226, 0.0
        %5242 = vadd.xlane.f32.xlu0 %v5241
        %v5243 = vpop.xlane.xlu0 %5242
        %v5244 = vsel %vm765, %v5228, 0.0
        %5245 = vadd.xlane.f32.xlu0 %v5244
        %v5246 = vpop.xlane.xlu0 %5245
        %v5247 = vsel %vm765, %v5230, 0.0
        %5248 = vadd.xlane.f32.xlu0 %v5247
        %v5249 = vpop.xlane.xlu0 %5248
        %v5250 = vsel %vm765, %v5232, 0.0
        %5251 = vadd.xlane.f32.xlu0 %v5250
        %v5252 = vpop.xlane.xlu0 %5251
        %v5253 = vsel %vm765, %v5234, 0.0
        %5254 = vadd.xlane.f32.xlu0 %v5253
        %v5255 = vpop.xlane.xlu0 %5254
        %v5256 = vsel %vm765, %v5236, 0.0
        %5257 = vadd.xlane.f32.xlu0 %v5256
        %v5258 = vpop.xlane.xlu0 %5257
        %v5259 = vsel %vm765, %v5238, 0.0
        %5260 = vadd.xlane.f32.xlu0 %v5259
        %v5261 = vpop.xlane.xlu0 %5260
        %v5262 = vsel %vm765, %v5240, 0.0
        %5263 = vadd.xlane.f32.xlu0 %v5262
        %v5264 = vpop.xlane.xlu0 %5263
        %v5265 = vrcp.pop %v5243
        %v5266 = vmul.f32 %v5226, %v5265
        %v5267 = vrcp.pop %v5246
        %v5268 = vmul.f32 %v5228, %v5267
        %v5269 = vrcp.pop %v5249
        %v5270 = vmul.f32 %v5230, %v5269
        %v5271 = vrcp.pop %v5252
        %v5272 = vmul.f32 %v5232, %v5271
        %v5273 = vrcp.pop %v5255
        %v5274 = vmul.f32 %v5234, %v5273
        %v5275 = vrcp.pop %v5258
        %v5276 = vmul.f32 %v5236, %v5275
        %v5277 = vrcp.pop %v5261
        %v5278 = vmul.f32 %v5238, %v5277
        %v5279 = vrcp.pop %v5264
        %v5280 = vmul.f32 %v5240, %v5279
        %v5281 = vpack.c.bf16 %v5268, %v5266
        %v5282 = vpack.c.bf16 %v5272, %v5270
        %v5283 = vpack.c.bf16 %v5276, %v5274
        %v5284 = vpack.c.bf16 %v5280, %v5278
        %v5286 = vsel %vm765, %v5281, 0
        %v5289 = vsel %vm1257, %v4795, 0
        %5291 = vmatprep.subr.bf16.mxu0 0
        %5292 = vmatpush1.bf16.msra.mxu0 %v5289
        %5293 = vmatprep.subr.bf16.mxu0 0
        %5294 = vmatpush1.bf16.msra.mxu0 0
        %5295 = vmatprep.subr.bf16.mxu0 0
        %5296 = vmatpush1.bf16.msra.mxu0 0
        %5297 = vmatprep.subr.bf16.mxu0 0
        %5298 = vmatpush1.bf16.msra.mxu0 0
        %5299 = vmatprep.subr.bf16.mxu0 0
        %5300 = vmatpush1.bf16.msra.mxu0 0
        %5301 = vmatprep.subr.bf16.mxu0 0
        %5302 = vmatpush1.bf16.msra.mxu0 0
        %5303 = vmatprep.subr.bf16.mxu0 0
        %5304 = vmatpush1.bf16.msra.mxu0 0
        %5305 = vmatprep.subr.bf16.mxu0 0
        %5306 = vmatpush1.bf16.msra.mxu0 0
        %5307 = vmatprep.subr.bf16.mxu0 0
        %5308 = vmatpush1.bf16.msra.mxu0 0
        %5309 = vmatprep.subr.bf16.mxu0 0
        %5310 = vmatpush1.bf16.msra.mxu0 0
        %5311 = vmatprep.subr.bf16.mxu0 0
        %5312 = vmatpush1.bf16.msra.mxu0 0
        %5313 = vmatprep.subr.bf16.mxu0 0
        %5314 = vmatpush1.bf16.msra.mxu0 0
        %5315 = vmatprep.subr.bf16.mxu0 0
        %5316 = vmatpush1.bf16.msra.mxu0 0
        %5317 = vmatprep.subr.bf16.mxu0 0
        %5318 = vmatpush1.bf16.msra.mxu0 0
        %5319 = vmatprep.subr.bf16.mxu0 0
        %5320 = vmatpush1.bf16.msra.mxu0 0
        %5321 = vmatprep.subr.bf16.mxu0 0
        %5322 = vmatpush1.bf16.msra.mxu0 0
        %5323 = vmatprep.mubr.bf16.mxu0 0
        %5324 = vmatmul.mubr.bf16.gmra.mrb[0].mxu0 %v5286
        %v5325 = vpop.f32.mrb[0].mxu0
        %v5326 = vadd.f32 0.0, %v5325
        %v5327 = vpop.f32.mrb[0].mxu0
        %v5328 = vpop.f32.mrb[0].mxu0
        %v5329 = vpop.f32.mrb[0].mxu0
        %5330 = vdwg.mxu0
        %v5332 = vsel %vm765, %v5283, 0
        %v5335 = vsel %vm1257, %v4796, 0
        %5337 = vmatprep.subr.bf16.mxu0 0
        %5338 = vmatpush1.bf16.msra.mxu0 %v5335
        %5339 = vmatprep.subr.bf16.mxu0 0
        %5340 = vmatpush1.bf16.msra.mxu0 0
        %5341 = vmatprep.subr.bf16.mxu0 0
        %5342 = vmatpush1.bf16.msra.mxu0 0
        %5343 = vmatprep.subr.bf16.mxu0 0
        %5344 = vmatpush1.bf16.msra.mxu0 0
        %5345 = vmatprep.subr.bf16.mxu0 0
        %5346 = vmatpush1.bf16.msra.mxu0 0
        %5347 = vmatprep.subr.bf16.mxu0 0
        %5348 = vmatpush1.bf16.msra.mxu0 0
        %5349 = vmatprep.subr.bf16.mxu0 0
        %5350 = vmatpush1.bf16.msra.mxu0 0
        %5351 = vmatprep.subr.bf16.mxu0 0
        %5352 = vmatpush1.bf16.msra.mxu0 0
        %5353 = vmatprep.subr.bf16.mxu0 0
        %5354 = vmatpush1.bf16.msra.mxu0 0
        %5355 = vmatprep.subr.bf16.mxu0 0
        %5356 = vmatpush1.bf16.msra.mxu0 0
        %5357 = vmatprep.subr.bf16.mxu0 0
        %5358 = vmatpush1.bf16.msra.mxu0 0
        %5359 = vmatprep.subr.bf16.mxu0 0
        %5360 = vmatpush1.bf16.msra.mxu0 0
        %5361 = vmatprep.subr.bf16.mxu0 0
        %5362 = vmatpush1.bf16.msra.mxu0 0
        %5363 = vmatprep.subr.bf16.mxu0 0
        %5364 = vmatpush1.bf16.msra.mxu0 0
        %5365 = vmatprep.subr.bf16.mxu0 0
        %5366 = vmatpush1.bf16.msra.mxu0 0
        %5367 = vmatprep.subr.bf16.mxu0 0
        %5368 = vmatpush1.bf16.msra.mxu0 0
        %5369 = vmatprep.mubr.bf16.mxu0 0
        %5370 = vmatmul.mubr.bf16.gmra.mrb[0].mxu0 %v5332
        %v5371 = vpop.f32.mrb[0].mxu0
        %v5372 = vadd.f32 0.0, %v5371
        %v5373 = vpop.f32.mrb[0].mxu0
        %v5374 = vpop.f32.mrb[0].mxu0
        %v5375 = vpop.f32.mrb[0].mxu0
        %5376 = vdwg.mxu0
        %v5378 = vrot.slane %v5281, 4
        %5380 = vrot.lane.b32.xlu0 %v4795, 120
        %v5381 = vpop.permute.xlu0 %5380
        %v5383 = vsel %vm765, %v5378, 0
        %v5386 = vsel %vm1257, %v5381, 0
        %5388 = vmatprep.subr.bf16.mxu0 0
        %5389 = vmatpush1.bf16.msra.mxu0 %v5386
        %5390 = vmatprep.subr.bf16.mxu0 0
        %5391 = vmatpush1.bf16.msra.mxu0 0
        %5392 = vmatprep.subr.bf16.mxu0 0
        %5393 = vmatpush1.bf16.msra.mxu0 0
        %5394 = vmatprep.subr.bf16.mxu0 0
        %5395 = vmatpush1.bf16.msra.mxu0 0
        %5396 = vmatprep.subr.bf16.mxu0 0
        %5397 = vmatpush1.bf16.msra.mxu0 0
        %5398 = vmatprep.subr.bf16.mxu0 0
        %5399 = vmatpush1.bf16.msra.mxu0 0
        %5400 = vmatprep.subr.bf16.mxu0 0
        %5401 = vmatpush1.bf16.msra.mxu0 0
        %5402 = vmatprep.subr.bf16.mxu0 0
        %5403 = vmatpush1.bf16.msra.mxu0 0
        %5404 = vmatprep.subr.bf16.mxu0 0
        %5405 = vmatpush1.bf16.msra.mxu0 0
        %5406 = vmatprep.subr.bf16.mxu0 0
        %5407 = vmatpush1.bf16.msra.mxu0 0
        %5408 = vmatprep.subr.bf16.mxu0 0
        %5409 = vmatpush1.bf16.msra.mxu0 0
        %5410 = vmatprep.subr.bf16.mxu0 0
        %5411 = vmatpush1.bf16.msra.mxu0 0
        %5412 = vmatprep.subr.bf16.mxu0 0
        %5413 = vmatpush1.bf16.msra.mxu0 0
        %5414 = vmatprep.subr.bf16.mxu0 0
        %5415 = vmatpush1.bf16.msra.mxu0 0
        %5416 = vmatprep.subr.bf16.mxu0 0
        %5417 = vmatpush1.bf16.msra.mxu0 0
        %5418 = vmatprep.subr.bf16.mxu0 0
        %5419 = vmatpush1.bf16.msra.mxu0 0
        %5420 = vmatprep.mubr.bf16.mxu0 0
        %5421 = vmatmul.mubr.bf16.gmra.mrb[0].mxu0 %v5383
        %v5422 = vpop.f32.mrb[0].mxu0
        %v5423 = vadd.f32 0.0, %v5422
        %v5424 = vpop.f32.mrb[0].mxu0
        %v5425 = vpop.f32.mrb[0].mxu0
        %v5426 = vpop.f32.mrb[0].mxu0
        %5427 = vdwg.mxu0
        %v5429 = vrot.slane %v5283, 4
        %5431 = vrot.lane.b32.xlu0 %v4796, 120
        %v5432 = vpop.permute.xlu0 %5431
        %v5434 = vsel %vm765, %v5429, 0
        %v5437 = vsel %vm1257, %v5432, 0
        %5439 = vmatprep.subr.bf16.mxu0 0
        %5440 = vmatpush1.bf16.msra.mxu0 %v5437
        %5441 = vmatprep.subr.bf16.mxu0 0
        %5442 = vmatpush1.bf16.msra.mxu0 0
        %5443 = vmatprep.subr.bf16.mxu0 0
        %5444 = vmatpush1.bf16.msra.mxu0 0
        %5445 = vmatprep.subr.bf16.mxu0 0
        %5446 = vmatpush1.bf16.msra.mxu0 0
        %5447 = vmatprep.subr.bf16.mxu0 0
        %5448 = vmatpush1.bf16.msra.mxu0 0
        %5449 = vmatprep.subr.bf16.mxu0 0
        %5450 = vmatpush1.bf16.msra.mxu0 0
        %5451 = vmatprep.subr.bf16.mxu0 0
        %5452 = vmatpush1.bf16.msra.mxu0 0
        %5453 = vmatprep.subr.bf16.mxu0 0
        %5454 = vmatpush1.bf16.msra.mxu0 0
        %5455 = vmatprep.subr.bf16.mxu0 0
        %5456 = vmatpush1.bf16.msra.mxu0 0
        %5457 = vmatprep.subr.bf16.mxu0 0
        %5458 = vmatpush1.bf16.msra.mxu0 0
        %5459 = vmatprep.subr.bf16.mxu0 0
        %5460 = vmatpush1.bf16.msra.mxu0 0
        %5461 = vmatprep.subr.bf16.mxu0 0
        %5462 = vmatpush1.bf16.msra.mxu0 0
        %5463 = vmatprep.subr.bf16.mxu0 0
        %5464 = vmatpush1.bf16.msra.mxu0 0
        %5465 = vmatprep.subr.bf16.mxu0 0
        %5466 = vmatpush1.bf16.msra.mxu0 0
        %5467 = vmatprep.subr.bf16.mxu0 0
        %5468 = vmatpush1.bf16.msra.mxu0 0
        %5469 = vmatprep.subr.bf16.mxu0 0
        %5470 = vmatpush1.bf16.msra.mxu0 0
        %5471 = vmatprep.mubr.bf16.mxu0 0
        %5472 = vmatmul.mubr.bf16.gmra.mrb[0].mxu0 %v5434
        %v5473 = vpop.f32.mrb[0].mxu0
        %v5474 = vadd.f32 0.0, %v5473
        %v5475 = vpop.f32.mrb[0].mxu0
        %v5476 = vpop.f32.mrb[0].mxu0
        %v5477 = vpop.f32.mrb[0].mxu0
        %5478 = vdwg.mxu0
        %5479 = vrot.lane.b32.xlu0 %v4795, 112
        %v5480 = vpop.permute.xlu0 %5479
        %v5482 = vsel %vm765, %v5282, 0
        %v5485 = vsel %vm1257, %v5480, 0
        %5487 = vmatprep.subr.bf16.mxu0 0
        %5488 = vmatpush1.bf16.msra.mxu0 %v5485
        %5489 = vmatprep.subr.bf16.mxu0 0
        %5490 = vmatpush1.bf16.msra.mxu0 0
        %5491 = vmatprep.subr.bf16.mxu0 0
        %5492 = vmatpush1.bf16.msra.mxu0 0
        %5493 = vmatprep.subr.bf16.mxu0 0
        %5494 = vmatpush1.bf16.msra.mxu0 0
        %5495 = vmatprep.subr.bf16.mxu0 0
        %5496 = vmatpush1.bf16.msra.mxu0 0
        %5497 = vmatprep.subr.bf16.mxu0 0
        %5498 = vmatpush1.bf16.msra.mxu0 0
        %5499 = vmatprep.subr.bf16.mxu0 0
        %5500 = vmatpush1.bf16.msra.mxu0 0
        %5501 = vmatprep.subr.bf16.mxu0 0
        %5502 = vmatpush1.bf16.msra.mxu0 0
        %5503 = vmatprep.subr.bf16.mxu0 0
        %5504 = vmatpush1.bf16.msra.mxu0 0
        %5505 = vmatprep.subr.bf16.mxu0 0
        %5506 = vmatpush1.bf16.msra.mxu0 0
        %5507 = vmatprep.subr.bf16.mxu0 0
        %5508 = vmatpush1.bf16.msra.mxu0 0
        %5509 = vmatprep.subr.bf16.mxu0 0
        %5510 = vmatpush1.bf16.msra.mxu0 0
        %5511 = vmatprep.subr.bf16.mxu0 0
        %5512 = vmatpush1.bf16.msra.mxu0 0
        %5513 = vmatprep.subr.bf16.mxu0 0
        %5514 = vmatpush1.bf16.msra.mxu0 0
        %5515 = vmatprep.subr.bf16.mxu0 0
        %5516 = vmatpush1.bf16.msra.mxu0 0
        %5517 = vmatprep.subr.bf16.mxu0 0
        %5518 = vmatpush1.bf16.msra.mxu0 0
        %5519 = vmatprep.mubr.bf16.mxu0 0
        %5520 = vmatmul.mubr.bf16.gmra.mrb[0].mxu0 %v5482
        %v5521 = vpop.f32.mrb[0].mxu0
        %v5522 = vadd.f32 0.0, %v5521
        %v5523 = vpop.f32.mrb[0].mxu0
        %v5524 = vpop.f32.mrb[0].mxu0
        %v5525 = vpop.f32.mrb[0].mxu0
        %5526 = vdwg.mxu0
        %5527 = vrot.lane.b32.xlu0 %v4796, 112
        %v5528 = vpop.permute.xlu0 %5527
        %v5530 = vsel %vm765, %v5284, 0
        %v5533 = vsel %vm1257, %v5528, 0
        %5535 = vmatprep.subr.bf16.mxu0 0
        %5536 = vmatpush1.bf16.msra.mxu0 %v5533
        %5537 = vmatprep.subr.bf16.mxu0 0
        %5538 = vmatpush1.bf16.msra.mxu0 0
        %5539 = vmatprep.subr.bf16.mxu0 0
        %5540 = vmatpush1.bf16.msra.mxu0 0
        %5541 = vmatprep.subr.bf16.mxu0 0
        %5542 = vmatpush1.bf16.msra.mxu0 0
        %5543 = vmatprep.subr.bf16.mxu0 0
        %5544 = vmatpush1.bf16.msra.mxu0 0
        %5545 = vmatprep.subr.bf16.mxu0 0
        %5546 = vmatpush1.bf16.msra.mxu0 0
        %5547 = vmatprep.subr.bf16.mxu0 0
        %5548 = vmatpush1.bf16.msra.mxu0 0
        %5549 = vmatprep.subr.bf16.mxu0 0
        %5550 = vmatpush1.bf16.msra.mxu0 0
        %5551 = vmatprep.subr.bf16.mxu0 0
        %5552 = vmatpush1.bf16.msra.mxu0 0
        %5553 = vmatprep.subr.bf16.mxu0 0
        %5554 = vmatpush1.bf16.msra.mxu0 0
        %5555 = vmatprep.subr.bf16.mxu0 0
        %5556 = vmatpush1.bf16.msra.mxu0 0
        %5557 = vmatprep.subr.bf16.mxu0 0
        %5558 = vmatpush1.bf16.msra.mxu0 0
        %5559 = vmatprep.subr.bf16.mxu0 0
        %5560 = vmatpush1.bf16.msra.mxu0 0
        %5561 = vmatprep.subr.bf16.mxu0 0
        %5562 = vmatpush1.bf16.msra.mxu0 0
        %5563 = vmatprep.subr.bf16.mxu0 0
        %5564 = vmatpush1.bf16.msra.mxu0 0
        %5565 = vmatprep.subr.bf16.mxu0 0
        %5566 = vmatpush1.bf16.msra.mxu0 0
        %5567 = vmatprep.mubr.bf16.mxu0 0
        %5568 = vmatmul.mubr.bf16.gmra.mrb[0].mxu0 %v5530
        %v5569 = vpop.f32.mrb[0].mxu0
        %v5570 = vadd.f32 0.0, %v5569
        %v5571 = vpop.f32.mrb[0].mxu0
        %v5572 = vpop.f32.mrb[0].mxu0
        %v5573 = vpop.f32.mrb[0].mxu0
        %5574 = vdwg.mxu0
        %v5576 = vrot.slane %v5282, 4
        %5577 = vrot.lane.b32.xlu0 %v4795, 104
        %v5578 = vpop.permute.xlu0 %5577
        %v5580 = vsel %vm765, %v5576, 0
        %v5583 = vsel %vm1257, %v5578, 0
        %5585 = vmatprep.subr.bf16.mxu0 0
        %5586 = vmatpush1.bf16.msra.mxu0 %v5583
        %5587 = vmatprep.subr.bf16.mxu0 0
        %5588 = vmatpush1.bf16.msra.mxu0 0
        %5589 = vmatprep.subr.bf16.mxu0 0
        %5590 = vmatpush1.bf16.msra.mxu0 0
        %5591 = vmatprep.subr.bf16.mxu0 0
        %5592 = vmatpush1.bf16.msra.mxu0 0
        %5593 = vmatprep.subr.bf16.mxu0 0
        %5594 = vmatpush1.bf16.msra.mxu0 0
        %5595 = vmatprep.subr.bf16.mxu0 0
        %5596 = vmatpush1.bf16.msra.mxu0 0
        %5597 = vmatprep.subr.bf16.mxu0 0
        %5598 = vmatpush1.bf16.msra.mxu0 0
        %5599 = vmatprep.subr.bf16.mxu0 0
        %5600 = vmatpush1.bf16.msra.mxu0 0
        %5601 = vmatprep.subr.bf16.mxu0 0
        %5602 = vmatpush1.bf16.msra.mxu0 0
        %5603 = vmatprep.subr.bf16.mxu0 0
        %5604 = vmatpush1.bf16.msra.mxu0 0
        %5605 = vmatprep.subr.bf16.mxu0 0
        %5606 = vmatpush1.bf16.msra.mxu0 0
        %5607 = vmatprep.subr.bf16.mxu0 0
        %5608 = vmatpush1.bf16.msra.mxu0 0
        %5609 = vmatprep.subr.bf16.mxu0 0
        %5610 = vmatpush1.bf16.msra.mxu0 0
        %5611 = vmatprep.subr.bf16.mxu0 0
        %5612 = vmatpush1.bf16.msra.mxu0 0
        %5613 = vmatprep.subr.bf16.mxu0 0
        %5614 = vmatpush1.bf16.msra.mxu0 0
        %5615 = vmatprep.subr.bf16.mxu0 0
        %5616 = vmatpush1.bf16.msra.mxu0 0
        %5617 = vmatprep.mubr.bf16.mxu0 0
        %5618 = vmatmul.mubr.bf16.gmra.mrb[0].mxu0 %v5580
        %v5619 = vpop.f32.mrb[0].mxu0
        %v5620 = vadd.f32 0.0, %v5619
        %v5621 = vpop.f32.mrb[0].mxu0
        %v5622 = vpop.f32.mrb[0].mxu0
        %v5623 = vpop.f32.mrb[0].mxu0
        %5624 = vdwg.mxu0
        %v5626 = vrot.slane %v5284, 4
        %5627 = vrot.lane.b32.xlu0 %v4796, 104
        %v5628 = vpop.permute.xlu0 %5627
        %v5630 = vsel %vm765, %v5626, 0
        %v5633 = vsel %vm1257, %v5628, 0
        %5635 = vmatprep.subr.bf16.mxu0 0
        %5636 = vmatpush1.bf16.msra.mxu0 %v5633
        %5637 = vmatprep.subr.bf16.mxu0 0
        %5638 = vmatpush1.bf16.msra.mxu0 0
        %5639 = vmatprep.subr.bf16.mxu0 0
        %5640 = vmatpush1.bf16.msra.mxu0 0
        %5641 = vmatprep.subr.bf16.mxu0 0
        %5642 = vmatpush1.bf16.msra.mxu0 0
        %5643 = vmatprep.subr.bf16.mxu0 0
        %5644 = vmatpush1.bf16.msra.mxu0 0
        %5645 = vmatprep.subr.bf16.mxu0 0
        %5646 = vmatpush1.bf16.msra.mxu0 0
        %5647 = vmatprep.subr.bf16.mxu0 0
        %5648 = vmatpush1.bf16.msra.mxu0 0
        %5649 = vmatprep.subr.bf16.mxu0 0
        %5650 = vmatpush1.bf16.msra.mxu0 0
        %5651 = vmatprep.subr.bf16.mxu0 0
        %5652 = vmatpush1.bf16.msra.mxu0 0
        %5653 = vmatprep.subr.bf16.mxu0 0
        %5654 = vmatpush1.bf16.msra.mxu0 0
        %5655 = vmatprep.subr.bf16.mxu0 0
        %5656 = vmatpush1.bf16.msra.mxu0 0
        %5657 = vmatprep.subr.bf16.mxu0 0
        %5658 = vmatpush1.bf16.msra.mxu0 0
        %5659 = vmatprep.subr.bf16.mxu0 0
        %5660 = vmatpush1.bf16.msra.mxu0 0
        %5661 = vmatprep.subr.bf16.mxu0 0
        %5662 = vmatpush1.bf16.msra.mxu0 0
        %5663 = vmatprep.subr.bf16.mxu0 0
        %5664 = vmatpush1.bf16.msra.mxu0 0
        %5665 = vmatprep.subr.bf16.mxu0 0
        %5666 = vmatpush1.bf16.msra.mxu0 0
        %5667 = vmatprep.mubr.bf16.mxu0 0
        %5668 = vmatmul.mubr.bf16.gmra.mrb[0].mxu0 %v5630
        %v5669 = vpop.f32.mrb[0].mxu0
        %v5670 = vadd.f32 0.0, %v5669
        %v5671 = vpop.f32.mrb[0].mxu0
        %v5672 = vpop.f32.mrb[0].mxu0
        %v5673 = vpop.f32.mrb[0].mxu0
        %5674 = vdwg.mxu0
        %5677 = vrot.lane.b32.xlu0 %v5423, 8
        %v5678 = vpop.permute.xlu0 %5677
        %5679 = vrot.lane.b32.xlu0 %v5474, 8
        %v5680 = vpop.permute.xlu0 %5679
        %5685 = vrot.lane.b32.xlu0 %v5522, 16
        %v5686 = vpop.permute.xlu0 %5685
        %5687 = vrot.lane.b32.xlu0 %v5570, 16
        %v5688 = vpop.permute.xlu0 %5687
        %5693 = vrot.lane.b32.xlu0 %v5620, 24
        %v5694 = vpop.permute.xlu0 %5693
        %5695 = vrot.lane.b32.xlu0 %v5670, 24
        %v5696 = vpop.permute.xlu0 %5695
        %v5699 = vsel %vm765, %v5326, %v5678
        %v5700 = vsel %vm765, %v5372, %v5680
        %v5701 = vsel %vm1671, %v5699, %v5686
        %v5702 = vsel %vm1671, %v5700, %v5688
        %v5703 = vsel %vm1674, %v5701, %v5694
        %v5704 = vsel %vm1674, %v5702, %v5696
        %v5705 = vpack.c.bf16 %v5704, %v5703
        %v5706 = vlaneseq
        %v5707 = vshrl.u32 %v5706, 7
        %v5708 = vsub.s32 7, %v5707
        %v5709 = vrot.slane %v554, %v5708
        %v5714 = vunpack.c.l.b16 %v4785
        %v5715 = vunpack.c.l.b16 %v4786
        %v5716 = vunpack.c.l.b16 %v4787
        %v5717 = vunpack.c.l.b16 %v4788
        %v5718 = vpack.c.b16 %v5715, %v5714
        %v5719 = vpack.c.b16 %v5717, %v5716
        %v5723 = vsel %vm583, %v5705, 0
        %5725 = vmatprep.subr.bf16.mxu0 0
        %5726 = vmatpush1.bf16.msra.mxu0 %v5718
        %5727 = vmatprep.subr.bf16.mxu0 0
        %5728 = vmatpush1.bf16.msra.mxu0 %v5719
        %5729 = vmatprep.subr.bf16.mxu0 0
        %5730 = vmatpush1.bf16.msra.mxu0 0
        %5731 = vmatprep.subr.bf16.mxu0 0
        %5732 = vmatpush1.bf16.msra.mxu0 0
        %5733 = vmatprep.subr.bf16.mxu0 0
        %5734 = vmatpush1.bf16.msra.mxu0 0
        %5735 = vmatprep.subr.bf16.mxu0 0
        %5736 = vmatpush1.bf16.msra.mxu0 0
        %5737 = vmatprep.subr.bf16.mxu0 0
        %5738 = vmatpush1.bf16.msra.mxu0 0
        %5739 = vmatprep.subr.bf16.mxu0 0
        %5740 = vmatpush1.bf16.msra.mxu0 0
        %5741 = vmatprep.subr.bf16.mxu0 0
        %5742 = vmatpush1.bf16.msra.mxu0 0
        %5743 = vmatprep.subr.bf16.mxu0 0
        %5744 = vmatpush1.bf16.msra.mxu0 0
        %5745 = vmatprep.subr.bf16.mxu0 0
        %5746 = vmatpush1.bf16.msra.mxu0 0
        %5747 = vmatprep.subr.bf16.mxu0 0
        %5748 = vmatpush1.bf16.msra.mxu0 0
        %5749 = vmatprep.subr.bf16.mxu0 0
        %5750 = vmatpush1.bf16.msra.mxu0 0
        %5751 = vmatprep.subr.bf16.mxu0 0
        %5752 = vmatpush1.bf16.msra.mxu0 0
        %5753 = vmatprep.subr.bf16.mxu0 0
        %5754 = vmatpush1.bf16.msra.mxu0 0
        %5755 = vmatprep.subr.bf16.mxu0 0
        %5756 = vmatpush1.bf16.msra.mxu0 0
        %5757 = vmatprep.mubr.bf16.mxu0 0
        %5758 = vmatmul.mubr.bf16.gmra.mrb[0].mxu0 %v5723
        %v5759 = vpop.f32.mrb[0].mxu0
        %v5760 = vadd.f32 %v5709, %v5759
        %v5761 = vpop.f32.mrb[0].mxu0
        %v5762 = vpop.f32.mrb[0].mxu0
        %v5763 = vadd.f32 %v5709, %v5762
        %v5764 = vpop.f32.mrb[0].mxu0
        %5765 = vdwg.mxu0
        %v5766 = vadd.f32 %v4588, %v5760
        %v5767 = vadd.f32 %v4589, %v5763
        %v5768 = vsel %vm583, %v5766, 0.0
        %5769 = vadd.xlane.f32.xlu0 %v5768
        %v5770 = vpop.xlane.xlu0 %5769
        %v5771 = vsel %vm583, %v5767, 0.0
        %5772 = vadd.xlane.f32.xlu0 %v5771
        %v5773 = vpop.xlane.xlu0 %5772
        %v5774 = vmul.f32 %v5770, %v1746
        %v5775 = vmul.f32 %v5773, %v1746
        %v5776 = vsub.f32 %v5766, %v5774
        %v5777 = vsub.f32 %v5767, %v5775
        %v5778 = vmul.f32 %v5776, %v5776
        %v5779 = vmul.f32 %v5777, %v5777
        %v5780 = vsel %vm583, %v5778, 0.0
        %5781 = vadd.xlane.f32.xlu0 %v5780
        %v5782 = vpop.xlane.xlu0 %5781
        %v5783 = vsel %vm583, %v5779, 0.0
        %5784 = vadd.xlane.f32.xlu0 %v5783
        %v5785 = vpop.xlane.xlu0 %5784
        %v5786 = vmul.f32 %v5782, %v1746
        %v5787 = vmul.f32 %v5785, %v1746
        %v5788 = vadd.f32 %v5786, 1e-05
        %v5789 = vadd.f32 %v5787, 1e-05
        %v5790 = vrsqrt.pop %v5788
        %v5791 = vrsqrt.pop %v5789
        %v5792 = vmul.f32 %v5776, %v5790
        %v5793 = vmul.f32 %v5777, %v5791
        %v5794 = vlaneseq
        %v5795 = vshrl.u32 %v5794, 7
        %v5796 = vsub.s32 4, %v5795
        %v5797 = vrot.slane %v555, %v5796
        %v5798 = vmul.f32 %v5792, %v5797
        %v5799 = vmul.f32 %v5793, %v5797
        %v5800 = vlaneseq
        %v5801 = vshrl.u32 %v5800, 7
        %v5802 = vsub.s32 5, %v5801
        %v5803 = vrot.slane %v555, %v5802
        %v5804 = vadd.f32 %v5798, %v5803
        %v5805 = vadd.f32 %v5799, %v5803
        %s5806 = scalar_lea.vmem %s541, 128
        %v5807 = vld [vmem:[%s5806] sm:$0xf]
        %v5808 = vld [vmem:[%s5806 + $0x4] sm:$0xf]
        %v5809 = vld [vmem:[%s5806 + $0x8] sm:$0xf]
        %v5810 = vld [vmem:[%s5806 + $0xc] sm:$0xf]
        %v5811 = vpack.c.bf16 %v5805, %v5804
        %v5812 = vlaneseq
        %v5813 = vshrl.u32 %v5812, 7
        %v5814 = vsub.s32 0, %v5813
        %v5815 = vrot.slane %v555, %v5814
        %v5820 = vunpack.c.l.b16 %v5807
        %v5821 = vunpack.c.l.b16 %v5808
        %v5822 = vunpack.c.l.b16 %v5809
        %v5823 = vunpack.c.l.b16 %v5810
        %v5824 = vpack.c.b16 %v5821, %v5820
        %v5825 = vpack.c.b16 %v5823, %v5822
        %v5829 = vsel %vm583, %v5811, 0
        %5831 = vmatprep.subr.bf16.mxu0 0
        %5832 = vmatpush1.bf16.msra.mxu0 %v5824
        %5833 = vmatprep.subr.bf16.mxu0 0
        %5834 = vmatpush1.bf16.msra.mxu0 %v5825
        %5835 = vmatprep.subr.bf16.mxu0 0
        %5836 = vmatpush1.bf16.msra.mxu0 0
        %5837 = vmatprep.subr.bf16.mxu0 0
        %5838 = vmatpush1.bf16.msra.mxu0 0
        %5839 = vmatprep.subr.bf16.mxu0 0
        %5840 = vmatpush1.bf16.msra.mxu0 0
        %5841 = vmatprep.subr.bf16.mxu0 0
        %5842 = vmatpush1.bf16.msra.mxu0 0
        %5843 = vmatprep.subr.bf16.mxu0 0
        %5844 = vmatpush1.bf16.msra.mxu0 0
        %5845 = vmatprep.subr.bf16.mxu0 0
        %5846 = vmatpush1.bf16.msra.mxu0 0
        %5847 = vmatprep.subr.bf16.mxu0 0
        %5848 = vmatpush1.bf16.msra.mxu0 0
        %5849 = vmatprep.subr.bf16.mxu0 0
        %5850 = vmatpush1.bf16.msra.mxu0 0
        %5851 = vmatprep.subr.bf16.mxu0 0
        %5852 = vmatpush1.bf16.msra.mxu0 0
        %5853 = vmatprep.subr.bf16.mxu0 0
        %5854 = vmatpush1.bf16.msra.mxu0 0
        %5855 = vmatprep.subr.bf16.mxu0 0
        %5856 = vmatpush1.bf16.msra.mxu0 0
        %5857 = vmatprep.subr.bf16.mxu0 0
        %5858 = vmatpush1.bf16.msra.mxu0 0
        %5859 = vmatprep.subr.bf16.mxu0 0
        %5860 = vmatpush1.bf16.msra.mxu0 0
        %5861 = vmatprep.subr.bf16.mxu0 0
        %5862 = vmatpush1.bf16.msra.mxu0 0
        %5863 = vmatprep.mubr.bf16.mxu0 0
        %5864 = vmatmul.mubr.bf16.gmra.mrb[0].mxu0 %v5829
        %v5865 = vpop.f32.mrb[0].mxu0
        %v5866 = vadd.f32 %v5815, %v5865
        %v5867 = vpop.f32.mrb[0].mxu0
        %v5868 = vpop.f32.mrb[0].mxu0
        %v5869 = vadd.f32 %v5815, %v5868
        %v5870 = vpop.f32.mrb[0].mxu0
        %5871 = vdwg.mxu0
        %v5872 = vmax.f32 %v5866, 0.0
        %v5873 = vmax.f32 %v5869, 0.0
        %s5874 = scalar_lea.vmem %s541, 144
        %v5875 = vld [vmem:[%s5874] sm:$0xf]
        %v5876 = vld [vmem:[%s5874 + $0x4] sm:$0xf]
        %v5877 = vld [vmem:[%s5874 + $0x8] sm:$0xf]
        %v5878 = vld [vmem:[%s5874 + $0xc] sm:$0xf]
        %v5879 = vpack.c.bf16 %v5873, %v5872
        %v5880 = vlaneseq
        %v5881 = vshrl.u32 %v5880, 7
        %v5882 = vsub.s32 1, %v5881
        %v5883 = vrot.slane %v555, %v5882
        %v5888 = vunpack.c.l.b16 %v5875
        %v5889 = vunpack.c.l.b16 %v5876
        %v5890 = vunpack.c.l.b16 %v5877
        %v5891 = vunpack.c.l.b16 %v5878
        %v5892 = vpack.c.b16 %v5889, %v5888
        %v5893 = vpack.c.b16 %v5891, %v5890
        %v5897 = vsel %vm583, %v5879, 0
        %5899 = vmatprep.subr.bf16.mxu0 0
        %5900 = vmatpush1.bf16.msra.mxu0 %v5892
        %5901 = vmatprep.subr.bf16.mxu0 0
        %5902 = vmatpush1.bf16.msra.mxu0 %v5893
        %5903 = vmatprep.subr.bf16.mxu0 0
        %5904 = vmatpush1.bf16.msra.mxu0 0
        %5905 = vmatprep.subr.bf16.mxu0 0
        %5906 = vmatpush1.bf16.msra.mxu0 0
        %5907 = vmatprep.subr.bf16.mxu0 0
        %5908 = vmatpush1.bf16.msra.mxu0 0
        %5909 = vmatprep.subr.bf16.mxu0 0
        %5910 = vmatpush1.bf16.msra.mxu0 0
        %5911 = vmatprep.subr.bf16.mxu0 0
        %5912 = vmatpush1.bf16.msra.mxu0 0
        %5913 = vmatprep.subr.bf16.mxu0 0
        %5914 = vmatpush1.bf16.msra.mxu0 0
        %5915 = vmatprep.subr.bf16.mxu0 0
        %5916 = vmatpush1.bf16.msra.mxu0 0
        %5917 = vmatprep.subr.bf16.mxu0 0
        %5918 = vmatpush1.bf16.msra.mxu0 0
        %5919 = vmatprep.subr.bf16.mxu0 0
        %5920 = vmatpush1.bf16.msra.mxu0 0
        %5921 = vmatprep.subr.bf16.mxu0 0
        %5922 = vmatpush1.bf16.msra.mxu0 0
        %5923 = vmatprep.subr.bf16.mxu0 0
        %5924 = vmatpush1.bf16.msra.mxu0 0
        %5925 = vmatprep.subr.bf16.mxu0 0
        %5926 = vmatpush1.bf16.msra.mxu0 0
        %5927 = vmatprep.subr.bf16.mxu0 0
        %5928 = vmatpush1.bf16.msra.mxu0 0
        %5929 = vmatprep.subr.bf16.mxu0 0
        %5930 = vmatpush1.bf16.msra.mxu0 0
        %5931 = vmatprep.mubr.bf16.mxu0 0
        %5932 = vmatmul.mubr.bf16.gmra.mrb[0].mxu0 %v5897
        %v5933 = vpop.f32.mrb[0].mxu0
        %v5934 = vadd.f32 %v5883, %v5933
        %v5935 = vpop.f32.mrb[0].mxu0
        %v5936 = vpop.f32.mrb[0].mxu0
        %v5937 = vadd.f32 %v5883, %v5936
        %v5938 = vpop.f32.mrb[0].mxu0
        %5939 = vdwg.mxu0
        %v5940 = vadd.f32 %v5804, %v5934
        %v5941 = vadd.f32 %v5805, %v5937
        %v5942 = vsel %vm583, %v5940, 0.0
        %5943 = vadd.xlane.f32.xlu0 %v5942
        %v5944 = vpop.xlane.xlu0 %5943
        %v5945 = vsel %vm583, %v5941, 0.0
        %5946 = vadd.xlane.f32.xlu0 %v5945
        %v5947 = vpop.xlane.xlu0 %5946
        %v5948 = vmul.f32 %v5944, %v1746
        %v5949 = vmul.f32 %v5947, %v1746
        %v5950 = vsub.f32 %v5940, %v5948
        %v5951 = vsub.f32 %v5941, %v5949
        %v5952 = vmul.f32 %v5950, %v5950
        %v5953 = vmul.f32 %v5951, %v5951
        %v5954 = vsel %vm583, %v5952, 0.0
        %5955 = vadd.xlane.f32.xlu0 %v5954
        %v5956 = vpop.xlane.xlu0 %5955
        %v5957 = vsel %vm583, %v5953, 0.0
        %5958 = vadd.xlane.f32.xlu0 %v5957
        %v5959 = vpop.xlane.xlu0 %5958
        %v5960 = vmul.f32 %v5956, %v1746
        %v5961 = vmul.f32 %v5959, %v1746
        %v5962 = vadd.f32 %v5960, 1e-05
        %v5963 = vadd.f32 %v5961, 1e-05
        %v5964 = vrsqrt.pop %v5962
        %v5965 = vrsqrt.pop %v5963
        %v5966 = vmul.f32 %v5950, %v5964
        %v5967 = vmul.f32 %v5951, %v5965
        %v5968 = vlaneseq
        %v5969 = vshrl.u32 %v5968, 7
        %v5970 = vsub.s32 6, %v5969
        %v5971 = vrot.slane %v555, %v5970
        %v5972 = vmul.f32 %v5966, %v5971
        %v5973 = vmul.f32 %v5967, %v5971
        %v5974 = vlaneseq
        %v5975 = vshrl.u32 %v5974, 7
        %v5976 = vsub.s32 7, %v5975
        %v5977 = vrot.slane %v555, %v5976
        %v5978 = vadd.f32 %v5972, %v5977
        %v5979 = vadd.f32 %v5973, %v5977
        %s5980 = scalar_lea.vmem %s541, 160
        %v5981 = vld [vmem:[%s5980] sm:$0xf]
        %v5982 = vld [vmem:[%s5980 + $0x4] sm:$0xf]
        %v5983 = vld [vmem:[%s5980 + $0x8] sm:$0xf]
        %v5984 = vld [vmem:[%s5980 + $0xc] sm:$0xf]
        %v5985 = vpack.c.bf16 %v5979, %v5978
        %v5986 = vlaneseq
        %v5987 = vshrl.u32 %v5986, 7
        %v5988 = vsub.s32 0, %v5987
        %v5989 = vrot.slane %v556, %v5988
        %v5994 = vunpack.c.l.b16 %v5981
        %v5995 = vunpack.c.l.b16 %v5982
        %v5996 = vunpack.c.l.b16 %v5983
        %v5997 = vunpack.c.l.b16 %v5984
        %v5998 = vpack.c.b16 %v5995, %v5994
        %v5999 = vpack.c.b16 %v5997, %v5996
        %v6003 = vsel %vm583, %v5985, 0
        %6005 = vmatprep.subr.bf16.mxu0 0
        %6006 = vmatpush1.bf16.msra.mxu0 %v5998
        %6007 = vmatprep.subr.bf16.mxu0 0
        %6008 = vmatpush1.bf16.msra.mxu0 %v5999
        %6009 = vmatprep.subr.bf16.mxu0 0
        %6010 = vmatpush1.bf16.msra.mxu0 0
        %6011 = vmatprep.subr.bf16.mxu0 0
        %6012 = vmatpush1.bf16.msra.mxu0 0
        %6013 = vmatprep.subr.bf16.mxu0 0
        %6014 = vmatpush1.bf16.msra.mxu0 0
        %6015 = vmatprep.subr.bf16.mxu0 0
        %6016 = vmatpush1.bf16.msra.mxu0 0
        %6017 = vmatprep.subr.bf16.mxu0 0
        %6018 = vmatpush1.bf16.msra.mxu0 0
        %6019 = vmatprep.subr.bf16.mxu0 0
        %6020 = vmatpush1.bf16.msra.mxu0 0
        %6021 = vmatprep.subr.bf16.mxu0 0
        %6022 = vmatpush1.bf16.msra.mxu0 0
        %6023 = vmatprep.subr.bf16.mxu0 0
        %6024 = vmatpush1.bf16.msra.mxu0 0
        %6025 = vmatprep.subr.bf16.mxu0 0
        %6026 = vmatpush1.bf16.msra.mxu0 0
        %6027 = vmatprep.subr.bf16.mxu0 0
        %6028 = vmatpush1.bf16.msra.mxu0 0
        %6029 = vmatprep.subr.bf16.mxu0 0
        %6030 = vmatpush1.bf16.msra.mxu0 0
        %6031 = vmatprep.subr.bf16.mxu0 0
        %6032 = vmatpush1.bf16.msra.mxu0 0
        %6033 = vmatprep.subr.bf16.mxu0 0
        %6034 = vmatpush1.bf16.msra.mxu0 0
        %6035 = vmatprep.subr.bf16.mxu0 0
        %6036 = vmatpush1.bf16.msra.mxu0 0
        %6037 = vmatprep.mubr.bf16.mxu0 0
        %6038 = vmatmul.mubr.bf16.gmra.mrb[0].mxu0 %v6003
        %v6039 = vpop.f32.mrb[0].mxu0
        %v6040 = vadd.f32 %v5989, %v6039
        %v6041 = vpop.f32.mrb[0].mxu0
        %v6042 = vpop.f32.mrb[0].mxu0
        %v6043 = vadd.f32 %v5989, %v6042
        %v6044 = vpop.f32.mrb[0].mxu0
        %6045 = vdwg.mxu0
        %s6046 = scalar_lea.vmem %s541, 176
        %v6047 = vld [vmem:[%s6046] sm:$0xf]
        %v6048 = vld [vmem:[%s6046 + $0x4] sm:$0xf]
        %v6049 = vld [vmem:[%s6046 + $0x8] sm:$0xf]
        %v6050 = vld [vmem:[%s6046 + $0xc] sm:$0xf]
        %v6051 = vlaneseq
        %v6052 = vshrl.u32 %v6051, 7
        %v6053 = vsub.s32 1, %v6052
        %v6054 = vrot.slane %v556, %v6053
        %v6059 = vunpack.c.l.b16 %v6047
        %v6060 = vunpack.c.l.b16 %v6048
        %v6061 = vunpack.c.l.b16 %v6049
        %v6062 = vunpack.c.l.b16 %v6050
        %v6063 = vpack.c.b16 %v6060, %v6059
        %v6064 = vpack.c.b16 %v6062, %v6061
        %6067 = vmatprep.subr.bf16.mxu0 0
        %6068 = vmatpush1.bf16.msra.mxu0 %v6063
        %6069 = vmatprep.subr.bf16.mxu0 0
        %6070 = vmatpush1.bf16.msra.mxu0 %v6064
        %6071 = vmatprep.subr.bf16.mxu0 0
        %6072 = vmatpush1.bf16.msra.mxu0 0
        %6073 = vmatprep.subr.bf16.mxu0 0
        %6074 = vmatpush1.bf16.msra.mxu0 0
        %6075 = vmatprep.subr.bf16.mxu0 0
        %6076 = vmatpush1.bf16.msra.mxu0 0
        %6077 = vmatprep.subr.bf16.mxu0 0
        %6078 = vmatpush1.bf16.msra.mxu0 0
        %6079 = vmatprep.subr.bf16.mxu0 0
        %6080 = vmatpush1.bf16.msra.mxu0 0
        %6081 = vmatprep.subr.bf16.mxu0 0
        %6082 = vmatpush1.bf16.msra.mxu0 0
        %6083 = vmatprep.subr.bf16.mxu0 0
        %6084 = vmatpush1.bf16.msra.mxu0 0
        %6085 = vmatprep.subr.bf16.mxu0 0
        %6086 = vmatpush1.bf16.msra.mxu0 0
        %6087 = vmatprep.subr.bf16.mxu0 0
        %6088 = vmatpush1.bf16.msra.mxu0 0
        %6089 = vmatprep.subr.bf16.mxu0 0
        %6090 = vmatpush1.bf16.msra.mxu0 0
        %6091 = vmatprep.subr.bf16.mxu0 0
        %6092 = vmatpush1.bf16.msra.mxu0 0
        %6093 = vmatprep.subr.bf16.mxu0 0
        %6094 = vmatpush1.bf16.msra.mxu0 0
        %6095 = vmatprep.subr.bf16.mxu0 0
        %6096 = vmatpush1.bf16.msra.mxu0 0
        %6097 = vmatprep.subr.bf16.mxu0 0
        %6098 = vmatpush1.bf16.msra.mxu0 0
        %6099 = vmatprep.mubr.bf16.mxu0 0
        %6100 = vmatmul.mubr.bf16.gmra.mrb[0].mxu0 %v6003
        %v6101 = vpop.f32.mrb[0].mxu0
        %v6102 = vadd.f32 %v6054, %v6101
        %v6103 = vpop.f32.mrb[0].mxu0
        %v6104 = vpop.f32.mrb[0].mxu0
        %v6105 = vadd.f32 %v6054, %v6104
        %v6106 = vpop.f32.mrb[0].mxu0
        %6107 = vdwg.mxu0
        %s6108 = scalar_lea.vmem %s541, 192
        %v6109 = vld [vmem:[%s6108] sm:$0xf]
        %v6110 = vld [vmem:[%s6108 + $0x4] sm:$0xf]
        %v6111 = vld [vmem:[%s6108 + $0x8] sm:$0xf]
        %v6112 = vld [vmem:[%s6108 + $0xc] sm:$0xf]
        %v6113 = vlaneseq
        %v6114 = vshrl.u32 %v6113, 7
        %v6115 = vsub.s32 2, %v6114
        %v6116 = vrot.slane %v556, %v6115
        %v6121 = vunpack.c.l.b16 %v6109
        %v6122 = vunpack.c.l.b16 %v6110
        %v6123 = vunpack.c.l.b16 %v6111
        %v6124 = vunpack.c.l.b16 %v6112
        %v6125 = vpack.c.b16 %v6122, %v6121
        %v6126 = vpack.c.b16 %v6124, %v6123
        %6129 = vmatprep.subr.bf16.mxu0 0
        %6130 = vmatpush1.bf16.msra.mxu0 %v6125
        %6131 = vmatprep.subr.bf16.mxu0 0
        %6132 = vmatpush1.bf16.msra.mxu0 %v6126
        %6133 = vmatprep.subr.bf16.mxu0 0
        %6134 = vmatpush1.bf16.msra.mxu0 0
        %6135 = vmatprep.subr.bf16.mxu0 0
        %6136 = vmatpush1.bf16.msra.mxu0 0
        %6137 = vmatprep.subr.bf16.mxu0 0
        %6138 = vmatpush1.bf16.msra.mxu0 0
        %6139 = vmatprep.subr.bf16.mxu0 0
        %6140 = vmatpush1.bf16.msra.mxu0 0
        %6141 = vmatprep.subr.bf16.mxu0 0
        %6142 = vmatpush1.bf16.msra.mxu0 0
        %6143 = vmatprep.subr.bf16.mxu0 0
        %6144 = vmatpush1.bf16.msra.mxu0 0
        %6145 = vmatprep.subr.bf16.mxu0 0
        %6146 = vmatpush1.bf16.msra.mxu0 0
        %6147 = vmatprep.subr.bf16.mxu0 0
        %6148 = vmatpush1.bf16.msra.mxu0 0
        %6149 = vmatprep.subr.bf16.mxu0 0
        %6150 = vmatpush1.bf16.msra.mxu0 0
        %6151 = vmatprep.subr.bf16.mxu0 0
        %6152 = vmatpush1.bf16.msra.mxu0 0
        %6153 = vmatprep.subr.bf16.mxu0 0
        %6154 = vmatpush1.bf16.msra.mxu0 0
        %6155 = vmatprep.subr.bf16.mxu0 0
        %6156 = vmatpush1.bf16.msra.mxu0 0
        %6157 = vmatprep.subr.bf16.mxu0 0
        %6158 = vmatpush1.bf16.msra.mxu0 0
        %6159 = vmatprep.subr.bf16.mxu0 0
        %6160 = vmatpush1.bf16.msra.mxu0 0
        %6161 = vmatprep.mubr.bf16.mxu0 0
        %6162 = vmatmul.mubr.bf16.gmra.mrb[0].mxu0 %v6003
        %v6163 = vpop.f32.mrb[0].mxu0
        %v6164 = vadd.f32 %v6116, %v6163
        %v6165 = vpop.f32.mrb[0].mxu0
        %v6166 = vpop.f32.mrb[0].mxu0
        %v6167 = vadd.f32 %v6116, %v6166
        %v6168 = vpop.f32.mrb[0].mxu0
        %6169 = vdwg.mxu0
        %s6170 = scalar_lea.vmem %s541, 208
        %v6171 = vld [vmem:[%s6170] sm:$0xf]
        %v6172 = vld [vmem:[%s6170 + $0x4] sm:$0xf]
        %v6173 = vld [vmem:[%s6170 + $0x8] sm:$0xf]
        %v6174 = vld [vmem:[%s6170 + $0xc] sm:$0xf]
        %v6175 = vmul.f32 %v6040, 0.35355338
        %v6176 = vmul.f32 %v6043, 0.35355338
        %v6177 = vpack.c.bf16 %v6175, %v6175
        %v6178 = vpack.c.bf16 %v6176, %v6176
        %v6179 = vpack.c.bf16 %v6102, %v6102
        %v6180 = vpack.c.bf16 %v6105, %v6105
        %v6181 = vpack.c.bf16 %v6164, %v6164
        %v6182 = vpack.c.bf16 %v6167, %v6167
        %v6184 = vsel %vm765, %v6177, 0
        %v6187 = vsel %vm765, %v6179, 0
        %6189 = vmatprep.subr.bf16.mxu0 0
        %6190 = vmatpush1.bf16.xpose.msra.mxu0 %v6187
        %6191 = vmatprep.subr.bf16.mxu0 0
        %6192 = vmatpush1.bf16.xpose.msra.mxu0 0
        %6193 = vmatprep.subr.bf16.mxu0 0
        %6194 = vmatpush1.bf16.xpose.msra.mxu0 0
        %6195 = vmatprep.subr.bf16.mxu0 0
        %6196 = vmatpush1.bf16.xpose.msra.mxu0 0
        %6197 = vmatprep.subr.bf16.mxu0 0
        %6198 = vmatpush1.bf16.xpose.msra.mxu0 0
        %6199 = vmatprep.subr.bf16.mxu0 0
        %6200 = vmatpush1.bf16.xpose.msra.mxu0 0
        %6201 = vmatprep.subr.bf16.mxu0 0
        %6202 = vmatpush1.bf16.xpose.msra.mxu0 0
        %6203 = vmatprep.subr.bf16.mxu0 0
        %6204 = vmatpush1.bf16.xpose.msra.mxu0 0
        %6205 = vmatprep.subr.bf16.mxu0 0
        %6206 = vmatpush1.bf16.xpose.msra.mxu0 0
        %6207 = vmatprep.subr.bf16.mxu0 0
        %6208 = vmatpush1.bf16.xpose.msra.mxu0 0
        %6209 = vmatprep.subr.bf16.mxu0 0
        %6210 = vmatpush1.bf16.xpose.msra.mxu0 0
        %6211 = vmatprep.subr.bf16.mxu0 0
        %6212 = vmatpush1.bf16.xpose.msra.mxu0 0
        %6213 = vmatprep.subr.bf16.mxu0 0
        %6214 = vmatpush1.bf16.xpose.msra.mxu0 0
        %6215 = vmatprep.subr.bf16.mxu0 0
        %6216 = vmatpush1.bf16.xpose.msra.mxu0 0
        %6217 = vmatprep.subr.bf16.mxu0 0
        %6218 = vmatpush1.bf16.xpose.msra.mxu0 0
        %6219 = vmatprep.subr.bf16.mxu0 0
        %6220 = vmatpush1.bf16.xpose.msra.mxu0 0
        %6221 = vmatprep.mubr.bf16.mxu0 0
        %6222 = vmatmul.mubr.bf16.gmra.mrb[0].mxu0 %v6184
        %v6223 = vpop.f32.mrb[0].mxu0
        %v6224 = vadd.f32 0.0, %v6223
        %v6225 = vpop.f32.mrb[0].mxu0
        %v6226 = vpop.f32.mrb[0].mxu0
        %v6227 = vpop.f32.mrb[0].mxu0
        %6228 = vdwg.mxu0
        %v6230 = vsel %vm765, %v6178, 0
        %v6233 = vsel %vm765, %v6180, 0
        %6235 = vmatprep.subr.bf16.mxu0 0
        %6236 = vmatpush1.bf16.xpose.msra.mxu0 %v6233
        %6237 = vmatprep.subr.bf16.mxu0 0
        %6238 = vmatpush1.bf16.xpose.msra.mxu0 0
        %6239 = vmatprep.subr.bf16.mxu0 0
        %6240 = vmatpush1.bf16.xpose.msra.mxu0 0
        %6241 = vmatprep.subr.bf16.mxu0 0
        %6242 = vmatpush1.bf16.xpose.msra.mxu0 0
        %6243 = vmatprep.subr.bf16.mxu0 0
        %6244 = vmatpush1.bf16.xpose.msra.mxu0 0
        %6245 = vmatprep.subr.bf16.mxu0 0
        %6246 = vmatpush1.bf16.xpose.msra.mxu0 0
        %6247 = vmatprep.subr.bf16.mxu0 0
        %6248 = vmatpush1.bf16.xpose.msra.mxu0 0
        %6249 = vmatprep.subr.bf16.mxu0 0
        %6250 = vmatpush1.bf16.xpose.msra.mxu0 0
        %6251 = vmatprep.subr.bf16.mxu0 0
        %6252 = vmatpush1.bf16.xpose.msra.mxu0 0
        %6253 = vmatprep.subr.bf16.mxu0 0
        %6254 = vmatpush1.bf16.xpose.msra.mxu0 0
        %6255 = vmatprep.subr.bf16.mxu0 0
        %6256 = vmatpush1.bf16.xpose.msra.mxu0 0
        %6257 = vmatprep.subr.bf16.mxu0 0
        %6258 = vmatpush1.bf16.xpose.msra.mxu0 0
        %6259 = vmatprep.subr.bf16.mxu0 0
        %6260 = vmatpush1.bf16.xpose.msra.mxu0 0
        %6261 = vmatprep.subr.bf16.mxu0 0
        %6262 = vmatpush1.bf16.xpose.msra.mxu0 0
        %6263 = vmatprep.subr.bf16.mxu0 0
        %6264 = vmatpush1.bf16.xpose.msra.mxu0 0
        %6265 = vmatprep.subr.bf16.mxu0 0
        %6266 = vmatpush1.bf16.xpose.msra.mxu0 0
        %6267 = vmatprep.mubr.bf16.mxu0 0
        %6268 = vmatmul.mubr.bf16.gmra.mrb[0].mxu0 %v6230
        %v6269 = vpop.f32.mrb[0].mxu0
        %v6270 = vadd.f32 0.0, %v6269
        %v6271 = vpop.f32.mrb[0].mxu0
        %v6272 = vpop.f32.mrb[0].mxu0
        %v6273 = vpop.f32.mrb[0].mxu0
        %6274 = vdwg.mxu0
        %6276 = vrot.lane.b32.xlu0 %v6177, 120
        %v6277 = vpop.permute.xlu0 %6276
        %6279 = vrot.lane.b32.xlu0 %v6179, 120
        %v6280 = vpop.permute.xlu0 %6279
        %v6282 = vsel %vm765, %v6277, 0
        %v6285 = vsel %vm765, %v6280, 0
        %6287 = vmatprep.subr.bf16.mxu0 0
        %6288 = vmatpush1.bf16.xpose.msra.mxu0 %v6285
        %6289 = vmatprep.subr.bf16.mxu0 0
        %6290 = vmatpush1.bf16.xpose.msra.mxu0 0
        %6291 = vmatprep.subr.bf16.mxu0 0
        %6292 = vmatpush1.bf16.xpose.msra.mxu0 0
        %6293 = vmatprep.subr.bf16.mxu0 0
        %6294 = vmatpush1.bf16.xpose.msra.mxu0 0
        %6295 = vmatprep.subr.bf16.mxu0 0
        %6296 = vmatpush1.bf16.xpose.msra.mxu0 0
        %6297 = vmatprep.subr.bf16.mxu0 0
        %6298 = vmatpush1.bf16.xpose.msra.mxu0 0
        %6299 = vmatprep.subr.bf16.mxu0 0
        %6300 = vmatpush1.bf16.xpose.msra.mxu0 0
        %6301 = vmatprep.subr.bf16.mxu0 0
        %6302 = vmatpush1.bf16.xpose.msra.mxu0 0
        %6303 = vmatprep.subr.bf16.mxu0 0
        %6304 = vmatpush1.bf16.xpose.msra.mxu0 0
        %6305 = vmatprep.subr.bf16.mxu0 0
        %6306 = vmatpush1.bf16.xpose.msra.mxu0 0
        %6307 = vmatprep.subr.bf16.mxu0 0
        %6308 = vmatpush1.bf16.xpose.msra.mxu0 0
        %6309 = vmatprep.subr.bf16.mxu0 0
        %6310 = vmatpush1.bf16.xpose.msra.mxu0 0
        %6311 = vmatprep.subr.bf16.mxu0 0
        %6312 = vmatpush1.bf16.xpose.msra.mxu0 0
        %6313 = vmatprep.subr.bf16.mxu0 0
        %6314 = vmatpush1.bf16.xpose.msra.mxu0 0
        %6315 = vmatprep.subr.bf16.mxu0 0
        %6316 = vmatpush1.bf16.xpose.msra.mxu0 0
        %6317 = vmatprep.subr.bf16.mxu0 0
        %6318 = vmatpush1.bf16.xpose.msra.mxu0 0
        %6319 = vmatprep.mubr.bf16.mxu0 0
        %6320 = vmatmul.mubr.bf16.gmra.mrb[0].mxu0 %v6282
        %v6321 = vpop.f32.mrb[0].mxu0
        %v6322 = vadd.f32 0.0, %v6321
        %v6323 = vpop.f32.mrb[0].mxu0
        %v6324 = vpop.f32.mrb[0].mxu0
        %v6325 = vpop.f32.mrb[0].mxu0
        %6326 = vdwg.mxu0
        %6328 = vrot.lane.b32.xlu0 %v6178, 120
        %v6329 = vpop.permute.xlu0 %6328
        %6331 = vrot.lane.b32.xlu0 %v6180, 120
        %v6332 = vpop.permute.xlu0 %6331
        %v6334 = vsel %vm765, %v6329, 0
        %v6337 = vsel %vm765, %v6332, 0
        %6339 = vmatprep.subr.bf16.mxu0 0
        %6340 = vmatpush1.bf16.xpose.msra.mxu0 %v6337
        %6341 = vmatprep.subr.bf16.mxu0 0
        %6342 = vmatpush1.bf16.xpose.msra.mxu0 0
        %6343 = vmatprep.subr.bf16.mxu0 0
        %6344 = vmatpush1.bf16.xpose.msra.mxu0 0
        %6345 = vmatprep.subr.bf16.mxu0 0
        %6346 = vmatpush1.bf16.xpose.msra.mxu0 0
        %6347 = vmatprep.subr.bf16.mxu0 0
        %6348 = vmatpush1.bf16.xpose.msra.mxu0 0
        %6349 = vmatprep.subr.bf16.mxu0 0
        %6350 = vmatpush1.bf16.xpose.msra.mxu0 0
        %6351 = vmatprep.subr.bf16.mxu0 0
        %6352 = vmatpush1.bf16.xpose.msra.mxu0 0
        %6353 = vmatprep.subr.bf16.mxu0 0
        %6354 = vmatpush1.bf16.xpose.msra.mxu0 0
        %6355 = vmatprep.subr.bf16.mxu0 0
        %6356 = vmatpush1.bf16.xpose.msra.mxu0 0
        %6357 = vmatprep.subr.bf16.mxu0 0
        %6358 = vmatpush1.bf16.xpose.msra.mxu0 0
        %6359 = vmatprep.subr.bf16.mxu0 0
        %6360 = vmatpush1.bf16.xpose.msra.mxu0 0
        %6361 = vmatprep.subr.bf16.mxu0 0
        %6362 = vmatpush1.bf16.xpose.msra.mxu0 0
        %6363 = vmatprep.subr.bf16.mxu0 0
        %6364 = vmatpush1.bf16.xpose.msra.mxu0 0
        %6365 = vmatprep.subr.bf16.mxu0 0
        %6366 = vmatpush1.bf16.xpose.msra.mxu0 0
        %6367 = vmatprep.subr.bf16.mxu0 0
        %6368 = vmatpush1.bf16.xpose.msra.mxu0 0
        %6369 = vmatprep.subr.bf16.mxu0 0
        %6370 = vmatpush1.bf16.xpose.msra.mxu0 0
        %6371 = vmatprep.mubr.bf16.mxu0 0
        %6372 = vmatmul.mubr.bf16.gmra.mrb[0].mxu0 %v6334
        %v6373 = vpop.f32.mrb[0].mxu0
        %v6374 = vadd.f32 0.0, %v6373
        %v6375 = vpop.f32.mrb[0].mxu0
        %v6376 = vpop.f32.mrb[0].mxu0
        %v6377 = vpop.f32.mrb[0].mxu0
        %6378 = vdwg.mxu0
        %6379 = vrot.lane.b32.xlu0 %v6177, 112
        %v6380 = vpop.permute.xlu0 %6379
        %6381 = vrot.lane.b32.xlu0 %v6179, 112
        %v6382 = vpop.permute.xlu0 %6381
        %v6384 = vsel %vm765, %v6380, 0
        %v6387 = vsel %vm765, %v6382, 0
        %6389 = vmatprep.subr.bf16.mxu0 0
        %6390 = vmatpush1.bf16.xpose.msra.mxu0 %v6387
        %6391 = vmatprep.subr.bf16.mxu0 0
        %6392 = vmatpush1.bf16.xpose.msra.mxu0 0
        %6393 = vmatprep.subr.bf16.mxu0 0
        %6394 = vmatpush1.bf16.xpose.msra.mxu0 0
        %6395 = vmatprep.subr.bf16.mxu0 0
        %6396 = vmatpush1.bf16.xpose.msra.mxu0 0
        %6397 = vmatprep.subr.bf16.mxu0 0
        %6398 = vmatpush1.bf16.xpose.msra.mxu0 0
        %6399 = vmatprep.subr.bf16.mxu0 0
        %6400 = vmatpush1.bf16.xpose.msra.mxu0 0
        %6401 = vmatprep.subr.bf16.mxu0 0
        %6402 = vmatpush1.bf16.xpose.msra.mxu0 0
        %6403 = vmatprep.subr.bf16.mxu0 0
        %6404 = vmatpush1.bf16.xpose.msra.mxu0 0
        %6405 = vmatprep.subr.bf16.mxu0 0
        %6406 = vmatpush1.bf16.xpose.msra.mxu0 0
        %6407 = vmatprep.subr.bf16.mxu0 0
        %6408 = vmatpush1.bf16.xpose.msra.mxu0 0
        %6409 = vmatprep.subr.bf16.mxu0 0
        %6410 = vmatpush1.bf16.xpose.msra.mxu0 0
        %6411 = vmatprep.subr.bf16.mxu0 0
        %6412 = vmatpush1.bf16.xpose.msra.mxu0 0
        %6413 = vmatprep.subr.bf16.mxu0 0
        %6414 = vmatpush1.bf16.xpose.msra.mxu0 0
        %6415 = vmatprep.subr.bf16.mxu0 0
        %6416 = vmatpush1.bf16.xpose.msra.mxu0 0
        %6417 = vmatprep.subr.bf16.mxu0 0
        %6418 = vmatpush1.bf16.xpose.msra.mxu0 0
        %6419 = vmatprep.subr.bf16.mxu0 0
        %6420 = vmatpush1.bf16.xpose.msra.mxu0 0
        %6421 = vmatprep.mubr.bf16.mxu0 0
        %6422 = vmatmul.mubr.bf16.gmra.mrb[0].mxu0 %v6384
        %v6423 = vpop.f32.mrb[0].mxu0
        %v6424 = vadd.f32 0.0, %v6423
        %v6425 = vpop.f32.mrb[0].mxu0
        %v6426 = vpop.f32.mrb[0].mxu0
        %v6427 = vpop.f32.mrb[0].mxu0
        %6428 = vdwg.mxu0
        %6429 = vrot.lane.b32.xlu0 %v6178, 112
        %v6430 = vpop.permute.xlu0 %6429
        %6431 = vrot.lane.b32.xlu0 %v6180, 112
        %v6432 = vpop.permute.xlu0 %6431
        %v6434 = vsel %vm765, %v6430, 0
        %v6437 = vsel %vm765, %v6432, 0
        %6439 = vmatprep.subr.bf16.mxu0 0
        %6440 = vmatpush1.bf16.xpose.msra.mxu0 %v6437
        %6441 = vmatprep.subr.bf16.mxu0 0
        %6442 = vmatpush1.bf16.xpose.msra.mxu0 0
        %6443 = vmatprep.subr.bf16.mxu0 0
        %6444 = vmatpush1.bf16.xpose.msra.mxu0 0
        %6445 = vmatprep.subr.bf16.mxu0 0
        %6446 = vmatpush1.bf16.xpose.msra.mxu0 0
        %6447 = vmatprep.subr.bf16.mxu0 0
        %6448 = vmatpush1.bf16.xpose.msra.mxu0 0
        %6449 = vmatprep.subr.bf16.mxu0 0
        %6450 = vmatpush1.bf16.xpose.msra.mxu0 0
        %6451 = vmatprep.subr.bf16.mxu0 0
        %6452 = vmatpush1.bf16.xpose.msra.mxu0 0
        %6453 = vmatprep.subr.bf16.mxu0 0
        %6454 = vmatpush1.bf16.xpose.msra.mxu0 0
        %6455 = vmatprep.subr.bf16.mxu0 0
        %6456 = vmatpush1.bf16.xpose.msra.mxu0 0
        %6457 = vmatprep.subr.bf16.mxu0 0
        %6458 = vmatpush1.bf16.xpose.msra.mxu0 0
        %6459 = vmatprep.subr.bf16.mxu0 0
        %6460 = vmatpush1.bf16.xpose.msra.mxu0 0
        %6461 = vmatprep.subr.bf16.mxu0 0
        %6462 = vmatpush1.bf16.xpose.msra.mxu0 0
        %6463 = vmatprep.subr.bf16.mxu0 0
        %6464 = vmatpush1.bf16.xpose.msra.mxu0 0
        %6465 = vmatprep.subr.bf16.mxu0 0
        %6466 = vmatpush1.bf16.xpose.msra.mxu0 0
        %6467 = vmatprep.subr.bf16.mxu0 0
        %6468 = vmatpush1.bf16.xpose.msra.mxu0 0
        %6469 = vmatprep.subr.bf16.mxu0 0
        %6470 = vmatpush1.bf16.xpose.msra.mxu0 0
        %6471 = vmatprep.mubr.bf16.mxu0 0
        %6472 = vmatmul.mubr.bf16.gmra.mrb[0].mxu0 %v6434
        %v6473 = vpop.f32.mrb[0].mxu0
        %v6474 = vadd.f32 0.0, %v6473
        %v6475 = vpop.f32.mrb[0].mxu0
        %v6476 = vpop.f32.mrb[0].mxu0
        %v6477 = vpop.f32.mrb[0].mxu0
        %6478 = vdwg.mxu0
        %6479 = vrot.lane.b32.xlu0 %v6177, 104
        %v6480 = vpop.permute.xlu0 %6479
        %6481 = vrot.lane.b32.xlu0 %v6179, 104
        %v6482 = vpop.permute.xlu0 %6481
        %v6484 = vsel %vm765, %v6480, 0
        %v6487 = vsel %vm765, %v6482, 0
        %6489 = vmatprep.subr.bf16.mxu0 0
        %6490 = vmatpush1.bf16.xpose.msra.mxu0 %v6487
        %6491 = vmatprep.subr.bf16.mxu0 0
        %6492 = vmatpush1.bf16.xpose.msra.mxu0 0
        %6493 = vmatprep.subr.bf16.mxu0 0
        %6494 = vmatpush1.bf16.xpose.msra.mxu0 0
        %6495 = vmatprep.subr.bf16.mxu0 0
        %6496 = vmatpush1.bf16.xpose.msra.mxu0 0
        %6497 = vmatprep.subr.bf16.mxu0 0
        %6498 = vmatpush1.bf16.xpose.msra.mxu0 0
        %6499 = vmatprep.subr.bf16.mxu0 0
        %6500 = vmatpush1.bf16.xpose.msra.mxu0 0
        %6501 = vmatprep.subr.bf16.mxu0 0
        %6502 = vmatpush1.bf16.xpose.msra.mxu0 0
        %6503 = vmatprep.subr.bf16.mxu0 0
        %6504 = vmatpush1.bf16.xpose.msra.mxu0 0
        %6505 = vmatprep.subr.bf16.mxu0 0
        %6506 = vmatpush1.bf16.xpose.msra.mxu0 0
        %6507 = vmatprep.subr.bf16.mxu0 0
        %6508 = vmatpush1.bf16.xpose.msra.mxu0 0
        %6509 = vmatprep.subr.bf16.mxu0 0
        %6510 = vmatpush1.bf16.xpose.msra.mxu0 0
        %6511 = vmatprep.subr.bf16.mxu0 0
        %6512 = vmatpush1.bf16.xpose.msra.mxu0 0
        %6513 = vmatprep.subr.bf16.mxu0 0
        %6514 = vmatpush1.bf16.xpose.msra.mxu0 0
        %6515 = vmatprep.subr.bf16.mxu0 0
        %6516 = vmatpush1.bf16.xpose.msra.mxu0 0
        %6517 = vmatprep.subr.bf16.mxu0 0
        %6518 = vmatpush1.bf16.xpose.msra.mxu0 0
        %6519 = vmatprep.subr.bf16.mxu0 0
        %6520 = vmatpush1.bf16.xpose.msra.mxu0 0
        %6521 = vmatprep.mubr.bf16.mxu0 0
        %6522 = vmatmul.mubr.bf16.gmra.mrb[0].mxu0 %v6484
        %v6523 = vpop.f32.mrb[0].mxu0
        %v6524 = vadd.f32 0.0, %v6523
        %v6525 = vpop.f32.mrb[0].mxu0
        %v6526 = vpop.f32.mrb[0].mxu0
        %v6527 = vpop.f32.mrb[0].mxu0
        %6528 = vdwg.mxu0
        %6529 = vrot.lane.b32.xlu0 %v6178, 104
        %v6530 = vpop.permute.xlu0 %6529
        %6531 = vrot.lane.b32.xlu0 %v6180, 104
        %v6532 = vpop.permute.xlu0 %6531
        %v6534 = vsel %vm765, %v6530, 0
        %v6537 = vsel %vm765, %v6532, 0
        %6539 = vmatprep.subr.bf16.mxu0 0
        %6540 = vmatpush1.bf16.xpose.msra.mxu0 %v6537
        %6541 = vmatprep.subr.bf16.mxu0 0
        %6542 = vmatpush1.bf16.xpose.msra.mxu0 0
        %6543 = vmatprep.subr.bf16.mxu0 0
        %6544 = vmatpush1.bf16.xpose.msra.mxu0 0
        %6545 = vmatprep.subr.bf16.mxu0 0
        %6546 = vmatpush1.bf16.xpose.msra.mxu0 0
        %6547 = vmatprep.subr.bf16.mxu0 0
        %6548 = vmatpush1.bf16.xpose.msra.mxu0 0
        %6549 = vmatprep.subr.bf16.mxu0 0
        %6550 = vmatpush1.bf16.xpose.msra.mxu0 0
        %6551 = vmatprep.subr.bf16.mxu0 0
        %6552 = vmatpush1.bf16.xpose.msra.mxu0 0
        %6553 = vmatprep.subr.bf16.mxu0 0
        %6554 = vmatpush1.bf16.xpose.msra.mxu0 0
        %6555 = vmatprep.subr.bf16.mxu0 0
        %6556 = vmatpush1.bf16.xpose.msra.mxu0 0
        %6557 = vmatprep.subr.bf16.mxu0 0
        %6558 = vmatpush1.bf16.xpose.msra.mxu0 0
        %6559 = vmatprep.subr.bf16.mxu0 0
        %6560 = vmatpush1.bf16.xpose.msra.mxu0 0
        %6561 = vmatprep.subr.bf16.mxu0 0
        %6562 = vmatpush1.bf16.xpose.msra.mxu0 0
        %6563 = vmatprep.subr.bf16.mxu0 0
        %6564 = vmatpush1.bf16.xpose.msra.mxu0 0
        %6565 = vmatprep.subr.bf16.mxu0 0
        %6566 = vmatpush1.bf16.xpose.msra.mxu0 0
        %6567 = vmatprep.subr.bf16.mxu0 0
        %6568 = vmatpush1.bf16.xpose.msra.mxu0 0
        %6569 = vmatprep.subr.bf16.mxu0 0
        %6570 = vmatpush1.bf16.xpose.msra.mxu0 0
        %6571 = vmatprep.mubr.bf16.mxu0 0
        %6572 = vmatmul.mubr.bf16.gmra.mrb[0].mxu0 %v6534
        %v6573 = vpop.f32.mrb[0].mxu0
        %v6574 = vadd.f32 0.0, %v6573
        %v6575 = vpop.f32.mrb[0].mxu0
        %v6576 = vpop.f32.mrb[0].mxu0
        %v6577 = vpop.f32.mrb[0].mxu0
        %6578 = vdwg.mxu0
        %v6579 = vsel %vm765, %v6224, -inf
        %6580 = vmax.xlane.f32.xlu0 %v6579
        %v6581 = vpop.xlane.xlu0 %6580
        %v6582 = vsel %vm765, %v6322, -inf
        %6583 = vmax.xlane.f32.xlu0 %v6582
        %v6584 = vpop.xlane.xlu0 %6583
        %v6585 = vsel %vm765, %v6424, -inf
        %6586 = vmax.xlane.f32.xlu0 %v6585
        %v6587 = vpop.xlane.xlu0 %6586
        %v6588 = vsel %vm765, %v6524, -inf
        %6589 = vmax.xlane.f32.xlu0 %v6588
        %v6590 = vpop.xlane.xlu0 %6589
        %v6591 = vsel %vm765, %v6270, -inf
        %6592 = vmax.xlane.f32.xlu0 %v6591
        %v6593 = vpop.xlane.xlu0 %6592
        %v6594 = vsel %vm765, %v6374, -inf
        %6595 = vmax.xlane.f32.xlu0 %v6594
        %v6596 = vpop.xlane.xlu0 %6595
        %v6597 = vsel %vm765, %v6474, -inf
        %6598 = vmax.xlane.f32.xlu0 %v6597
        %v6599 = vpop.xlane.xlu0 %6598
        %v6600 = vsel %vm765, %v6574, -inf
        %6601 = vmax.xlane.f32.xlu0 %v6600
        %v6602 = vpop.xlane.xlu0 %6601
        %v6603 = vsub.f32 %v6224, %v6581
        %v6604 = vsub.f32 %v6322, %v6584
        %v6605 = vsub.f32 %v6424, %v6587
        %v6606 = vsub.f32 %v6524, %v6590
        %v6607 = vsub.f32 %v6270, %v6593
        %v6608 = vsub.f32 %v6374, %v6596
        %v6609 = vsub.f32 %v6474, %v6599
        %v6610 = vsub.f32 %v6574, %v6602
        %v6611 = vmul.f32 %v6603, 1.442695
        %v6612 = vpow.pop %v6611
        %v6613 = vmul.f32 %v6604, 1.442695
        %v6614 = vpow.pop %v6613
        %v6615 = vmul.f32 %v6605, 1.442695
        %v6616 = vpow.pop %v6615
        %v6617 = vmul.f32 %v6606, 1.442695
        %v6618 = vpow.pop %v6617
        %v6619 = vmul.f32 %v6607, 1.442695
        %v6620 = vpow.pop %v6619
        %v6621 = vmul.f32 %v6608, 1.442695
        %v6622 = vpow.pop %v6621
        %v6623 = vmul.f32 %v6609, 1.442695
        %v6624 = vpow.pop %v6623
        %v6625 = vmul.f32 %v6610, 1.442695
        %v6626 = vpow.pop %v6625
        %v6627 = vsel %vm765, %v6612, 0.0
        %6628 = vadd.xlane.f32.xlu0 %v6627
        %v6629 = vpop.xlane.xlu0 %6628
        %v6630 = vsel %vm765, %v6614, 0.0
        %6631 = vadd.xlane.f32.xlu0 %v6630
        %v6632 = vpop.xlane.xlu0 %6631
        %v6633 = vsel %vm765, %v6616, 0.0
        %6634 = vadd.xlane.f32.xlu0 %v6633
        %v6635 = vpop.xlane.xlu0 %6634
        %v6636 = vsel %vm765, %v6618, 0.0
        %6637 = vadd.xlane.f32.xlu0 %v6636
        %v6638 = vpop.xlane.xlu0 %6637
        %v6639 = vsel %vm765, %v6620, 0.0
        %6640 = vadd.xlane.f32.xlu0 %v6639
        %v6641 = vpop.xlane.xlu0 %6640
        %v6642 = vsel %vm765, %v6622, 0.0
        %6643 = vadd.xlane.f32.xlu0 %v6642
        %v6644 = vpop.xlane.xlu0 %6643
        %v6645 = vsel %vm765, %v6624, 0.0
        %6646 = vadd.xlane.f32.xlu0 %v6645
        %v6647 = vpop.xlane.xlu0 %6646
        %v6648 = vsel %vm765, %v6626, 0.0
        %6649 = vadd.xlane.f32.xlu0 %v6648
        %v6650 = vpop.xlane.xlu0 %6649
        %v6651 = vrcp.pop %v6629
        %v6652 = vmul.f32 %v6612, %v6651
        %v6653 = vrcp.pop %v6632
        %v6654 = vmul.f32 %v6614, %v6653
        %v6655 = vrcp.pop %v6635
        %v6656 = vmul.f32 %v6616, %v6655
        %v6657 = vrcp.pop %v6638
        %v6658 = vmul.f32 %v6618, %v6657
        %v6659 = vrcp.pop %v6641
        %v6660 = vmul.f32 %v6620, %v6659
        %v6661 = vrcp.pop %v6644
        %v6662 = vmul.f32 %v6622, %v6661
        %v6663 = vrcp.pop %v6647
        %v6664 = vmul.f32 %v6624, %v6663
        %v6665 = vrcp.pop %v6650
        %v6666 = vmul.f32 %v6626, %v6665
        %v6667 = vpack.c.bf16 %v6654, %v6652
        %v6668 = vpack.c.bf16 %v6658, %v6656
        %v6669 = vpack.c.bf16 %v6662, %v6660
        %v6670 = vpack.c.bf16 %v6666, %v6664
        %v6672 = vsel %vm765, %v6667, 0
        %v6675 = vsel %vm1257, %v6181, 0
        %6677 = vmatprep.subr.bf16.mxu0 0
        %6678 = vmatpush1.bf16.msra.mxu0 %v6675
        %6679 = vmatprep.subr.bf16.mxu0 0
        %6680 = vmatpush1.bf16.msra.mxu0 0
        %6681 = vmatprep.subr.bf16.mxu0 0
        %6682 = vmatpush1.bf16.msra.mxu0 0
        %6683 = vmatprep.subr.bf16.mxu0 0
        %6684 = vmatpush1.bf16.msra.mxu0 0
        %6685 = vmatprep.subr.bf16.mxu0 0
        %6686 = vmatpush1.bf16.msra.mxu0 0
        %6687 = vmatprep.subr.bf16.mxu0 0
        %6688 = vmatpush1.bf16.msra.mxu0 0
        %6689 = vmatprep.subr.bf16.mxu0 0
        %6690 = vmatpush1.bf16.msra.mxu0 0
        %6691 = vmatprep.subr.bf16.mxu0 0
        %6692 = vmatpush1.bf16.msra.mxu0 0
        %6693 = vmatprep.subr.bf16.mxu0 0
        %6694 = vmatpush1.bf16.msra.mxu0 0
        %6695 = vmatprep.subr.bf16.mxu0 0
        %6696 = vmatpush1.bf16.msra.mxu0 0
        %6697 = vmatprep.subr.bf16.mxu0 0
        %6698 = vmatpush1.bf16.msra.mxu0 0
        %6699 = vmatprep.subr.bf16.mxu0 0
        %6700 = vmatpush1.bf16.msra.mxu0 0
        %6701 = vmatprep.subr.bf16.mxu0 0
        %6702 = vmatpush1.bf16.msra.mxu0 0
        %6703 = vmatprep.subr.bf16.mxu0 0
        %6704 = vmatpush1.bf16.msra.mxu0 0
        %6705 = vmatprep.subr.bf16.mxu0 0
        %6706 = vmatpush1.bf16.msra.mxu0 0
        %6707 = vmatprep.subr.bf16.mxu0 0
        %6708 = vmatpush1.bf16.msra.mxu0 0
        %6709 = vmatprep.mubr.bf16.mxu0 0
        %6710 = vmatmul.mubr.bf16.gmra.mrb[0].mxu0 %v6672
        %v6711 = vpop.f32.mrb[0].mxu0
        %v6712 = vadd.f32 0.0, %v6711
        %v6713 = vpop.f32.mrb[0].mxu0
        %v6714 = vpop.f32.mrb[0].mxu0
        %v6715 = vpop.f32.mrb[0].mxu0
        %6716 = vdwg.mxu0
        %v6718 = vsel %vm765, %v6669, 0
        %v6721 = vsel %vm1257, %v6182, 0
        %6723 = vmatprep.subr.bf16.mxu0 0
        %6724 = vmatpush1.bf16.msra.mxu0 %v6721
        %6725 = vmatprep.subr.bf16.mxu0 0
        %6726 = vmatpush1.bf16.msra.mxu0 0
        %6727 = vmatprep.subr.bf16.mxu0 0
        %6728 = vmatpush1.bf16.msra.mxu0 0
        %6729 = vmatprep.subr.bf16.mxu0 0
        %6730 = vmatpush1.bf16.msra.mxu0 0
        %6731 = vmatprep.subr.bf16.mxu0 0
        %6732 = vmatpush1.bf16.msra.mxu0 0
        %6733 = vmatprep.subr.bf16.mxu0 0
        %6734 = vmatpush1.bf16.msra.mxu0 0
        %6735 = vmatprep.subr.bf16.mxu0 0
        %6736 = vmatpush1.bf16.msra.mxu0 0
        %6737 = vmatprep.subr.bf16.mxu0 0
        %6738 = vmatpush1.bf16.msra.mxu0 0
        %6739 = vmatprep.subr.bf16.mxu0 0
        %6740 = vmatpush1.bf16.msra.mxu0 0
        %6741 = vmatprep.subr.bf16.mxu0 0
        %6742 = vmatpush1.bf16.msra.mxu0 0
        %6743 = vmatprep.subr.bf16.mxu0 0
        %6744 = vmatpush1.bf16.msra.mxu0 0
        %6745 = vmatprep.subr.bf16.mxu0 0
        %6746 = vmatpush1.bf16.msra.mxu0 0
        %6747 = vmatprep.subr.bf16.mxu0 0
        %6748 = vmatpush1.bf16.msra.mxu0 0
        %6749 = vmatprep.subr.bf16.mxu0 0
        %6750 = vmatpush1.bf16.msra.mxu0 0
        %6751 = vmatprep.subr.bf16.mxu0 0
        %6752 = vmatpush1.bf16.msra.mxu0 0
        %6753 = vmatprep.subr.bf16.mxu0 0
        %6754 = vmatpush1.bf16.msra.mxu0 0
        %6755 = vmatprep.mubr.bf16.mxu0 0
        %6756 = vmatmul.mubr.bf16.gmra.mrb[0].mxu0 %v6718
        %v6757 = vpop.f32.mrb[0].mxu0
        %v6758 = vadd.f32 0.0, %v6757
        %v6759 = vpop.f32.mrb[0].mxu0
        %v6760 = vpop.f32.mrb[0].mxu0
        %v6761 = vpop.f32.mrb[0].mxu0
        %6762 = vdwg.mxu0
        %v6764 = vrot.slane %v6667, 4
        %6766 = vrot.lane.b32.xlu0 %v6181, 120
        %v6767 = vpop.permute.xlu0 %6766
        %v6769 = vsel %vm765, %v6764, 0
        %v6772 = vsel %vm1257, %v6767, 0
        %6774 = vmatprep.subr.bf16.mxu0 0
        %6775 = vmatpush1.bf16.msra.mxu0 %v6772
        %6776 = vmatprep.subr.bf16.mxu0 0
        %6777 = vmatpush1.bf16.msra.mxu0 0
        %6778 = vmatprep.subr.bf16.mxu0 0
        %6779 = vmatpush1.bf16.msra.mxu0 0
        %6780 = vmatprep.subr.bf16.mxu0 0
        %6781 = vmatpush1.bf16.msra.mxu0 0
        %6782 = vmatprep.subr.bf16.mxu0 0
        %6783 = vmatpush1.bf16.msra.mxu0 0
        %6784 = vmatprep.subr.bf16.mxu0 0
        %6785 = vmatpush1.bf16.msra.mxu0 0
        %6786 = vmatprep.subr.bf16.mxu0 0
        %6787 = vmatpush1.bf16.msra.mxu0 0
        %6788 = vmatprep.subr.bf16.mxu0 0
        %6789 = vmatpush1.bf16.msra.mxu0 0
        %6790 = vmatprep.subr.bf16.mxu0 0
        %6791 = vmatpush1.bf16.msra.mxu0 0
        %6792 = vmatprep.subr.bf16.mxu0 0
        %6793 = vmatpush1.bf16.msra.mxu0 0
        %6794 = vmatprep.subr.bf16.mxu0 0
        %6795 = vmatpush1.bf16.msra.mxu0 0
        %6796 = vmatprep.subr.bf16.mxu0 0
        %6797 = vmatpush1.bf16.msra.mxu0 0
        %6798 = vmatprep.subr.bf16.mxu0 0
        %6799 = vmatpush1.bf16.msra.mxu0 0
        %6800 = vmatprep.subr.bf16.mxu0 0
        %6801 = vmatpush1.bf16.msra.mxu0 0
        %6802 = vmatprep.subr.bf16.mxu0 0
        %6803 = vmatpush1.bf16.msra.mxu0 0
        %6804 = vmatprep.subr.bf16.mxu0 0
        %6805 = vmatpush1.bf16.msra.mxu0 0
        %6806 = vmatprep.mubr.bf16.mxu0 0
        %6807 = vmatmul.mubr.bf16.gmra.mrb[0].mxu0 %v6769
        %v6808 = vpop.f32.mrb[0].mxu0
        %v6809 = vadd.f32 0.0, %v6808
        %v6810 = vpop.f32.mrb[0].mxu0
        %v6811 = vpop.f32.mrb[0].mxu0
        %v6812 = vpop.f32.mrb[0].mxu0
        %6813 = vdwg.mxu0
        %v6815 = vrot.slane %v6669, 4
        %6817 = vrot.lane.b32.xlu0 %v6182, 120
        %v6818 = vpop.permute.xlu0 %6817
        %v6820 = vsel %vm765, %v6815, 0
        %v6823 = vsel %vm1257, %v6818, 0
        %6825 = vmatprep.subr.bf16.mxu0 0
        %6826 = vmatpush1.bf16.msra.mxu0 %v6823
        %6827 = vmatprep.subr.bf16.mxu0 0
        %6828 = vmatpush1.bf16.msra.mxu0 0
        %6829 = vmatprep.subr.bf16.mxu0 0
        %6830 = vmatpush1.bf16.msra.mxu0 0
        %6831 = vmatprep.subr.bf16.mxu0 0
        %6832 = vmatpush1.bf16.msra.mxu0 0
        %6833 = vmatprep.subr.bf16.mxu0 0
        %6834 = vmatpush1.bf16.msra.mxu0 0
        %6835 = vmatprep.subr.bf16.mxu0 0
        %6836 = vmatpush1.bf16.msra.mxu0 0
        %6837 = vmatprep.subr.bf16.mxu0 0
        %6838 = vmatpush1.bf16.msra.mxu0 0
        %6839 = vmatprep.subr.bf16.mxu0 0
        %6840 = vmatpush1.bf16.msra.mxu0 0
        %6841 = vmatprep.subr.bf16.mxu0 0
        %6842 = vmatpush1.bf16.msra.mxu0 0
        %6843 = vmatprep.subr.bf16.mxu0 0
        %6844 = vmatpush1.bf16.msra.mxu0 0
        %6845 = vmatprep.subr.bf16.mxu0 0
        %6846 = vmatpush1.bf16.msra.mxu0 0
        %6847 = vmatprep.subr.bf16.mxu0 0
        %6848 = vmatpush1.bf16.msra.mxu0 0
        %6849 = vmatprep.subr.bf16.mxu0 0
        %6850 = vmatpush1.bf16.msra.mxu0 0
        %6851 = vmatprep.subr.bf16.mxu0 0
        %6852 = vmatpush1.bf16.msra.mxu0 0
        %6853 = vmatprep.subr.bf16.mxu0 0
        %6854 = vmatpush1.bf16.msra.mxu0 0
        %6855 = vmatprep.subr.bf16.mxu0 0
        %6856 = vmatpush1.bf16.msra.mxu0 0
        %6857 = vmatprep.mubr.bf16.mxu0 0
        %6858 = vmatmul.mubr.bf16.gmra.mrb[0].mxu0 %v6820
        %v6859 = vpop.f32.mrb[0].mxu0
        %v6860 = vadd.f32 0.0, %v6859
        %v6861 = vpop.f32.mrb[0].mxu0
        %v6862 = vpop.f32.mrb[0].mxu0
        %v6863 = vpop.f32.mrb[0].mxu0
        %6864 = vdwg.mxu0
        %6865 = vrot.lane.b32.xlu0 %v6181, 112
        %v6866 = vpop.permute.xlu0 %6865
        %v6868 = vsel %vm765, %v6668, 0
        %v6871 = vsel %vm1257, %v6866, 0
        %6873 = vmatprep.subr.bf16.mxu0 0
        %6874 = vmatpush1.bf16.msra.mxu0 %v6871
        %6875 = vmatprep.subr.bf16.mxu0 0
        %6876 = vmatpush1.bf16.msra.mxu0 0
        %6877 = vmatprep.subr.bf16.mxu0 0
        %6878 = vmatpush1.bf16.msra.mxu0 0
        %6879 = vmatprep.subr.bf16.mxu0 0
        %6880 = vmatpush1.bf16.msra.mxu0 0
        %6881 = vmatprep.subr.bf16.mxu0 0
        %6882 = vmatpush1.bf16.msra.mxu0 0
        %6883 = vmatprep.subr.bf16.mxu0 0
        %6884 = vmatpush1.bf16.msra.mxu0 0
        %6885 = vmatprep.subr.bf16.mxu0 0
        %6886 = vmatpush1.bf16.msra.mxu0 0
        %6887 = vmatprep.subr.bf16.mxu0 0
        %6888 = vmatpush1.bf16.msra.mxu0 0
        %6889 = vmatprep.subr.bf16.mxu0 0
        %6890 = vmatpush1.bf16.msra.mxu0 0
        %6891 = vmatprep.subr.bf16.mxu0 0
        %6892 = vmatpush1.bf16.msra.mxu0 0
        %6893 = vmatprep.subr.bf16.mxu0 0
        %6894 = vmatpush1.bf16.msra.mxu0 0
        %6895 = vmatprep.subr.bf16.mxu0 0
        %6896 = vmatpush1.bf16.msra.mxu0 0
        %6897 = vmatprep.subr.bf16.mxu0 0
        %6898 = vmatpush1.bf16.msra.mxu0 0
        %6899 = vmatprep.subr.bf16.mxu0 0
        %6900 = vmatpush1.bf16.msra.mxu0 0
        %6901 = vmatprep.subr.bf16.mxu0 0
        %6902 = vmatpush1.bf16.msra.mxu0 0
        %6903 = vmatprep.subr.bf16.mxu0 0
        %6904 = vmatpush1.bf16.msra.mxu0 0
        %6905 = vmatprep.mubr.bf16.mxu0 0
        %6906 = vmatmul.mubr.bf16.gmra.mrb[0].mxu0 %v6868
        %v6907 = vpop.f32.mrb[0].mxu0
        %v6908 = vadd.f32 0.0, %v6907
        %v6909 = vpop.f32.mrb[0].mxu0
        %v6910 = vpop.f32.mrb[0].mxu0
        %v6911 = vpop.f32.mrb[0].mxu0
        %6912 = vdwg.mxu0
        %6913 = vrot.lane.b32.xlu0 %v6182, 112
        %v6914 = vpop.permute.xlu0 %6913
        %v6916 = vsel %vm765, %v6670, 0
        %v6919 = vsel %vm1257, %v6914, 0
        %6921 = vmatprep.subr.bf16.mxu0 0
        %6922 = vmatpush1.bf16.msra.mxu0 %v6919
        %6923 = vmatprep.subr.bf16.mxu0 0
        %6924 = vmatpush1.bf16.msra.mxu0 0
        %6925 = vmatprep.subr.bf16.mxu0 0
        %6926 = vmatpush1.bf16.msra.mxu0 0
        %6927 = vmatprep.subr.bf16.mxu0 0
        %6928 = vmatpush1.bf16.msra.mxu0 0
        %6929 = vmatprep.subr.bf16.mxu0 0
        %6930 = vmatpush1.bf16.msra.mxu0 0
        %6931 = vmatprep.subr.bf16.mxu0 0
        %6932 = vmatpush1.bf16.msra.mxu0 0
        %6933 = vmatprep.subr.bf16.mxu0 0
        %6934 = vmatpush1.bf16.msra.mxu0 0
        %6935 = vmatprep.subr.bf16.mxu0 0
        %6936 = vmatpush1.bf16.msra.mxu0 0
        %6937 = vmatprep.subr.bf16.mxu0 0
        %6938 = vmatpush1.bf16.msra.mxu0 0
        %6939 = vmatprep.subr.bf16.mxu0 0
        %6940 = vmatpush1.bf16.msra.mxu0 0
        %6941 = vmatprep.subr.bf16.mxu0 0
        %6942 = vmatpush1.bf16.msra.mxu0 0
        %6943 = vmatprep.subr.bf16.mxu0 0
        %6944 = vmatpush1.bf16.msra.mxu0 0
        %6945 = vmatprep.subr.bf16.mxu0 0
        %6946 = vmatpush1.bf16.msra.mxu0 0
        %6947 = vmatprep.subr.bf16.mxu0 0
        %6948 = vmatpush1.bf16.msra.mxu0 0
        %6949 = vmatprep.subr.bf16.mxu0 0
        %6950 = vmatpush1.bf16.msra.mxu0 0
        %6951 = vmatprep.subr.bf16.mxu0 0
        %6952 = vmatpush1.bf16.msra.mxu0 0
        %6953 = vmatprep.mubr.bf16.mxu0 0
        %6954 = vmatmul.mubr.bf16.gmra.mrb[0].mxu0 %v6916
        %v6955 = vpop.f32.mrb[0].mxu0
        %v6956 = vadd.f32 0.0, %v6955
        %v6957 = vpop.f32.mrb[0].mxu0
        %v6958 = vpop.f32.mrb[0].mxu0
        %v6959 = vpop.f32.mrb[0].mxu0
        %6960 = vdwg.mxu0
        %v6962 = vrot.slane %v6668, 4
        %6963 = vrot.lane.b32.xlu0 %v6181, 104
        %v6964 = vpop.permute.xlu0 %6963
        %v6966 = vsel %vm765, %v6962, 0
        %v6969 = vsel %vm1257, %v6964, 0
        %6971 = vmatprep.subr.bf16.mxu0 0
        %6972 = vmatpush1.bf16.msra.mxu0 %v6969
        %6973 = vmatprep.subr.bf16.mxu0 0
        %6974 = vmatpush1.bf16.msra.mxu0 0
        %6975 = vmatprep.subr.bf16.mxu0 0
        %6976 = vmatpush1.bf16.msra.mxu0 0
        %6977 = vmatprep.subr.bf16.mxu0 0
        %6978 = vmatpush1.bf16.msra.mxu0 0
        %6979 = vmatprep.subr.bf16.mxu0 0
        %6980 = vmatpush1.bf16.msra.mxu0 0
        %6981 = vmatprep.subr.bf16.mxu0 0
        %6982 = vmatpush1.bf16.msra.mxu0 0
        %6983 = vmatprep.subr.bf16.mxu0 0
        %6984 = vmatpush1.bf16.msra.mxu0 0
        %6985 = vmatprep.subr.bf16.mxu0 0
        %6986 = vmatpush1.bf16.msra.mxu0 0
        %6987 = vmatprep.subr.bf16.mxu0 0
        %6988 = vmatpush1.bf16.msra.mxu0 0
        %6989 = vmatprep.subr.bf16.mxu0 0
        %6990 = vmatpush1.bf16.msra.mxu0 0
        %6991 = vmatprep.subr.bf16.mxu0 0
        %6992 = vmatpush1.bf16.msra.mxu0 0
        %6993 = vmatprep.subr.bf16.mxu0 0
        %6994 = vmatpush1.bf16.msra.mxu0 0
        %6995 = vmatprep.subr.bf16.mxu0 0
        %6996 = vmatpush1.bf16.msra.mxu0 0
        %6997 = vmatprep.subr.bf16.mxu0 0
        %6998 = vmatpush1.bf16.msra.mxu0 0
        %6999 = vmatprep.subr.bf16.mxu0 0
        %7000 = vmatpush1.bf16.msra.mxu0 0
        %7001 = vmatprep.subr.bf16.mxu0 0
        %7002 = vmatpush1.bf16.msra.mxu0 0
        %7003 = vmatprep.mubr.bf16.mxu0 0
        %7004 = vmatmul.mubr.bf16.gmra.mrb[0].mxu0 %v6966
        %v7005 = vpop.f32.mrb[0].mxu0
        %v7006 = vadd.f32 0.0, %v7005
        %v7007 = vpop.f32.mrb[0].mxu0
        %v7008 = vpop.f32.mrb[0].mxu0
        %v7009 = vpop.f32.mrb[0].mxu0
        %7010 = vdwg.mxu0
        %v7012 = vrot.slane %v6670, 4
        %7013 = vrot.lane.b32.xlu0 %v6182, 104
        %v7014 = vpop.permute.xlu0 %7013
        %v7016 = vsel %vm765, %v7012, 0
        %v7019 = vsel %vm1257, %v7014, 0
        %7021 = vmatprep.subr.bf16.mxu0 0
        %7022 = vmatpush1.bf16.msra.mxu0 %v7019
        %7023 = vmatprep.subr.bf16.mxu0 0
        %7024 = vmatpush1.bf16.msra.mxu0 0
        %7025 = vmatprep.subr.bf16.mxu0 0
        %7026 = vmatpush1.bf16.msra.mxu0 0
        %7027 = vmatprep.subr.bf16.mxu0 0
        %7028 = vmatpush1.bf16.msra.mxu0 0
        %7029 = vmatprep.subr.bf16.mxu0 0
        %7030 = vmatpush1.bf16.msra.mxu0 0
        %7031 = vmatprep.subr.bf16.mxu0 0
        %7032 = vmatpush1.bf16.msra.mxu0 0
        %7033 = vmatprep.subr.bf16.mxu0 0
        %7034 = vmatpush1.bf16.msra.mxu0 0
        %7035 = vmatprep.subr.bf16.mxu0 0
        %7036 = vmatpush1.bf16.msra.mxu0 0
        %7037 = vmatprep.subr.bf16.mxu0 0
        %7038 = vmatpush1.bf16.msra.mxu0 0
        %7039 = vmatprep.subr.bf16.mxu0 0
        %7040 = vmatpush1.bf16.msra.mxu0 0
        %7041 = vmatprep.subr.bf16.mxu0 0
        %7042 = vmatpush1.bf16.msra.mxu0 0
        %7043 = vmatprep.subr.bf16.mxu0 0
        %7044 = vmatpush1.bf16.msra.mxu0 0
        %7045 = vmatprep.subr.bf16.mxu0 0
        %7046 = vmatpush1.bf16.msra.mxu0 0
        %7047 = vmatprep.subr.bf16.mxu0 0
        %7048 = vmatpush1.bf16.msra.mxu0 0
        %7049 = vmatprep.subr.bf16.mxu0 0
        %7050 = vmatpush1.bf16.msra.mxu0 0
        %7051 = vmatprep.subr.bf16.mxu0 0
        %7052 = vmatpush1.bf16.msra.mxu0 0
        %7053 = vmatprep.mubr.bf16.mxu0 0
        %7054 = vmatmul.mubr.bf16.gmra.mrb[0].mxu0 %v7016
        %v7055 = vpop.f32.mrb[0].mxu0
        %v7056 = vadd.f32 0.0, %v7055
        %v7057 = vpop.f32.mrb[0].mxu0
        %v7058 = vpop.f32.mrb[0].mxu0
        %v7059 = vpop.f32.mrb[0].mxu0
        %7060 = vdwg.mxu0
        %7063 = vrot.lane.b32.xlu0 %v6809, 8
        %v7064 = vpop.permute.xlu0 %7063
        %7065 = vrot.lane.b32.xlu0 %v6860, 8
        %v7066 = vpop.permute.xlu0 %7065
        %7071 = vrot.lane.b32.xlu0 %v6908, 16
        %v7072 = vpop.permute.xlu0 %7071
        %7073 = vrot.lane.b32.xlu0 %v6956, 16
        %v7074 = vpop.permute.xlu0 %7073
        %7079 = vrot.lane.b32.xlu0 %v7006, 24
        %v7080 = vpop.permute.xlu0 %7079
        %7081 = vrot.lane.b32.xlu0 %v7056, 24
        %v7082 = vpop.permute.xlu0 %7081
        %v7085 = vsel %vm765, %v6712, %v7064
        %v7086 = vsel %vm765, %v6758, %v7066
        %v7087 = vsel %vm1671, %v7085, %v7072
        %v7088 = vsel %vm1671, %v7086, %v7074
        %v7089 = vsel %vm1674, %v7087, %v7080
        %v7090 = vsel %vm1674, %v7088, %v7082
        %v7091 = vpack.c.bf16 %v7090, %v7089
        %v7092 = vlaneseq
        %v7093 = vshrl.u32 %v7092, 7
        %v7094 = vsub.s32 3, %v7093
        %v7095 = vrot.slane %v556, %v7094
        %v7100 = vunpack.c.l.b16 %v6171
        %v7101 = vunpack.c.l.b16 %v6172
        %v7102 = vunpack.c.l.b16 %v6173
        %v7103 = vunpack.c.l.b16 %v6174
        %v7104 = vpack.c.b16 %v7101, %v7100
        %v7105 = vpack.c.b16 %v7103, %v7102
        %v7109 = vsel %vm583, %v7091, 0
        %7111 = vmatprep.subr.bf16.mxu0 0
        %7112 = vmatpush1.bf16.msra.mxu0 %v7104
        %7113 = vmatprep.subr.bf16.mxu0 0
        %7114 = vmatpush1.bf16.msra.mxu0 %v7105
        %7115 = vmatprep.subr.bf16.mxu0 0
        %7116 = vmatpush1.bf16.msra.mxu0 0
        %7117 = vmatprep.subr.bf16.mxu0 0
        %7118 = vmatpush1.bf16.msra.mxu0 0
        %7119 = vmatprep.subr.bf16.mxu0 0
        %7120 = vmatpush1.bf16.msra.mxu0 0
        %7121 = vmatprep.subr.bf16.mxu0 0
        %7122 = vmatpush1.bf16.msra.mxu0 0
        %7123 = vmatprep.subr.bf16.mxu0 0
        %7124 = vmatpush1.bf16.msra.mxu0 0
        %7125 = vmatprep.subr.bf16.mxu0 0
        %7126 = vmatpush1.bf16.msra.mxu0 0
        %7127 = vmatprep.subr.bf16.mxu0 0
        %7128 = vmatpush1.bf16.msra.mxu0 0
        %7129 = vmatprep.subr.bf16.mxu0 0
        %7130 = vmatpush1.bf16.msra.mxu0 0
        %7131 = vmatprep.subr.bf16.mxu0 0
        %7132 = vmatpush1.bf16.msra.mxu0 0
        %7133 = vmatprep.subr.bf16.mxu0 0
        %7134 = vmatpush1.bf16.msra.mxu0 0
        %7135 = vmatprep.subr.bf16.mxu0 0
        %7136 = vmatpush1.bf16.msra.mxu0 0
        %7137 = vmatprep.subr.bf16.mxu0 0
        %7138 = vmatpush1.bf16.msra.mxu0 0
        %7139 = vmatprep.subr.bf16.mxu0 0
        %7140 = vmatpush1.bf16.msra.mxu0 0
        %7141 = vmatprep.subr.bf16.mxu0 0
        %7142 = vmatpush1.bf16.msra.mxu0 0
        %7143 = vmatprep.mubr.bf16.mxu0 0
        %7144 = vmatmul.mubr.bf16.gmra.mrb[0].mxu0 %v7109
        %v7145 = vpop.f32.mrb[0].mxu0
        %v7146 = vadd.f32 %v7095, %v7145
        %v7147 = vpop.f32.mrb[0].mxu0
        %v7148 = vpop.f32.mrb[0].mxu0
        %v7149 = vadd.f32 %v7095, %v7148
        %v7150 = vpop.f32.mrb[0].mxu0
        %7151 = vdwg.mxu0
        %v7152 = vadd.f32 %v5978, %v7146
        %v7153 = vadd.f32 %v5979, %v7149
        %v7154 = vsel %vm583, %v7152, 0.0
        %7155 = vadd.xlane.f32.xlu0 %v7154
        %v7156 = vpop.xlane.xlu0 %7155
        %v7157 = vsel %vm583, %v7153, 0.0
        %7158 = vadd.xlane.f32.xlu0 %v7157
        %v7159 = vpop.xlane.xlu0 %7158
        %v7160 = vmul.f32 %v7156, %v1746
        %v7161 = vmul.f32 %v7159, %v1746
        %v7162 = vsub.f32 %v7152, %v7160
        %v7163 = vsub.f32 %v7153, %v7161
        %v7164 = vmul.f32 %v7162, %v7162
        %v7165 = vmul.f32 %v7163, %v7163
        %v7166 = vsel %vm583, %v7164, 0.0
        %7167 = vadd.xlane.f32.xlu0 %v7166
        %v7168 = vpop.xlane.xlu0 %7167
        %v7169 = vsel %vm583, %v7165, 0.0
        %7170 = vadd.xlane.f32.xlu0 %v7169
        %v7171 = vpop.xlane.xlu0 %7170
        %v7172 = vmul.f32 %v7168, %v1746
        %v7173 = vmul.f32 %v7171, %v1746
        %v7174 = vadd.f32 %v7172, 1e-05
        %v7175 = vadd.f32 %v7173, 1e-05
        %v7176 = vrsqrt.pop %v7174
        %v7177 = vrsqrt.pop %v7175
        %v7178 = vmul.f32 %v7162, %v7176
        %v7179 = vmul.f32 %v7163, %v7177
        %v7180 = vlaneseq
        %v7181 = vshrl.u32 %v7180, 7
        %v7182 = vsub.s32 2, %v7181
        %v7183 = vrot.slane %v557, %v7182
        %v7184 = vmul.f32 %v7178, %v7183
        %v7185 = vmul.f32 %v7179, %v7183
        %v7186 = vlaneseq
        %v7187 = vshrl.u32 %v7186, 7
        %v7188 = vsub.s32 3, %v7187
        %v7189 = vrot.slane %v557, %v7188
        %v7190 = vadd.f32 %v7184, %v7189
        %v7191 = vadd.f32 %v7185, %v7189
        %s7192 = scalar_lea.vmem %s541, 224
        %v7193 = vld [vmem:[%s7192] sm:$0xf]
        %v7194 = vld [vmem:[%s7192 + $0x4] sm:$0xf]
        %v7195 = vld [vmem:[%s7192 + $0x8] sm:$0xf]
        %v7196 = vld [vmem:[%s7192 + $0xc] sm:$0xf]
        %v7197 = vpack.c.bf16 %v7191, %v7190
        %v7198 = vlaneseq
        %v7199 = vshrl.u32 %v7198, 7
        %v7200 = vsub.s32 4, %v7199
        %v7201 = vrot.slane %v556, %v7200
        %v7206 = vunpack.c.l.b16 %v7193
        %v7207 = vunpack.c.l.b16 %v7194
        %v7208 = vunpack.c.l.b16 %v7195
        %v7209 = vunpack.c.l.b16 %v7196
        %v7210 = vpack.c.b16 %v7207, %v7206
        %v7211 = vpack.c.b16 %v7209, %v7208
        %v7215 = vsel %vm583, %v7197, 0
        %7217 = vmatprep.subr.bf16.mxu0 0
        %7218 = vmatpush1.bf16.msra.mxu0 %v7210
        %7219 = vmatprep.subr.bf16.mxu0 0
        %7220 = vmatpush1.bf16.msra.mxu0 %v7211
        %7221 = vmatprep.subr.bf16.mxu0 0
        %7222 = vmatpush1.bf16.msra.mxu0 0
        %7223 = vmatprep.subr.bf16.mxu0 0
        %7224 = vmatpush1.bf16.msra.mxu0 0
        %7225 = vmatprep.subr.bf16.mxu0 0
        %7226 = vmatpush1.bf16.msra.mxu0 0
        %7227 = vmatprep.subr.bf16.mxu0 0
        %7228 = vmatpush1.bf16.msra.mxu0 0
        %7229 = vmatprep.subr.bf16.mxu0 0
        %7230 = vmatpush1.bf16.msra.mxu0 0
        %7231 = vmatprep.subr.bf16.mxu0 0
        %7232 = vmatpush1.bf16.msra.mxu0 0
        %7233 = vmatprep.subr.bf16.mxu0 0
        %7234 = vmatpush1.bf16.msra.mxu0 0
        %7235 = vmatprep.subr.bf16.mxu0 0
        %7236 = vmatpush1.bf16.msra.mxu0 0
        %7237 = vmatprep.subr.bf16.mxu0 0
        %7238 = vmatpush1.bf16.msra.mxu0 0
        %7239 = vmatprep.subr.bf16.mxu0 0
        %7240 = vmatpush1.bf16.msra.mxu0 0
        %7241 = vmatprep.subr.bf16.mxu0 0
        %7242 = vmatpush1.bf16.msra.mxu0 0
        %7243 = vmatprep.subr.bf16.mxu0 0
        %7244 = vmatpush1.bf16.msra.mxu0 0
        %7245 = vmatprep.subr.bf16.mxu0 0
        %7246 = vmatpush1.bf16.msra.mxu0 0
        %7247 = vmatprep.subr.bf16.mxu0 0
        %7248 = vmatpush1.bf16.msra.mxu0 0
        %7249 = vmatprep.mubr.bf16.mxu0 0
        %7250 = vmatmul.mubr.bf16.gmra.mrb[0].mxu0 %v7215
        %v7251 = vpop.f32.mrb[0].mxu0
        %v7252 = vadd.f32 %v7201, %v7251
        %v7253 = vpop.f32.mrb[0].mxu0
        %v7254 = vpop.f32.mrb[0].mxu0
        %v7255 = vadd.f32 %v7201, %v7254
        %v7256 = vpop.f32.mrb[0].mxu0
        %7257 = vdwg.mxu0
        %s7258 = scalar_lea.vmem %s541, 240
        %v7259 = vld [vmem:[%s7258] sm:$0xf]
        %v7260 = vld [vmem:[%s7258 + $0x4] sm:$0xf]
        %v7261 = vld [vmem:[%s7258 + $0x8] sm:$0xf]
        %v7262 = vld [vmem:[%s7258 + $0xc] sm:$0xf]
        %v7263 = vlaneseq
        %v7264 = vshrl.u32 %v7263, 7
        %v7265 = vsub.s32 5, %v7264
        %v7266 = vrot.slane %v556, %v7265
        %v7271 = vunpack.c.l.b16 %v7259
        %v7272 = vunpack.c.l.b16 %v7260
        %v7273 = vunpack.c.l.b16 %v7261
        %v7274 = vunpack.c.l.b16 %v7262
        %v7275 = vpack.c.b16 %v7272, %v7271
        %v7276 = vpack.c.b16 %v7274, %v7273
        %7279 = vmatprep.subr.bf16.mxu0 0
        %7280 = vmatpush1.bf16.msra.mxu0 %v7275
        %7281 = vmatprep.subr.bf16.mxu0 0
        %7282 = vmatpush1.bf16.msra.mxu0 %v7276
        %7283 = vmatprep.subr.bf16.mxu0 0
        %7284 = vmatpush1.bf16.msra.mxu0 0
        %7285 = vmatprep.subr.bf16.mxu0 0
        %7286 = vmatpush1.bf16.msra.mxu0 0
        %7287 = vmatprep.subr.bf16.mxu0 0
        %7288 = vmatpush1.bf16.msra.mxu0 0
        %7289 = vmatprep.subr.bf16.mxu0 0
        %7290 = vmatpush1.bf16.msra.mxu0 0
        %7291 = vmatprep.subr.bf16.mxu0 0
        %7292 = vmatpush1.bf16.msra.mxu0 0
        %7293 = vmatprep.subr.bf16.mxu0 0
        %7294 = vmatpush1.bf16.msra.mxu0 0
        %7295 = vmatprep.subr.bf16.mxu0 0
        %7296 = vmatpush1.bf16.msra.mxu0 0
        %7297 = vmatprep.subr.bf16.mxu0 0
        %7298 = vmatpush1.bf16.msra.mxu0 0
        %7299 = vmatprep.subr.bf16.mxu0 0
        %7300 = vmatpush1.bf16.msra.mxu0 0
        %7301 = vmatprep.subr.bf16.mxu0 0
        %7302 = vmatpush1.bf16.msra.mxu0 0
        %7303 = vmatprep.subr.bf16.mxu0 0
        %7304 = vmatpush1.bf16.msra.mxu0 0
        %7305 = vmatprep.subr.bf16.mxu0 0
        %7306 = vmatpush1.bf16.msra.mxu0 0
        %7307 = vmatprep.subr.bf16.mxu0 0
        %7308 = vmatpush1.bf16.msra.mxu0 0
        %7309 = vmatprep.subr.bf16.mxu0 0
        %7310 = vmatpush1.bf16.msra.mxu0 0
        %7311 = vmatprep.mubr.bf16.mxu0 0
        %7312 = vmatmul.mubr.bf16.gmra.mrb[0].mxu0 %v4679
        %v7313 = vpop.f32.mrb[0].mxu0
        %v7314 = vadd.f32 %v7266, %v7313
        %v7315 = vpop.f32.mrb[0].mxu0
        %v7316 = vpop.f32.mrb[0].mxu0
        %v7317 = vadd.f32 %v7266, %v7316
        %v7318 = vpop.f32.mrb[0].mxu0
        %7319 = vdwg.mxu0
        %s7320 = scalar_lea.vmem %s541, 256
        %v7321 = vld [vmem:[%s7320] sm:$0xf]
        %v7322 = vld [vmem:[%s7320 + $0x4] sm:$0xf]
        %v7323 = vld [vmem:[%s7320 + $0x8] sm:$0xf]
        %v7324 = vld [vmem:[%s7320 + $0xc] sm:$0xf]
        %v7325 = vlaneseq
        %v7326 = vshrl.u32 %v7325, 7
        %v7327 = vsub.s32 6, %v7326
        %v7328 = vrot.slane %v556, %v7327
        %v7333 = vunpack.c.l.b16 %v7321
        %v7334 = vunpack.c.l.b16 %v7322
        %v7335 = vunpack.c.l.b16 %v7323
        %v7336 = vunpack.c.l.b16 %v7324
        %v7337 = vpack.c.b16 %v7334, %v7333
        %v7338 = vpack.c.b16 %v7336, %v7335
        %7341 = vmatprep.subr.bf16.mxu0 0
        %7342 = vmatpush1.bf16.msra.mxu0 %v7337
        %7343 = vmatprep.subr.bf16.mxu0 0
        %7344 = vmatpush1.bf16.msra.mxu0 %v7338
        %7345 = vmatprep.subr.bf16.mxu0 0
        %7346 = vmatpush1.bf16.msra.mxu0 0
        %7347 = vmatprep.subr.bf16.mxu0 0
        %7348 = vmatpush1.bf16.msra.mxu0 0
        %7349 = vmatprep.subr.bf16.mxu0 0
        %7350 = vmatpush1.bf16.msra.mxu0 0
        %7351 = vmatprep.subr.bf16.mxu0 0
        %7352 = vmatpush1.bf16.msra.mxu0 0
        %7353 = vmatprep.subr.bf16.mxu0 0
        %7354 = vmatpush1.bf16.msra.mxu0 0
        %7355 = vmatprep.subr.bf16.mxu0 0
        %7356 = vmatpush1.bf16.msra.mxu0 0
        %7357 = vmatprep.subr.bf16.mxu0 0
        %7358 = vmatpush1.bf16.msra.mxu0 0
        %7359 = vmatprep.subr.bf16.mxu0 0
        %7360 = vmatpush1.bf16.msra.mxu0 0
        %7361 = vmatprep.subr.bf16.mxu0 0
        %7362 = vmatpush1.bf16.msra.mxu0 0
        %7363 = vmatprep.subr.bf16.mxu0 0
        %7364 = vmatpush1.bf16.msra.mxu0 0
        %7365 = vmatprep.subr.bf16.mxu0 0
        %7366 = vmatpush1.bf16.msra.mxu0 0
        %7367 = vmatprep.subr.bf16.mxu0 0
        %7368 = vmatpush1.bf16.msra.mxu0 0
        %7369 = vmatprep.subr.bf16.mxu0 0
        %7370 = vmatpush1.bf16.msra.mxu0 0
        %7371 = vmatprep.subr.bf16.mxu0 0
        %7372 = vmatpush1.bf16.msra.mxu0 0
        %7373 = vmatprep.mubr.bf16.mxu0 0
        %7374 = vmatmul.mubr.bf16.gmra.mrb[0].mxu0 %v4679
        %v7375 = vpop.f32.mrb[0].mxu0
        %v7376 = vadd.f32 %v7328, %v7375
        %v7377 = vpop.f32.mrb[0].mxu0
        %v7378 = vpop.f32.mrb[0].mxu0
        %v7379 = vadd.f32 %v7328, %v7378
        %v7380 = vpop.f32.mrb[0].mxu0
        %7381 = vdwg.mxu0
        %s7382 = scalar_lea.vmem %s541, 272
        %v7383 = vld [vmem:[%s7382] sm:$0xf]
        %v7384 = vld [vmem:[%s7382 + $0x4] sm:$0xf]
        %v7385 = vld [vmem:[%s7382 + $0x8] sm:$0xf]
        %v7386 = vld [vmem:[%s7382 + $0xc] sm:$0xf]
        %v7387 = vmul.f32 %v7252, 0.35355338
        %v7388 = vmul.f32 %v7255, 0.35355338
        %v7389 = vpack.c.bf16 %v7387, %v7387
        %v7390 = vpack.c.bf16 %v7388, %v7388
        %v7391 = vpack.c.bf16 %v7314, %v7314
        %v7392 = vpack.c.bf16 %v7317, %v7317
        %v7393 = vpack.c.bf16 %v7376, %v7376
        %v7394 = vpack.c.bf16 %v7379, %v7379
        %v7396 = vsel %vm765, %v7389, 0
        %v7399 = vsel %vm765, %v7391, 0
        %7401 = vmatprep.subr.bf16.mxu0 0
        %7402 = vmatpush1.bf16.xpose.msra.mxu0 %v7399
        %7403 = vmatprep.subr.bf16.mxu0 0
        %7404 = vmatpush1.bf16.xpose.msra.mxu0 0
        %7405 = vmatprep.subr.bf16.mxu0 0
        %7406 = vmatpush1.bf16.xpose.msra.mxu0 0
        %7407 = vmatprep.subr.bf16.mxu0 0
        %7408 = vmatpush1.bf16.xpose.msra.mxu0 0
        %7409 = vmatprep.subr.bf16.mxu0 0
        %7410 = vmatpush1.bf16.xpose.msra.mxu0 0
        %7411 = vmatprep.subr.bf16.mxu0 0
        %7412 = vmatpush1.bf16.xpose.msra.mxu0 0
        %7413 = vmatprep.subr.bf16.mxu0 0
        %7414 = vmatpush1.bf16.xpose.msra.mxu0 0
        %7415 = vmatprep.subr.bf16.mxu0 0
        %7416 = vmatpush1.bf16.xpose.msra.mxu0 0
        %7417 = vmatprep.subr.bf16.mxu0 0
        %7418 = vmatpush1.bf16.xpose.msra.mxu0 0
        %7419 = vmatprep.subr.bf16.mxu0 0
        %7420 = vmatpush1.bf16.xpose.msra.mxu0 0
        %7421 = vmatprep.subr.bf16.mxu0 0
        %7422 = vmatpush1.bf16.xpose.msra.mxu0 0
        %7423 = vmatprep.subr.bf16.mxu0 0
        %7424 = vmatpush1.bf16.xpose.msra.mxu0 0
        %7425 = vmatprep.subr.bf16.mxu0 0
        %7426 = vmatpush1.bf16.xpose.msra.mxu0 0
        %7427 = vmatprep.subr.bf16.mxu0 0
        %7428 = vmatpush1.bf16.xpose.msra.mxu0 0
        %7429 = vmatprep.subr.bf16.mxu0 0
        %7430 = vmatpush1.bf16.xpose.msra.mxu0 0
        %7431 = vmatprep.subr.bf16.mxu0 0
        %7432 = vmatpush1.bf16.xpose.msra.mxu0 0
        %7433 = vmatprep.mubr.bf16.mxu0 0
        %7434 = vmatmul.mubr.bf16.gmra.mrb[0].mxu0 %v7396
        %v7435 = vpop.f32.mrb[0].mxu0
        %v7436 = vadd.f32 0.0, %v7435
        %v7437 = vpop.f32.mrb[0].mxu0
        %v7438 = vpop.f32.mrb[0].mxu0
        %v7439 = vpop.f32.mrb[0].mxu0
        %7440 = vdwg.mxu0
        %v7442 = vsel %vm765, %v7390, 0
        %v7445 = vsel %vm765, %v7392, 0
        %7447 = vmatprep.subr.bf16.mxu0 0
        %7448 = vmatpush1.bf16.xpose.msra.mxu0 %v7445
        %7449 = vmatprep.subr.bf16.mxu0 0
        %7450 = vmatpush1.bf16.xpose.msra.mxu0 0
        %7451 = vmatprep.subr.bf16.mxu0 0
        %7452 = vmatpush1.bf16.xpose.msra.mxu0 0
        %7453 = vmatprep.subr.bf16.mxu0 0
        %7454 = vmatpush1.bf16.xpose.msra.mxu0 0
        %7455 = vmatprep.subr.bf16.mxu0 0
        %7456 = vmatpush1.bf16.xpose.msra.mxu0 0
        %7457 = vmatprep.subr.bf16.mxu0 0
        %7458 = vmatpush1.bf16.xpose.msra.mxu0 0
        %7459 = vmatprep.subr.bf16.mxu0 0
        %7460 = vmatpush1.bf16.xpose.msra.mxu0 0
        %7461 = vmatprep.subr.bf16.mxu0 0
        %7462 = vmatpush1.bf16.xpose.msra.mxu0 0
        %7463 = vmatprep.subr.bf16.mxu0 0
        %7464 = vmatpush1.bf16.xpose.msra.mxu0 0
        %7465 = vmatprep.subr.bf16.mxu0 0
        %7466 = vmatpush1.bf16.xpose.msra.mxu0 0
        %7467 = vmatprep.subr.bf16.mxu0 0
        %7468 = vmatpush1.bf16.xpose.msra.mxu0 0
        %7469 = vmatprep.subr.bf16.mxu0 0
        %7470 = vmatpush1.bf16.xpose.msra.mxu0 0
        %7471 = vmatprep.subr.bf16.mxu0 0
        %7472 = vmatpush1.bf16.xpose.msra.mxu0 0
        %7473 = vmatprep.subr.bf16.mxu0 0
        %7474 = vmatpush1.bf16.xpose.msra.mxu0 0
        %7475 = vmatprep.subr.bf16.mxu0 0
        %7476 = vmatpush1.bf16.xpose.msra.mxu0 0
        %7477 = vmatprep.subr.bf16.mxu0 0
        %7478 = vmatpush1.bf16.xpose.msra.mxu0 0
        %7479 = vmatprep.mubr.bf16.mxu0 0
        %7480 = vmatmul.mubr.bf16.gmra.mrb[0].mxu0 %v7442
        %v7481 = vpop.f32.mrb[0].mxu0
        %v7482 = vadd.f32 0.0, %v7481
        %v7483 = vpop.f32.mrb[0].mxu0
        %v7484 = vpop.f32.mrb[0].mxu0
        %v7485 = vpop.f32.mrb[0].mxu0
        %7486 = vdwg.mxu0
        %7488 = vrot.lane.b32.xlu0 %v7389, 120
        %v7489 = vpop.permute.xlu0 %7488
        %7491 = vrot.lane.b32.xlu0 %v7391, 120
        %v7492 = vpop.permute.xlu0 %7491
        %v7494 = vsel %vm765, %v7489, 0
        %v7497 = vsel %vm765, %v7492, 0
        %7499 = vmatprep.subr.bf16.mxu0 0
        %7500 = vmatpush1.bf16.xpose.msra.mxu0 %v7497
        %7501 = vmatprep.subr.bf16.mxu0 0
        %7502 = vmatpush1.bf16.xpose.msra.mxu0 0
        %7503 = vmatprep.subr.bf16.mxu0 0
        %7504 = vmatpush1.bf16.xpose.msra.mxu0 0
        %7505 = vmatprep.subr.bf16.mxu0 0
        %7506 = vmatpush1.bf16.xpose.msra.mxu0 0
        %7507 = vmatprep.subr.bf16.mxu0 0
        %7508 = vmatpush1.bf16.xpose.msra.mxu0 0
        %7509 = vmatprep.subr.bf16.mxu0 0
        %7510 = vmatpush1.bf16.xpose.msra.mxu0 0
        %7511 = vmatprep.subr.bf16.mxu0 0
        %7512 = vmatpush1.bf16.xpose.msra.mxu0 0
        %7513 = vmatprep.subr.bf16.mxu0 0
        %7514 = vmatpush1.bf16.xpose.msra.mxu0 0
        %7515 = vmatprep.subr.bf16.mxu0 0
        %7516 = vmatpush1.bf16.xpose.msra.mxu0 0
        %7517 = vmatprep.subr.bf16.mxu0 0
        %7518 = vmatpush1.bf16.xpose.msra.mxu0 0
        %7519 = vmatprep.subr.bf16.mxu0 0
        %7520 = vmatpush1.bf16.xpose.msra.mxu0 0
        %7521 = vmatprep.subr.bf16.mxu0 0
        %7522 = vmatpush1.bf16.xpose.msra.mxu0 0
        %7523 = vmatprep.subr.bf16.mxu0 0
        %7524 = vmatpush1.bf16.xpose.msra.mxu0 0
        %7525 = vmatprep.subr.bf16.mxu0 0
        %7526 = vmatpush1.bf16.xpose.msra.mxu0 0
        %7527 = vmatprep.subr.bf16.mxu0 0
        %7528 = vmatpush1.bf16.xpose.msra.mxu0 0
        %7529 = vmatprep.subr.bf16.mxu0 0
        %7530 = vmatpush1.bf16.xpose.msra.mxu0 0
        %7531 = vmatprep.mubr.bf16.mxu0 0
        %7532 = vmatmul.mubr.bf16.gmra.mrb[0].mxu0 %v7494
        %v7533 = vpop.f32.mrb[0].mxu0
        %v7534 = vadd.f32 0.0, %v7533
        %v7535 = vpop.f32.mrb[0].mxu0
        %v7536 = vpop.f32.mrb[0].mxu0
        %v7537 = vpop.f32.mrb[0].mxu0
        %7538 = vdwg.mxu0
        %7540 = vrot.lane.b32.xlu0 %v7390, 120
        %v7541 = vpop.permute.xlu0 %7540
        %7543 = vrot.lane.b32.xlu0 %v7392, 120
        %v7544 = vpop.permute.xlu0 %7543
        %v7546 = vsel %vm765, %v7541, 0
        %v7549 = vsel %vm765, %v7544, 0
        %7551 = vmatprep.subr.bf16.mxu0 0
        %7552 = vmatpush1.bf16.xpose.msra.mxu0 %v7549
        %7553 = vmatprep.subr.bf16.mxu0 0
        %7554 = vmatpush1.bf16.xpose.msra.mxu0 0
        %7555 = vmatprep.subr.bf16.mxu0 0
        %7556 = vmatpush1.bf16.xpose.msra.mxu0 0
        %7557 = vmatprep.subr.bf16.mxu0 0
        %7558 = vmatpush1.bf16.xpose.msra.mxu0 0
        %7559 = vmatprep.subr.bf16.mxu0 0
        %7560 = vmatpush1.bf16.xpose.msra.mxu0 0
        %7561 = vmatprep.subr.bf16.mxu0 0
        %7562 = vmatpush1.bf16.xpose.msra.mxu0 0
        %7563 = vmatprep.subr.bf16.mxu0 0
        %7564 = vmatpush1.bf16.xpose.msra.mxu0 0
        %7565 = vmatprep.subr.bf16.mxu0 0
        %7566 = vmatpush1.bf16.xpose.msra.mxu0 0
        %7567 = vmatprep.subr.bf16.mxu0 0
        %7568 = vmatpush1.bf16.xpose.msra.mxu0 0
        %7569 = vmatprep.subr.bf16.mxu0 0
        %7570 = vmatpush1.bf16.xpose.msra.mxu0 0
        %7571 = vmatprep.subr.bf16.mxu0 0
        %7572 = vmatpush1.bf16.xpose.msra.mxu0 0
        %7573 = vmatprep.subr.bf16.mxu0 0
        %7574 = vmatpush1.bf16.xpose.msra.mxu0 0
        %7575 = vmatprep.subr.bf16.mxu0 0
        %7576 = vmatpush1.bf16.xpose.msra.mxu0 0
        %7577 = vmatprep.subr.bf16.mxu0 0
        %7578 = vmatpush1.bf16.xpose.msra.mxu0 0
        %7579 = vmatprep.subr.bf16.mxu0 0
        %7580 = vmatpush1.bf16.xpose.msra.mxu0 0
        %7581 = vmatprep.subr.bf16.mxu0 0
        %7582 = vmatpush1.bf16.xpose.msra.mxu0 0
        %7583 = vmatprep.mubr.bf16.mxu0 0
        %7584 = vmatmul.mubr.bf16.gmra.mrb[0].mxu0 %v7546
        %v7585 = vpop.f32.mrb[0].mxu0
        %v7586 = vadd.f32 0.0, %v7585
        %v7587 = vpop.f32.mrb[0].mxu0
        %v7588 = vpop.f32.mrb[0].mxu0
        %v7589 = vpop.f32.mrb[0].mxu0
        %7590 = vdwg.mxu0
        %7591 = vrot.lane.b32.xlu0 %v7389, 112
        %v7592 = vpop.permute.xlu0 %7591
        %7593 = vrot.lane.b32.xlu0 %v7391, 112
        %v7594 = vpop.permute.xlu0 %7593
        %v7596 = vsel %vm765, %v7592, 0
        %v7599 = vsel %vm765, %v7594, 0
        %7601 = vmatprep.subr.bf16.mxu0 0
        %7602 = vmatpush1.bf16.xpose.msra.mxu0 %v7599
        %7603 = vmatprep.subr.bf16.mxu0 0
        %7604 = vmatpush1.bf16.xpose.msra.mxu0 0
        %7605 = vmatprep.subr.bf16.mxu0 0
        %7606 = vmatpush1.bf16.xpose.msra.mxu0 0
        %7607 = vmatprep.subr.bf16.mxu0 0
        %7608 = vmatpush1.bf16.xpose.msra.mxu0 0
        %7609 = vmatprep.subr.bf16.mxu0 0
        %7610 = vmatpush1.bf16.xpose.msra.mxu0 0
        %7611 = vmatprep.subr.bf16.mxu0 0
        %7612 = vmatpush1.bf16.xpose.msra.mxu0 0
        %7613 = vmatprep.subr.bf16.mxu0 0
        %7614 = vmatpush1.bf16.xpose.msra.mxu0 0
        %7615 = vmatprep.subr.bf16.mxu0 0
        %7616 = vmatpush1.bf16.xpose.msra.mxu0 0
        %7617 = vmatprep.subr.bf16.mxu0 0
        %7618 = vmatpush1.bf16.xpose.msra.mxu0 0
        %7619 = vmatprep.subr.bf16.mxu0 0
        %7620 = vmatpush1.bf16.xpose.msra.mxu0 0
        %7621 = vmatprep.subr.bf16.mxu0 0
        %7622 = vmatpush1.bf16.xpose.msra.mxu0 0
        %7623 = vmatprep.subr.bf16.mxu0 0
        %7624 = vmatpush1.bf16.xpose.msra.mxu0 0
        %7625 = vmatprep.subr.bf16.mxu0 0
        %7626 = vmatpush1.bf16.xpose.msra.mxu0 0
        %7627 = vmatprep.subr.bf16.mxu0 0
        %7628 = vmatpush1.bf16.xpose.msra.mxu0 0
        %7629 = vmatprep.subr.bf16.mxu0 0
        %7630 = vmatpush1.bf16.xpose.msra.mxu0 0
        %7631 = vmatprep.subr.bf16.mxu0 0
        %7632 = vmatpush1.bf16.xpose.msra.mxu0 0
        %7633 = vmatprep.mubr.bf16.mxu0 0
        %7634 = vmatmul.mubr.bf16.gmra.mrb[0].mxu0 %v7596
        %v7635 = vpop.f32.mrb[0].mxu0
        %v7636 = vadd.f32 0.0, %v7635
        %v7637 = vpop.f32.mrb[0].mxu0
        %v7638 = vpop.f32.mrb[0].mxu0
        %v7639 = vpop.f32.mrb[0].mxu0
        %7640 = vdwg.mxu0
        %7641 = vrot.lane.b32.xlu0 %v7390, 112
        %v7642 = vpop.permute.xlu0 %7641
        %7643 = vrot.lane.b32.xlu0 %v7392, 112
        %v7644 = vpop.permute.xlu0 %7643
        %v7646 = vsel %vm765, %v7642, 0
        %v7649 = vsel %vm765, %v7644, 0
        %7651 = vmatprep.subr.bf16.mxu0 0
        %7652 = vmatpush1.bf16.xpose.msra.mxu0 %v7649
        %7653 = vmatprep.subr.bf16.mxu0 0
        %7654 = vmatpush1.bf16.xpose.msra.mxu0 0
        %7655 = vmatprep.subr.bf16.mxu0 0
        %7656 = vmatpush1.bf16.xpose.msra.mxu0 0
        %7657 = vmatprep.subr.bf16.mxu0 0
        %7658 = vmatpush1.bf16.xpose.msra.mxu0 0
        %7659 = vmatprep.subr.bf16.mxu0 0
        %7660 = vmatpush1.bf16.xpose.msra.mxu0 0
        %7661 = vmatprep.subr.bf16.mxu0 0
        %7662 = vmatpush1.bf16.xpose.msra.mxu0 0
        %7663 = vmatprep.subr.bf16.mxu0 0
        %7664 = vmatpush1.bf16.xpose.msra.mxu0 0
        %7665 = vmatprep.subr.bf16.mxu0 0
        %7666 = vmatpush1.bf16.xpose.msra.mxu0 0
        %7667 = vmatprep.subr.bf16.mxu0 0
        %7668 = vmatpush1.bf16.xpose.msra.mxu0 0
        %7669 = vmatprep.subr.bf16.mxu0 0
        %7670 = vmatpush1.bf16.xpose.msra.mxu0 0
        %7671 = vmatprep.subr.bf16.mxu0 0
        %7672 = vmatpush1.bf16.xpose.msra.mxu0 0
        %7673 = vmatprep.subr.bf16.mxu0 0
        %7674 = vmatpush1.bf16.xpose.msra.mxu0 0
        %7675 = vmatprep.subr.bf16.mxu0 0
        %7676 = vmatpush1.bf16.xpose.msra.mxu0 0
        %7677 = vmatprep.subr.bf16.mxu0 0
        %7678 = vmatpush1.bf16.xpose.msra.mxu0 0
        %7679 = vmatprep.subr.bf16.mxu0 0
        %7680 = vmatpush1.bf16.xpose.msra.mxu0 0
        %7681 = vmatprep.subr.bf16.mxu0 0
        %7682 = vmatpush1.bf16.xpose.msra.mxu0 0
        %7683 = vmatprep.mubr.bf16.mxu0 0
        %7684 = vmatmul.mubr.bf16.gmra.mrb[0].mxu0 %v7646
        %v7685 = vpop.f32.mrb[0].mxu0
        %v7686 = vadd.f32 0.0, %v7685
        %v7687 = vpop.f32.mrb[0].mxu0
        %v7688 = vpop.f32.mrb[0].mxu0
        %v7689 = vpop.f32.mrb[0].mxu0
        %7690 = vdwg.mxu0
        %7691 = vrot.lane.b32.xlu0 %v7389, 104
        %v7692 = vpop.permute.xlu0 %7691
        %7693 = vrot.lane.b32.xlu0 %v7391, 104
        %v7694 = vpop.permute.xlu0 %7693
        %v7696 = vsel %vm765, %v7692, 0
        %v7699 = vsel %vm765, %v7694, 0
        %7701 = vmatprep.subr.bf16.mxu0 0
        %7702 = vmatpush1.bf16.xpose.msra.mxu0 %v7699
        %7703 = vmatprep.subr.bf16.mxu0 0
        %7704 = vmatpush1.bf16.xpose.msra.mxu0 0
        %7705 = vmatprep.subr.bf16.mxu0 0
        %7706 = vmatpush1.bf16.xpose.msra.mxu0 0
        %7707 = vmatprep.subr.bf16.mxu0 0
        %7708 = vmatpush1.bf16.xpose.msra.mxu0 0
        %7709 = vmatprep.subr.bf16.mxu0 0
        %7710 = vmatpush1.bf16.xpose.msra.mxu0 0
        %7711 = vmatprep.subr.bf16.mxu0 0
        %7712 = vmatpush1.bf16.xpose.msra.mxu0 0
        %7713 = vmatprep.subr.bf16.mxu0 0
        %7714 = vmatpush1.bf16.xpose.msra.mxu0 0
        %7715 = vmatprep.subr.bf16.mxu0 0
        %7716 = vmatpush1.bf16.xpose.msra.mxu0 0
        %7717 = vmatprep.subr.bf16.mxu0 0
        %7718 = vmatpush1.bf16.xpose.msra.mxu0 0
        %7719 = vmatprep.subr.bf16.mxu0 0
        %7720 = vmatpush1.bf16.xpose.msra.mxu0 0
        %7721 = vmatprep.subr.bf16.mxu0 0
        %7722 = vmatpush1.bf16.xpose.msra.mxu0 0
        %7723 = vmatprep.subr.bf16.mxu0 0
        %7724 = vmatpush1.bf16.xpose.msra.mxu0 0
        %7725 = vmatprep.subr.bf16.mxu0 0
        %7726 = vmatpush1.bf16.xpose.msra.mxu0 0
        %7727 = vmatprep.subr.bf16.mxu0 0
        %7728 = vmatpush1.bf16.xpose.msra.mxu0 0
        %7729 = vmatprep.subr.bf16.mxu0 0
        %7730 = vmatpush1.bf16.xpose.msra.mxu0 0
        %7731 = vmatprep.subr.bf16.mxu0 0
        %7732 = vmatpush1.bf16.xpose.msra.mxu0 0
        %7733 = vmatprep.mubr.bf16.mxu0 0
        %7734 = vmatmul.mubr.bf16.gmra.mrb[0].mxu0 %v7696
        %v7735 = vpop.f32.mrb[0].mxu0
        %v7736 = vadd.f32 0.0, %v7735
        %v7737 = vpop.f32.mrb[0].mxu0
        %v7738 = vpop.f32.mrb[0].mxu0
        %v7739 = vpop.f32.mrb[0].mxu0
        %7740 = vdwg.mxu0
        %7741 = vrot.lane.b32.xlu0 %v7390, 104
        %v7742 = vpop.permute.xlu0 %7741
        %7743 = vrot.lane.b32.xlu0 %v7392, 104
        %v7744 = vpop.permute.xlu0 %7743
        %v7746 = vsel %vm765, %v7742, 0
        %v7749 = vsel %vm765, %v7744, 0
        %7751 = vmatprep.subr.bf16.mxu0 0
        %7752 = vmatpush1.bf16.xpose.msra.mxu0 %v7749
        %7753 = vmatprep.subr.bf16.mxu0 0
        %7754 = vmatpush1.bf16.xpose.msra.mxu0 0
        %7755 = vmatprep.subr.bf16.mxu0 0
        %7756 = vmatpush1.bf16.xpose.msra.mxu0 0
        %7757 = vmatprep.subr.bf16.mxu0 0
        %7758 = vmatpush1.bf16.xpose.msra.mxu0 0
        %7759 = vmatprep.subr.bf16.mxu0 0
        %7760 = vmatpush1.bf16.xpose.msra.mxu0 0
        %7761 = vmatprep.subr.bf16.mxu0 0
        %7762 = vmatpush1.bf16.xpose.msra.mxu0 0
        %7763 = vmatprep.subr.bf16.mxu0 0
        %7764 = vmatpush1.bf16.xpose.msra.mxu0 0
        %7765 = vmatprep.subr.bf16.mxu0 0
        %7766 = vmatpush1.bf16.xpose.msra.mxu0 0
        %7767 = vmatprep.subr.bf16.mxu0 0
        %7768 = vmatpush1.bf16.xpose.msra.mxu0 0
        %7769 = vmatprep.subr.bf16.mxu0 0
        %7770 = vmatpush1.bf16.xpose.msra.mxu0 0
        %7771 = vmatprep.subr.bf16.mxu0 0
        %7772 = vmatpush1.bf16.xpose.msra.mxu0 0
        %7773 = vmatprep.subr.bf16.mxu0 0
        %7774 = vmatpush1.bf16.xpose.msra.mxu0 0
        %7775 = vmatprep.subr.bf16.mxu0 0
        %7776 = vmatpush1.bf16.xpose.msra.mxu0 0
        %7777 = vmatprep.subr.bf16.mxu0 0
        %7778 = vmatpush1.bf16.xpose.msra.mxu0 0
        %7779 = vmatprep.subr.bf16.mxu0 0
        %7780 = vmatpush1.bf16.xpose.msra.mxu0 0
        %7781 = vmatprep.subr.bf16.mxu0 0
        %7782 = vmatpush1.bf16.xpose.msra.mxu0 0
        %7783 = vmatprep.mubr.bf16.mxu0 0
        %7784 = vmatmul.mubr.bf16.gmra.mrb[0].mxu0 %v7746
        %v7785 = vpop.f32.mrb[0].mxu0
        %v7786 = vadd.f32 0.0, %v7785
        %v7787 = vpop.f32.mrb[0].mxu0
        %v7788 = vpop.f32.mrb[0].mxu0
        %v7789 = vpop.f32.mrb[0].mxu0
        %7790 = vdwg.mxu0
        %v7791 = vsel %vm765, %v7436, -inf
        %7792 = vmax.xlane.f32.xlu0 %v7791
        %v7793 = vpop.xlane.xlu0 %7792
        %v7794 = vsel %vm765, %v7534, -inf
        %7795 = vmax.xlane.f32.xlu0 %v7794
        %v7796 = vpop.xlane.xlu0 %7795
        %v7797 = vsel %vm765, %v7636, -inf
        %7798 = vmax.xlane.f32.xlu0 %v7797
        %v7799 = vpop.xlane.xlu0 %7798
        %v7800 = vsel %vm765, %v7736, -inf
        %7801 = vmax.xlane.f32.xlu0 %v7800
        %v7802 = vpop.xlane.xlu0 %7801
        %v7803 = vsel %vm765, %v7482, -inf
        %7804 = vmax.xlane.f32.xlu0 %v7803
        %v7805 = vpop.xlane.xlu0 %7804
        %v7806 = vsel %vm765, %v7586, -inf
        %7807 = vmax.xlane.f32.xlu0 %v7806
        %v7808 = vpop.xlane.xlu0 %7807
        %v7809 = vsel %vm765, %v7686, -inf
        %7810 = vmax.xlane.f32.xlu0 %v7809
        %v7811 = vpop.xlane.xlu0 %7810
        %v7812 = vsel %vm765, %v7786, -inf
        %7813 = vmax.xlane.f32.xlu0 %v7812
        %v7814 = vpop.xlane.xlu0 %7813
        %v7815 = vsub.f32 %v7436, %v7793
        %v7816 = vsub.f32 %v7534, %v7796
        %v7817 = vsub.f32 %v7636, %v7799
        %v7818 = vsub.f32 %v7736, %v7802
        %v7819 = vsub.f32 %v7482, %v7805
        %v7820 = vsub.f32 %v7586, %v7808
        %v7821 = vsub.f32 %v7686, %v7811
        %v7822 = vsub.f32 %v7786, %v7814
        %v7823 = vmul.f32 %v7815, 1.442695
        %v7824 = vpow.pop %v7823
        %v7825 = vmul.f32 %v7816, 1.442695
        %v7826 = vpow.pop %v7825
        %v7827 = vmul.f32 %v7817, 1.442695
        %v7828 = vpow.pop %v7827
        %v7829 = vmul.f32 %v7818, 1.442695
        %v7830 = vpow.pop %v7829
        %v7831 = vmul.f32 %v7819, 1.442695
        %v7832 = vpow.pop %v7831
        %v7833 = vmul.f32 %v7820, 1.442695
        %v7834 = vpow.pop %v7833
        %v7835 = vmul.f32 %v7821, 1.442695
        %v7836 = vpow.pop %v7835
        %v7837 = vmul.f32 %v7822, 1.442695
        %v7838 = vpow.pop %v7837
        %v7839 = vsel %vm765, %v7824, 0.0
        %7840 = vadd.xlane.f32.xlu0 %v7839
        %v7841 = vpop.xlane.xlu0 %7840
        %v7842 = vsel %vm765, %v7826, 0.0
        %7843 = vadd.xlane.f32.xlu0 %v7842
        %v7844 = vpop.xlane.xlu0 %7843
        %v7845 = vsel %vm765, %v7828, 0.0
        %7846 = vadd.xlane.f32.xlu0 %v7845
        %v7847 = vpop.xlane.xlu0 %7846
        %v7848 = vsel %vm765, %v7830, 0.0
        %7849 = vadd.xlane.f32.xlu0 %v7848
        %v7850 = vpop.xlane.xlu0 %7849
        %v7851 = vsel %vm765, %v7832, 0.0
        %7852 = vadd.xlane.f32.xlu0 %v7851
        %v7853 = vpop.xlane.xlu0 %7852
        %v7854 = vsel %vm765, %v7834, 0.0
        %7855 = vadd.xlane.f32.xlu0 %v7854
        %v7856 = vpop.xlane.xlu0 %7855
        %v7857 = vsel %vm765, %v7836, 0.0
        %7858 = vadd.xlane.f32.xlu0 %v7857
        %v7859 = vpop.xlane.xlu0 %7858
        %v7860 = vsel %vm765, %v7838, 0.0
        %7861 = vadd.xlane.f32.xlu0 %v7860
        %v7862 = vpop.xlane.xlu0 %7861
        %v7863 = vrcp.pop %v7841
        %v7864 = vmul.f32 %v7824, %v7863
        %v7865 = vrcp.pop %v7844
        %v7866 = vmul.f32 %v7826, %v7865
        %v7867 = vrcp.pop %v7847
        %v7868 = vmul.f32 %v7828, %v7867
        %v7869 = vrcp.pop %v7850
        %v7870 = vmul.f32 %v7830, %v7869
        %v7871 = vrcp.pop %v7853
        %v7872 = vmul.f32 %v7832, %v7871
        %v7873 = vrcp.pop %v7856
        %v7874 = vmul.f32 %v7834, %v7873
        %v7875 = vrcp.pop %v7859
        %v7876 = vmul.f32 %v7836, %v7875
        %v7877 = vrcp.pop %v7862
        %v7878 = vmul.f32 %v7838, %v7877
        %v7879 = vpack.c.bf16 %v7866, %v7864
        %v7880 = vpack.c.bf16 %v7870, %v7868
        %v7881 = vpack.c.bf16 %v7874, %v7872
        %v7882 = vpack.c.bf16 %v7878, %v7876
        %v7884 = vsel %vm765, %v7879, 0
        %v7887 = vsel %vm1257, %v7393, 0
        %7889 = vmatprep.subr.bf16.mxu0 0
        %7890 = vmatpush1.bf16.msra.mxu0 %v7887
        %7891 = vmatprep.subr.bf16.mxu0 0
        %7892 = vmatpush1.bf16.msra.mxu0 0
        %7893 = vmatprep.subr.bf16.mxu0 0
        %7894 = vmatpush1.bf16.msra.mxu0 0
        %7895 = vmatprep.subr.bf16.mxu0 0
        %7896 = vmatpush1.bf16.msra.mxu0 0
        %7897 = vmatprep.subr.bf16.mxu0 0
        %7898 = vmatpush1.bf16.msra.mxu0 0
        %7899 = vmatprep.subr.bf16.mxu0 0
        %7900 = vmatpush1.bf16.msra.mxu0 0
        %7901 = vmatprep.subr.bf16.mxu0 0
        %7902 = vmatpush1.bf16.msra.mxu0 0
        %7903 = vmatprep.subr.bf16.mxu0 0
        %7904 = vmatpush1.bf16.msra.mxu0 0
        %7905 = vmatprep.subr.bf16.mxu0 0
        %7906 = vmatpush1.bf16.msra.mxu0 0
        %7907 = vmatprep.subr.bf16.mxu0 0
        %7908 = vmatpush1.bf16.msra.mxu0 0
        %7909 = vmatprep.subr.bf16.mxu0 0
        %7910 = vmatpush1.bf16.msra.mxu0 0
        %7911 = vmatprep.subr.bf16.mxu0 0
        %7912 = vmatpush1.bf16.msra.mxu0 0
        %7913 = vmatprep.subr.bf16.mxu0 0
        %7914 = vmatpush1.bf16.msra.mxu0 0
        %7915 = vmatprep.subr.bf16.mxu0 0
        %7916 = vmatpush1.bf16.msra.mxu0 0
        %7917 = vmatprep.subr.bf16.mxu0 0
        %7918 = vmatpush1.bf16.msra.mxu0 0
        %7919 = vmatprep.subr.bf16.mxu0 0
        %7920 = vmatpush1.bf16.msra.mxu0 0
        %7921 = vmatprep.mubr.bf16.mxu0 0
        %7922 = vmatmul.mubr.bf16.gmra.mrb[0].mxu0 %v7884
        %v7923 = vpop.f32.mrb[0].mxu0
        %v7924 = vadd.f32 0.0, %v7923
        %v7925 = vpop.f32.mrb[0].mxu0
        %v7926 = vpop.f32.mrb[0].mxu0
        %v7927 = vpop.f32.mrb[0].mxu0
        %7928 = vdwg.mxu0
        %v7930 = vsel %vm765, %v7881, 0
        %v7933 = vsel %vm1257, %v7394, 0
        %7935 = vmatprep.subr.bf16.mxu0 0
        %7936 = vmatpush1.bf16.msra.mxu0 %v7933
        %7937 = vmatprep.subr.bf16.mxu0 0
        %7938 = vmatpush1.bf16.msra.mxu0 0
        %7939 = vmatprep.subr.bf16.mxu0 0
        %7940 = vmatpush1.bf16.msra.mxu0 0
        %7941 = vmatprep.subr.bf16.mxu0 0
        %7942 = vmatpush1.bf16.msra.mxu0 0
        %7943 = vmatprep.subr.bf16.mxu0 0
        %7944 = vmatpush1.bf16.msra.mxu0 0
        %7945 = vmatprep.subr.bf16.mxu0 0
        %7946 = vmatpush1.bf16.msra.mxu0 0
        %7947 = vmatprep.subr.bf16.mxu0 0
        %7948 = vmatpush1.bf16.msra.mxu0 0
        %7949 = vmatprep.subr.bf16.mxu0 0
        %7950 = vmatpush1.bf16.msra.mxu0 0
        %7951 = vmatprep.subr.bf16.mxu0 0
        %7952 = vmatpush1.bf16.msra.mxu0 0
        %7953 = vmatprep.subr.bf16.mxu0 0
        %7954 = vmatpush1.bf16.msra.mxu0 0
        %7955 = vmatprep.subr.bf16.mxu0 0
        %7956 = vmatpush1.bf16.msra.mxu0 0
        %7957 = vmatprep.subr.bf16.mxu0 0
        %7958 = vmatpush1.bf16.msra.mxu0 0
        %7959 = vmatprep.subr.bf16.mxu0 0
        %7960 = vmatpush1.bf16.msra.mxu0 0
        %7961 = vmatprep.subr.bf16.mxu0 0
        %7962 = vmatpush1.bf16.msra.mxu0 0
        %7963 = vmatprep.subr.bf16.mxu0 0
        %7964 = vmatpush1.bf16.msra.mxu0 0
        %7965 = vmatprep.subr.bf16.mxu0 0
        %7966 = vmatpush1.bf16.msra.mxu0 0
        %7967 = vmatprep.mubr.bf16.mxu0 0
        %7968 = vmatmul.mubr.bf16.gmra.mrb[0].mxu0 %v7930
        %v7969 = vpop.f32.mrb[0].mxu0
        %v7970 = vadd.f32 0.0, %v7969
        %v7971 = vpop.f32.mrb[0].mxu0
        %v7972 = vpop.f32.mrb[0].mxu0
        %v7973 = vpop.f32.mrb[0].mxu0
        %7974 = vdwg.mxu0
        %v7976 = vrot.slane %v7879, 4
        %7978 = vrot.lane.b32.xlu0 %v7393, 120
        %v7979 = vpop.permute.xlu0 %7978
        %v7981 = vsel %vm765, %v7976, 0
        %v7984 = vsel %vm1257, %v7979, 0
        %7986 = vmatprep.subr.bf16.mxu0 0
        %7987 = vmatpush1.bf16.msra.mxu0 %v7984
        %7988 = vmatprep.subr.bf16.mxu0 0
        %7989 = vmatpush1.bf16.msra.mxu0 0
        %7990 = vmatprep.subr.bf16.mxu0 0
        %7991 = vmatpush1.bf16.msra.mxu0 0
        %7992 = vmatprep.subr.bf16.mxu0 0
        %7993 = vmatpush1.bf16.msra.mxu0 0
        %7994 = vmatprep.subr.bf16.mxu0 0
        %7995 = vmatpush1.bf16.msra.mxu0 0
        %7996 = vmatprep.subr.bf16.mxu0 0
        %7997 = vmatpush1.bf16.msra.mxu0 0
        %7998 = vmatprep.subr.bf16.mxu0 0
        %7999 = vmatpush1.bf16.msra.mxu0 0
        %8000 = vmatprep.subr.bf16.mxu0 0
        %8001 = vmatpush1.bf16.msra.mxu0 0
        %8002 = vmatprep.subr.bf16.mxu0 0
        %8003 = vmatpush1.bf16.msra.mxu0 0
        %8004 = vmatprep.subr.bf16.mxu0 0
        %8005 = vmatpush1.bf16.msra.mxu0 0
        %8006 = vmatprep.subr.bf16.mxu0 0
        %8007 = vmatpush1.bf16.msra.mxu0 0
        %8008 = vmatprep.subr.bf16.mxu0 0
        %8009 = vmatpush1.bf16.msra.mxu0 0
        %8010 = vmatprep.subr.bf16.mxu0 0
        %8011 = vmatpush1.bf16.msra.mxu0 0
        %8012 = vmatprep.subr.bf16.mxu0 0
        %8013 = vmatpush1.bf16.msra.mxu0 0
        %8014 = vmatprep.subr.bf16.mxu0 0
        %8015 = vmatpush1.bf16.msra.mxu0 0
        %8016 = vmatprep.subr.bf16.mxu0 0
        %8017 = vmatpush1.bf16.msra.mxu0 0
        %8018 = vmatprep.mubr.bf16.mxu0 0
        %8019 = vmatmul.mubr.bf16.gmra.mrb[0].mxu0 %v7981
        %v8020 = vpop.f32.mrb[0].mxu0
        %v8021 = vadd.f32 0.0, %v8020
        %v8022 = vpop.f32.mrb[0].mxu0
        %v8023 = vpop.f32.mrb[0].mxu0
        %v8024 = vpop.f32.mrb[0].mxu0
        %8025 = vdwg.mxu0
        %v8027 = vrot.slane %v7881, 4
        %8029 = vrot.lane.b32.xlu0 %v7394, 120
        %v8030 = vpop.permute.xlu0 %8029
        %v8032 = vsel %vm765, %v8027, 0
        %v8035 = vsel %vm1257, %v8030, 0
        %8037 = vmatprep.subr.bf16.mxu0 0
        %8038 = vmatpush1.bf16.msra.mxu0 %v8035
        %8039 = vmatprep.subr.bf16.mxu0 0
        %8040 = vmatpush1.bf16.msra.mxu0 0
        %8041 = vmatprep.subr.bf16.mxu0 0
        %8042 = vmatpush1.bf16.msra.mxu0 0
        %8043 = vmatprep.subr.bf16.mxu0 0
        %8044 = vmatpush1.bf16.msra.mxu0 0
        %8045 = vmatprep.subr.bf16.mxu0 0
        %8046 = vmatpush1.bf16.msra.mxu0 0
        %8047 = vmatprep.subr.bf16.mxu0 0
        %8048 = vmatpush1.bf16.msra.mxu0 0
        %8049 = vmatprep.subr.bf16.mxu0 0
        %8050 = vmatpush1.bf16.msra.mxu0 0
        %8051 = vmatprep.subr.bf16.mxu0 0
        %8052 = vmatpush1.bf16.msra.mxu0 0
        %8053 = vmatprep.subr.bf16.mxu0 0
        %8054 = vmatpush1.bf16.msra.mxu0 0
        %8055 = vmatprep.subr.bf16.mxu0 0
        %8056 = vmatpush1.bf16.msra.mxu0 0
        %8057 = vmatprep.subr.bf16.mxu0 0
        %8058 = vmatpush1.bf16.msra.mxu0 0
        %8059 = vmatprep.subr.bf16.mxu0 0
        %8060 = vmatpush1.bf16.msra.mxu0 0
        %8061 = vmatprep.subr.bf16.mxu0 0
        %8062 = vmatpush1.bf16.msra.mxu0 0
        %8063 = vmatprep.subr.bf16.mxu0 0
        %8064 = vmatpush1.bf16.msra.mxu0 0
        %8065 = vmatprep.subr.bf16.mxu0 0
        %8066 = vmatpush1.bf16.msra.mxu0 0
        %8067 = vmatprep.subr.bf16.mxu0 0
        %8068 = vmatpush1.bf16.msra.mxu0 0
        %8069 = vmatprep.mubr.bf16.mxu0 0
        %8070 = vmatmul.mubr.bf16.gmra.mrb[0].mxu0 %v8032
        %v8071 = vpop.f32.mrb[0].mxu0
        %v8072 = vadd.f32 0.0, %v8071
        %v8073 = vpop.f32.mrb[0].mxu0
        %v8074 = vpop.f32.mrb[0].mxu0
        %v8075 = vpop.f32.mrb[0].mxu0
        %8076 = vdwg.mxu0
        %8077 = vrot.lane.b32.xlu0 %v7393, 112
        %v8078 = vpop.permute.xlu0 %8077
        %v8080 = vsel %vm765, %v7880, 0
        %v8083 = vsel %vm1257, %v8078, 0
        %8085 = vmatprep.subr.bf16.mxu0 0
        %8086 = vmatpush1.bf16.msra.mxu0 %v8083
        %8087 = vmatprep.subr.bf16.mxu0 0
        %8088 = vmatpush1.bf16.msra.mxu0 0
        %8089 = vmatprep.subr.bf16.mxu0 0
        %8090 = vmatpush1.bf16.msra.mxu0 0
        %8091 = vmatprep.subr.bf16.mxu0 0
        %8092 = vmatpush1.bf16.msra.mxu0 0
        %8093 = vmatprep.subr.bf16.mxu0 0
        %8094 = vmatpush1.bf16.msra.mxu0 0
        %8095 = vmatprep.subr.bf16.mxu0 0
        %8096 = vmatpush1.bf16.msra.mxu0 0
        %8097 = vmatprep.subr.bf16.mxu0 0
        %8098 = vmatpush1.bf16.msra.mxu0 0
        %8099 = vmatprep.subr.bf16.mxu0 0
        %8100 = vmatpush1.bf16.msra.mxu0 0
        %8101 = vmatprep.subr.bf16.mxu0 0
        %8102 = vmatpush1.bf16.msra.mxu0 0
        %8103 = vmatprep.subr.bf16.mxu0 0
        %8104 = vmatpush1.bf16.msra.mxu0 0
        %8105 = vmatprep.subr.bf16.mxu0 0
        %8106 = vmatpush1.bf16.msra.mxu0 0
        %8107 = vmatprep.subr.bf16.mxu0 0
        %8108 = vmatpush1.bf16.msra.mxu0 0
        %8109 = vmatprep.subr.bf16.mxu0 0
        %8110 = vmatpush1.bf16.msra.mxu0 0
        %8111 = vmatprep.subr.bf16.mxu0 0
        %8112 = vmatpush1.bf16.msra.mxu0 0
        %8113 = vmatprep.subr.bf16.mxu0 0
        %8114 = vmatpush1.bf16.msra.mxu0 0
        %8115 = vmatprep.subr.bf16.mxu0 0
        %8116 = vmatpush1.bf16.msra.mxu0 0
        %8117 = vmatprep.mubr.bf16.mxu0 0
        %8118 = vmatmul.mubr.bf16.gmra.mrb[0].mxu0 %v8080
        %v8119 = vpop.f32.mrb[0].mxu0
        %v8120 = vadd.f32 0.0, %v8119
        %v8121 = vpop.f32.mrb[0].mxu0
        %v8122 = vpop.f32.mrb[0].mxu0
        %v8123 = vpop.f32.mrb[0].mxu0
        %8124 = vdwg.mxu0
        %8125 = vrot.lane.b32.xlu0 %v7394, 112
        %v8126 = vpop.permute.xlu0 %8125
        %v8128 = vsel %vm765, %v7882, 0
        %v8131 = vsel %vm1257, %v8126, 0
        %8133 = vmatprep.subr.bf16.mxu0 0
        %8134 = vmatpush1.bf16.msra.mxu0 %v8131
        %8135 = vmatprep.subr.bf16.mxu0 0
        %8136 = vmatpush1.bf16.msra.mxu0 0
        %8137 = vmatprep.subr.bf16.mxu0 0
        %8138 = vmatpush1.bf16.msra.mxu0 0
        %8139 = vmatprep.subr.bf16.mxu0 0
        %8140 = vmatpush1.bf16.msra.mxu0 0
        %8141 = vmatprep.subr.bf16.mxu0 0
        %8142 = vmatpush1.bf16.msra.mxu0 0
        %8143 = vmatprep.subr.bf16.mxu0 0
        %8144 = vmatpush1.bf16.msra.mxu0 0
        %8145 = vmatprep.subr.bf16.mxu0 0
        %8146 = vmatpush1.bf16.msra.mxu0 0
        %8147 = vmatprep.subr.bf16.mxu0 0
        %8148 = vmatpush1.bf16.msra.mxu0 0
        %8149 = vmatprep.subr.bf16.mxu0 0
        %8150 = vmatpush1.bf16.msra.mxu0 0
        %8151 = vmatprep.subr.bf16.mxu0 0
        %8152 = vmatpush1.bf16.msra.mxu0 0
        %8153 = vmatprep.subr.bf16.mxu0 0
        %8154 = vmatpush1.bf16.msra.mxu0 0
        %8155 = vmatprep.subr.bf16.mxu0 0
        %8156 = vmatpush1.bf16.msra.mxu0 0
        %8157 = vmatprep.subr.bf16.mxu0 0
        %8158 = vmatpush1.bf16.msra.mxu0 0
        %8159 = vmatprep.subr.bf16.mxu0 0
        %8160 = vmatpush1.bf16.msra.mxu0 0
        %8161 = vmatprep.subr.bf16.mxu0 0
        %8162 = vmatpush1.bf16.msra.mxu0 0
        %8163 = vmatprep.subr.bf16.mxu0 0
        %8164 = vmatpush1.bf16.msra.mxu0 0
        %8165 = vmatprep.mubr.bf16.mxu0 0
        %8166 = vmatmul.mubr.bf16.gmra.mrb[0].mxu0 %v8128
        %v8167 = vpop.f32.mrb[0].mxu0
        %v8168 = vadd.f32 0.0, %v8167
        %v8169 = vpop.f32.mrb[0].mxu0
        %v8170 = vpop.f32.mrb[0].mxu0
        %v8171 = vpop.f32.mrb[0].mxu0
        %8172 = vdwg.mxu0
        %v8174 = vrot.slane %v7880, 4
        %8175 = vrot.lane.b32.xlu0 %v7393, 104
        %v8176 = vpop.permute.xlu0 %8175
        %v8178 = vsel %vm765, %v8174, 0
        %v8181 = vsel %vm1257, %v8176, 0
        %8183 = vmatprep.subr.bf16.mxu0 0
        %8184 = vmatpush1.bf16.msra.mxu0 %v8181
        %8185 = vmatprep.subr.bf16.mxu0 0
        %8186 = vmatpush1.bf16.msra.mxu0 0
        %8187 = vmatprep.subr.bf16.mxu0 0
        %8188 = vmatpush1.bf16.msra.mxu0 0
        %8189 = vmatprep.subr.bf16.mxu0 0
        %8190 = vmatpush1.bf16.msra.mxu0 0
        %8191 = vmatprep.subr.bf16.mxu0 0
        %8192 = vmatpush1.bf16.msra.mxu0 0
        %8193 = vmatprep.subr.bf16.mxu0 0
        %8194 = vmatpush1.bf16.msra.mxu0 0
        %8195 = vmatprep.subr.bf16.mxu0 0
        %8196 = vmatpush1.bf16.msra.mxu0 0
        %8197 = vmatprep.subr.bf16.mxu0 0
        %8198 = vmatpush1.bf16.msra.mxu0 0
        %8199 = vmatprep.subr.bf16.mxu0 0
        %8200 = vmatpush1.bf16.msra.mxu0 0
        %8201 = vmatprep.subr.bf16.mxu0 0
        %8202 = vmatpush1.bf16.msra.mxu0 0
        %8203 = vmatprep.subr.bf16.mxu0 0
        %8204 = vmatpush1.bf16.msra.mxu0 0
        %8205 = vmatprep.subr.bf16.mxu0 0
        %8206 = vmatpush1.bf16.msra.mxu0 0
        %8207 = vmatprep.subr.bf16.mxu0 0
        %8208 = vmatpush1.bf16.msra.mxu0 0
        %8209 = vmatprep.subr.bf16.mxu0 0
        %8210 = vmatpush1.bf16.msra.mxu0 0
        %8211 = vmatprep.subr.bf16.mxu0 0
        %8212 = vmatpush1.bf16.msra.mxu0 0
        %8213 = vmatprep.subr.bf16.mxu0 0
        %8214 = vmatpush1.bf16.msra.mxu0 0
        %8215 = vmatprep.mubr.bf16.mxu0 0
        %8216 = vmatmul.mubr.bf16.gmra.mrb[0].mxu0 %v8178
        %v8217 = vpop.f32.mrb[0].mxu0
        %v8218 = vadd.f32 0.0, %v8217
        %v8219 = vpop.f32.mrb[0].mxu0
        %v8220 = vpop.f32.mrb[0].mxu0
        %v8221 = vpop.f32.mrb[0].mxu0
        %8222 = vdwg.mxu0
        %v8224 = vrot.slane %v7882, 4
        %8225 = vrot.lane.b32.xlu0 %v7394, 104
        %v8226 = vpop.permute.xlu0 %8225
        %v8228 = vsel %vm765, %v8224, 0
        %v8231 = vsel %vm1257, %v8226, 0
        %8233 = vmatprep.subr.bf16.mxu0 0
        %8234 = vmatpush1.bf16.msra.mxu0 %v8231
        %8235 = vmatprep.subr.bf16.mxu0 0
        %8236 = vmatpush1.bf16.msra.mxu0 0
        %8237 = vmatprep.subr.bf16.mxu0 0
        %8238 = vmatpush1.bf16.msra.mxu0 0
        %8239 = vmatprep.subr.bf16.mxu0 0
        %8240 = vmatpush1.bf16.msra.mxu0 0
        %8241 = vmatprep.subr.bf16.mxu0 0
        %8242 = vmatpush1.bf16.msra.mxu0 0
        %8243 = vmatprep.subr.bf16.mxu0 0
        %8244 = vmatpush1.bf16.msra.mxu0 0
        %8245 = vmatprep.subr.bf16.mxu0 0
        %8246 = vmatpush1.bf16.msra.mxu0 0
        %8247 = vmatprep.subr.bf16.mxu0 0
        %8248 = vmatpush1.bf16.msra.mxu0 0
        %8249 = vmatprep.subr.bf16.mxu0 0
        %8250 = vmatpush1.bf16.msra.mxu0 0
        %8251 = vmatprep.subr.bf16.mxu0 0
        %8252 = vmatpush1.bf16.msra.mxu0 0
        %8253 = vmatprep.subr.bf16.mxu0 0
        %8254 = vmatpush1.bf16.msra.mxu0 0
        %8255 = vmatprep.subr.bf16.mxu0 0
        %8256 = vmatpush1.bf16.msra.mxu0 0
        %8257 = vmatprep.subr.bf16.mxu0 0
        %8258 = vmatpush1.bf16.msra.mxu0 0
        %8259 = vmatprep.subr.bf16.mxu0 0
        %8260 = vmatpush1.bf16.msra.mxu0 0
        %8261 = vmatprep.subr.bf16.mxu0 0
        %8262 = vmatpush1.bf16.msra.mxu0 0
        %8263 = vmatprep.subr.bf16.mxu0 0
        %8264 = vmatpush1.bf16.msra.mxu0 0
        %8265 = vmatprep.mubr.bf16.mxu0 0
        %8266 = vmatmul.mubr.bf16.gmra.mrb[0].mxu0 %v8228
        %v8267 = vpop.f32.mrb[0].mxu0
        %v8268 = vadd.f32 0.0, %v8267
        %v8269 = vpop.f32.mrb[0].mxu0
        %v8270 = vpop.f32.mrb[0].mxu0
        %v8271 = vpop.f32.mrb[0].mxu0
        %8272 = vdwg.mxu0
        %8275 = vrot.lane.b32.xlu0 %v8021, 8
        %v8276 = vpop.permute.xlu0 %8275
        %8277 = vrot.lane.b32.xlu0 %v8072, 8
        %v8278 = vpop.permute.xlu0 %8277
        %8283 = vrot.lane.b32.xlu0 %v8120, 16
        %v8284 = vpop.permute.xlu0 %8283
        %8285 = vrot.lane.b32.xlu0 %v8168, 16
        %v8286 = vpop.permute.xlu0 %8285
        %8291 = vrot.lane.b32.xlu0 %v8218, 24
        %v8292 = vpop.permute.xlu0 %8291
        %8293 = vrot.lane.b32.xlu0 %v8268, 24
        %v8294 = vpop.permute.xlu0 %8293
        %v8297 = vsel %vm765, %v7924, %v8276
        %v8298 = vsel %vm765, %v7970, %v8278
        %v8299 = vsel %vm1671, %v8297, %v8284
        %v8300 = vsel %vm1671, %v8298, %v8286
        %v8301 = vsel %vm1674, %v8299, %v8292
        %v8302 = vsel %vm1674, %v8300, %v8294
        %v8303 = vpack.c.bf16 %v8302, %v8301
        %v8304 = vlaneseq
        %v8305 = vshrl.u32 %v8304, 7
        %v8306 = vsub.s32 7, %v8305
        %v8307 = vrot.slane %v556, %v8306
        %v8312 = vunpack.c.l.b16 %v7383
        %v8313 = vunpack.c.l.b16 %v7384
        %v8314 = vunpack.c.l.b16 %v7385
        %v8315 = vunpack.c.l.b16 %v7386
        %v8316 = vpack.c.b16 %v8313, %v8312
        %v8317 = vpack.c.b16 %v8315, %v8314
        %v8321 = vsel %vm583, %v8303, 0
        %8323 = vmatprep.subr.bf16.mxu0 0
        %8324 = vmatpush1.bf16.msra.mxu0 %v8316
        %8325 = vmatprep.subr.bf16.mxu0 0
        %8326 = vmatpush1.bf16.msra.mxu0 %v8317
        %8327 = vmatprep.subr.bf16.mxu0 0
        %8328 = vmatpush1.bf16.msra.mxu0 0
        %8329 = vmatprep.subr.bf16.mxu0 0
        %8330 = vmatpush1.bf16.msra.mxu0 0
        %8331 = vmatprep.subr.bf16.mxu0 0
        %8332 = vmatpush1.bf16.msra.mxu0 0
        %8333 = vmatprep.subr.bf16.mxu0 0
        %8334 = vmatpush1.bf16.msra.mxu0 0
        %8335 = vmatprep.subr.bf16.mxu0 0
        %8336 = vmatpush1.bf16.msra.mxu0 0
        %8337 = vmatprep.subr.bf16.mxu0 0
        %8338 = vmatpush1.bf16.msra.mxu0 0
        %8339 = vmatprep.subr.bf16.mxu0 0
        %8340 = vmatpush1.bf16.msra.mxu0 0
        %8341 = vmatprep.subr.bf16.mxu0 0
        %8342 = vmatpush1.bf16.msra.mxu0 0
        %8343 = vmatprep.subr.bf16.mxu0 0
        %8344 = vmatpush1.bf16.msra.mxu0 0
        %8345 = vmatprep.subr.bf16.mxu0 0
        %8346 = vmatpush1.bf16.msra.mxu0 0
        %8347 = vmatprep.subr.bf16.mxu0 0
        %8348 = vmatpush1.bf16.msra.mxu0 0
        %8349 = vmatprep.subr.bf16.mxu0 0
        %8350 = vmatpush1.bf16.msra.mxu0 0
        %8351 = vmatprep.subr.bf16.mxu0 0
        %8352 = vmatpush1.bf16.msra.mxu0 0
        %8353 = vmatprep.subr.bf16.mxu0 0
        %8354 = vmatpush1.bf16.msra.mxu0 0
        %8355 = vmatprep.mubr.bf16.mxu0 0
        %8356 = vmatmul.mubr.bf16.gmra.mrb[0].mxu0 %v8321
        %v8357 = vpop.f32.mrb[0].mxu0
        %v8358 = vadd.f32 %v8307, %v8357
        %v8359 = vpop.f32.mrb[0].mxu0
        %v8360 = vpop.f32.mrb[0].mxu0
        %v8361 = vadd.f32 %v8307, %v8360
        %v8362 = vpop.f32.mrb[0].mxu0
        %8363 = vdwg.mxu0
        %v8364 = vadd.f32 %v7190, %v8358
        %v8365 = vadd.f32 %v7191, %v8361
        %v8366 = vsel %vm583, %v8364, 0.0
        %8367 = vadd.xlane.f32.xlu0 %v8366
        %v8368 = vpop.xlane.xlu0 %8367
        %v8369 = vsel %vm583, %v8365, 0.0
        %8370 = vadd.xlane.f32.xlu0 %v8369
        %v8371 = vpop.xlane.xlu0 %8370
        %v8372 = vmul.f32 %v8368, %v1746
        %v8373 = vmul.f32 %v8371, %v1746
        %v8374 = vsub.f32 %v8364, %v8372
        %v8375 = vsub.f32 %v8365, %v8373
        %v8376 = vmul.f32 %v8374, %v8374
        %v8377 = vmul.f32 %v8375, %v8375
        %v8378 = vsel %vm583, %v8376, 0.0
        %8379 = vadd.xlane.f32.xlu0 %v8378
        %v8380 = vpop.xlane.xlu0 %8379
        %v8381 = vsel %vm583, %v8377, 0.0
        %8382 = vadd.xlane.f32.xlu0 %v8381
        %v8383 = vpop.xlane.xlu0 %8382
        %v8384 = vmul.f32 %v8380, %v1746
        %v8385 = vmul.f32 %v8383, %v1746
        %v8386 = vadd.f32 %v8384, 1e-05
        %v8387 = vadd.f32 %v8385, 1e-05
        %v8388 = vrsqrt.pop %v8386
        %v8389 = vrsqrt.pop %v8387
        %v8390 = vmul.f32 %v8374, %v8388
        %v8391 = vmul.f32 %v8375, %v8389
        %v8392 = vlaneseq
        %v8393 = vshrl.u32 %v8392, 7
        %v8394 = vsub.s32 4, %v8393
        %v8395 = vrot.slane %v557, %v8394
        %v8396 = vmul.f32 %v8390, %v8395
        %v8397 = vmul.f32 %v8391, %v8395
        %v8398 = vlaneseq
        %v8399 = vshrl.u32 %v8398, 7
        %v8400 = vsub.s32 5, %v8399
        %v8401 = vrot.slane %v557, %v8400
        %v8402 = vadd.f32 %v8396, %v8401
        %v8403 = vadd.f32 %v8397, %v8401
        %s8404 = scalar_lea.vmem %s541, 288
        %v8405 = vld [vmem:[%s8404] sm:$0xf]
        %v8406 = vld [vmem:[%s8404 + $0x4] sm:$0xf]
        %v8407 = vld [vmem:[%s8404 + $0x8] sm:$0xf]
        %v8408 = vld [vmem:[%s8404 + $0xc] sm:$0xf]
        %v8409 = vpack.c.bf16 %v8403, %v8402
        %v8410 = vlaneseq
        %v8411 = vshrl.u32 %v8410, 7
        %v8412 = vsub.s32 0, %v8411
        %v8413 = vrot.slane %v557, %v8412
        %v8418 = vunpack.c.l.b16 %v8405
        %v8419 = vunpack.c.l.b16 %v8406
        %v8420 = vunpack.c.l.b16 %v8407
        %v8421 = vunpack.c.l.b16 %v8408
        %v8422 = vpack.c.b16 %v8419, %v8418
        %v8423 = vpack.c.b16 %v8421, %v8420
        %v8427 = vsel %vm583, %v8409, 0
        %8429 = vmatprep.subr.bf16.mxu0 0
        %8430 = vmatpush1.bf16.msra.mxu0 %v8422
        %8431 = vmatprep.subr.bf16.mxu0 0
        %8432 = vmatpush1.bf16.msra.mxu0 %v8423
        %8433 = vmatprep.subr.bf16.mxu0 0
        %8434 = vmatpush1.bf16.msra.mxu0 0
        %8435 = vmatprep.subr.bf16.mxu0 0
        %8436 = vmatpush1.bf16.msra.mxu0 0
        %8437 = vmatprep.subr.bf16.mxu0 0
        %8438 = vmatpush1.bf16.msra.mxu0 0
        %8439 = vmatprep.subr.bf16.mxu0 0
        %8440 = vmatpush1.bf16.msra.mxu0 0
        %8441 = vmatprep.subr.bf16.mxu0 0
        %8442 = vmatpush1.bf16.msra.mxu0 0
        %8443 = vmatprep.subr.bf16.mxu0 0
        %8444 = vmatpush1.bf16.msra.mxu0 0
        %8445 = vmatprep.subr.bf16.mxu0 0
        %8446 = vmatpush1.bf16.msra.mxu0 0
        %8447 = vmatprep.subr.bf16.mxu0 0
        %8448 = vmatpush1.bf16.msra.mxu0 0
        %8449 = vmatprep.subr.bf16.mxu0 0
        %8450 = vmatpush1.bf16.msra.mxu0 0
        %8451 = vmatprep.subr.bf16.mxu0 0
        %8452 = vmatpush1.bf16.msra.mxu0 0
        %8453 = vmatprep.subr.bf16.mxu0 0
        %8454 = vmatpush1.bf16.msra.mxu0 0
        %8455 = vmatprep.subr.bf16.mxu0 0
        %8456 = vmatpush1.bf16.msra.mxu0 0
        %8457 = vmatprep.subr.bf16.mxu0 0
        %8458 = vmatpush1.bf16.msra.mxu0 0
        %8459 = vmatprep.subr.bf16.mxu0 0
        %8460 = vmatpush1.bf16.msra.mxu0 0
        %8461 = vmatprep.mubr.bf16.mxu0 0
        %8462 = vmatmul.mubr.bf16.gmra.mrb[0].mxu0 %v8427
        %v8463 = vpop.f32.mrb[0].mxu0
        %v8464 = vadd.f32 %v8413, %v8463
        %v8465 = vpop.f32.mrb[0].mxu0
        %v8466 = vpop.f32.mrb[0].mxu0
        %v8467 = vadd.f32 %v8413, %v8466
        %v8468 = vpop.f32.mrb[0].mxu0
        %8469 = vdwg.mxu0
        %v8470 = vmax.f32 %v8464, 0.0
        %v8471 = vmax.f32 %v8467, 0.0
        %s8472 = scalar_lea.vmem %s541, 304
        %v8473 = vld [vmem:[%s8472] sm:$0xf]
        %v8474 = vld [vmem:[%s8472 + $0x4] sm:$0xf]
        %v8475 = vld [vmem:[%s8472 + $0x8] sm:$0xf]
        %v8476 = vld [vmem:[%s8472 + $0xc] sm:$0xf]
        %v8477 = vpack.c.bf16 %v8471, %v8470
        %v8478 = vlaneseq
        %v8479 = vshrl.u32 %v8478, 7
        %v8480 = vsub.s32 1, %v8479
        %v8481 = vrot.slane %v557, %v8480
        %v8486 = vunpack.c.l.b16 %v8473
        %v8487 = vunpack.c.l.b16 %v8474
        %v8488 = vunpack.c.l.b16 %v8475
        %v8489 = vunpack.c.l.b16 %v8476
        %v8490 = vpack.c.b16 %v8487, %v8486
        %v8491 = vpack.c.b16 %v8489, %v8488
        %v8495 = vsel %vm583, %v8477, 0
        %8497 = vmatprep.subr.bf16.mxu0 0
        %8498 = vmatpush1.bf16.msra.mxu0 %v8490
        %8499 = vmatprep.subr.bf16.mxu0 0
        %8500 = vmatpush1.bf16.msra.mxu0 %v8491
        %8501 = vmatprep.subr.bf16.mxu0 0
        %8502 = vmatpush1.bf16.msra.mxu0 0
        %8503 = vmatprep.subr.bf16.mxu0 0
        %8504 = vmatpush1.bf16.msra.mxu0 0
        %8505 = vmatprep.subr.bf16.mxu0 0
        %8506 = vmatpush1.bf16.msra.mxu0 0
        %8507 = vmatprep.subr.bf16.mxu0 0
        %8508 = vmatpush1.bf16.msra.mxu0 0
        %8509 = vmatprep.subr.bf16.mxu0 0
        %8510 = vmatpush1.bf16.msra.mxu0 0
        %8511 = vmatprep.subr.bf16.mxu0 0
        %8512 = vmatpush1.bf16.msra.mxu0 0
        %8513 = vmatprep.subr.bf16.mxu0 0
        %8514 = vmatpush1.bf16.msra.mxu0 0
        %8515 = vmatprep.subr.bf16.mxu0 0
        %8516 = vmatpush1.bf16.msra.mxu0 0
        %8517 = vmatprep.subr.bf16.mxu0 0
        %8518 = vmatpush1.bf16.msra.mxu0 0
        %8519 = vmatprep.subr.bf16.mxu0 0
        %8520 = vmatpush1.bf16.msra.mxu0 0
        %8521 = vmatprep.subr.bf16.mxu0 0
        %8522 = vmatpush1.bf16.msra.mxu0 0
        %8523 = vmatprep.subr.bf16.mxu0 0
        %8524 = vmatpush1.bf16.msra.mxu0 0
        %8525 = vmatprep.subr.bf16.mxu0 0
        %8526 = vmatpush1.bf16.msra.mxu0 0
        %8527 = vmatprep.subr.bf16.mxu0 0
        %8528 = vmatpush1.bf16.msra.mxu0 0
        %8529 = vmatprep.mubr.bf16.mxu0 0
        %8530 = vmatmul.mubr.bf16.gmra.mrb[0].mxu0 %v8495
        %v8531 = vpop.f32.mrb[0].mxu0
        %v8532 = vadd.f32 %v8481, %v8531
        %v8533 = vpop.f32.mrb[0].mxu0
        %v8534 = vpop.f32.mrb[0].mxu0
        %v8535 = vadd.f32 %v8481, %v8534
        %v8536 = vpop.f32.mrb[0].mxu0
        %8537 = vdwg.mxu0
        %v8538 = vadd.f32 %v8402, %v8532
        %v8539 = vadd.f32 %v8403, %v8535
        %v8540 = vsel %vm583, %v8538, 0.0
        %8541 = vadd.xlane.f32.xlu0 %v8540
        %v8542 = vpop.xlane.xlu0 %8541
        %v8543 = vsel %vm583, %v8539, 0.0
        %8544 = vadd.xlane.f32.xlu0 %v8543
        %v8545 = vpop.xlane.xlu0 %8544
        %v8546 = vmul.f32 %v8542, %v1746
        %v8547 = vmul.f32 %v8545, %v1746
        %v8548 = vsub.f32 %v8538, %v8546
        %v8549 = vsub.f32 %v8539, %v8547
        %v8550 = vmul.f32 %v8548, %v8548
        %v8551 = vmul.f32 %v8549, %v8549
        %v8552 = vsel %vm583, %v8550, 0.0
        %8553 = vadd.xlane.f32.xlu0 %v8552
        %v8554 = vpop.xlane.xlu0 %8553
        %v8555 = vsel %vm583, %v8551, 0.0
        %8556 = vadd.xlane.f32.xlu0 %v8555
        %v8557 = vpop.xlane.xlu0 %8556
        %v8558 = vmul.f32 %v8554, %v1746
        %v8559 = vmul.f32 %v8557, %v1746
        %v8560 = vadd.f32 %v8558, 1e-05
        %v8561 = vadd.f32 %v8559, 1e-05
        %v8562 = vrsqrt.pop %v8560
        %v8563 = vrsqrt.pop %v8561
        %v8564 = vmul.f32 %v8548, %v8562
        %v8565 = vmul.f32 %v8549, %v8563
        %v8566 = vlaneseq
        %v8567 = vshrl.u32 %v8566, 7
        %v8568 = vsub.s32 6, %v8567
        %v8569 = vrot.slane %v557, %v8568
        %v8570 = vmul.f32 %v8564, %v8569
        %v8571 = vmul.f32 %v8565, %v8569
        %v8572 = vlaneseq
        %v8573 = vshrl.u32 %v8572, 7
        %v8574 = vsub.s32 7, %v8573
        %v8575 = vrot.slane %v557, %v8574
        %v8576 = vadd.f32 %v8570, %v8575
        %v8577 = vadd.f32 %v8571, %v8575
        %v8578 = vsel %vm583, %v8576, 0.0
        %8579 = vadd.xlane.f32.xlu0 %v8578
        %v8580 = vpop.xlane.xlu0 %8579
        %v8581 = vsel %vm583, %v8577, 0.0
        %8582 = vadd.xlane.f32.xlu0 %v8581
        %v8583 = vpop.xlane.xlu0 %8582
        %v8584 = vmul.f32 %v8580, %v1746
        %v8585 = vmul.f32 %v8583, %v1746
        %v8586 = vsub.f32 %v8576, %v8584
        %v8587 = vsub.f32 %v8577, %v8585
        %v8588 = vmul.f32 %v8586, %v8586
        %v8589 = vmul.f32 %v8587, %v8587
        %v8590 = vsel %vm583, %v8588, 0.0
        %8591 = vadd.xlane.f32.xlu0 %v8590
        %v8592 = vpop.xlane.xlu0 %8591
        %v8593 = vsel %vm583, %v8589, 0.0
        %8594 = vadd.xlane.f32.xlu0 %v8593
        %v8595 = vpop.xlane.xlu0 %8594
        %v8596 = vmul.f32 %v8592, %v1746
        %v8597 = vmul.f32 %v8595, %v1746
        %v8598 = vadd.f32 %v8596, 1e-05
        %v8599 = vadd.f32 %v8597, 1e-05
        %v8600 = vrsqrt.pop %v8598
        %v8601 = vrsqrt.pop %v8599
        %v8602 = vmul.f32 %v8586, %v8600
        %v8603 = vmul.f32 %v8587, %v8601
        %v8604 = vlaneseq
        %v8605 = vshrl.u32 %v8604, 7
        %v8606 = vsub.s32 0, %v8605
        %v8607 = vrot.slane %v559, %v8606
        %v8608 = vmul.f32 %v8602, %v8607
        %v8609 = vmul.f32 %v8603, %v8607
        %v8610 = vlaneseq
        %v8611 = vshrl.u32 %v8610, 7
        %v8612 = vsub.s32 1, %v8611
        %v8613 = vrot.slane %v559, %v8612
        %v8614 = vadd.f32 %v8608, %v8613
        %v8615 = vadd.f32 %v8609, %v8613
        %v8616 = vld [vmem:[%s472] sm:$0xf]
        %v8617 = vld [vmem:[%s472 + $0x4] sm:$0xf]
        %v8618 = vld [vmem:[%s472 + $0x8] sm:$0xf]
        %v8619 = vld [vmem:[%s472 + $0xc] sm:$0xf]
        %v8620 = vpack.c.bf16 %v8615, %v8614
        %v8621 = vld [vmem:[%s544] sm:$0x1]
        %v8623 = vlaneseq
        %v8624 = vshrl.u32 %v8623, 7
        %v8625 = vsub.s32 0, %v8624
        %v8626 = vrot.slane %v8621, %v8625
        %v8632 = vunpack.c.l.b16 %v8616
        %v8633 = vunpack.c.l.b16 %v8617
        %v8634 = vunpack.c.l.b16 %v8618
        %v8635 = vunpack.c.l.b16 %v8619
        %v8636 = vpack.c.b16 %v8633, %v8632
        %v8637 = vpack.c.b16 %v8635, %v8634
        %v8641 = vsel %vm583, %v8620, 0
        %8643 = vmatprep.subr.bf16.mxu0 0
        %8644 = vmatpush1.bf16.msra.mxu0 %v8636
        %8645 = vmatprep.subr.bf16.mxu0 0
        %8646 = vmatpush1.bf16.msra.mxu0 %v8637
        %8647 = vmatprep.subr.bf16.mxu0 0
        %8648 = vmatpush1.bf16.msra.mxu0 0
        %8649 = vmatprep.subr.bf16.mxu0 0
        %8650 = vmatpush1.bf16.msra.mxu0 0
        %8651 = vmatprep.subr.bf16.mxu0 0
        %8652 = vmatpush1.bf16.msra.mxu0 0
        %8653 = vmatprep.subr.bf16.mxu0 0
        %8654 = vmatpush1.bf16.msra.mxu0 0
        %8655 = vmatprep.subr.bf16.mxu0 0
        %8656 = vmatpush1.bf16.msra.mxu0 0
        %8657 = vmatprep.subr.bf16.mxu0 0
        %8658 = vmatpush1.bf16.msra.mxu0 0
        %8659 = vmatprep.subr.bf16.mxu0 0
        %8660 = vmatpush1.bf16.msra.mxu0 0
        %8661 = vmatprep.subr.bf16.mxu0 0
        %8662 = vmatpush1.bf16.msra.mxu0 0
        %8663 = vmatprep.subr.bf16.mxu0 0
        %8664 = vmatpush1.bf16.msra.mxu0 0
        %8665 = vmatprep.subr.bf16.mxu0 0
        %8666 = vmatpush1.bf16.msra.mxu0 0
        %8667 = vmatprep.subr.bf16.mxu0 0
        %8668 = vmatpush1.bf16.msra.mxu0 0
        %8669 = vmatprep.subr.bf16.mxu0 0
        %8670 = vmatpush1.bf16.msra.mxu0 0
        %8671 = vmatprep.subr.bf16.mxu0 0
        %8672 = vmatpush1.bf16.msra.mxu0 0
        %8673 = vmatprep.subr.bf16.mxu0 0
        %8674 = vmatpush1.bf16.msra.mxu0 0
        %8675 = vmatprep.mubr.bf16.mxu0 0
        %8676 = vmatmul.mubr.bf16.gmra.mrb[0].mxu0 %v8641
        %v8677 = vpop.f32.mrb[0].mxu0
        %v8678 = vadd.f32 %v8626, %v8677
        %v8679 = vpop.f32.mrb[0].mxu0
        %v8680 = vpop.f32.mrb[0].mxu0
        %v8681 = vadd.f32 %v8626, %v8680
        %v8682 = vpop.f32.mrb[0].mxu0
        %8683 = vdwg.mxu0
        %8684 = vmax.xlane.f32.xlu0 %v8678
        %v8685 = vpop.xlane.xlu0 %8684
        %8686 = vmax.xlane.f32.xlu0 %v8681
        %v8687 = vpop.xlane.xlu0 %8686
        %v8688 = vsub.f32 %v8678, %v8685
        %v8689 = vsub.f32 %v8681, %v8687
        %v8690 = vmul.f32 %v8688, 1.442695
        %v8691 = vpow.pop %v8690
        %v8692 = vmul.f32 %v8689, 1.442695
        %v8693 = vpow.pop %v8692
        %8694 = vadd.xlane.f32.xlu0 %v8691
        %v8695 = vpop.xlane.xlu0 %8694
        %8696 = vadd.xlane.f32.xlu0 %v8693
        %v8697 = vpop.xlane.xlu0 %8696
        %v8698 = vlog2.pop %v8695
        %v8699 = vmul.f32 %v8698, 0.6931472
        %v8700 = vlog2.pop %v8697
        %v8701 = vmul.f32 %v8700, 0.6931472
        %v8702 = vsub.f32 %v8688, %v8699
        %v8703 = vsub.f32 %v8689, %v8701
        %8704 = vst [vmem:[%s549] sm:$0xff] %v8702
        %8705 = vst [vmem:[%s549 + $0x8] sm:$0xff] %v8703
        %p8706 = scmp.lt.s32.totalorder %s29, 3
        %s8707 = scalar_select %p8706, %s29, 3
        %s8708 = smul.addr %s8707, 2
        %s8709 = smul.addr %s8708, 8
        %s8710 = scalar_lea.vmem %s10, %s8709
        // Predicated region
        $region85: #{forward.1} parent=59 // pred_check
          %p8711 = pneg %p287
        $region86: #{forward.1} parent=59 // pred_check_branch
          %8713 = sbr.rel (%p8711) target = $region88
        $region87: #{forward.1} parent=59 // pred_region
          _
        $region88: #{forward.1} parent=59 // pred_fallthru
          _
      $region60: #{forward.1} parent=5 // pred_fallthru
        _
      %p8714 = scmp.le.s32.totalorder 2, %s24
      // Predicated region
      $region89: #{forward.1} parent=5 // pred_check
        %p8715 = pneg %p8714
      $region90: #{forward.1} parent=5 // pred_check_branch
        %8717 = sbr.rel (%p8715) target = $region92
      $region91: #{forward.1} parent=5 // pred_region
        %s8718 = ssub.s32 %s24, 2
        // Predicated region
        $region93: #{forward.1} parent=91 // pred_check
          %p8719 = pneg %p293
        $region94: #{forward.1} parent=91 // pred_check_branch
          %8721 = sbr.rel (%p8719) target = $region96
        $region95: #{forward.1} parent=91 // pred_region
          %p8722 = scmp.lt.s32.totalorder %s30, 3
          %s8723 = scalar_select %p8722, %s30, 3
          %s8724 = smul.addr %s8723, 2
          %s8725 = smul.addr %s8724, 8
          %s8726 = scalar_lea.vmem %s10, %s8725
        $region96: #{forward.1} parent=91 // pred_fallthru
          _
      $region92: #{forward.1} parent=5 // pred_fallthru
        _
    $region6: #{forward.1} parent=1 // loop_footer
      %s28 = sadd.s32 1, %s24
    $region7: #{forward.1} parent=1 // loop_footer_branch
      %23 = sbr.rel target = $region3
    $region8: #{forward.1} parent=1 // loop_exit
      _
    %8727 = vsyncpa [#allocation3], 1
    %s8728 = scalar_lea.sflag [#allocation3], 1
    %8729 = vsyncpa %s8728, 1
    %8730 = vsyncpa [#allocation5], 1
    %8731 = vsyncpa [#allocation8], 1
    %s8732 = scalar_lea.sflag [#allocation8], 1
    %8733 = vsyncpa %s8732, 1
    %8734 = vsyncpa [#allocation11], 1
    %s8735 = scalar_lea.sflag [#allocation11], 1
    %8736 = vsyncpa %s8735, 1

</llo_original>
